<compile_context>
chip_gen: v7x
topology: tpu7x:2x2x1
jax: 0.10.0
libtpu: 0.0.40
codegen_flags: <defaults>
</compile_context>

<pallas_src>
import jax
import jax.numpy as jnp
from jax.experimental import pallas as pl
from jax.experimental.pallas import tpu as pltpu

# ---------------- configuration (small shapes consistent with ISA.__init__) ---------------
B = 2
NUM_SLOTS = 4          # num_slots
SLOT_ITERS = 2         # slot_att_iter
SLOT_DIM = 32          # slot_dim
INPUT_DIM = 32         # input_dim
RESIZE_TO = (64, 64)
PATCH = 8
RES_H = RESIZE_TO[0] // PATCH
RES_W = RESIZE_TO[1] // PATCH
TOKENS = RES_H * RES_W         # N = 64
SIGMA = 5.0
SCALE = SLOT_DIM ** (-0.5)
EPS = 1e-8
LN_EPS = 1e-5


def _ln(v, g, b):
    mu = jnp.mean(v, axis=-1, keepdims=True)
    var = jnp.mean(jnp.square(v - mu), axis=-1, keepdims=True)
    return (v - mu) * jax.lax.rsqrt(var + LN_EPS) * g + b


# --------------------------------- Pallas kernel ------------------------------------------
def isa_kernel(
    x_ref, ag_ref, slots0_ref, sp0_ref, ss0_ref,
    ln0g_ref, ln0b_ref, Wi1_ref, bi1_ref, Wi2_ref, bi2_ref, ln1g_ref, ln1b_ref,
    WKV_ref, WQ_ref, Wg_bd_ref, bg_t_ref,
    Wf1bd_ref, bf1t_ref, Wf2bd_ref, bf2t_ref,
    sel_ref, selT_ref,
    ng_ref, nb_ref,
    WI_ref, WH_ref, bI_ref, bH_ref,
    mng_ref, mnb_ref, Wm1_ref, bm1_ref, Wm2_ref, bm2_ref,
    Wfin_ref, bfin_ref,
    slots_out_ref, attn_out_ref,
):
    S, D = slots0_ref.shape
    SD = S * D
    N = ag_ref.shape[0]

    # ---- small, every-round tensors: hoist into vregs once ----
    WQ = WQ_ref[...]
    ng = ng_ref[...]
    nb = nb_ref[...]
    bg_t = bg_t_ref[...]
    bf1t = bf1t_ref[...]
    bf2t = bf2t_ref[...]
    bI = bI_ref[...]
    bH = bH_ref[...]
    mng = mng_ref[...]
    mnb = mnb_ref[...]
    bm1 = bm1_ref[...]
    bm2 = bm2_ref[...]

    x = x_ref[0]                                                        # (N, Din)

    # initial_mlp: LN -> Linear -> ReLU -> Linear -> LN  (iteration-invariant)
    h = _ln(x, ln0g_ref[...], ln0b_ref[...])
    h = jnp.maximum(jnp.dot(h, Wi1_ref[...], preferred_element_type=jnp.float32)
                    + bi1_ref[...], 0.0)
    h = jnp.dot(h, Wi2_ref[...], preferred_element_type=jnp.float32) + bi2_ref[...]
    xp = _ln(h, ln1g_ref[...], ln1b_ref[...])                           # (N, D)

    # K/V projection producing slot-tiled outputs directly: one (N, D) @ (D, 2*S*D)
    # matmul, iteration-invariant; stacked (K rows | V rows) for the fused f-MLP.
    KVt = jnp.dot(xp, WKV_ref[...], preferred_element_type=jnp.float32)  # (N, 2*S*D)
    KVx = jnp.concatenate([KVt[:, :SD], KVt[:, SD:]], axis=0)            # (2N, S*D)

    ag_xy = ag_ref[...]                                                  # (N, 2S) [x...|y...]
    slots = slots0_ref[...]                                              # (S, D)
    Sp_pk = sp0_ref[...]                                                 # (1, 2S)
    # exact divide: tiny (1, 2S) op; this path is amplified by the saturated softmax.
    # NOTE: like the PyTorch reference, there is no epsilon on S_s here.
    rinv = 1.0 / (ss0_ref[...] * SIGMA)                                  # (1, 2S)

    attn = None

    # iters+1 slot-attention rounds (static unroll; SLOT_ITERS is small)
    for t in range(SLOT_ITERS + 1):
        # NOTE: the query_opt straight-through trick (detach arithmetic) is a value
        # no-op in the forward pass, so it is omitted here.
        last = (t == SLOT_ITERS)

        sl_n = _ln(slots, ng, nb)                                        # (S, D)
        q = jnp.dot(sl_n, WQ, preferred_element_type=jnp.float32)        # (S, D)
        q_flat = jnp.concatenate([q[s:s + 1, :] for s in range(S)], axis=-1)  # (1, S*D)

        # relative grid, lane-packed over slots and both coordinates: (N, 2S)
        relxy = (ag_xy - Sp_pk) * rinv
        # positional code g(rel) for all slots at once: (N, 2S) @ (2S, S*D) MXU matmul
        g_pk = (jnp.dot(relxy, Wg_bd_ref[...], preferred_element_type=jnp.float32)
                + bg_t)                                                  # (N, S*D)
        kv_in = KVx + jnp.concatenate([g_pk, g_pk], axis=0)              # (2N, S*D)

        # fused f-MLP (block-diagonal weights): two (2N, S*D) @ (S*D, S*D) MXU matmuls;
        # weights read at point of use to keep vreg live ranges short.
        hf = jnp.maximum(jnp.dot(kv_in, Wf1bd_ref[...],
                                 preferred_element_type=jnp.float32) + bf1t, 0.0)
        kv = jnp.dot(hf, Wf2bd_ref[...], preferred_element_type=jnp.float32) + bf2t
        k_pk = kv[:N, :]                                                 # (N, S*D)
        v_pk = kv[N:, :]                                                 # (N, S*D)

        # dots[n, s] = sum_d q[s, d] * k[s, n, d]:
        # full-vreg VPU multiply + one (N, S*D) @ (S*D, S) MXU push via the slot selector.
        dots = jnp.dot(k_pk * q_flat, sel_ref[...],
                       preferred_element_type=jnp.float32) * SCALE       # (N, S)

        # softmax over slots, then normalize over tokens (approx reciprocal -> EUP)
        m = jnp.max(dots, axis=-1, keepdims=True)
        e = jnp.exp(dots - m)
        attn = e * pl.reciprocal(jnp.sum(e, axis=-1, keepdims=True), approx=True) + EPS
        attn = attn * pl.reciprocal(jnp.sum(attn, axis=0, keepdims=True), approx=True)

        if not last:
            # updates[s, :] = sum_n attn[n, s] * v[s, n, :] — lane-packed:
            # replicate attn per slot block with one MXU push, multiply, sublane-reduce.
            attn_rep = jnp.dot(attn, selT_ref[...],
                               preferred_element_type=jnp.float32)        # (N, S*D)
            upd_flat = jnp.sum(attn_rep * v_pk, axis=0, keepdims=True)    # (1, S*D)
            updates = jnp.concatenate(
                [upd_flat[:, s * D:(s + 1) * D] for s in range(S)], axis=0)  # (S, D)

            # slot position / scale statistics, packed into one (N, 2S) reduce each
            attn2 = jnp.concatenate([attn, attn], axis=-1)                # (N, 2S)
            Sp_pk = jnp.sum(attn2 * ag_xy, axis=0, keepdims=True)         # (1, 2S)
            dxy = ag_xy - Sp_pk
            Ss_pk = jnp.sqrt(jnp.sum(attn2 * dxy * dxy, axis=0, keepdims=True))
            rinv = 1.0 / (Ss_pk * SIGMA)

            # fused GRUCell: [Wir|Wiz|Win], [Whr|Whz|Whn] -> 2 matmuls instead of 6
            gi = jnp.dot(updates, WI_ref[...], preferred_element_type=jnp.float32) + bI
            gh = jnp.dot(slots, WH_ref[...], preferred_element_type=jnp.float32) + bH
            r = jax.nn.sigmoid(gi[:, :D] + gh[:, :D])
            z = jax.nn.sigmoid(gi[:, D:2 * D] + gh[:, D:2 * D])
            n_gate = jnp.tanh(gi[:, 2 * D:] + r * gh[:, 2 * D:])
            slots = (1.0 - z) * n_gate + z * slots

            # MLP (pre-LN, residual).  TODO(synk): nn.Dropout(p=0.1) is train-time
            # randomness; implemented here as identity (eval semantics).
            mh = _ln(slots, mng, mnb)
            mh = jnp.maximum(jnp.dot(mh, Wm1_ref[...],
                                     preferred_element_type=jnp.float32) + bm1, 0.0)
            mh = jnp.dot(mh, Wm2_ref[...], preferred_element_type=jnp.float32) + bm2
            slots = mh + slots

    # final_layer(slots_prev): slots is unchanged in the last round, so use it directly
    slots_out_ref[0] = (jnp.dot(slots, Wfin_ref[...], preferred_element_type=jnp.float32)
                        + bfin_ref[...])

    # emit attn slot-major (S, N) for a lane-dense store; the (64, 4) -> (4, 64)
    # transpose is expressed as masked sublane reductions (known-lowerable ops), once.
    eye = (jax.lax.broadcasted_iota(jnp.int32, (N, N), 0)
           == jax.lax.broadcasted_iota(jnp.int32, (N, N), 1)).astype(jnp.float32)
    attn_out_ref[0] = jnp.concatenate(
        [jnp.sum(attn[:, s:s + 1] * eye, axis=0, keepdims=True) for s in range(S)],
        axis=0)


# ------------------------------------ wrapper ---------------------------------------------
def _block_diag(W, reps):
    din, dout = W.shape
    out = jnp.zeros((reps * din, reps * dout), W.dtype)
    for i in range(reps):
        out = out.at[i * din:(i + 1) * din, i * dout:(i + 1) * dout].set(W)
    return out


def _prep_inputs(x, params, abs_grid):
    """Host-side fusion: slot-tiled K|V, block-structured g / f / selector matrices,
    fused GRU gates, lane-packed abs-grid and slot statistics."""
    p = params
    S, D = p['slots0'].shape
    SD = S * D

    # lane-packed absolute grid: columns [x coord per slot | y coord per slot]
    ag_xy = jnp.concatenate([jnp.tile(abs_grid[:, 0:1], (1, S)),
                             jnp.tile(abs_grid[:, 1:2], (1, S))], axis=1)     # (N, 2S)
    sp_pk0 = jnp.concatenate([p['sp0'][:, 0, 0], p['sp0'][:, 0, 1]]).reshape(1, 2 * S)
    ss_pk0 = jnp.concatenate([p['ss0'][:, 0, 0], p['ss0'][:, 0, 1]]).reshape(1, 2 * S)

    # slot-tiled K|V projection: (D, 2*S*D)
    WKV_big = jnp.concatenate([jnp.tile(p['WK'], (1, S)),
                               jnp.tile(p['WV'], (1, S))], axis=1)

    # rank-2 positional projection as a (2S, S*D) block-structured matrix
    Wg_bd = jnp.zeros((2 * S, SD), jnp.float32)
    for s in range(S):
        Wg_bd = Wg_bd.at[s, s * D:(s + 1) * D].set(p['Wg'][0])
        Wg_bd = Wg_bd.at[S + s, s * D:(s + 1) * D].set(p['Wg'][1])
    bg_t = jnp.tile(p['bg'], (1, S))                                          # (1, S*D)

    # block-diagonal f-MLP
    Wf1bd = _block_diag(p['Wf1'], S)
    Wf2bd = _block_diag(p['Wf2'], S)
    bf1t = jnp.tile(p['bf1'], (1, S))
    bf2t = jnp.tile(p['bf2'], (1, S))

    # 0/1 slot selector matrices
    sel = jnp.zeros((SD, S), jnp.float32)
    for s in range(S):
        sel = sel.at[s * D:(s + 1) * D, s].set(1.0)
    selT = jnp.transpose(sel)                                                 # (S, S*D)

    # fused GRU gate weights / biases
    WI = jnp.concatenate([p['Wir'], p['Wiz'], p['Win']], axis=1)              # (D, 3D)
    WH = jnp.concatenate([p['Whr'], p['Whz'], p['Whn']], axis=1)              # (D, 3D)
    bI = jnp.concatenate([p['br'], p['bz'], p['bin']], axis=1)                # (1, 3D)
    bH = jnp.concatenate([jnp.zeros_like(p['br']), jnp.zeros_like(p['bz']),
                          p['bhn']], axis=1)                                  # (1, 3D)

    return [
        x, ag_xy, p['slots0'], sp_pk0, ss_pk0,
        p['ln0g'], p['ln0b'], p['Wi1'], p['bi1'], p['Wi2'], p['bi2'], p['ln1g'], p['ln1b'],
        WKV_big, p['WQ'], Wg_bd, bg_t,
        Wf1bd, bf1t, Wf2bd, bf2t,
        sel, selT,
        p['ng'], p['nb'],
        WI, WH, bI, bH,
        p['mng'], p['mnb'], p['Wm1'], p['bm1'], p['Wm2'], p['bm2'],
        p['Wfin'], p['bfin'],
    ]


def isa_pallas(x, params, abs_grid):
    Bb, N, Din = x.shape
    S, D = params['slots0'].shape
    arrays = _prep_inputs(x, params, abs_grid)

    def bc_spec(a):
        nd = a.ndim
        return pl.BlockSpec(a.shape, lambda b, _nd=nd: (0,) * _nd)

    in_specs = [pl.BlockSpec((1, N, Din), lambda b: (b, 0, 0))]
    in_specs += [bc_spec(a) for a in arrays[1:]]

    out_shapes = (jax.ShapeDtypeStruct((Bb, S, D), jnp.float32),
                  jax.ShapeDtypeStruct((Bb, S, N), jnp.float32))
    out_specs = (pl.BlockSpec((1, S, D), lambda b: (b, 0, 0)),
                 pl.BlockSpec((1, S, N), lambda b: (b, 0, 0)))

    slots_out, attn_sn = pl.pallas_call(
        isa_kernel,
        out_shape=out_shapes,
        grid_spec=pltpu.PrefetchScalarGridSpec(
            num_scalar_prefetch=0,
            grid=(Bb,),
            in_specs=in_specs,
            out_specs=out_specs,
        ),
        compiler_params=pltpu.CompilerParams(dimension_semantics=("parallel",)),
    )(*arrays)
    return slots_out, attn_sn


# ----------------------------- pure-JAX reference (for checking) --------------------------
def isa_reference(x, p, abs_grid):
    Bb, N, Din = x.shape
    S, D = p['slots0'].shape

    def ln(v, g, b):
        mu = v.mean(-1, keepdims=True)
        var = ((v - mu) ** 2).mean(-1, keepdims=True)
        return (v - mu) / jnp.sqrt(var + LN_EPS) * g + b

    h = ln(x, p['ln0g'], p['ln0b'])
    h = jnp.maximum(h @ p['Wi1'] + p['bi1'], 0.0)
    h = h @ p['Wi2'] + p['bi2']
    xp = ln(h, p['ln1g'], p['ln1b'])                        # (B, N, D)
    Kx = xp @ p['WK']
    Vx = xp @ p['WV']

    ag = jnp.broadcast_to(abs_grid[None, None], (Bb, S, N, 2))
    slots = jnp.broadcast_to(p['slots0'][None], (Bb, S, D))
    S_p = jnp.broadcast_to(p['sp0'][None], (Bb, S, 1, 2))
    S_s = jnp.broadcast_to(p['ss0'][None], (Bb, S, 1, 2))

    attn = None
    slots_prev = slots
    for t in range(SLOT_ITERS + 1):
        slots_prev = slots
        sl = ln(slots, p['ng'], p['nb'])
        rel = (ag - S_p) / (S_s * SIGMA)
        g_rel = rel @ p['Wg'] + p['bg']

        def f_fn(u):
            u = jnp.maximum(u @ p['Wf1'] + p['bf1'], 0.0)
            return u @ p['Wf2'] + p['bf2']

        k = f_fn(Kx[:, None] + g_rel)
        v = f_fn(Vx[:, None] + g_rel)
        q = sl @ p['WQ']
        dots = jnp.einsum('bsd,bsnd->bsn', q, k) * SCALE
        attn = jax.nn.softmax(dots, axis=1) + EPS
        attn = attn / attn.sum(-1, keepdims=True)
        updates = jnp.einsum('bsnd,bsn->bsd', v, attn)
        S_p = jnp.einsum('bsnd,bsn->bsd', ag, attn)[:, :, None, :]
        S_s = jnp.sqrt(jnp.einsum('bsnd,bsn->bsd', (ag - S_p) ** 2, attn))[:, :, None, :]
        if t != SLOT_ITERS:
            r = jax.nn.sigmoid(updates @ p['Wir'] + slots_prev @ p['Whr'] + p['br'])
            z = jax.nn.sigmoid(updates @ p['Wiz'] + slots_prev @ p['Whz'] + p['bz'])
            n = jnp.tanh(updates @ p['Win'] + p['bin']
                         + r * (slots_prev @ p['Whn'] + p['bhn']))
            slots = (1.0 - z) * n + z * slots_prev
            resid = slots
            mh = ln(slots, p['mng'], p['mnb'])
            mh = jnp.maximum(mh @ p['Wm1'] + p['bm1'], 0.0)
            mh = mh @ p['Wm2'] + p['bm2']
            slots = mh + resid

    slots_out = slots_prev @ p['Wfin'] + p['bfin']
    return slots_out, attn                                  # attn is (B, S, N)


# ---------------------------------- params & inputs ---------------------------------------
def build_abs_grid():
    xs = jnp.linspace(-1.0, 1.0, RES_W)
    ys = jnp.linspace(-1.0, 1.0, RES_H)
    xg, yg = jnp.meshgrid(xs, ys, indexing='xy')            # (RES_H, RES_W)
    return jnp.stack([xg.reshape(-1), yg.reshape(-1)], axis=-1).astype(jnp.float32)  # (N, 2)


def init_params(key):
    keys = list(jax.random.split(key, 64))
    it = iter(keys)
    Din, D, S = INPUT_DIM, SLOT_DIM, NUM_SLOTS

    def lin_w(fan_in, fan_out):
        return (jax.random.normal(next(it), (fan_in, fan_out), jnp.float32)
                / jnp.sqrt(float(fan_in)))

    def bias(dim):
        return jax.random.normal(next(it), (1, dim), jnp.float32) * 0.01

    p = {}
    # query_opt=True: learned slot queries, xavier-uniform init
    bound = (6.0 / (S + D)) ** 0.5
    p['slots0'] = jax.random.uniform(next(it), (S, D), jnp.float32, -bound, bound)
    # S_p, S_s ~ N(0, 0.02) as in the module
    p['sp0'] = jax.random.normal(next(it), (S, 1, 2), jnp.float32) * 0.02
    p['ss0'] = jax.random.normal(next(it), (S, 1, 2), jnp.float32) * 0.02
    # initial_mlp
    p['ln0g'] = jnp.ones((1, Din), jnp.float32); p['ln0b'] = jnp.zeros((1, Din), jnp.float32)
    p['Wi1'] = lin_w(Din, Din); p['bi1'] = bias(Din)
    p['Wi2'] = lin_w(Din, D); p['bi2'] = bias(D)
    p['ln1g'] = jnp.ones((1, D), jnp.float32); p['ln1b'] = jnp.zeros((1, D), jnp.float32)
    # K, V, Q (no bias), g, f
    p['WK'] = lin_w(D, D); p['WV'] = lin_w(D, D); p['WQ'] = lin_w(D, D)
    p['Wg'] = lin_w(2, D); p['bg'] = bias(D)
    p['Wf1'] = lin_w(D, D); p['bf1'] = bias(D)
    p['Wf2'] = lin_w(D, D); p['bf2'] = bias(D)
    # slot LayerNorm
    p['ng'] = jnp.ones((1, D), jnp.float32); p['nb'] = jnp.zeros((1, D), jnp.float32)
    # GRUCell (per-gate weights; input/hidden biases of r and z gates merged)
    for nm in ('Wir', 'Wiz', 'Win', 'Whr', 'Whz', 'Whn'):
        p[nm] = lin_w(D, D)
    for nm in ('br', 'bz', 'bin', 'bhn'):
        p[nm] = bias(D)
    # MLP (pre-LN, residual)
    p['mng'] = jnp.ones((1, D), jnp.float32); p['mnb'] = jnp.zeros((1, D), jnp.float32)
    p['Wm1'] = lin_w(D, 4 * D); p['bm1'] = bias(4 * D)
    p['Wm2'] = lin_w(4 * D, D); p['bm2'] = bias(D)
    # final layer
    p['Wfin'] = lin_w(D, D); p['bfin'] = bias(D)
    return p


if __name__ == "__main__":
    import numpy as np

    key = jax.random.PRNGKey(0)
    kp, kx = jax.random.split(key)
    params = init_params(kp)
    x = jax.random.normal(kx, (B, TOKENS, INPUT_DIM), jnp.float32)
    abs_grid = build_abs_grid()

    slots, attn = isa_pallas(x, params, abs_grid)
    jax.block_until_ready((slots, attn))

    assert slots.shape == (B, NUM_SLOTS, SLOT_DIM)
    assert attn.shape == (B, NUM_SLOTS, TOKENS)
    assert bool(jnp.all(jnp.isfinite(slots))) and bool(jnp.all(jnp.isfinite(attn)))

    slots_ref, attn_ref = isa_reference(x, params, abs_grid)
    np.testing.assert_allclose(np.asarray(slots), np.asarray(slots_ref), rtol=1e-2, atol=5e-3)
    np.testing.assert_allclose(np.asarray(attn), np.asarray(attn_ref), rtol=1e-2, atol=5e-3)

    print("KERNEL_OK")
</pallas_src>

<mosaic_0001>
module attributes {stable_mosaic.version = 11 : i64} {
  func.func @isa_kernel(%arg0: i32, %arg1: memref<1x64x32xf32, #tpu.memory_space<vmem>>, %arg2: memref<64x8xf32, #tpu.memory_space<vmem>>, %arg3: memref<4x32xf32, #tpu.memory_space<vmem>>, %arg4: memref<1x8xf32, #tpu.memory_space<vmem>>, %arg5: memref<1x8xf32, #tpu.memory_space<vmem>>, %arg6: memref<1x32xf32, #tpu.memory_space<vmem>>, %arg7: memref<1x32xf32, #tpu.memory_space<vmem>>, %arg8: memref<32x32xf32, #tpu.memory_space<vmem>>, %arg9: memref<1x32xf32, #tpu.memory_space<vmem>>, %arg10: memref<32x32xf32, #tpu.memory_space<vmem>>, %arg11: memref<1x32xf32, #tpu.memory_space<vmem>>, %arg12: memref<1x32xf32, #tpu.memory_space<vmem>>, %arg13: memref<1x32xf32, #tpu.memory_space<vmem>>, %arg14: memref<32x256xf32, #tpu.memory_space<vmem>>, %arg15: memref<32x32xf32, #tpu.memory_space<vmem>>, %arg16: memref<8x128xf32, #tpu.memory_space<vmem>>, %arg17: memref<1x128xf32, #tpu.memory_space<vmem>>, %arg18: memref<128x128xf32, #tpu.memory_space<vmem>>, %arg19: memref<1x128xf32, #tpu.memory_space<vmem>>, %arg20: memref<128x128xf32, #tpu.memory_space<vmem>>, %arg21: memref<1x128xf32, #tpu.memory_space<vmem>>, %arg22: memref<128x4xf32, #tpu.memory_space<vmem>>, %arg23: memref<4x128xf32, #tpu.memory_space<vmem>>, %arg24: memref<1x32xf32, #tpu.memory_space<vmem>>, %arg25: memref<1x32xf32, #tpu.memory_space<vmem>>, %arg26: memref<32x96xf32, #tpu.memory_space<vmem>>, %arg27: memref<32x96xf32, #tpu.memory_space<vmem>>, %arg28: memref<1x96xf32, #tpu.memory_space<vmem>>, %arg29: memref<1x96xf32, #tpu.memory_space<vmem>>, %arg30: memref<1x32xf32, #tpu.memory_space<vmem>>, %arg31: memref<1x32xf32, #tpu.memory_space<vmem>>, %arg32: memref<32x128xf32, #tpu.memory_space<vmem>>, %arg33: memref<1x128xf32, #tpu.memory_space<vmem>>, %arg34: memref<128x32xf32, #tpu.memory_space<vmem>>, %arg35: memref<1x32xf32, #tpu.memory_space<vmem>>, %arg36: memref<32x32xf32, #tpu.memory_space<vmem>>, %arg37: memref<1x32xf32, #tpu.memory_space<vmem>>, %arg38: memref<1x4x32xf32, #tpu.memory_space<vmem>>, %arg39: memref<1x4x64xf32, #tpu.memory_space<vmem>>) attributes {dimension_semantics = [#tpu.dimension_semantics<parallel>], iteration_bounds = array<i64: 2>, scalar_prefetch = 0 : i64, scratch_operands = 0 : i64, tpu.core_type = #tpu.core_type<tc>, window_params = [{transform_indices = @transform_0, window_bounds = array<i64: 1, 64, 32>}, {pipeline_mode = #tpu.pipeline_mode<synchronous>, transform_indices = @transform_1, window_bounds = array<i64: 64, 8>}, {pipeline_mode = #tpu.pipeline_mode<synchronous>, transform_indices = @transform_2, window_bounds = array<i64: 4, 32>}, {pipeline_mode = #tpu.pipeline_mode<synchronous>, transform_indices = @transform_3, window_bounds = array<i64: 1, 8>}, {pipeline_mode = #tpu.pipeline_mode<synchronous>, transform_indices = @transform_4, window_bounds = array<i64: 1, 8>}, {pipeline_mode = #tpu.pipeline_mode<synchronous>, transform_indices = @transform_5, window_bounds = array<i64: 1, 32>}, {pipeline_mode = #tpu.pipeline_mode<synchronous>, transform_indices = @transform_6, window_bounds = array<i64: 1, 32>}, {pipeline_mode = #tpu.pipeline_mode<synchronous>, transform_indices = @transform_7, window_bounds = array<i64: 32, 32>}, {pipeline_mode = #tpu.pipeline_mode<synchronous>, transform_indices = @transform_8, window_bounds = array<i64: 1, 32>}, {pipeline_mode = #tpu.pipeline_mode<synchronous>, transform_indices = @transform_9, window_bounds = array<i64: 32, 32>}, {pipeline_mode = #tpu.pipeline_mode<synchronous>, transform_indices = @transform_10, window_bounds = array<i64: 1, 32>}, {pipeline_mode = #tpu.pipeline_mode<synchronous>, transform_indices = @transform_11, window_bounds = array<i64: 1, 32>}, {pipeline_mode = #tpu.pipeline_mode<synchronous>, transform_indices = @transform_12, window_bounds = array<i64: 1, 32>}, {pipeline_mode = #tpu.pipeline_mode<synchronous>, transform_indices = @transform_13, window_bounds = array<i64: 32, 256>}, {pipeline_mode = #tpu.pipeline_mode<synchronous>, transform_indices = @transform_14, window_bounds = array<i64: 32, 32>}, {pipeline_mode = #tpu.pipeline_mode<synchronous>, transform_indices = @transform_15, window_bounds = array<i64: 8, 128>}, {pipeline_mode = #tpu.pipeline_mode<synchronous>, transform_indices = @transform_16, window_bounds = array<i64: 1, 128>}, {pipeline_mode = #tpu.pipeline_mode<synchronous>, transform_indices = @transform_17, window_bounds = array<i64: 128, 128>}, {pipeline_mode = #tpu.pipeline_mode<synchronous>, transform_indices = @transform_18, window_bounds = array<i64: 1, 128>}, {pipeline_mode = #tpu.pipeline_mode<synchronous>, transform_indices = @transform_19, window_bounds = array<i64: 128, 128>}, {pipeline_mode = #tpu.pipeline_mode<synchronous>, transform_indices = @transform_20, window_bounds = array<i64: 1, 128>}, {pipeline_mode = #tpu.pipeline_mode<synchronous>, transform_indices = @transform_21, window_bounds = array<i64: 128, 4>}, {pipeline_mode = #tpu.pipeline_mode<synchronous>, transform_indices = @transform_22, window_bounds = array<i64: 4, 128>}, {pipeline_mode = #tpu.pipeline_mode<synchronous>, transform_indices = @transform_23, window_bounds = array<i64: 1, 32>}, {pipeline_mode = #tpu.pipeline_mode<synchronous>, transform_indices = @transform_24, window_bounds = array<i64: 1, 32>}, {pipeline_mode = #tpu.pipeline_mode<synchronous>, transform_indices = @transform_25, window_bounds = array<i64: 32, 96>}, {pipeline_mode = #tpu.pipeline_mode<synchronous>, transform_indices = @transform_26, window_bounds = array<i64: 32, 96>}, {pipeline_mode = #tpu.pipeline_mode<synchronous>, transform_indices = @transform_27, window_bounds = array<i64: 1, 96>}, {pipeline_mode = #tpu.pipeline_mode<synchronous>, transform_indices = @transform_28, window_bounds = array<i64: 1, 96>}, {pipeline_mode = #tpu.pipeline_mode<synchronous>, transform_indices = @transform_29, window_bounds = array<i64: 1, 32>}, {pipeline_mode = #tpu.pipeline_mode<synchronous>, transform_indices = @transform_30, window_bounds = array<i64: 1, 32>}, {pipeline_mode = #tpu.pipeline_mode<synchronous>, transform_indices = @transform_31, window_bounds = array<i64: 32, 128>}, {pipeline_mode = #tpu.pipeline_mode<synchronous>, transform_indices = @transform_32, window_bounds = array<i64: 1, 128>}, {pipeline_mode = #tpu.pipeline_mode<synchronous>, transform_indices = @transform_33, window_bounds = array<i64: 128, 32>}, {pipeline_mode = #tpu.pipeline_mode<synchronous>, transform_indices = @transform_34, window_bounds = array<i64: 1, 32>}, {pipeline_mode = #tpu.pipeline_mode<synchronous>, transform_indices = @transform_35, window_bounds = array<i64: 32, 32>}, {pipeline_mode = #tpu.pipeline_mode<synchronous>, transform_indices = @transform_36, window_bounds = array<i64: 1, 32>}, {transform_indices = @transform_37, window_bounds = array<i64: 1, 4, 32>}, {transform_indices = @transform_38, window_bounds = array<i64: 1, 4, 64>}]} {
    %c0 = arith.constant 0 : index
    %c0_0 = arith.constant 0 : index
    %0 = vector.load %arg15[%c0, %c0_0] : memref<32x32xf32, #tpu.memory_space<vmem>>, vector<32x32xf32>
    %c0_1 = arith.constant 0 : index
    %c0_2 = arith.constant 0 : index
    %1 = vector.load %arg24[%c0_1, %c0_2] : memref<1x32xf32, #tpu.memory_space<vmem>>, vector<1x32xf32>
    %c0_3 = arith.constant 0 : index
    %c0_4 = arith.constant 0 : index
    %2 = vector.load %arg25[%c0_3, %c0_4] : memref<1x32xf32, #tpu.memory_space<vmem>>, vector<1x32xf32>
    %c0_5 = arith.constant 0 : index
    %c0_6 = arith.constant 0 : index
    %3 = vector.load %arg17[%c0_5, %c0_6] : memref<1x128xf32, #tpu.memory_space<vmem>>, vector<1x128xf32>
    %c0_7 = arith.constant 0 : index
    %c0_8 = arith.constant 0 : index
    %4 = vector.load %arg19[%c0_7, %c0_8] : memref<1x128xf32, #tpu.memory_space<vmem>>, vector<1x128xf32>
    %c0_9 = arith.constant 0 : index
    %c0_10 = arith.constant 0 : index
    %5 = vector.load %arg21[%c0_9, %c0_10] : memref<1x128xf32, #tpu.memory_space<vmem>>, vector<1x128xf32>
    %c0_11 = arith.constant 0 : index
    %c0_12 = arith.constant 0 : index
    %6 = vector.load %arg28[%c0_11, %c0_12] : memref<1x96xf32, #tpu.memory_space<vmem>>, vector<1x96xf32>
    %c0_13 = arith.constant 0 : index
    %c0_14 = arith.constant 0 : index
    %7 = vector.load %arg29[%c0_13, %c0_14] : memref<1x96xf32, #tpu.memory_space<vmem>>, vector<1x96xf32>
    %c0_15 = arith.constant 0 : index
    %c0_16 = arith.constant 0 : index
    %8 = vector.load %arg30[%c0_15, %c0_16] : memref<1x32xf32, #tpu.memory_space<vmem>>, vector<1x32xf32>
    %c0_17 = arith.constant 0 : index
    %c0_18 = arith.constant 0 : index
    %9 = vector.load %arg31[%c0_17, %c0_18] : memref<1x32xf32, #tpu.memory_space<vmem>>, vector<1x32xf32>
    %c0_19 = arith.constant 0 : index
    %c0_20 = arith.constant 0 : index
    %10 = vector.load %arg33[%c0_19, %c0_20] : memref<1x128xf32, #tpu.memory_space<vmem>>, vector<1x128xf32>
    %c0_21 = arith.constant 0 : index
    %c0_22 = arith.constant 0 : index
    %11 = vector.load %arg35[%c0_21, %c0_22] : memref<1x32xf32, #tpu.memory_space<vmem>>, vector<1x32xf32>
    %c0_23 = arith.constant 0 : index
    %c0_24 = arith.constant 0 : index
    %c0_25 = arith.constant 0 : index
    %12 = vector.load %arg1[%c0_23, %c0_24, %c0_25] : memref<1x64x32xf32, #tpu.memory_space<vmem>>, vector<1x64x32xf32>
    %13 = vector.shape_cast %12 : vector<1x64x32xf32> to vector<64x32xf32>
    %c0_26 = arith.constant 0 : index
    %c0_27 = arith.constant 0 : index
    %14 = vector.load %arg6[%c0_26, %c0_27] : memref<1x32xf32, #tpu.memory_space<vmem>>, vector<1x32xf32>
    %c0_28 = arith.constant 0 : index
    %c0_29 = arith.constant 0 : index
    %15 = vector.load %arg7[%c0_28, %c0_29] : memref<1x32xf32, #tpu.memory_space<vmem>>, vector<1x32xf32>
    %cst = arith.constant dense<0.000000e+00> : vector<64xf32>
    %16 = vector.multi_reduction <add>, %13, %cst [1] : vector<64x32xf32> to vector<64xf32>
    %17 = vector.shape_cast %16 : vector<64xf32> to vector<64x1xf32>
    %cst_30 = arith.constant 3.200000e+01 : f32
    %18 = vector.broadcast %cst_30 : f32 to vector<64x1xf32>
    %19 = arith.divf %17, %18 : vector<64x1xf32>
    %20 = vector.broadcast %19 : vector<64x1xf32> to vector<64x32xf32>
    %21 = arith.subf %13, %20 : vector<64x32xf32>
    %22 = arith.mulf %21, %21 : vector<64x32xf32>
    %cst_31 = arith.constant dense<0.000000e+00> : vector<64xf32>
    %23 = vector.multi_reduction <add>, %22, %cst_31 [1] : vector<64x32xf32> to vector<64xf32>
    %24 = vector.shape_cast %23 : vector<64xf32> to vector<64x1xf32>
    %cst_32 = arith.constant 3.200000e+01 : f32
    %25 = vector.broadcast %cst_32 : f32 to vector<64x1xf32>
    %26 = arith.divf %24, %25 : vector<64x1xf32>
    %27 = vector.broadcast %19 : vector<64x1xf32> to vector<64x32xf32>
    %28 = arith.subf %13, %27 : vector<64x32xf32>
    %cst_33 = arith.constant 9.99999974E-6 : f32
    %29 = vector.broadcast %cst_33 : f32 to vector<64x1xf32>
    %30 = arith.addf %26, %29 : vector<64x1xf32>
    %31 = math.rsqrt %30 : vector<64x1xf32>
    %32 = vector.broadcast %31 : vector<64x1xf32> to vector<64x32xf32>
    %33 = arith.mulf %28, %32 : vector<64x32xf32>
    %34 = vector.broadcast %14 : vector<1x32xf32> to vector<64x32xf32>
    %35 = arith.mulf %33, %34 : vector<64x32xf32>
    %36 = vector.broadcast %15 : vector<1x32xf32> to vector<64x32xf32>
    %37 = arith.addf %35, %36 : vector<64x32xf32>
    %c0_34 = arith.constant 0 : index
    %c0_35 = arith.constant 0 : index
    %38 = vector.load %arg8[%c0_34, %c0_35] : memref<32x32xf32, #tpu.memory_space<vmem>>, vector<32x32xf32>
    %cst_36 = arith.constant dense<0.000000e+00> : vector<64x32xf32>
    %39 = tpu.matmul %37, %38, %cst_36 {dimension_numbers = #tpu.dot_dimension_numbers<[1], [0], [0], [1], [0, 0, 1, 1], [], []>} : vector<64x32xf32>, vector<32x32xf32>, vector<64x32xf32> -> vector<64x32xf32>
    %c0_37 = arith.constant 0 : index
    %c0_38 = arith.constant 0 : index
    %40 = vector.load %arg9[%c0_37, %c0_38] : memref<1x32xf32, #tpu.memory_space<vmem>>, vector<1x32xf32>
    %41 = vector.broadcast %40 : vector<1x32xf32> to vector<64x32xf32>
    %42 = arith.addf %39, %41 : vector<64x32xf32>
    %cst_39 = arith.constant 0.000000e+00 : f32
    %43 = vector.broadcast %cst_39 : f32 to vector<64x32xf32>
    %44 = arith.maximumf %42, %43 : vector<64x32xf32>
    %c0_40 = arith.constant 0 : index
    %c0_41 = arith.constant 0 : index
    %45 = vector.load %arg10[%c0_40, %c0_41] : memref<32x32xf32, #tpu.memory_space<vmem>>, vector<32x32xf32>
    %cst_42 = arith.constant dense<0.000000e+00> : vector<64x32xf32>
    %46 = tpu.matmul %44, %45, %cst_42 {dimension_numbers = #tpu.dot_dimension_numbers<[1], [0], [0], [1], [0, 0, 1, 1], [], []>} : vector<64x32xf32>, vector<32x32xf32>, vector<64x32xf32> -> vector<64x32xf32>
    %c0_43 = arith.constant 0 : index
    %c0_44 = arith.constant 0 : index
    %47 = vector.load %arg11[%c0_43, %c0_44] : memref<1x32xf32, #tpu.memory_space<vmem>>, vector<1x32xf32>
    %48 = vector.broadcast %47 : vector<1x32xf32> to vector<64x32xf32>
    %49 = arith.addf %46, %48 : vector<64x32xf32>
    %c0_45 = arith.constant 0 : index
    %c0_46 = arith.constant 0 : index
    %50 = vector.load %arg12[%c0_45, %c0_46] : memref<1x32xf32, #tpu.memory_space<vmem>>, vector<1x32xf32>
    %c0_47 = arith.constant 0 : index
    %c0_48 = arith.constant 0 : index
    %51 = vector.load %arg13[%c0_47, %c0_48] : memref<1x32xf32, #tpu.memory_space<vmem>>, vector<1x32xf32>
    %cst_49 = arith.constant dense<0.000000e+00> : vector<64xf32>
    %52 = vector.multi_reduction <add>, %49, %cst_49 [1] : vector<64x32xf32> to vector<64xf32>
    %53 = vector.shape_cast %52 : vector<64xf32> to vector<64x1xf32>
    %cst_50 = arith.constant 3.200000e+01 : f32
    %54 = vector.broadcast %cst_50 : f32 to vector<64x1xf32>
    %55 = arith.divf %53, %54 : vector<64x1xf32>
    %56 = vector.broadcast %55 : vector<64x1xf32> to vector<64x32xf32>
    %57 = arith.subf %49, %56 : vector<64x32xf32>
    %58 = arith.mulf %57, %57 : vector<64x32xf32>
    %cst_51 = arith.constant dense<0.000000e+00> : vector<64xf32>
    %59 = vector.multi_reduction <add>, %58, %cst_51 [1] : vector<64x32xf32> to vector<64xf32>
    %60 = vector.shape_cast %59 : vector<64xf32> to vector<64x1xf32>
    %cst_52 = arith.constant 3.200000e+01 : f32
    %61 = vector.broadcast %cst_52 : f32 to vector<64x1xf32>
    %62 = arith.divf %60, %61 : vector<64x1xf32>
    %63 = vector.broadcast %55 : vector<64x1xf32> to vector<64x32xf32>
    %64 = arith.subf %49, %63 : vector<64x32xf32>
    %cst_53 = arith.constant 9.99999974E-6 : f32
    %65 = vector.broadcast %cst_53 : f32 to vector<64x1xf32>
    %66 = arith.addf %62, %65 : vector<64x1xf32>
    %67 = math.rsqrt %66 : vector<64x1xf32>
    %68 = vector.broadcast %67 : vector<64x1xf32> to vector<64x32xf32>
    %69 = arith.mulf %64, %68 : vector<64x32xf32>
    %70 = vector.broadcast %50 : vector<1x32xf32> to vector<64x32xf32>
    %71 = arith.mulf %69, %70 : vector<64x32xf32>
    %72 = vector.broadcast %51 : vector<1x32xf32> to vector<64x32xf32>
    %73 = arith.addf %71, %72 : vector<64x32xf32>
    %c0_54 = arith.constant 0 : index
    %c0_55 = arith.constant 0 : index
    %74 = vector.load %arg14[%c0_54, %c0_55] : memref<32x256xf32, #tpu.memory_space<vmem>>, vector<32x256xf32>
    %cst_56 = arith.constant dense<0.000000e+00> : vector<64x256xf32>
    %75 = tpu.matmul %73, %74, %cst_56 {dimension_numbers = #tpu.dot_dimension_numbers<[1], [0], [0], [1], [0, 0, 1, 1], [], []>} : vector<64x32xf32>, vector<32x256xf32>, vector<64x256xf32> -> vector<64x256xf32>
    %76 = vector.extract_strided_slice %75 {offsets = [0, 0], sizes = [64, 128], strides = [1, 1]} : vector<64x256xf32> to vector<64x128xf32>
    %77 = vector.extract_strided_slice %75 {offsets = [0, 128], sizes = [64, 128], strides = [1, 1]} : vector<64x256xf32> to vector<64x128xf32>
    %78 = tpu.concatenate %76, %77 in 0 : vector<64x128xf32>, vector<64x128xf32> -> vector<128x128xf32>
    %c0_57 = arith.constant 0 : index
    %c0_58 = arith.constant 0 : index
    %79 = vector.load %arg2[%c0_57, %c0_58] : memref<64x8xf32, #tpu.memory_space<vmem>>, vector<64x8xf32>
    %c0_59 = arith.constant 0 : index
    %c0_60 = arith.constant 0 : index
    %80 = vector.load %arg3[%c0_59, %c0_60] : memref<4x32xf32, #tpu.memory_space<vmem>>, vector<4x32xf32>
    %c0_61 = arith.constant 0 : index
    %c0_62 = arith.constant 0 : index
    %81 = vector.load %arg4[%c0_61, %c0_62] : memref<1x8xf32, #tpu.memory_space<vmem>>, vector<1x8xf32>
    %c0_63 = arith.constant 0 : index
    %c0_64 = arith.constant 0 : index
    %82 = vector.load %arg5[%c0_63, %c0_64] : memref<1x8xf32, #tpu.memory_space<vmem>>, vector<1x8xf32>
    %cst_65 = arith.constant 5.000000e+00 : f32
    %83 = vector.broadcast %cst_65 : f32 to vector<1x8xf32>
    %84 = arith.mulf %82, %83 : vector<1x8xf32>
    %cst_66 = arith.constant 1.000000e+00 : f32
    %85 = vector.broadcast %cst_66 : f32 to vector<1x8xf32>
    %86 = arith.divf %85, %84 : vector<1x8xf32>
    %cst_67 = arith.constant dense<0.000000e+00> : vector<4xf32>
    %87 = vector.multi_reduction <add>, %80, %cst_67 [1] : vector<4x32xf32> to vector<4xf32>
    %88 = vector.shape_cast %87 : vector<4xf32> to vector<4x1xf32>
    %cst_68 = arith.constant 3.200000e+01 : f32
    %89 = vector.broadcast %cst_68 : f32 to vector<4x1xf32>
    %90 = arith.divf %88, %89 : vector<4x1xf32>
    %91 = vector.broadcast %90 : vector<4x1xf32> to vector<4x32xf32>
    %92 = arith.subf %80, %91 : vector<4x32xf32>
    %93 = arith.mulf %92, %92 : vector<4x32xf32>
    %cst_69 = arith.constant dense<0.000000e+00> : vector<4xf32>
    %94 = vector.multi_reduction <add>, %93, %cst_69 [1] : vector<4x32xf32> to vector<4xf32>
    %95 = vector.shape_cast %94 : vector<4xf32> to vector<4x1xf32>
    %cst_70 = arith.constant 3.200000e+01 : f32
    %96 = vector.broadcast %cst_70 : f32 to vector<4x1xf32>
    %97 = arith.divf %95, %96 : vector<4x1xf32>
    %98 = vector.broadcast %90 : vector<4x1xf32> to vector<4x32xf32>
    %99 = arith.subf %80, %98 : vector<4x32xf32>
    %cst_71 = arith.constant 9.99999974E-6 : f32
    %100 = vector.broadcast %cst_71 : f32 to vector<4x1xf32>
    %101 = arith.addf %97, %100 : vector<4x1xf32>
    %102 = math.rsqrt %101 : vector<4x1xf32>
    %103 = vector.broadcast %102 : vector<4x1xf32> to vector<4x32xf32>
    %104 = arith.mulf %99, %103 : vector<4x32xf32>
    %105 = vector.broadcast %1 : vector<1x32xf32> to vector<4x32xf32>
    %106 = arith.mulf %104, %105 : vector<4x32xf32>
    %107 = vector.broadcast %2 : vector<1x32xf32> to vector<4x32xf32>
    %108 = arith.addf %106, %107 : vector<4x32xf32>
    %cst_72 = arith.constant dense<0.000000e+00> : vector<4x32xf32>
    %109 = tpu.matmul %108, %0, %cst_72 {dimension_numbers = #tpu.dot_dimension_numbers<[1], [0], [0], [1], [0, 0, 1, 1], [], []>} : vector<4x32xf32>, vector<32x32xf32>, vector<4x32xf32> -> vector<4x32xf32>
    %110 = vector.extract_strided_slice %109 {offsets = [0, 0], sizes = [1, 32], strides = [1, 1]} : vector<4x32xf32> to vector<1x32xf32>
    %111 = vector.extract_strided_slice %109 {offsets = [1, 0], sizes = [1, 32], strides = [1, 1]} : vector<4x32xf32> to vector<1x32xf32>
    %112 = vector.extract_strided_slice %109 {offsets = [2, 0], sizes = [1, 32], strides = [1, 1]} : vector<4x32xf32> to vector<1x32xf32>
    %113 = vector.extract_strided_slice %109 {offsets = [3, 0], sizes = [1, 32], strides = [1, 1]} : vector<4x32xf32> to vector<1x32xf32>
    %114 = tpu.concatenate %110, %111, %112, %113 in 1 : vector<1x32xf32>, vector<1x32xf32>, vector<1x32xf32>, vector<1x32xf32> -> vector<1x128xf32>
    %115 = vector.broadcast %81 : vector<1x8xf32> to vector<64x8xf32>
    %116 = arith.subf %79, %115 : vector<64x8xf32>
    %117 = vector.broadcast %86 : vector<1x8xf32> to vector<64x8xf32>
    %118 = arith.mulf %116, %117 : vector<64x8xf32>
    %c0_73 = arith.constant 0 : index
    %c0_74 = arith.constant 0 : index
    %119 = vector.load %arg16[%c0_73, %c0_74] : memref<8x128xf32, #tpu.memory_space<vmem>>, vector<8x128xf32>
    %cst_75 = arith.constant dense<0.000000e+00> : vector<64x128xf32>
    %120 = tpu.matmul %118, %119, %cst_75 {dimension_numbers = #tpu.dot_dimension_numbers<[1], [0], [0], [1], [0, 0, 1, 1], [], []>} : vector<64x8xf32>, vector<8x128xf32>, vector<64x128xf32> -> vector<64x128xf32>
    %121 = vector.broadcast %3 : vector<1x128xf32> to vector<64x128xf32>
    %122 = arith.addf %120, %121 : vector<64x128xf32>
    %123 = tpu.concatenate %122, %122 in 0 : vector<64x128xf32>, vector<64x128xf32> -> vector<128x128xf32>
    %124 = arith.addf %78, %123 : vector<128x128xf32>
    %c0_76 = arith.constant 0 : index
    %c0_77 = arith.constant 0 : index
    %125 = vector.load %arg18[%c0_76, %c0_77] : memref<128x128xf32, #tpu.memory_space<vmem>>, vector<128x128xf32>
    %cst_78 = arith.constant dense<0.000000e+00> : vector<128x128xf32>
    %126 = tpu.matmul %124, %125, %cst_78 {dimension_numbers = #tpu.dot_dimension_numbers<[1], [0], [0], [1], [0, 0, 1, 1], [], []>} : vector<128x128xf32>, vector<128x128xf32>, vector<128x128xf32> -> vector<128x128xf32>
    %127 = vector.broadcast %4 : vector<1x128xf32> to vector<128x128xf32>
    %128 = arith.addf %126, %127 : vector<128x128xf32>
    %cst_79 = arith.constant 0.000000e+00 : f32
    %129 = vector.broadcast %cst_79 : f32 to vector<128x128xf32>
    %130 = arith.maximumf %128, %129 : vector<128x128xf32>
    %c0_80 = arith.constant 0 : index
    %c0_81 = arith.constant 0 : index
    %131 = vector.load %arg20[%c0_80, %c0_81] : memref<128x128xf32, #tpu.memory_space<vmem>>, vector<128x128xf32>
    %cst_82 = arith.constant dense<0.000000e+00> : vector<128x128xf32>
    %132 = tpu.matmul %130, %131, %cst_82 {dimension_numbers = #tpu.dot_dimension_numbers<[1], [0], [0], [1], [0, 0, 1, 1], [], []>} : vector<128x128xf32>, vector<128x128xf32>, vector<128x128xf32> -> vector<128x128xf32>
    %133 = vector.broadcast %5 : vector<1x128xf32> to vector<128x128xf32>
    %134 = arith.addf %132, %133 : vector<128x128xf32>
    %135 = vector.extract_strided_slice %134 {offsets = [0, 0], sizes = [64, 128], strides = [1, 1]} : vector<128x128xf32> to vector<64x128xf32>
    %136 = vector.extract_strided_slice %134 {offsets = [64, 0], sizes = [64, 128], strides = [1, 1]} : vector<128x128xf32> to vector<64x128xf32>
    %137 = vector.broadcast %114 : vector<1x128xf32> to vector<64x128xf32>
    %138 = arith.mulf %135, %137 : vector<64x128xf32>
    %c0_83 = arith.constant 0 : index
    %c0_84 = arith.constant 0 : index
    %139 = vector.load %arg22[%c0_83, %c0_84] : memref<128x4xf32, #tpu.memory_space<vmem>>, vector<128x4xf32>
    %cst_85 = arith.constant dense<0.000000e+00> : vector<64x4xf32>
    %140 = tpu.matmul %138, %139, %cst_85 {dimension_numbers = #tpu.dot_dimension_numbers<[1], [0], [0], [1], [0, 0, 1, 1], [], []>} : vector<64x128xf32>, vector<128x4xf32>, vector<64x4xf32> -> vector<64x4xf32>
    %cst_86 = arith.constant 0.176776692 : f32
    %141 = vector.broadcast %cst_86 : f32 to vector<64x4xf32>
    %142 = arith.mulf %140, %141 : vector<64x4xf32>
    %cst_87 = arith.constant dense<0xFF800000> : vector<64xf32>
    %143 = vector.multi_reduction <maximumf>, %142, %cst_87 [1] : vector<64x4xf32> to vector<64xf32>
    %144 = vector.shape_cast %143 : vector<64xf32> to vector<64x1xf32>
    %145 = vector.broadcast %144 : vector<64x1xf32> to vector<64x4xf32>
    %146 = arith.subf %142, %145 : vector<64x4xf32>
    %147 = math.exp %146 : vector<64x4xf32>
    %cst_88 = arith.constant dense<0.000000e+00> : vector<64xf32>
    %148 = vector.multi_reduction <add>, %147, %cst_88 [1] : vector<64x4xf32> to vector<64xf32>
    %149 = vector.shape_cast %148 : vector<64xf32> to vector<64x1xf32>
    %150 = tpu.reciprocal %149 {approx = true} : vector<64x1xf32> -> vector<64x1xf32>
    %151 = vector.broadcast %150 : vector<64x1xf32> to vector<64x4xf32>
    %152 = arith.mulf %147, %151 : vector<64x4xf32>
    %cst_89 = arith.constant 9.99999993E-9 : f32
    %153 = vector.broadcast %cst_89 : f32 to vector<64x4xf32>
    %154 = arith.addf %152, %153 : vector<64x4xf32>
    %cst_90 = arith.constant dense<0.000000e+00> : vector<4xf32>
    %155 = vector.multi_reduction <add>, %154, %cst_90 [0] : vector<64x4xf32> to vector<4xf32>
    %156 = vector.shape_cast %155 : vector<4xf32> to vector<1x4xf32>
    %157 = tpu.reciprocal %156 {approx = true} : vector<1x4xf32> -> vector<1x4xf32>
    %158 = vector.broadcast %157 : vector<1x4xf32> to vector<64x4xf32>
    %159 = arith.mulf %154, %158 : vector<64x4xf32>
    %c0_91 = arith.constant 0 : index
    %c0_92 = arith.constant 0 : index
    %160 = vector.load %arg23[%c0_91, %c0_92] : memref<4x128xf32, #tpu.memory_space<vmem>>, vector<4x128xf32>
    %cst_93 = arith.constant dense<0.000000e+00> : vector<64x128xf32>
    %161 = tpu.matmul %159, %160, %cst_93 {dimension_numbers = #tpu.dot_dimension_numbers<[1], [0], [0], [1], [0, 0, 1, 1], [], []>} : vector<64x4xf32>, vector<4x128xf32>, vector<64x128xf32> -> vector<64x128xf32>
    %162 = arith.mulf %161, %136 : vector<64x128xf32>
    %cst_94 = arith.constant dense<0.000000e+00> : vector<128xf32>
    %163 = vector.multi_reduction <add>, %162, %cst_94 [0] : vector<64x128xf32> to vector<128xf32>
    %164 = vector.shape_cast %163 : vector<128xf32> to vector<1x128xf32>
    %165 = vector.extract_strided_slice %164 {offsets = [0, 0], sizes = [1, 32], strides = [1, 1]} : vector<1x128xf32> to vector<1x32xf32>
    %166 = vector.extract_strided_slice %164 {offsets = [0, 32], sizes = [1, 32], strides = [1, 1]} : vector<1x128xf32> to vector<1x32xf32>
    %167 = vector.extract_strided_slice %164 {offsets = [0, 64], sizes = [1, 32], strides = [1, 1]} : vector<1x128xf32> to vector<1x32xf32>
    %168 = vector.extract_strided_slice %164 {offsets = [0, 96], sizes = [1, 32], strides = [1, 1]} : vector<1x128xf32> to vector<1x32xf32>
    %169 = tpu.concatenate %165, %166, %167, %168 in 0 : vector<1x32xf32>, vector<1x32xf32>, vector<1x32xf32>, vector<1x32xf32> -> vector<4x32xf32>
    %170 = tpu.concatenate %159, %159 in 1 : vector<64x4xf32>, vector<64x4xf32> -> vector<64x8xf32>
    %171 = arith.mulf %170, %79 : vector<64x8xf32>
    %cst_95 = arith.constant dense<0.000000e+00> : vector<8xf32>
    %172 = vector.multi_reduction <add>, %171, %cst_95 [0] : vector<64x8xf32> to vector<8xf32>
    %173 = vector.shape_cast %172 : vector<8xf32> to vector<1x8xf32>
    %174 = vector.broadcast %173 : vector<1x8xf32> to vector<64x8xf32>
    %175 = arith.subf %79, %174 : vector<64x8xf32>
    %176 = arith.mulf %170, %175 : vector<64x8xf32>
    %177 = arith.mulf %176, %175 : vector<64x8xf32>
    %cst_96 = arith.constant dense<0.000000e+00> : vector<8xf32>
    %178 = vector.multi_reduction <add>, %177, %cst_96 [0] : vector<64x8xf32> to vector<8xf32>
    %179 = vector.shape_cast %178 : vector<8xf32> to vector<1x8xf32>
    %180 = math.sqrt %179 : vector<1x8xf32>
    %cst_97 = arith.constant 5.000000e+00 : f32
    %181 = vector.broadcast %cst_97 : f32 to vector<1x8xf32>
    %182 = arith.mulf %180, %181 : vector<1x8xf32>
    %cst_98 = arith.constant 1.000000e+00 : f32
    %183 = vector.broadcast %cst_98 : f32 to vector<1x8xf32>
    %184 = arith.divf %183, %182 : vector<1x8xf32>
    %c0_99 = arith.constant 0 : index
    %c0_100 = arith.constant 0 : index
    %185 = vector.load %arg26[%c0_99, %c0_100] : memref<32x96xf32, #tpu.memory_space<vmem>>, vector<32x96xf32>
    %cst_101 = arith.constant dense<0.000000e+00> : vector<4x96xf32>
    %186 = tpu.matmul %169, %185, %cst_101 {dimension_numbers = #tpu.dot_dimension_numbers<[1], [0], [0], [1], [0, 0, 1, 1], [], []>} : vector<4x32xf32>, vector<32x96xf32>, vector<4x96xf32> -> vector<4x96xf32>
    %187 = vector.broadcast %6 : vector<1x96xf32> to vector<4x96xf32>
    %188 = arith.addf %186, %187 : vector<4x96xf32>
    %c0_102 = arith.constant 0 : index
    %c0_103 = arith.constant 0 : index
    %189 = vector.load %arg27[%c0_102, %c0_103] : memref<32x96xf32, #tpu.memory_space<vmem>>, vector<32x96xf32>
    %cst_104 = arith.constant dense<0.000000e+00> : vector<4x96xf32>
    %190 = tpu.matmul %80, %189, %cst_104 {dimension_numbers = #tpu.dot_dimension_numbers<[1], [0], [0], [1], [0, 0, 1, 1], [], []>} : vector<4x32xf32>, vector<32x96xf32>, vector<4x96xf32> -> vector<4x96xf32>
    %191 = vector.broadcast %7 : vector<1x96xf32> to vector<4x96xf32>
    %192 = arith.addf %190, %191 : vector<4x96xf32>
    %193 = vector.extract_strided_slice %188 {offsets = [0, 0], sizes = [4, 32], strides = [1, 1]} : vector<4x96xf32> to vector<4x32xf32>
    %194 = vector.extract_strided_slice %192 {offsets = [0, 0], sizes = [4, 32], strides = [1, 1]} : vector<4x96xf32> to vector<4x32xf32>
    %195 = arith.addf %193, %194 : vector<4x32xf32>
    %196 = arith.negf %195 : vector<4x32xf32>
    %197 = math.exp %196 : vector<4x32xf32>
    %cst_105 = arith.constant 1.000000e+00 : f32
    %198 = vector.broadcast %cst_105 : f32 to vector<4x32xf32>
    %199 = arith.addf %198, %197 : vector<4x32xf32>
    %200 = arith.divf %198, %199 : vector<4x32xf32>
    %201 = vector.extract_strided_slice %188 {offsets = [0, 32], sizes = [4, 32], strides = [1, 1]} : vector<4x96xf32> to vector<4x32xf32>
    %202 = vector.extract_strided_slice %192 {offsets = [0, 32], sizes = [4, 32], strides = [1, 1]} : vector<4x96xf32> to vector<4x32xf32>
    %203 = arith.addf %201, %202 : vector<4x32xf32>
    %204 = arith.negf %203 : vector<4x32xf32>
    %205 = math.exp %204 : vector<4x32xf32>
    %cst_106 = arith.constant 1.000000e+00 : f32
    %206 = vector.broadcast %cst_106 : f32 to vector<4x32xf32>
    %207 = arith.addf %206, %205 : vector<4x32xf32>
    %208 = arith.divf %206, %207 : vector<4x32xf32>
    %209 = vector.extract_strided_slice %188 {offsets = [0, 64], sizes = [4, 32], strides = [1, 1]} : vector<4x96xf32> to vector<4x32xf32>
    %210 = vector.extract_strided_slice %192 {offsets = [0, 64], sizes = [4, 32], strides = [1, 1]} : vector<4x96xf32> to vector<4x32xf32>
    %211 = arith.mulf %200, %210 : vector<4x32xf32>
    %212 = arith.addf %209, %211 : vector<4x32xf32>
    %213 = math.tanh %212 : vector<4x32xf32>
    %cst_107 = arith.constant 1.000000e+00 : f32
    %214 = vector.broadcast %cst_107 : f32 to vector<4x32xf32>
    %215 = arith.subf %214, %208 : vector<4x32xf32>
    %216 = arith.mulf %215, %213 : vector<4x32xf32>
    %217 = arith.mulf %208, %80 : vector<4x32xf32>
    %218 = arith.addf %216, %217 : vector<4x32xf32>
    %cst_108 = arith.constant dense<0.000000e+00> : vector<4xf32>
    %219 = vector.multi_reduction <add>, %218, %cst_108 [1] : vector<4x32xf32> to vector<4xf32>
    %220 = vector.shape_cast %219 : vector<4xf32> to vector<4x1xf32>
    %cst_109 = arith.constant 3.200000e+01 : f32
    %221 = vector.broadcast %cst_109 : f32 to vector<4x1xf32>
    %222 = arith.divf %220, %221 : vector<4x1xf32>
    %223 = vector.broadcast %222 : vector<4x1xf32> to vector<4x32xf32>
    %224 = arith.subf %218, %223 : vector<4x32xf32>
    %225 = arith.mulf %224, %224 : vector<4x32xf32>
    %cst_110 = arith.constant dense<0.000000e+00> : vector<4xf32>
    %226 = vector.multi_reduction <add>, %225, %cst_110 [1] : vector<4x32xf32> to vector<4xf32>
    %227 = vector.shape_cast %226 : vector<4xf32> to vector<4x1xf32>
    %cst_111 = arith.constant 3.200000e+01 : f32
    %228 = vector.broadcast %cst_111 : f32 to vector<4x1xf32>
    %229 = arith.divf %227, %228 : vector<4x1xf32>
    %230 = vector.broadcast %222 : vector<4x1xf32> to vector<4x32xf32>
    %231 = arith.subf %218, %230 : vector<4x32xf32>
    %cst_112 = arith.constant 9.99999974E-6 : f32
    %232 = vector.broadcast %cst_112 : f32 to vector<4x1xf32>
    %233 = arith.addf %229, %232 : vector<4x1xf32>
    %234 = math.rsqrt %233 : vector<4x1xf32>
    %235 = vector.broadcast %234 : vector<4x1xf32> to vector<4x32xf32>
    %236 = arith.mulf %231, %235 : vector<4x32xf32>
    %237 = vector.broadcast %8 : vector<1x32xf32> to vector<4x32xf32>
    %238 = arith.mulf %236, %237 : vector<4x32xf32>
    %239 = vector.broadcast %9 : vector<1x32xf32> to vector<4x32xf32>
    %240 = arith.addf %238, %239 : vector<4x32xf32>
    %c0_113 = arith.constant 0 : index
    %c0_114 = arith.constant 0 : index
    %241 = vector.load %arg32[%c0_113, %c0_114] : memref<32x128xf32, #tpu.memory_space<vmem>>, vector<32x128xf32>
    %cst_115 = arith.constant dense<0.000000e+00> : vector<4x128xf32>
    %242 = tpu.matmul %240, %241, %cst_115 {dimension_numbers = #tpu.dot_dimension_numbers<[1], [0], [0], [1], [0, 0, 1, 1], [], []>} : vector<4x32xf32>, vector<32x128xf32>, vector<4x128xf32> -> vector<4x128xf32>
    %243 = vector.broadcast %10 : vector<1x128xf32> to vector<4x128xf32>
    %244 = arith.addf %242, %243 : vector<4x128xf32>
    %cst_116 = arith.constant 0.000000e+00 : f32
    %245 = vector.broadcast %cst_116 : f32 to vector<4x128xf32>
    %246 = arith.maximumf %244, %245 : vector<4x128xf32>
    %c0_117 = arith.constant 0 : index
    %c0_118 = arith.constant 0 : index
    %247 = vector.load %arg34[%c0_117, %c0_118] : memref<128x32xf32, #tpu.memory_space<vmem>>, vector<128x32xf32>
    %cst_119 = arith.constant dense<0.000000e+00> : vector<4x32xf32>
    %248 = tpu.matmul %246, %247, %cst_119 {dimension_numbers = #tpu.dot_dimension_numbers<[1], [0], [0], [1], [0, 0, 1, 1], [], []>} : vector<4x128xf32>, vector<128x32xf32>, vector<4x32xf32> -> vector<4x32xf32>
    %249 = vector.broadcast %11 : vector<1x32xf32> to vector<4x32xf32>
    %250 = arith.addf %248, %249 : vector<4x32xf32>
    %251 = arith.addf %250, %218 : vector<4x32xf32>
    %cst_120 = arith.constant dense<0.000000e+00> : vector<4xf32>
    %252 = vector.multi_reduction <add>, %251, %cst_120 [1] : vector<4x32xf32> to vector<4xf32>
    %253 = vector.shape_cast %252 : vector<4xf32> to vector<4x1xf32>
    %cst_121 = arith.constant 3.200000e+01 : f32
    %254 = vector.broadcast %cst_121 : f32 to vector<4x1xf32>
    %255 = arith.divf %253, %254 : vector<4x1xf32>
    %256 = vector.broadcast %255 : vector<4x1xf32> to vector<4x32xf32>
    %257 = arith.subf %251, %256 : vector<4x32xf32>
    %258 = arith.mulf %257, %257 : vector<4x32xf32>
    %cst_122 = arith.constant dense<0.000000e+00> : vector<4xf32>
    %259 = vector.multi_reduction <add>, %258, %cst_122 [1] : vector<4x32xf32> to vector<4xf32>
    %260 = vector.shape_cast %259 : vector<4xf32> to vector<4x1xf32>
    %cst_123 = arith.constant 3.200000e+01 : f32
    %261 = vector.broadcast %cst_123 : f32 to vector<4x1xf32>
    %262 = arith.divf %260, %261 : vector<4x1xf32>
    %263 = vector.broadcast %255 : vector<4x1xf32> to vector<4x32xf32>
    %264 = arith.subf %251, %263 : vector<4x32xf32>
    %cst_124 = arith.constant 9.99999974E-6 : f32
    %265 = vector.broadcast %cst_124 : f32 to vector<4x1xf32>
    %266 = arith.addf %262, %265 : vector<4x1xf32>
    %267 = math.rsqrt %266 : vector<4x1xf32>
    %268 = vector.broadcast %267 : vector<4x1xf32> to vector<4x32xf32>
    %269 = arith.mulf %264, %268 : vector<4x32xf32>
    %270 = vector.broadcast %1 : vector<1x32xf32> to vector<4x32xf32>
    %271 = arith.mulf %269, %270 : vector<4x32xf32>
    %272 = vector.broadcast %2 : vector<1x32xf32> to vector<4x32xf32>
    %273 = arith.addf %271, %272 : vector<4x32xf32>
    %cst_125 = arith.constant dense<0.000000e+00> : vector<4x32xf32>
    %274 = tpu.matmul %273, %0, %cst_125 {dimension_numbers = #tpu.dot_dimension_numbers<[1], [0], [0], [1], [0, 0, 1, 1], [], []>} : vector<4x32xf32>, vector<32x32xf32>, vector<4x32xf32> -> vector<4x32xf32>
    %275 = vector.extract_strided_slice %274 {offsets = [0, 0], sizes = [1, 32], strides = [1, 1]} : vector<4x32xf32> to vector<1x32xf32>
    %276 = vector.extract_strided_slice %274 {offsets = [1, 0], sizes = [1, 32], strides = [1, 1]} : vector<4x32xf32> to vector<1x32xf32>
    %277 = vector.extract_strided_slice %274 {offsets = [2, 0], sizes = [1, 32], strides = [1, 1]} : vector<4x32xf32> to vector<1x32xf32>
    %278 = vector.extract_strided_slice %274 {offsets = [3, 0], sizes = [1, 32], strides = [1, 1]} : vector<4x32xf32> to vector<1x32xf32>
    %279 = tpu.concatenate %275, %276, %277, %278 in 1 : vector<1x32xf32>, vector<1x32xf32>, vector<1x32xf32>, vector<1x32xf32> -> vector<1x128xf32>
    %280 = vector.broadcast %173 : vector<1x8xf32> to vector<64x8xf32>
    %281 = arith.subf %79, %280 : vector<64x8xf32>
    %282 = vector.broadcast %184 : vector<1x8xf32> to vector<64x8xf32>
    %283 = arith.mulf %281, %282 : vector<64x8xf32>
    %c0_126 = arith.constant 0 : index
    %c0_127 = arith.constant 0 : index
    %284 = vector.load %arg16[%c0_126, %c0_127] : memref<8x128xf32, #tpu.memory_space<vmem>>, vector<8x128xf32>
    %cst_128 = arith.constant dense<0.000000e+00> : vector<64x128xf32>
    %285 = tpu.matmul %283, %284, %cst_128 {dimension_numbers = #tpu.dot_dimension_numbers<[1], [0], [0], [1], [0, 0, 1, 1], [], []>} : vector<64x8xf32>, vector<8x128xf32>, vector<64x128xf32> -> vector<64x128xf32>
    %286 = vector.broadcast %3 : vector<1x128xf32> to vector<64x128xf32>
    %287 = arith.addf %285, %286 : vector<64x128xf32>
    %288 = tpu.concatenate %287, %287 in 0 : vector<64x128xf32>, vector<64x128xf32> -> vector<128x128xf32>
    %289 = arith.addf %78, %288 : vector<128x128xf32>
    %c0_129 = arith.constant 0 : index
    %c0_130 = arith.constant 0 : index
    %290 = vector.load %arg18[%c0_129, %c0_130] : memref<128x128xf32, #tpu.memory_space<vmem>>, vector<128x128xf32>
    %cst_131 = arith.constant dense<0.000000e+00> : vector<128x128xf32>
    %291 = tpu.matmul %289, %290, %cst_131 {dimension_numbers = #tpu.dot_dimension_numbers<[1], [0], [0], [1], [0, 0, 1, 1], [], []>} : vector<128x128xf32>, vector<128x128xf32>, vector<128x128xf32> -> vector<128x128xf32>
    %292 = vector.broadcast %4 : vector<1x128xf32> to vector<128x128xf32>
    %293 = arith.addf %291, %292 : vector<128x128xf32>
    %cst_132 = arith.constant 0.000000e+00 : f32
    %294 = vector.broadcast %cst_132 : f32 to vector<128x128xf32>
    %295 = arith.maximumf %293, %294 : vector<128x128xf32>
    %c0_133 = arith.constant 0 : index
    %c0_134 = arith.constant 0 : index
    %296 = vector.load %arg20[%c0_133, %c0_134] : memref<128x128xf32, #tpu.memory_space<vmem>>, vector<128x128xf32>
    %cst_135 = arith.constant dense<0.000000e+00> : vector<128x128xf32>
    %297 = tpu.matmul %295, %296, %cst_135 {dimension_numbers = #tpu.dot_dimension_numbers<[1], [0], [0], [1], [0, 0, 1, 1], [], []>} : vector<128x128xf32>, vector<128x128xf32>, vector<128x128xf32> -> vector<128x128xf32>
    %298 = vector.broadcast %5 : vector<1x128xf32> to vector<128x128xf32>
    %299 = arith.addf %297, %298 : vector<128x128xf32>
    %300 = vector.extract_strided_slice %299 {offsets = [0, 0], sizes = [64, 128], strides = [1, 1]} : vector<128x128xf32> to vector<64x128xf32>
    %301 = vector.extract_strided_slice %299 {offsets = [64, 0], sizes = [64, 128], strides = [1, 1]} : vector<128x128xf32> to vector<64x128xf32>
    %302 = vector.broadcast %279 : vector<1x128xf32> to vector<64x128xf32>
    %303 = arith.mulf %300, %302 : vector<64x128xf32>
    %c0_136 = arith.constant 0 : index
    %c0_137 = arith.constant 0 : index
    %304 = vector.load %arg22[%c0_136, %c0_137] : memref<128x4xf32, #tpu.memory_space<vmem>>, vector<128x4xf32>
    %cst_138 = arith.constant dense<0.000000e+00> : vector<64x4xf32>
    %305 = tpu.matmul %303, %304, %cst_138 {dimension_numbers = #tpu.dot_dimension_numbers<[1], [0], [0], [1], [0, 0, 1, 1], [], []>} : vector<64x128xf32>, vector<128x4xf32>, vector<64x4xf32> -> vector<64x4xf32>
    %cst_139 = arith.constant 0.176776692 : f32
    %306 = vector.broadcast %cst_139 : f32 to vector<64x4xf32>
    %307 = arith.mulf %305, %306 : vector<64x4xf32>
    %cst_140 = arith.constant dense<0xFF800000> : vector<64xf32>
    %308 = vector.multi_reduction <maximumf>, %307, %cst_140 [1] : vector<64x4xf32> to vector<64xf32>
    %309 = vector.shape_cast %308 : vector<64xf32> to vector<64x1xf32>
    %310 = vector.broadcast %309 : vector<64x1xf32> to vector<64x4xf32>
    %311 = arith.subf %307, %310 : vector<64x4xf32>
    %312 = math.exp %311 : vector<64x4xf32>
    %cst_141 = arith.constant dense<0.000000e+00> : vector<64xf32>
    %313 = vector.multi_reduction <add>, %312, %cst_141 [1] : vector<64x4xf32> to vector<64xf32>
    %314 = vector.shape_cast %313 : vector<64xf32> to vector<64x1xf32>
    %315 = tpu.reciprocal %314 {approx = true} : vector<64x1xf32> -> vector<64x1xf32>
    %316 = vector.broadcast %315 : vector<64x1xf32> to vector<64x4xf32>
    %317 = arith.mulf %312, %316 : vector<64x4xf32>
    %cst_142 = arith.constant 9.99999993E-9 : f32
    %318 = vector.broadcast %cst_142 : f32 to vector<64x4xf32>
    %319 = arith.addf %317, %318 : vector<64x4xf32>
    %cst_143 = arith.constant dense<0.000000e+00> : vector<4xf32>
    %320 = vector.multi_reduction <add>, %319, %cst_143 [0] : vector<64x4xf32> to vector<4xf32>
    %321 = vector.shape_cast %320 : vector<4xf32> to vector<1x4xf32>
    %322 = tpu.reciprocal %321 {approx = true} : vector<1x4xf32> -> vector<1x4xf32>
    %323 = vector.broadcast %322 : vector<1x4xf32> to vector<64x4xf32>
    %324 = arith.mulf %319, %323 : vector<64x4xf32>
    %c0_144 = arith.constant 0 : index
    %c0_145 = arith.constant 0 : index
    %325 = vector.load %arg23[%c0_144, %c0_145] : memref<4x128xf32, #tpu.memory_space<vmem>>, vector<4x128xf32>
    %cst_146 = arith.constant dense<0.000000e+00> : vector<64x128xf32>
    %326 = tpu.matmul %324, %325, %cst_146 {dimension_numbers = #tpu.dot_dimension_numbers<[1], [0], [0], [1], [0, 0, 1, 1], [], []>} : vector<64x4xf32>, vector<4x128xf32>, vector<64x128xf32> -> vector<64x128xf32>
    %327 = arith.mulf %326, %301 : vector<64x128xf32>
    %cst_147 = arith.constant dense<0.000000e+00> : vector<128xf32>
    %328 = vector.multi_reduction <add>, %327, %cst_147 [0] : vector<64x128xf32> to vector<128xf32>
    %329 = vector.shape_cast %328 : vector<128xf32> to vector<1x128xf32>
    %330 = vector.extract_strided_slice %329 {offsets = [0, 0], sizes = [1, 32], strides = [1, 1]} : vector<1x128xf32> to vector<1x32xf32>
    %331 = vector.extract_strided_slice %329 {offsets = [0, 32], sizes = [1, 32], strides = [1, 1]} : vector<1x128xf32> to vector<1x32xf32>
    %332 = vector.extract_strided_slice %329 {offsets = [0, 64], sizes = [1, 32], strides = [1, 1]} : vector<1x128xf32> to vector<1x32xf32>
    %333 = vector.extract_strided_slice %329 {offsets = [0, 96], sizes = [1, 32], strides = [1, 1]} : vector<1x128xf32> to vector<1x32xf32>
    %334 = tpu.concatenate %330, %331, %332, %333 in 0 : vector<1x32xf32>, vector<1x32xf32>, vector<1x32xf32>, vector<1x32xf32> -> vector<4x32xf32>
    %335 = tpu.concatenate %324, %324 in 1 : vector<64x4xf32>, vector<64x4xf32> -> vector<64x8xf32>
    %336 = arith.mulf %335, %79 : vector<64x8xf32>
    %cst_148 = arith.constant dense<0.000000e+00> : vector<8xf32>
    %337 = vector.multi_reduction <add>, %336, %cst_148 [0] : vector<64x8xf32> to vector<8xf32>
    %338 = vector.shape_cast %337 : vector<8xf32> to vector<1x8xf32>
    %339 = vector.broadcast %338 : vector<1x8xf32> to vector<64x8xf32>
    %340 = arith.subf %79, %339 : vector<64x8xf32>
    %341 = arith.mulf %335, %340 : vector<64x8xf32>
    %342 = arith.mulf %341, %340 : vector<64x8xf32>
    %cst_149 = arith.constant dense<0.000000e+00> : vector<8xf32>
    %343 = vector.multi_reduction <add>, %342, %cst_149 [0] : vector<64x8xf32> to vector<8xf32>
    %344 = vector.shape_cast %343 : vector<8xf32> to vector<1x8xf32>
    %345 = math.sqrt %344 : vector<1x8xf32>
    %cst_150 = arith.constant 5.000000e+00 : f32
    %346 = vector.broadcast %cst_150 : f32 to vector<1x8xf32>
    %347 = arith.mulf %345, %346 : vector<1x8xf32>
    %cst_151 = arith.constant 1.000000e+00 : f32
    %348 = vector.broadcast %cst_151 : f32 to vector<1x8xf32>
    %349 = arith.divf %348, %347 : vector<1x8xf32>
    %c0_152 = arith.constant 0 : index
    %c0_153 = arith.constant 0 : index
    %350 = vector.load %arg26[%c0_152, %c0_153] : memref<32x96xf32, #tpu.memory_space<vmem>>, vector<32x96xf32>
    %cst_154 = arith.constant dense<0.000000e+00> : vector<4x96xf32>
    %351 = tpu.matmul %334, %350, %cst_154 {dimension_numbers = #tpu.dot_dimension_numbers<[1], [0], [0], [1], [0, 0, 1, 1], [], []>} : vector<4x32xf32>, vector<32x96xf32>, vector<4x96xf32> -> vector<4x96xf32>
    %352 = vector.broadcast %6 : vector<1x96xf32> to vector<4x96xf32>
    %353 = arith.addf %351, %352 : vector<4x96xf32>
    %c0_155 = arith.constant 0 : index
    %c0_156 = arith.constant 0 : index
    %354 = vector.load %arg27[%c0_155, %c0_156] : memref<32x96xf32, #tpu.memory_space<vmem>>, vector<32x96xf32>
    %cst_157 = arith.constant dense<0.000000e+00> : vector<4x96xf32>
    %355 = tpu.matmul %251, %354, %cst_157 {dimension_numbers = #tpu.dot_dimension_numbers<[1], [0], [0], [1], [0, 0, 1, 1], [], []>} : vector<4x32xf32>, vector<32x96xf32>, vector<4x96xf32> -> vector<4x96xf32>
    %356 = vector.broadcast %7 : vector<1x96xf32> to vector<4x96xf32>
    %357 = arith.addf %355, %356 : vector<4x96xf32>
    %358 = vector.extract_strided_slice %353 {offsets = [0, 0], sizes = [4, 32], strides = [1, 1]} : vector<4x96xf32> to vector<4x32xf32>
    %359 = vector.extract_strided_slice %357 {offsets = [0, 0], sizes = [4, 32], strides = [1, 1]} : vector<4x96xf32> to vector<4x32xf32>
    %360 = arith.addf %358, %359 : vector<4x32xf32>
    %361 = arith.negf %360 : vector<4x32xf32>
    %362 = math.exp %361 : vector<4x32xf32>
    %cst_158 = arith.constant 1.000000e+00 : f32
    %363 = vector.broadcast %cst_158 : f32 to vector<4x32xf32>
    %364 = arith.addf %363, %362 : vector<4x32xf32>
    %365 = arith.divf %363, %364 : vector<4x32xf32>
    %366 = vector.extract_strided_slice %353 {offsets = [0, 32], sizes = [4, 32], strides = [1, 1]} : vector<4x96xf32> to vector<4x32xf32>
    %367 = vector.extract_strided_slice %357 {offsets = [0, 32], sizes = [4, 32], strides = [1, 1]} : vector<4x96xf32> to vector<4x32xf32>
    %368 = arith.addf %366, %367 : vector<4x32xf32>
    %369 = arith.negf %368 : vector<4x32xf32>
    %370 = math.exp %369 : vector<4x32xf32>
    %cst_159 = arith.constant 1.000000e+00 : f32
    %371 = vector.broadcast %cst_159 : f32 to vector<4x32xf32>
    %372 = arith.addf %371, %370 : vector<4x32xf32>
    %373 = arith.divf %371, %372 : vector<4x32xf32>
    %374 = vector.extract_strided_slice %353 {offsets = [0, 64], sizes = [4, 32], strides = [1, 1]} : vector<4x96xf32> to vector<4x32xf32>
    %375 = vector.extract_strided_slice %357 {offsets = [0, 64], sizes = [4, 32], strides = [1, 1]} : vector<4x96xf32> to vector<4x32xf32>
    %376 = arith.mulf %365, %375 : vector<4x32xf32>
    %377 = arith.addf %374, %376 : vector<4x32xf32>
    %378 = math.tanh %377 : vector<4x32xf32>
    %cst_160 = arith.constant 1.000000e+00 : f32
    %379 = vector.broadcast %cst_160 : f32 to vector<4x32xf32>
    %380 = arith.subf %379, %373 : vector<4x32xf32>
    %381 = arith.mulf %380, %378 : vector<4x32xf32>
    %382 = arith.mulf %373, %251 : vector<4x32xf32>
    %383 = arith.addf %381, %382 : vector<4x32xf32>
    %cst_161 = arith.constant dense<0.000000e+00> : vector<4xf32>
    %384 = vector.multi_reduction <add>, %383, %cst_161 [1] : vector<4x32xf32> to vector<4xf32>
    %385 = vector.shape_cast %384 : vector<4xf32> to vector<4x1xf32>
    %cst_162 = arith.constant 3.200000e+01 : f32
    %386 = vector.broadcast %cst_162 : f32 to vector<4x1xf32>
    %387 = arith.divf %385, %386 : vector<4x1xf32>
    %388 = vector.broadcast %387 : vector<4x1xf32> to vector<4x32xf32>
    %389 = arith.subf %383, %388 : vector<4x32xf32>
    %390 = arith.mulf %389, %389 : vector<4x32xf32>
    %cst_163 = arith.constant dense<0.000000e+00> : vector<4xf32>
    %391 = vector.multi_reduction <add>, %390, %cst_163 [1] : vector<4x32xf32> to vector<4xf32>
    %392 = vector.shape_cast %391 : vector<4xf32> to vector<4x1xf32>
    %cst_164 = arith.constant 3.200000e+01 : f32
    %393 = vector.broadcast %cst_164 : f32 to vector<4x1xf32>
    %394 = arith.divf %392, %393 : vector<4x1xf32>
    %395 = vector.broadcast %387 : vector<4x1xf32> to vector<4x32xf32>
    %396 = arith.subf %383, %395 : vector<4x32xf32>
    %cst_165 = arith.constant 9.99999974E-6 : f32
    %397 = vector.broadcast %cst_165 : f32 to vector<4x1xf32>
    %398 = arith.addf %394, %397 : vector<4x1xf32>
    %399 = math.rsqrt %398 : vector<4x1xf32>
    %400 = vector.broadcast %399 : vector<4x1xf32> to vector<4x32xf32>
    %401 = arith.mulf %396, %400 : vector<4x32xf32>
    %402 = vector.broadcast %8 : vector<1x32xf32> to vector<4x32xf32>
    %403 = arith.mulf %401, %402 : vector<4x32xf32>
    %404 = vector.broadcast %9 : vector<1x32xf32> to vector<4x32xf32>
    %405 = arith.addf %403, %404 : vector<4x32xf32>
    %c0_166 = arith.constant 0 : index
    %c0_167 = arith.constant 0 : index
    %406 = vector.load %arg32[%c0_166, %c0_167] : memref<32x128xf32, #tpu.memory_space<vmem>>, vector<32x128xf32>
    %cst_168 = arith.constant dense<0.000000e+00> : vector<4x128xf32>
    %407 = tpu.matmul %405, %406, %cst_168 {dimension_numbers = #tpu.dot_dimension_numbers<[1], [0], [0], [1], [0, 0, 1, 1], [], []>} : vector<4x32xf32>, vector<32x128xf32>, vector<4x128xf32> -> vector<4x128xf32>
    %408 = vector.broadcast %10 : vector<1x128xf32> to vector<4x128xf32>
    %409 = arith.addf %407, %408 : vector<4x128xf32>
    %cst_169 = arith.constant 0.000000e+00 : f32
    %410 = vector.broadcast %cst_169 : f32 to vector<4x128xf32>
    %411 = arith.maximumf %409, %410 : vector<4x128xf32>
    %c0_170 = arith.constant 0 : index
    %c0_171 = arith.constant 0 : index
    %412 = vector.load %arg34[%c0_170, %c0_171] : memref<128x32xf32, #tpu.memory_space<vmem>>, vector<128x32xf32>
    %cst_172 = arith.constant dense<0.000000e+00> : vector<4x32xf32>
    %413 = tpu.matmul %411, %412, %cst_172 {dimension_numbers = #tpu.dot_dimension_numbers<[1], [0], [0], [1], [0, 0, 1, 1], [], []>} : vector<4x128xf32>, vector<128x32xf32>, vector<4x32xf32> -> vector<4x32xf32>
    %414 = vector.broadcast %11 : vector<1x32xf32> to vector<4x32xf32>
    %415 = arith.addf %413, %414 : vector<4x32xf32>
    %416 = arith.addf %415, %383 : vector<4x32xf32>
    %cst_173 = arith.constant dense<0.000000e+00> : vector<4xf32>
    %417 = vector.multi_reduction <add>, %416, %cst_173 [1] : vector<4x32xf32> to vector<4xf32>
    %418 = vector.shape_cast %417 : vector<4xf32> to vector<4x1xf32>
    %cst_174 = arith.constant 3.200000e+01 : f32
    %419 = vector.broadcast %cst_174 : f32 to vector<4x1xf32>
    %420 = arith.divf %418, %419 : vector<4x1xf32>
    %421 = vector.broadcast %420 : vector<4x1xf32> to vector<4x32xf32>
    %422 = arith.subf %416, %421 : vector<4x32xf32>
    %423 = arith.mulf %422, %422 : vector<4x32xf32>
    %cst_175 = arith.constant dense<0.000000e+00> : vector<4xf32>
    %424 = vector.multi_reduction <add>, %423, %cst_175 [1] : vector<4x32xf32> to vector<4xf32>
    %425 = vector.shape_cast %424 : vector<4xf32> to vector<4x1xf32>
    %cst_176 = arith.constant 3.200000e+01 : f32
    %426 = vector.broadcast %cst_176 : f32 to vector<4x1xf32>
    %427 = arith.divf %425, %426 : vector<4x1xf32>
    %428 = vector.broadcast %420 : vector<4x1xf32> to vector<4x32xf32>
    %429 = arith.subf %416, %428 : vector<4x32xf32>
    %cst_177 = arith.constant 9.99999974E-6 : f32
    %430 = vector.broadcast %cst_177 : f32 to vector<4x1xf32>
    %431 = arith.addf %427, %430 : vector<4x1xf32>
    %432 = math.rsqrt %431 : vector<4x1xf32>
    %433 = vector.broadcast %432 : vector<4x1xf32> to vector<4x32xf32>
    %434 = arith.mulf %429, %433 : vector<4x32xf32>
    %435 = vector.broadcast %1 : vector<1x32xf32> to vector<4x32xf32>
    %436 = arith.mulf %434, %435 : vector<4x32xf32>
    %437 = vector.broadcast %2 : vector<1x32xf32> to vector<4x32xf32>
    %438 = arith.addf %436, %437 : vector<4x32xf32>
    %cst_178 = arith.constant dense<0.000000e+00> : vector<4x32xf32>
    %439 = tpu.matmul %438, %0, %cst_178 {dimension_numbers = #tpu.dot_dimension_numbers<[1], [0], [0], [1], [0, 0, 1, 1], [], []>} : vector<4x32xf32>, vector<32x32xf32>, vector<4x32xf32> -> vector<4x32xf32>
    %440 = vector.extract_strided_slice %439 {offsets = [0, 0], sizes = [1, 32], strides = [1, 1]} : vector<4x32xf32> to vector<1x32xf32>
    %441 = vector.extract_strided_slice %439 {offsets = [1, 0], sizes = [1, 32], strides = [1, 1]} : vector<4x32xf32> to vector<1x32xf32>
    %442 = vector.extract_strided_slice %439 {offsets = [2, 0], sizes = [1, 32], strides = [1, 1]} : vector<4x32xf32> to vector<1x32xf32>
    %443 = vector.extract_strided_slice %439 {offsets = [3, 0], sizes = [1, 32], strides = [1, 1]} : vector<4x32xf32> to vector<1x32xf32>
    %444 = tpu.concatenate %440, %441, %442, %443 in 1 : vector<1x32xf32>, vector<1x32xf32>, vector<1x32xf32>, vector<1x32xf32> -> vector<1x128xf32>
    %445 = vector.broadcast %338 : vector<1x8xf32> to vector<64x8xf32>
    %446 = arith.subf %79, %445 : vector<64x8xf32>
    %447 = vector.broadcast %349 : vector<1x8xf32> to vector<64x8xf32>
    %448 = arith.mulf %446, %447 : vector<64x8xf32>
    %c0_179 = arith.constant 0 : index
    %c0_180 = arith.constant 0 : index
    %449 = vector.load %arg16[%c0_179, %c0_180] : memref<8x128xf32, #tpu.memory_space<vmem>>, vector<8x128xf32>
    %cst_181 = arith.constant dense<0.000000e+00> : vector<64x128xf32>
    %450 = tpu.matmul %448, %449, %cst_181 {dimension_numbers = #tpu.dot_dimension_numbers<[1], [0], [0], [1], [0, 0, 1, 1], [], []>} : vector<64x8xf32>, vector<8x128xf32>, vector<64x128xf32> -> vector<64x128xf32>
    %451 = vector.broadcast %3 : vector<1x128xf32> to vector<64x128xf32>
    %452 = arith.addf %450, %451 : vector<64x128xf32>
    %453 = tpu.concatenate %452, %452 in 0 : vector<64x128xf32>, vector<64x128xf32> -> vector<128x128xf32>
    %454 = arith.addf %78, %453 : vector<128x128xf32>
    %c0_182 = arith.constant 0 : index
    %c0_183 = arith.constant 0 : index
    %455 = vector.load %arg18[%c0_182, %c0_183] : memref<128x128xf32, #tpu.memory_space<vmem>>, vector<128x128xf32>
    %cst_184 = arith.constant dense<0.000000e+00> : vector<128x128xf32>
    %456 = tpu.matmul %454, %455, %cst_184 {dimension_numbers = #tpu.dot_dimension_numbers<[1], [0], [0], [1], [0, 0, 1, 1], [], []>} : vector<128x128xf32>, vector<128x128xf32>, vector<128x128xf32> -> vector<128x128xf32>
    %457 = vector.broadcast %4 : vector<1x128xf32> to vector<128x128xf32>
    %458 = arith.addf %456, %457 : vector<128x128xf32>
    %cst_185 = arith.constant 0.000000e+00 : f32
    %459 = vector.broadcast %cst_185 : f32 to vector<128x128xf32>
    %460 = arith.maximumf %458, %459 : vector<128x128xf32>
    %c0_186 = arith.constant 0 : index
    %c0_187 = arith.constant 0 : index
    %461 = vector.load %arg20[%c0_186, %c0_187] : memref<128x128xf32, #tpu.memory_space<vmem>>, vector<128x128xf32>
    %cst_188 = arith.constant dense<0.000000e+00> : vector<128x128xf32>
    %462 = tpu.matmul %460, %461, %cst_188 {dimension_numbers = #tpu.dot_dimension_numbers<[1], [0], [0], [1], [0, 0, 1, 1], [], []>} : vector<128x128xf32>, vector<128x128xf32>, vector<128x128xf32> -> vector<128x128xf32>
    %463 = vector.broadcast %5 : vector<1x128xf32> to vector<128x128xf32>
    %464 = arith.addf %462, %463 : vector<128x128xf32>
    %465 = vector.extract_strided_slice %464 {offsets = [0, 0], sizes = [64, 128], strides = [1, 1]} : vector<128x128xf32> to vector<64x128xf32>
    %466 = vector.broadcast %444 : vector<1x128xf32> to vector<64x128xf32>
    %467 = arith.mulf %465, %466 : vector<64x128xf32>
    %c0_189 = arith.constant 0 : index
    %c0_190 = arith.constant 0 : index
    %468 = vector.load %arg22[%c0_189, %c0_190] : memref<128x4xf32, #tpu.memory_space<vmem>>, vector<128x4xf32>
    %cst_191 = arith.constant dense<0.000000e+00> : vector<64x4xf32>
    %469 = tpu.matmul %467, %468, %cst_191 {dimension_numbers = #tpu.dot_dimension_numbers<[1], [0], [0], [1], [0, 0, 1, 1], [], []>} : vector<64x128xf32>, vector<128x4xf32>, vector<64x4xf32> -> vector<64x4xf32>
    %cst_192 = arith.constant 0.176776692 : f32
    %470 = vector.broadcast %cst_192 : f32 to vector<64x4xf32>
    %471 = arith.mulf %469, %470 : vector<64x4xf32>
    %cst_193 = arith.constant dense<0xFF800000> : vector<64xf32>
    %472 = vector.multi_reduction <maximumf>, %471, %cst_193 [1] : vector<64x4xf32> to vector<64xf32>
    %473 = vector.shape_cast %472 : vector<64xf32> to vector<64x1xf32>
    %474 = vector.broadcast %473 : vector<64x1xf32> to vector<64x4xf32>
    %475 = arith.subf %471, %474 : vector<64x4xf32>
    %476 = math.exp %475 : vector<64x4xf32>
    %cst_194 = arith.constant dense<0.000000e+00> : vector<64xf32>
    %477 = vector.multi_reduction <add>, %476, %cst_194 [1] : vector<64x4xf32> to vector<64xf32>
    %478 = vector.shape_cast %477 : vector<64xf32> to vector<64x1xf32>
    %479 = tpu.reciprocal %478 {approx = true} : vector<64x1xf32> -> vector<64x1xf32>
    %480 = vector.broadcast %479 : vector<64x1xf32> to vector<64x4xf32>
    %481 = arith.mulf %476, %480 : vector<64x4xf32>
    %cst_195 = arith.constant 9.99999993E-9 : f32
    %482 = vector.broadcast %cst_195 : f32 to vector<64x4xf32>
    %483 = arith.addf %481, %482 : vector<64x4xf32>
    %cst_196 = arith.constant dense<0.000000e+00> : vector<4xf32>
    %484 = vector.multi_reduction <add>, %483, %cst_196 [0] : vector<64x4xf32> to vector<4xf32>
    %485 = vector.shape_cast %484 : vector<4xf32> to vector<1x4xf32>
    %486 = tpu.reciprocal %485 {approx = true} : vector<1x4xf32> -> vector<1x4xf32>
    %487 = vector.broadcast %486 : vector<1x4xf32> to vector<64x4xf32>
    %488 = arith.mulf %483, %487 : vector<64x4xf32>
    %c0_197 = arith.constant 0 : index
    %c0_198 = arith.constant 0 : index
    %489 = vector.load %arg36[%c0_197, %c0_198] : memref<32x32xf32, #tpu.memory_space<vmem>>, vector<32x32xf32>
    %cst_199 = arith.constant dense<0.000000e+00> : vector<4x32xf32>
    %490 = tpu.matmul %416, %489, %cst_199 {dimension_numbers = #tpu.dot_dimension_numbers<[1], [0], [0], [1], [0, 0, 1, 1], [], []>} : vector<4x32xf32>, vector<32x32xf32>, vector<4x32xf32> -> vector<4x32xf32>
    %c0_200 = arith.constant 0 : index
    %c0_201 = arith.constant 0 : index
    %491 = vector.load %arg37[%c0_200, %c0_201] : memref<1x32xf32, #tpu.memory_space<vmem>>, vector<1x32xf32>
    %492 = vector.broadcast %491 : vector<1x32xf32> to vector<4x32xf32>
    %493 = arith.addf %490, %492 : vector<4x32xf32>
    %c0_202 = arith.constant 0 : index
    %c0_203 = arith.constant 0 : index
    %c0_204 = arith.constant 0 : index
    %494 = vector.load %arg38[%c0_202, %c0_203, %c0_204] : memref<1x4x32xf32, #tpu.memory_space<vmem>>, vector<1x4x32xf32>
    %495 = vector.shape_cast %494 : vector<1x4x32xf32> to vector<4x32xf32>
    %496 = vector.shape_cast %493 : vector<4x32xf32> to vector<1x4x32xf32>
    tpu.vector_store %arg38[%c0_202, %c0_203, %c0_204], %496 {strides = array<i32>} : memref<1x4x32xf32, #tpu.memory_space<vmem>>, vector<1x4x32xf32>,
    %497 = tpu.iota {dimensions = array<i32: 0>} : vector<64x64xi32>
    %498 = tpu.iota {dimensions = array<i32: 1>} : vector<64x64xi32>
    %499 = arith.cmpi eq, %497, %498 : vector<64x64xi32>
    %500 = arith.extui %499 : vector<64x64xi1> to vector<64x64xi32>
    %501 = arith.sitofp %500 : vector<64x64xi32> to vector<64x64xf32>
    %502 = vector.extract_strided_slice %488 {offsets = [0, 0], sizes = [64, 1], strides = [1, 1]} : vector<64x4xf32> to vector<64x1xf32>
    %503 = vector.broadcast %502 : vector<64x1xf32> to vector<64x64xf32>
    %504 = arith.mulf %503, %501 : vector<64x64xf32>
    %cst_205 = arith.constant dense<0.000000e+00> : vector<64xf32>
    %505 = vector.multi_reduction <add>, %504, %cst_205 [0] : vector<64x64xf32> to vector<64xf32>
    %506 = vector.shape_cast %505 : vector<64xf32> to vector<1x64xf32>
    %507 = vector.extract_strided_slice %488 {offsets = [0, 1], sizes = [64, 1], strides = [1, 1]} : vector<64x4xf32> to vector<64x1xf32>
    %508 = vector.broadcast %507 : vector<64x1xf32> to vector<64x64xf32>
    %509 = arith.mulf %508, %501 : vector<64x64xf32>
    %cst_206 = arith.constant dense<0.000000e+00> : vector<64xf32>
    %510 = vector.multi_reduction <add>, %509, %cst_206 [0] : vector<64x64xf32> to vector<64xf32>
    %511 = vector.shape_cast %510 : vector<64xf32> to vector<1x64xf32>
    %512 = vector.extract_strided_slice %488 {offsets = [0, 2], sizes = [64, 1], strides = [1, 1]} : vector<64x4xf32> to vector<64x1xf32>
    %513 = vector.broadcast %512 : vector<64x1xf32> to vector<64x64xf32>
    %514 = arith.mulf %513, %501 : vector<64x64xf32>
    %cst_207 = arith.constant dense<0.000000e+00> : vector<64xf32>
    %515 = vector.multi_reduction <add>, %514, %cst_207 [0] : vector<64x64xf32> to vector<64xf32>
    %516 = vector.shape_cast %515 : vector<64xf32> to vector<1x64xf32>
    %517 = vector.extract_strided_slice %488 {offsets = [0, 3], sizes = [64, 1], strides = [1, 1]} : vector<64x4xf32> to vector<64x1xf32>
    %518 = vector.broadcast %517 : vector<64x1xf32> to vector<64x64xf32>
    %519 = arith.mulf %518, %501 : vector<64x64xf32>
    %cst_208 = arith.constant dense<0.000000e+00> : vector<64xf32>
    %520 = vector.multi_reduction <add>, %519, %cst_208 [0] : vector<64x64xf32> to vector<64xf32>
    %521 = vector.shape_cast %520 : vector<64xf32> to vector<1x64xf32>
    %522 = tpu.concatenate %506, %511, %516, %521 in 0 : vector<1x64xf32>, vector<1x64xf32>, vector<1x64xf32>, vector<1x64xf32> -> vector<4x64xf32>
    %c0_209 = arith.constant 0 : index
    %c0_210 = arith.constant 0 : index
    %c0_211 = arith.constant 0 : index
    %523 = vector.load %arg39[%c0_209, %c0_210, %c0_211] : memref<1x4x64xf32, #tpu.memory_space<vmem>>, vector<1x4x64xf32>
    %524 = vector.shape_cast %523 : vector<1x4x64xf32> to vector<4x64xf32>
    %525 = vector.shape_cast %522 : vector<4x64xf32> to vector<1x4x64xf32>
    tpu.vector_store %arg39[%c0_209, %c0_210, %c0_211], %525 {strides = array<i32>} : memref<1x4x64xf32, #tpu.memory_space<vmem>>, vector<1x4x64xf32>,
    return
  }
  func.func @transform_0(%arg0: i32) -> (i32, i32, i32) {
    %c0_i32 = arith.constant 0 : i32
    %c0_i32_0 = arith.constant 0 : i32
    %c0_i32_1 = arith.constant 0 : i32
    return %arg0, %c0_i32, %c0_i32_0 : i32, i32, i32
  }
  func.func @transform_1(%arg0: i32) -> (i32, i32) {
    %c0_i32 = arith.constant 0 : i32
    %c0_i32_0 = arith.constant 0 : i32
    %c0_i32_1 = arith.constant 0 : i32
    return %c0_i32, %c0_i32_0 : i32, i32
  }
  func.func @transform_2(%arg0: i32) -> (i32, i32) {
    %c0_i32 = arith.constant 0 : i32
    %c0_i32_0 = arith.constant 0 : i32
    %c0_i32_1 = arith.constant 0 : i32
    return %c0_i32, %c0_i32_0 : i32, i32
  }
  func.func @transform_3(%arg0: i32) -> (i32, i32) {
    %c0_i32 = arith.constant 0 : i32
    %c0_i32_0 = arith.constant 0 : i32
    %c0_i32_1 = arith.constant 0 : i32
    return %c0_i32, %c0_i32_0 : i32, i32
  }
  func.func @transform_4(%arg0: i32) -> (i32, i32) {
    %c0_i32 = arith.constant 0 : i32
    %c0_i32_0 = arith.constant 0 : i32
    %c0_i32_1 = arith.constant 0 : i32
    return %c0_i32, %c0_i32_0 : i32, i32
  }
  func.func @transform_5(%arg0: i32) -> (i32, i32) {
    %c0_i32 = arith.constant 0 : i32
    %c0_i32_0 = arith.constant 0 : i32
    %c0_i32_1 = arith.constant 0 : i32
    return %c0_i32, %c0_i32_0 : i32, i32
  }
  func.func @transform_6(%arg0: i32) -> (i32, i32) {
    %c0_i32 = arith.constant 0 : i32
    %c0_i32_0 = arith.constant 0 : i32
    %c0_i32_1 = arith.constant 0 : i32
    return %c0_i32, %c0_i32_0 : i32, i32
  }
  func.func @transform_7(%arg0: i32) -> (i32, i32) {
    %c0_i32 = arith.constant 0 : i32
    %c0_i32_0 = arith.constant 0 : i32
    %c0_i32_1 = arith.constant 0 : i32
    return %c0_i32, %c0_i32_0 : i32, i32
  }
  func.func @transform_8(%arg0: i32) -> (i32, i32) {
    %c0_i32 = arith.constant 0 : i32
    %c0_i32_0 = arith.constant 0 : i32
    %c0_i32_1 = arith.constant 0 : i32
    return %c0_i32, %c0_i32_0 : i32, i32
  }
  func.func @transform_9(%arg0: i32) -> (i32, i32) {
    %c0_i32 = arith.constant 0 : i32
    %c0_i32_0 = arith.constant 0 : i32
    %c0_i32_1 = arith.constant 0 : i32
    return %c0_i32, %c0_i32_0 : i32, i32
  }
  func.func @transform_10(%arg0: i32) -> (i32, i32) {
    %c0_i32 = arith.constant 0 : i32
    %c0_i32_0 = arith.constant 0 : i32
    %c0_i32_1 = arith.constant 0 : i32
    return %c0_i32, %c0_i32_0 : i32, i32
  }
  func.func @transform_11(%arg0: i32) -> (i32, i32) {
    %c0_i32 = arith.constant 0 : i32
    %c0_i32_0 = arith.constant 0 : i32
    %c0_i32_1 = arith.constant 0 : i32
    return %c0_i32, %c0_i32_0 : i32, i32
  }
  func.func @transform_12(%arg0: i32) -> (i32, i32) {
    %c0_i32 = arith.constant 0 : i32
    %c0_i32_0 = arith.constant 0 : i32
    %c0_i32_1 = arith.constant 0 : i32
    return %c0_i32, %c0_i32_0 : i32, i32
  }
  func.func @transform_13(%arg0: i32) -> (i32, i32) {
    %c0_i32 = arith.constant 0 : i32
    %c0_i32_0 = arith.constant 0 : i32
    %c0_i32_1 = arith.constant 0 : i32
    return %c0_i32, %c0_i32_0 : i32, i32
  }
  func.func @transform_14(%arg0: i32) -> (i32, i32) {
    %c0_i32 = arith.constant 0 : i32
    %c0_i32_0 = arith.constant 0 : i32
    %c0_i32_1 = arith.constant 0 : i32
    return %c0_i32, %c0_i32_0 : i32, i32
  }
  func.func @transform_15(%arg0: i32) -> (i32, i32) {
    %c0_i32 = arith.constant 0 : i32
    %c0_i32_0 = arith.constant 0 : i32
    %c0_i32_1 = arith.constant 0 : i32
    return %c0_i32, %c0_i32_0 : i32, i32
  }
  func.func @transform_16(%arg0: i32) -> (i32, i32) {
    %c0_i32 = arith.constant 0 : i32
    %c0_i32_0 = arith.constant 0 : i32
    %c0_i32_1 = arith.constant 0 : i32
    return %c0_i32, %c0_i32_0 : i32, i32
  }
  func.func @transform_17(%arg0: i32) -> (i32, i32) {
    %c0_i32 = arith.constant 0 : i32
    %c0_i32_0 = arith.constant 0 : i32
    %c0_i32_1 = arith.constant 0 : i32
    return %c0_i32, %c0_i32_0 : i32, i32
  }
  func.func @transform_18(%arg0: i32) -> (i32, i32) {
    %c0_i32 = arith.constant 0 : i32
    %c0_i32_0 = arith.constant 0 : i32
    %c0_i32_1 = arith.constant 0 : i32
    return %c0_i32, %c0_i32_0 : i32, i32
  }
  func.func @transform_19(%arg0: i32) -> (i32, i32) {
    %c0_i32 = arith.constant 0 : i32
    %c0_i32_0 = arith.constant 0 : i32
    %c0_i32_1 = arith.constant 0 : i32
    return %c0_i32, %c0_i32_0 : i32, i32
  }
  func.func @transform_20(%arg0: i32) -> (i32, i32) {
    %c0_i32 = arith.constant 0 : i32
    %c0_i32_0 = arith.constant 0 : i32
    %c0_i32_1 = arith.constant 0 : i32
    return %c0_i32, %c0_i32_0 : i32, i32
  }
  func.func @transform_21(%arg0: i32) -> (i32, i32) {
    %c0_i32 = arith.constant 0 : i32
    %c0_i32_0 = arith.constant 0 : i32
    %c0_i32_1 = arith.constant 0 : i32
    return %c0_i32, %c0_i32_0 : i32, i32
  }
  func.func @transform_22(%arg0: i32) -> (i32, i32) {
    %c0_i32 = arith.constant 0 : i32
    %c0_i32_0 = arith.constant 0 : i32
    %c0_i32_1 = arith.constant 0 : i32
    return %c0_i32, %c0_i32_0 : i32, i32
  }
  func.func @transform_23(%arg0: i32) -> (i32, i32) {
    %c0_i32 = arith.constant 0 : i32
    %c0_i32_0 = arith.constant 0 : i32
    %c0_i32_1 = arith.constant 0 : i32
    return %c0_i32, %c0_i32_0 : i32, i32
  }
  func.func @transform_24(%arg0: i32) -> (i32, i32) {
    %c0_i32 = arith.constant 0 : i32
    %c0_i32_0 = arith.constant 0 : i32
    %c0_i32_1 = arith.constant 0 : i32
    return %c0_i32, %c0_i32_0 : i32, i32
  }
  func.func @transform_25(%arg0: i32) -> (i32, i32) {
    %c0_i32 = arith.constant 0 : i32
    %c0_i32_0 = arith.constant 0 : i32
    %c0_i32_1 = arith.constant 0 : i32
    return %c0_i32, %c0_i32_0 : i32, i32
  }
  func.func @transform_26(%arg0: i32) -> (i32, i32) {
    %c0_i32 = arith.constant 0 : i32
    %c0_i32_0 = arith.constant 0 : i32
    %c0_i32_1 = arith.constant 0 : i32
    return %c0_i32, %c0_i32_0 : i32, i32
  }
  func.func @transform_27(%arg0: i32) -> (i32, i32) {
    %c0_i32 = arith.constant 0 : i32
    %c0_i32_0 = arith.constant 0 : i32
    %c0_i32_1 = arith.constant 0 : i32
    return %c0_i32, %c0_i32_0 : i32, i32
  }
  func.func @transform_28(%arg0: i32) -> (i32, i32) {
    %c0_i32 = arith.constant 0 : i32
    %c0_i32_0 = arith.constant 0 : i32
    %c0_i32_1 = arith.constant 0 : i32
    return %c0_i32, %c0_i32_0 : i32, i32
  }
  func.func @transform_29(%arg0: i32) -> (i32, i32) {
    %c0_i32 = arith.constant 0 : i32
    %c0_i32_0 = arith.constant 0 : i32
    %c0_i32_1 = arith.constant 0 : i32
    return %c0_i32, %c0_i32_0 : i32, i32
  }
  func.func @transform_30(%arg0: i32) -> (i32, i32) {
    %c0_i32 = arith.constant 0 : i32
    %c0_i32_0 = arith.constant 0 : i32
    %c0_i32_1 = arith.constant 0 : i32
    return %c0_i32, %c0_i32_0 : i32, i32
  }
  func.func @transform_31(%arg0: i32) -> (i32, i32) {
    %c0_i32 = arith.constant 0 : i32
    %c0_i32_0 = arith.constant 0 : i32
    %c0_i32_1 = arith.constant 0 : i32
    return %c0_i32, %c0_i32_0 : i32, i32
  }
  func.func @transform_32(%arg0: i32) -> (i32, i32) {
    %c0_i32 = arith.constant 0 : i32
    %c0_i32_0 = arith.constant 0 : i32
    %c0_i32_1 = arith.constant 0 : i32
    return %c0_i32, %c0_i32_0 : i32, i32
  }
  func.func @transform_33(%arg0: i32) -> (i32, i32) {
    %c0_i32 = arith.constant 0 : i32
    %c0_i32_0 = arith.constant 0 : i32
    %c0_i32_1 = arith.constant 0 : i32
    return %c0_i32, %c0_i32_0 : i32, i32
  }
  func.func @transform_34(%arg0: i32) -> (i32, i32) {
    %c0_i32 = arith.constant 0 : i32
    %c0_i32_0 = arith.constant 0 : i32
    %c0_i32_1 = arith.constant 0 : i32
    return %c0_i32, %c0_i32_0 : i32, i32
  }
  func.func @transform_35(%arg0: i32) -> (i32, i32) {
    %c0_i32 = arith.constant 0 : i32
    %c0_i32_0 = arith.constant 0 : i32
    %c0_i32_1 = arith.constant 0 : i32
    return %c0_i32, %c0_i32_0 : i32, i32
  }
  func.func @transform_36(%arg0: i32) -> (i32, i32) {
    %c0_i32 = arith.constant 0 : i32
    %c0_i32_0 = arith.constant 0 : i32
    %c0_i32_1 = arith.constant 0 : i32
    return %c0_i32, %c0_i32_0 : i32, i32
  }
  func.func @transform_37(%arg0: i32) -> (i32, i32, i32) {
    %c0_i32 = arith.constant 0 : i32
    %c0_i32_0 = arith.constant 0 : i32
    %c0_i32_1 = arith.constant 0 : i32
    return %arg0, %c0_i32, %c0_i32_0 : i32, i32, i32
  }
  func.func @transform_38(%arg0: i32) -> (i32, i32, i32) {
    %c0_i32 = arith.constant 0 : i32
    %c0_i32_0 = arith.constant 0 : i32
    %c0_i32_1 = arith.constant 0 : i32
    return %arg0, %c0_i32, %c0_i32_0 : i32, i32, i32
  }
}

</mosaic_0001>

<llo_original>
// kernel: tpu_custom_call.1
$region0: #{tpu_custom_call.1}
  #allocation0 [shape = 'u32[]', space=smem, size = 0x4, offset = 0x4, fixed_abs, tag = 'smem constant byte address 0x4 - core index']
  #allocation1 [shape = 'u32[144,128]{1,0:T(1,128)}', space=vmem, size = 0x12000, scoped, tag = 'internal scratch']
  %s0 = inlined_call_operand.smem [shape: u32[39], index: -1, kind: input, shape index: {}]
  %s1 = sld [smem:[%s0]]
  %s2 = scalar_lea.smem %s0, 1
  %s3 = sld [smem:[%s2]]
  %s4 = scalar_lea.smem %s0, 2
  %s5 = sld [smem:[%s4]]
  %s6 = scalar_lea.smem %s0, 3
  %s7 = sld [smem:[%s6]]
  %s8 = scalar_lea.smem %s0, 4
  %s9 = sld [smem:[%s8]]
  %s10 = scalar_lea.smem %s0, 5
  %s11 = sld [smem:[%s10]]
  %s12 = scalar_lea.smem %s0, 6
  %s13 = sld [smem:[%s12]]
  %s14 = scalar_lea.smem %s0, 7
  %s15 = sld [smem:[%s14]]
  %s16 = scalar_lea.smem %s0, 8
  %s17 = sld [smem:[%s16]]
  %s18 = scalar_lea.smem %s0, 9
  %s19 = sld [smem:[%s18]]
  %s20 = scalar_lea.smem %s0, 10
  %s21 = sld [smem:[%s20]]
  %s22 = scalar_lea.smem %s0, 11
  %s23 = sld [smem:[%s22]]
  %s24 = scalar_lea.smem %s0, 12
  %s25 = sld [smem:[%s24]]
  %s26 = scalar_lea.smem %s0, 13
  %s27 = sld [smem:[%s26]]
  %s28 = scalar_lea.smem %s0, 14
  %s29 = sld [smem:[%s28]]
  %s30 = scalar_lea.smem %s0, 15
  %s31 = sld [smem:[%s30]]
  %s32 = scalar_lea.smem %s0, 16
  %s33 = sld [smem:[%s32]]
  %s34 = scalar_lea.smem %s0, 17
  %s35 = sld [smem:[%s34]]
  %s36 = scalar_lea.smem %s0, 18
  %s37 = sld [smem:[%s36]]
  %s38 = scalar_lea.smem %s0, 19
  %s39 = sld [smem:[%s38]]
  %s40 = scalar_lea.smem %s0, 20
  %s41 = sld [smem:[%s40]]
  %s42 = scalar_lea.smem %s0, 21
  %s43 = sld [smem:[%s42]]
  %s44 = scalar_lea.smem %s0, 22
  %s45 = sld [smem:[%s44]]
  %s46 = scalar_lea.smem %s0, 23
  %s47 = sld [smem:[%s46]]
  %s48 = scalar_lea.smem %s0, 24
  %s49 = sld [smem:[%s48]]
  %s50 = scalar_lea.smem %s0, 25
  %s51 = sld [smem:[%s50]]
  %s52 = scalar_lea.smem %s0, 26
  %s53 = sld [smem:[%s52]]
  %s54 = scalar_lea.smem %s0, 27
  %s55 = sld [smem:[%s54]]
  %s56 = scalar_lea.smem %s0, 28
  %s57 = sld [smem:[%s56]]
  %s58 = scalar_lea.smem %s0, 29
  %s59 = sld [smem:[%s58]]
  %s60 = scalar_lea.smem %s0, 30
  %s61 = sld [smem:[%s60]]
  %s62 = scalar_lea.smem %s0, 31
  %s63 = sld [smem:[%s62]]
  %s64 = scalar_lea.smem %s0, 32
  %s65 = sld [smem:[%s64]]
  %s66 = scalar_lea.smem %s0, 33
  %s67 = sld [smem:[%s66]]
  %s68 = scalar_lea.smem %s0, 34
  %s69 = sld [smem:[%s68]]
  %s70 = scalar_lea.smem %s0, 35
  %s71 = sld [smem:[%s70]]
  %s72 = scalar_lea.smem %s0, 36
  %s73 = sld [smem:[%s72]]
  %s74 = scalar_lea.smem %s0, 37
  %s75 = sld [smem:[%s74]]
  %s76 = scalar_lea.smem %s0, 38
  %s77 = sld [smem:[%s76]]
  %78 = xla_tuple %s75, %s77
  %s79 = sld [smem:[#allocation0]]
  $region241: #{tpu_custom_call.1} parent=0
    _
  %s81 = ssub.s32 1, %s79
  %s82 = scalar_select 0, %s81, %s79
  $region1: #{tpu_custom_call.1} parent=0
    #allocation2 [shape = 'u8[512]{0}', space=vmem, size = 0x400, scoped, tag = 'input window, operand 5, single buffered']
    #allocation3 [shape = 's32[2]{0}', space=sflag, size = 0x8, scoped, tag = 'scoped memory for tpu_custom_call.1']
    #allocation4 [shape = 's32[2]{0}', space=sflag, size = 0x8, scoped, tag = 'scoped memory for tpu_custom_call.1']
    #allocation5 [shape = 'u8[512]{0}', space=vmem, size = 0x400, scoped, tag = 'input window, operand 6, single buffered']
    #allocation6 [shape = 's32[1]{0}', space=sflag, size = 0x4, scoped, tag = 'scoped memory for tpu_custom_call.1']
    #allocation7 [shape = 'u8[512]{0}', space=vmem, size = 0x400, scoped, tag = 'input window, operand 8, single buffered']
    #allocation8 [shape = 'u8[512]{0}', space=vmem, size = 0x400, scoped, tag = 'input window, operand 10, single buffered']
    #allocation9 [shape = 's32[1]{0}', space=sflag, size = 0x4, scoped, tag = 'scoped memory for tpu_custom_call.1']
    #allocation10 [shape = 'u8[512]{0}', space=vmem, size = 0x400, scoped, tag = 'input window, operand 11, single buffered']
    #allocation11 [shape = 'u8[512]{0}', space=vmem, size = 0x400, scoped, tag = 'input window, operand 12, single buffered']
    #allocation12 [shape = 's32[1]{0}', space=sflag, size = 0x4, scoped, tag = 'scoped memory for tpu_custom_call.1']
    #allocation13 [shape = 'u8[4096]{0}', space=vmem, size = 0x1000, scoped, tag = 'input window, operand 15, single buffered']
    #allocation14 [shape = 'u8[512]{0}', space=vmem, size = 0x400, scoped, tag = 'input window, operand 16, single buffered']
    #allocation15 [shape = 's32[1]{0}', space=sflag, size = 0x4, scoped, tag = 'scoped memory for tpu_custom_call.1']
    #allocation16 [shape = 'u8[512]{0}', space=vmem, size = 0x400, scoped, tag = 'input window, operand 18, single buffered']
    #allocation17 [shape = 'u8[512]{0}', space=vmem, size = 0x400, scoped, tag = 'input window, operand 20, single buffered']
    #allocation18 [shape = 's32[1]{0}', space=sflag, size = 0x4, scoped, tag = 'scoped memory for tpu_custom_call.1']
    #allocation19 [shape = 'u8[2048]{0}', space=vmem, size = 0x800, scoped, tag = 'input window, operand 22, single buffered']
    #allocation20 [shape = 'u8[512]{0}', space=vmem, size = 0x400, scoped, tag = 'input window, operand 23, single buffered']
    #allocation21 [shape = 's32[1]{0}', space=sflag, size = 0x4, scoped, tag = 'scoped memory for tpu_custom_call.1']
    #allocation22 [shape = 'u8[512]{0}', space=vmem, size = 0x400, scoped, tag = 'input window, operand 24, single buffered']
    #allocation23 [shape = 'u8[4096]{0}', space=vmem, size = 0x1000, scoped, tag = 'output window, operand 0']
    #allocation24 [shape = 'u8[4096]{0}', space=vmem, size = 0x1000, scoped, tag = 'output window, operand 1']
    #allocation25 [shape = 's32[2]{0}', space=sflag, size = 0x8, scoped, tag = 'scoped memory for tpu_custom_call.1']
    %83 = vsyncpa [#allocation3], 0
    %84 = vsyncpa [#allocation6], 0
    %85 = vsyncpa [#allocation9], 0
    %86 = vsyncpa [#allocation12], 0
    %87 = vsyncpa [#allocation15], 0
    %88 = vsyncpa [#allocation18], 0
    %89 = vsyncpa [#allocation21], 0
    %90 = vsyncpa [#allocation4], 0
    %s91 = scalar_lea.sflag [#allocation4], 1
    %92 = vsyncpa %s91, 0
    %93 = vsyncpa [#allocation25], 0
    %s94 = scalar_lea.sflag [#allocation25], 1
    %95 = vsyncpa %s94, 0
    loop: start=0, step=1, limit=4
    $region2: #{tpu_custom_call.1} parent=1 // loop_pre_header
      _
    $region3: #{tpu_custom_call.1} parent=1 // loop_header
      %s97 = sphi 0, %s101
      %p98 = scmp.ge.s32.totalorder %s97, 4
      %s107 = sphi 0, %s109
      %s110 = sphi 0, %s107
      %s111 = sphi 0, %s110
      %s127 = sphi 0, %s111
      %s131 = sphi 0, %s131
      %s133 = sphi 0, %s131
      %s134 = sphi 0, %s133
      %s148 = sphi 0, %s134
      %s152 = sphi 0, %s152
      %s154 = sphi 0, %s152
      %s155 = sphi 0, %s154
      %s169 = sphi 0, %s155
      %s173 = sphi 0, %s173
      %s175 = sphi 0, %s173
      %s176 = sphi 0, %s175
      %s190 = sphi 0, %s176
      %s194 = sphi 0, %s194
      %s196 = sphi 0, %s194
      %s197 = sphi 0, %s196
      %s211 = sphi 0, %s197
      %s215 = sphi 0, %s215
      %s217 = sphi 0, %s215
      %s218 = sphi 0, %s217
      %s232 = sphi 0, %s218
      %s236 = sphi 0, %s236
      %s238 = sphi 0, %s236
      %s239 = sphi 0, %s238
      %s253 = sphi 0, %s239
      %s257 = sphi 0, %s257
      %s259 = sphi 0, %s257
      %s260 = sphi 0, %s259
      %s274 = sphi 0, %s260
      %s278 = sphi 0, %s278
      %s280 = sphi 0, %s278
      %s281 = sphi 0, %s280
      %s295 = sphi 0, %s281
      %s299 = sphi 0, %s299
      %s301 = sphi 0, %s299
      %s302 = sphi 0, %s301
      %s316 = sphi 0, %s302
      %s320 = sphi 0, %s320
      %s322 = sphi 0, %s320
      %s323 = sphi 0, %s322
      %s337 = sphi 0, %s323
      %s341 = sphi 0, %s341
      %s343 = sphi 0, %s341
      %s344 = sphi 0, %s343
      %s358 = sphi 0, %s344
      %s362 = sphi 0, %s362
      %s364 = sphi 0, %s362
      %s365 = sphi 0, %s364
      %s379 = sphi 0, %s365
      %s383 = sphi 0, %s383
      %s385 = sphi 0, %s383
      %s386 = sphi 0, %s385
      %s400 = sphi 0, %s386
      %s404 = sphi 0, %s404
      %s406 = sphi 0, %s404
      %s407 = sphi 0, %s406
      %s421 = sphi 0, %s407
      %s425 = sphi 0, %s425
      %s427 = sphi 0, %s425
      %s428 = sphi 0, %s427
      %s442 = sphi 0, %s428
      %s446 = sphi 0, %s446
      %s448 = sphi 0, %s446
      %s449 = sphi 0, %s448
      %s463 = sphi 0, %s449
      %s467 = sphi 0, %s467
      %s469 = sphi 0, %s467
      %s470 = sphi 0, %s469
      %s484 = sphi 0, %s470
      %s488 = sphi 0, %s488
      %s490 = sphi 0, %s488
      %s491 = sphi 0, %s490
      %s505 = sphi 0, %s491
      %s509 = sphi 0, %s509
      %s511 = sphi 0, %s509
      %s512 = sphi 0, %s511
      %s526 = sphi 0, %s512
      %s530 = sphi 0, %s530
      %s532 = sphi 0, %s530
      %s533 = sphi 0, %s532
      %s547 = sphi 0, %s533
      %s551 = sphi 0, %s551
      %s553 = sphi 0, %s551
      %s554 = sphi 0, %s553
      %s568 = sphi 0, %s554
      %s572 = sphi 0, %s572
      %s574 = sphi 0, %s572
      %s575 = sphi 0, %s574
      %s589 = sphi 0, %s575
      %s593 = sphi 0, %s593
      %s595 = sphi 0, %s593
      %s596 = sphi 0, %s595
      %s610 = sphi 0, %s596
      %s614 = sphi 0, %s614
      %s616 = sphi 0, %s614
      %s617 = sphi 0, %s616
      %s631 = sphi 0, %s617
      %s635 = sphi 0, %s635
      %s637 = sphi 0, %s635
      %s638 = sphi 0, %s637
      %s652 = sphi 0, %s638
      %s656 = sphi 0, %s656
      %s658 = sphi 0, %s656
      %s659 = sphi 0, %s658
      %s673 = sphi 0, %s659
      %s677 = sphi 0, %s677
      %s679 = sphi 0, %s677
      %s680 = sphi 0, %s679
      %s694 = sphi 0, %s680
      %s698 = sphi 0, %s698
      %s700 = sphi 0, %s698
      %s701 = sphi 0, %s700
      %s715 = sphi 0, %s701
      %s719 = sphi 0, %s719
      %s721 = sphi 0, %s719
      %s722 = sphi 0, %s721
      %s736 = sphi 0, %s722
      %s740 = sphi 0, %s740
      %s742 = sphi 0, %s740
      %s743 = sphi 0, %s742
      %s757 = sphi 0, %s743
      %s761 = sphi 0, %s761
      %s763 = sphi 0, %s761
      %s764 = sphi 0, %s763
      %s778 = sphi 0, %s764
      %s782 = sphi 0, %s782
      %s784 = sphi 0, %s782
      %s785 = sphi 0, %s784
      %s799 = sphi 0, %s785
      %s803 = sphi 0, %s803
      %s805 = sphi 0, %s803
      %s806 = sphi 0, %s805
      %s820 = sphi 0, %s806
      %s824 = sphi 0, %s824
      %s826 = sphi 0, %s824
      %s827 = sphi 0, %s826
      %s841 = sphi 0, %s827
      %s845 = sphi 0, %s845
      %s847 = sphi 0, %s845
      %s848 = sphi 0, %s847
      %s862 = sphi 0, %s848
      %s866 = sphi 0, %s866
      %s868 = sphi 0, %s866
      %s869 = sphi 0, %s868
      %s883 = sphi 0, %s869
      %s889 = sphi 0, %s891
      %s892 = sphi 0, %s889
      %s893 = sphi 0, %s892
      %s909 = sphi 0, %s893
      %s915 = sphi 0, %s917
      %s918 = sphi 0, %s915
      %s919 = sphi 0, %s918
      %s935 = sphi 0, %s919
    $region4: #{tpu_custom_call.1} parent=1 // loop_header_branch
      %100 = sbr.rel (%p98) target = $region8
    $region5: #{tpu_custom_call.1} parent=1 // loop_body
      %s102 = ssub.s32 %s97, 1
      %s103 = ssub.s32 %s97, 2
      %s104 = sadd.s32 %s97, 1
      %s105 = ssub.s32 %s97, %s104
      %p106 = scmp.eq.s32.totalorder %s105, 0
      %s108 = sadd.s32 %s107, 1
      %s109 = scalar_select %p106, %s107, %s108
      %p112 = pneg %p106
      %p113 = scmp.eq.s32.totalorder %s97, 1
      %p114 = por %p112, %p113
      %p115 = scmp.ne.s32.totalorder %s107, %s110
      %p116 = scmp.eq.s32.totalorder %s97, 0
      %p117 = por %p115, %p116
      %p118 = scmp.ne.s32.totalorder %s107, %s110
      %p119 = scmp.eq.s32.totalorder %s102, 1
      %p120 = por %p118, %p119
      %p121 = scmp.ne.s32.totalorder %s110, %s111
      %p122 = scmp.eq.s32.totalorder %s102, 0
      %p123 = por %p121, %p122
      %p124 = scmp.ne.s32.totalorder %s110, %s111
      %p125 = scmp.eq.s32.totalorder %s103, 1
      %p126 = por %p124, %p125
      %p128 = scmp.ne.s32.totalorder %s111, %s127
      %p129 = scmp.eq.s32.totalorder %s103, 0
      %p130 = por %p128, %p129
      %s132 = sadd.s32 %s131, 1
      %p135 = scmp.eq.s32.totalorder %s97, 1
      %p136 = scmp.ne.s32.totalorder %s131, %s133
      %p137 = scmp.eq.s32.totalorder %s97, 0
      %p138 = por %p136, %p137
      %p139 = scmp.ne.s32.totalorder %s131, %s133
      %p140 = scmp.eq.s32.totalorder %s102, 1
      %p141 = por %p139, %p140
      %p142 = scmp.ne.s32.totalorder %s133, %s134
      %p143 = scmp.eq.s32.totalorder %s102, 0
      %p144 = por %p142, %p143
      %p145 = scmp.ne.s32.totalorder %s133, %s134
      %p146 = scmp.eq.s32.totalorder %s103, 1
      %p147 = por %p145, %p146
      %p149 = scmp.ne.s32.totalorder %s134, %s148
      %p150 = scmp.eq.s32.totalorder %s103, 0
      %p151 = por %p149, %p150
      %s153 = sadd.s32 %s152, 1
      %p156 = scmp.eq.s32.totalorder %s97, 1
      %p157 = scmp.ne.s32.totalorder %s152, %s154
      %p158 = scmp.eq.s32.totalorder %s97, 0
      %p159 = por %p157, %p158
      %p160 = scmp.ne.s32.totalorder %s152, %s154
      %p161 = scmp.eq.s32.totalorder %s102, 1
      %p162 = por %p160, %p161
      %p163 = scmp.ne.s32.totalorder %s154, %s155
      %p164 = scmp.eq.s32.totalorder %s102, 0
      %p165 = por %p163, %p164
      %p166 = scmp.ne.s32.totalorder %s154, %s155
      %p167 = scmp.eq.s32.totalorder %s103, 1
      %p168 = por %p166, %p167
      %p170 = scmp.ne.s32.totalorder %s155, %s169
      %p171 = scmp.eq.s32.totalorder %s103, 0
      %p172 = por %p170, %p171
      %s174 = sadd.s32 %s173, 1
      %p177 = scmp.eq.s32.totalorder %s97, 1
      %p178 = scmp.ne.s32.totalorder %s173, %s175
      %p179 = scmp.eq.s32.totalorder %s97, 0
      %p180 = por %p178, %p179
      %p181 = scmp.ne.s32.totalorder %s173, %s175
      %p182 = scmp.eq.s32.totalorder %s102, 1
      %p183 = por %p181, %p182
      %p184 = scmp.ne.s32.totalorder %s175, %s176
      %p185 = scmp.eq.s32.totalorder %s102, 0
      %p186 = por %p184, %p185
      %p187 = scmp.ne.s32.totalorder %s175, %s176
      %p188 = scmp.eq.s32.totalorder %s103, 1
      %p189 = por %p187, %p188
      %p191 = scmp.ne.s32.totalorder %s176, %s190
      %p192 = scmp.eq.s32.totalorder %s103, 0
      %p193 = por %p191, %p192
      %s195 = sadd.s32 %s194, 1
      %p198 = scmp.eq.s32.totalorder %s97, 1
      %p199 = scmp.ne.s32.totalorder %s194, %s196
      %p200 = scmp.eq.s32.totalorder %s97, 0
      %p201 = por %p199, %p200
      %p202 = scmp.ne.s32.totalorder %s194, %s196
      %p203 = scmp.eq.s32.totalorder %s102, 1
      %p204 = por %p202, %p203
      %p205 = scmp.ne.s32.totalorder %s196, %s197
      %p206 = scmp.eq.s32.totalorder %s102, 0
      %p207 = por %p205, %p206
      %p208 = scmp.ne.s32.totalorder %s196, %s197
      %p209 = scmp.eq.s32.totalorder %s103, 1
      %p210 = por %p208, %p209
      %p212 = scmp.ne.s32.totalorder %s197, %s211
      %p213 = scmp.eq.s32.totalorder %s103, 0
      %p214 = por %p212, %p213
      %s216 = sadd.s32 %s215, 1
      %p219 = scmp.eq.s32.totalorder %s97, 1
      %p220 = scmp.ne.s32.totalorder %s215, %s217
      %p221 = scmp.eq.s32.totalorder %s97, 0
      %p222 = por %p220, %p221
      %p223 = scmp.ne.s32.totalorder %s215, %s217
      %p224 = scmp.eq.s32.totalorder %s102, 1
      %p225 = por %p223, %p224
      %p226 = scmp.ne.s32.totalorder %s217, %s218
      %p227 = scmp.eq.s32.totalorder %s102, 0
      %p228 = por %p226, %p227
      %p229 = scmp.ne.s32.totalorder %s217, %s218
      %p230 = scmp.eq.s32.totalorder %s103, 1
      %p231 = por %p229, %p230
      %p233 = scmp.ne.s32.totalorder %s218, %s232
      %p234 = scmp.eq.s32.totalorder %s103, 0
      %p235 = por %p233, %p234
      %s237 = sadd.s32 %s236, 1
      %p240 = scmp.eq.s32.totalorder %s97, 1
      %p241 = scmp.ne.s32.totalorder %s236, %s238
      %p242 = scmp.eq.s32.totalorder %s97, 0
      %p243 = por %p241, %p242
      %p244 = scmp.ne.s32.totalorder %s236, %s238
      %p245 = scmp.eq.s32.totalorder %s102, 1
      %p246 = por %p244, %p245
      %p247 = scmp.ne.s32.totalorder %s238, %s239
      %p248 = scmp.eq.s32.totalorder %s102, 0
      %p249 = por %p247, %p248
      %p250 = scmp.ne.s32.totalorder %s238, %s239
      %p251 = scmp.eq.s32.totalorder %s103, 1
      %p252 = por %p250, %p251
      %p254 = scmp.ne.s32.totalorder %s239, %s253
      %p255 = scmp.eq.s32.totalorder %s103, 0
      %p256 = por %p254, %p255
      %s258 = sadd.s32 %s257, 1
      %p261 = scmp.eq.s32.totalorder %s97, 1
      %p262 = scmp.ne.s32.totalorder %s257, %s259
      %p263 = scmp.eq.s32.totalorder %s97, 0
      %p264 = por %p262, %p263
      %p265 = scmp.ne.s32.totalorder %s257, %s259
      %p266 = scmp.eq.s32.totalorder %s102, 1
      %p267 = por %p265, %p266
      %p268 = scmp.ne.s32.totalorder %s259, %s260
      %p269 = scmp.eq.s32.totalorder %s102, 0
      %p270 = por %p268, %p269
      %p271 = scmp.ne.s32.totalorder %s259, %s260
      %p272 = scmp.eq.s32.totalorder %s103, 1
      %p273 = por %p271, %p272
      %p275 = scmp.ne.s32.totalorder %s260, %s274
      %p276 = scmp.eq.s32.totalorder %s103, 0
      %p277 = por %p275, %p276
      %s279 = sadd.s32 %s278, 1
      %p282 = scmp.eq.s32.totalorder %s97, 1
      %p283 = scmp.ne.s32.totalorder %s278, %s280
      %p284 = scmp.eq.s32.totalorder %s97, 0
      %p285 = por %p283, %p284
      %p286 = scmp.ne.s32.totalorder %s278, %s280
      %p287 = scmp.eq.s32.totalorder %s102, 1
      %p288 = por %p286, %p287
      %p289 = scmp.ne.s32.totalorder %s280, %s281
      %p290 = scmp.eq.s32.totalorder %s102, 0
      %p291 = por %p289, %p290
      %p292 = scmp.ne.s32.totalorder %s280, %s281
      %p293 = scmp.eq.s32.totalorder %s103, 1
      %p294 = por %p292, %p293
      %p296 = scmp.ne.s32.totalorder %s281, %s295
      %p297 = scmp.eq.s32.totalorder %s103, 0
      %p298 = por %p296, %p297
      %s300 = sadd.s32 %s299, 1
      %p303 = scmp.eq.s32.totalorder %s97, 1
      %p304 = scmp.ne.s32.totalorder %s299, %s301
      %p305 = scmp.eq.s32.totalorder %s97, 0
      %p306 = por %p304, %p305
      %p307 = scmp.ne.s32.totalorder %s299, %s301
      %p308 = scmp.eq.s32.totalorder %s102, 1
      %p309 = por %p307, %p308
      %p310 = scmp.ne.s32.totalorder %s301, %s302
      %p311 = scmp.eq.s32.totalorder %s102, 0
      %p312 = por %p310, %p311
      %p313 = scmp.ne.s32.totalorder %s301, %s302
      %p314 = scmp.eq.s32.totalorder %s103, 1
      %p315 = por %p313, %p314
      %p317 = scmp.ne.s32.totalorder %s302, %s316
      %p318 = scmp.eq.s32.totalorder %s103, 0
      %p319 = por %p317, %p318
      %s321 = sadd.s32 %s320, 1
      %p324 = scmp.eq.s32.totalorder %s97, 1
      %p325 = scmp.ne.s32.totalorder %s320, %s322
      %p326 = scmp.eq.s32.totalorder %s97, 0
      %p327 = por %p325, %p326
      %p328 = scmp.ne.s32.totalorder %s320, %s322
      %p329 = scmp.eq.s32.totalorder %s102, 1
      %p330 = por %p328, %p329
      %p331 = scmp.ne.s32.totalorder %s322, %s323
      %p332 = scmp.eq.s32.totalorder %s102, 0
      %p333 = por %p331, %p332
      %p334 = scmp.ne.s32.totalorder %s322, %s323
      %p335 = scmp.eq.s32.totalorder %s103, 1
      %p336 = por %p334, %p335
      %p338 = scmp.ne.s32.totalorder %s323, %s337
      %p339 = scmp.eq.s32.totalorder %s103, 0
      %p340 = por %p338, %p339
      %s342 = sadd.s32 %s341, 1
      %p345 = scmp.eq.s32.totalorder %s97, 1
      %p346 = scmp.ne.s32.totalorder %s341, %s343
      %p347 = scmp.eq.s32.totalorder %s97, 0
      %p348 = por %p346, %p347
      %p349 = scmp.ne.s32.totalorder %s341, %s343
      %p350 = scmp.eq.s32.totalorder %s102, 1
      %p351 = por %p349, %p350
      %p352 = scmp.ne.s32.totalorder %s343, %s344
      %p353 = scmp.eq.s32.totalorder %s102, 0
      %p354 = por %p352, %p353
      %p355 = scmp.ne.s32.totalorder %s343, %s344
      %p356 = scmp.eq.s32.totalorder %s103, 1
      %p357 = por %p355, %p356
      %p359 = scmp.ne.s32.totalorder %s344, %s358
      %p360 = scmp.eq.s32.totalorder %s103, 0
      %p361 = por %p359, %p360
      %s363 = sadd.s32 %s362, 1
      %p366 = scmp.eq.s32.totalorder %s97, 1
      %p367 = scmp.ne.s32.totalorder %s362, %s364
      %p368 = scmp.eq.s32.totalorder %s97, 0
      %p369 = por %p367, %p368
      %p370 = scmp.ne.s32.totalorder %s362, %s364
      %p371 = scmp.eq.s32.totalorder %s102, 1
      %p372 = por %p370, %p371
      %p373 = scmp.ne.s32.totalorder %s364, %s365
      %p374 = scmp.eq.s32.totalorder %s102, 0
      %p375 = por %p373, %p374
      %p376 = scmp.ne.s32.totalorder %s364, %s365
      %p377 = scmp.eq.s32.totalorder %s103, 1
      %p378 = por %p376, %p377
      %p380 = scmp.ne.s32.totalorder %s365, %s379
      %p381 = scmp.eq.s32.totalorder %s103, 0
      %p382 = por %p380, %p381
      %s384 = sadd.s32 %s383, 1
      %p387 = scmp.eq.s32.totalorder %s97, 1
      %p388 = scmp.ne.s32.totalorder %s383, %s385
      %p389 = scmp.eq.s32.totalorder %s97, 0
      %p390 = por %p388, %p389
      %p391 = scmp.ne.s32.totalorder %s383, %s385
      %p392 = scmp.eq.s32.totalorder %s102, 1
      %p393 = por %p391, %p392
      %p394 = scmp.ne.s32.totalorder %s385, %s386
      %p395 = scmp.eq.s32.totalorder %s102, 0
      %p396 = por %p394, %p395
      %p397 = scmp.ne.s32.totalorder %s385, %s386
      %p398 = scmp.eq.s32.totalorder %s103, 1
      %p399 = por %p397, %p398
      %p401 = scmp.ne.s32.totalorder %s386, %s400
      %p402 = scmp.eq.s32.totalorder %s103, 0
      %p403 = por %p401, %p402
      %s405 = sadd.s32 %s404, 1
      %p408 = scmp.eq.s32.totalorder %s97, 1
      %p409 = scmp.ne.s32.totalorder %s404, %s406
      %p410 = scmp.eq.s32.totalorder %s97, 0
      %p411 = por %p409, %p410
      %p412 = scmp.ne.s32.totalorder %s404, %s406
      %p413 = scmp.eq.s32.totalorder %s102, 1
      %p414 = por %p412, %p413
      %p415 = scmp.ne.s32.totalorder %s406, %s407
      %p416 = scmp.eq.s32.totalorder %s102, 0
      %p417 = por %p415, %p416
      %p418 = scmp.ne.s32.totalorder %s406, %s407
      %p419 = scmp.eq.s32.totalorder %s103, 1
      %p420 = por %p418, %p419
      %p422 = scmp.ne.s32.totalorder %s407, %s421
      %p423 = scmp.eq.s32.totalorder %s103, 0
      %p424 = por %p422, %p423
      %s426 = sadd.s32 %s425, 1
      %p429 = scmp.eq.s32.totalorder %s97, 1
      %p430 = scmp.ne.s32.totalorder %s425, %s427
      %p431 = scmp.eq.s32.totalorder %s97, 0
      %p432 = por %p430, %p431
      %p433 = scmp.ne.s32.totalorder %s425, %s427
      %p434 = scmp.eq.s32.totalorder %s102, 1
      %p435 = por %p433, %p434
      %p436 = scmp.ne.s32.totalorder %s427, %s428
      %p437 = scmp.eq.s32.totalorder %s102, 0
      %p438 = por %p436, %p437
      %p439 = scmp.ne.s32.totalorder %s427, %s428
      %p440 = scmp.eq.s32.totalorder %s103, 1
      %p441 = por %p439, %p440
      %p443 = scmp.ne.s32.totalorder %s428, %s442
      %p444 = scmp.eq.s32.totalorder %s103, 0
      %p445 = por %p443, %p444
      %s447 = sadd.s32 %s446, 1
      %p450 = scmp.eq.s32.totalorder %s97, 1
      %p451 = scmp.ne.s32.totalorder %s446, %s448
      %p452 = scmp.eq.s32.totalorder %s97, 0
      %p453 = por %p451, %p452
      %p454 = scmp.ne.s32.totalorder %s446, %s448
      %p455 = scmp.eq.s32.totalorder %s102, 1
      %p456 = por %p454, %p455
      %p457 = scmp.ne.s32.totalorder %s448, %s449
      %p458 = scmp.eq.s32.totalorder %s102, 0
      %p459 = por %p457, %p458
      %p460 = scmp.ne.s32.totalorder %s448, %s449
      %p461 = scmp.eq.s32.totalorder %s103, 1
      %p462 = por %p460, %p461
      %p464 = scmp.ne.s32.totalorder %s449, %s463
      %p465 = scmp.eq.s32.totalorder %s103, 0
      %p466 = por %p464, %p465
      %s468 = sadd.s32 %s467, 1
      %p471 = scmp.eq.s32.totalorder %s97, 1
      %p472 = scmp.ne.s32.totalorder %s467, %s469
      %p473 = scmp.eq.s32.totalorder %s97, 0
      %p474 = por %p472, %p473
      %p475 = scmp.ne.s32.totalorder %s467, %s469
      %p476 = scmp.eq.s32.totalorder %s102, 1
      %p477 = por %p475, %p476
      %p478 = scmp.ne.s32.totalorder %s469, %s470
      %p479 = scmp.eq.s32.totalorder %s102, 0
      %p480 = por %p478, %p479
      %p481 = scmp.ne.s32.totalorder %s469, %s470
      %p482 = scmp.eq.s32.totalorder %s103, 1
      %p483 = por %p481, %p482
      %p485 = scmp.ne.s32.totalorder %s470, %s484
      %p486 = scmp.eq.s32.totalorder %s103, 0
      %p487 = por %p485, %p486
      %s489 = sadd.s32 %s488, 1
      %p492 = scmp.eq.s32.totalorder %s97, 1
      %p493 = scmp.ne.s32.totalorder %s488, %s490
      %p494 = scmp.eq.s32.totalorder %s97, 0
      %p495 = por %p493, %p494
      %p496 = scmp.ne.s32.totalorder %s488, %s490
      %p497 = scmp.eq.s32.totalorder %s102, 1
      %p498 = por %p496, %p497
      %p499 = scmp.ne.s32.totalorder %s490, %s491
      %p500 = scmp.eq.s32.totalorder %s102, 0
      %p501 = por %p499, %p500
      %p502 = scmp.ne.s32.totalorder %s490, %s491
      %p503 = scmp.eq.s32.totalorder %s103, 1
      %p504 = por %p502, %p503
      %p506 = scmp.ne.s32.totalorder %s491, %s505
      %p507 = scmp.eq.s32.totalorder %s103, 0
      %p508 = por %p506, %p507
      %s510 = sadd.s32 %s509, 1
      %p513 = scmp.eq.s32.totalorder %s97, 1
      %p514 = scmp.ne.s32.totalorder %s509, %s511
      %p515 = scmp.eq.s32.totalorder %s97, 0
      %p516 = por %p514, %p515
      %p517 = scmp.ne.s32.totalorder %s509, %s511
      %p518 = scmp.eq.s32.totalorder %s102, 1
      %p519 = por %p517, %p518
      %p520 = scmp.ne.s32.totalorder %s511, %s512
      %p521 = scmp.eq.s32.totalorder %s102, 0
      %p522 = por %p520, %p521
      %p523 = scmp.ne.s32.totalorder %s511, %s512
      %p524 = scmp.eq.s32.totalorder %s103, 1
      %p525 = por %p523, %p524
      %p527 = scmp.ne.s32.totalorder %s512, %s526
      %p528 = scmp.eq.s32.totalorder %s103, 0
      %p529 = por %p527, %p528
      %s531 = sadd.s32 %s530, 1
      %p534 = scmp.eq.s32.totalorder %s97, 1
      %p535 = scmp.ne.s32.totalorder %s530, %s532
      %p536 = scmp.eq.s32.totalorder %s97, 0
      %p537 = por %p535, %p536
      %p538 = scmp.ne.s32.totalorder %s530, %s532
      %p539 = scmp.eq.s32.totalorder %s102, 1
      %p540 = por %p538, %p539
      %p541 = scmp.ne.s32.totalorder %s532, %s533
      %p542 = scmp.eq.s32.totalorder %s102, 0
      %p543 = por %p541, %p542
      %p544 = scmp.ne.s32.totalorder %s532, %s533
      %p545 = scmp.eq.s32.totalorder %s103, 1
      %p546 = por %p544, %p545
      %p548 = scmp.ne.s32.totalorder %s533, %s547
      %p549 = scmp.eq.s32.totalorder %s103, 0
      %p550 = por %p548, %p549
      %s552 = sadd.s32 %s551, 1
      %p555 = scmp.eq.s32.totalorder %s97, 1
      %p556 = scmp.ne.s32.totalorder %s551, %s553
      %p557 = scmp.eq.s32.totalorder %s97, 0
      %p558 = por %p556, %p557
      %p559 = scmp.ne.s32.totalorder %s551, %s553
      %p560 = scmp.eq.s32.totalorder %s102, 1
      %p561 = por %p559, %p560
      %p562 = scmp.ne.s32.totalorder %s553, %s554
      %p563 = scmp.eq.s32.totalorder %s102, 0
      %p564 = por %p562, %p563
      %p565 = scmp.ne.s32.totalorder %s553, %s554
      %p566 = scmp.eq.s32.totalorder %s103, 1
      %p567 = por %p565, %p566
      %p569 = scmp.ne.s32.totalorder %s554, %s568
      %p570 = scmp.eq.s32.totalorder %s103, 0
      %p571 = por %p569, %p570
      %s573 = sadd.s32 %s572, 1
      %p576 = scmp.eq.s32.totalorder %s97, 1
      %p577 = scmp.ne.s32.totalorder %s572, %s574
      %p578 = scmp.eq.s32.totalorder %s97, 0
      %p579 = por %p577, %p578
      %p580 = scmp.ne.s32.totalorder %s572, %s574
      %p581 = scmp.eq.s32.totalorder %s102, 1
      %p582 = por %p580, %p581
      %p583 = scmp.ne.s32.totalorder %s574, %s575
      %p584 = scmp.eq.s32.totalorder %s102, 0
      %p585 = por %p583, %p584
      %p586 = scmp.ne.s32.totalorder %s574, %s575
      %p587 = scmp.eq.s32.totalorder %s103, 1
      %p588 = por %p586, %p587
      %p590 = scmp.ne.s32.totalorder %s575, %s589
      %p591 = scmp.eq.s32.totalorder %s103, 0
      %p592 = por %p590, %p591
      %s594 = sadd.s32 %s593, 1
      %p597 = scmp.eq.s32.totalorder %s97, 1
      %p598 = scmp.ne.s32.totalorder %s593, %s595
      %p599 = scmp.eq.s32.totalorder %s97, 0
      %p600 = por %p598, %p599
      %p601 = scmp.ne.s32.totalorder %s593, %s595
      %p602 = scmp.eq.s32.totalorder %s102, 1
      %p603 = por %p601, %p602
      %p604 = scmp.ne.s32.totalorder %s595, %s596
      %p605 = scmp.eq.s32.totalorder %s102, 0
      %p606 = por %p604, %p605
      %p607 = scmp.ne.s32.totalorder %s595, %s596
      %p608 = scmp.eq.s32.totalorder %s103, 1
      %p609 = por %p607, %p608
      %p611 = scmp.ne.s32.totalorder %s596, %s610
      %p612 = scmp.eq.s32.totalorder %s103, 0
      %p613 = por %p611, %p612
      %s615 = sadd.s32 %s614, 1
      %p618 = scmp.eq.s32.totalorder %s97, 1
      %p619 = scmp.ne.s32.totalorder %s614, %s616
      %p620 = scmp.eq.s32.totalorder %s97, 0
      %p621 = por %p619, %p620
      %p622 = scmp.ne.s32.totalorder %s614, %s616
      %p623 = scmp.eq.s32.totalorder %s102, 1
      %p624 = por %p622, %p623
      %p625 = scmp.ne.s32.totalorder %s616, %s617
      %p626 = scmp.eq.s32.totalorder %s102, 0
      %p627 = por %p625, %p626
      %p628 = scmp.ne.s32.totalorder %s616, %s617
      %p629 = scmp.eq.s32.totalorder %s103, 1
      %p630 = por %p628, %p629
      %p632 = scmp.ne.s32.totalorder %s617, %s631
      %p633 = scmp.eq.s32.totalorder %s103, 0
      %p634 = por %p632, %p633
      %s636 = sadd.s32 %s635, 1
      %p639 = scmp.eq.s32.totalorder %s97, 1
      %p640 = scmp.ne.s32.totalorder %s635, %s637
      %p641 = scmp.eq.s32.totalorder %s97, 0
      %p642 = por %p640, %p641
      %p643 = scmp.ne.s32.totalorder %s635, %s637
      %p644 = scmp.eq.s32.totalorder %s102, 1
      %p645 = por %p643, %p644
      %p646 = scmp.ne.s32.totalorder %s637, %s638
      %p647 = scmp.eq.s32.totalorder %s102, 0
      %p648 = por %p646, %p647
      %p649 = scmp.ne.s32.totalorder %s637, %s638
      %p650 = scmp.eq.s32.totalorder %s103, 1
      %p651 = por %p649, %p650
      %p653 = scmp.ne.s32.totalorder %s638, %s652
      %p654 = scmp.eq.s32.totalorder %s103, 0
      %p655 = por %p653, %p654
      %s657 = sadd.s32 %s656, 1
      %p660 = scmp.eq.s32.totalorder %s97, 1
      %p661 = scmp.ne.s32.totalorder %s656, %s658
      %p662 = scmp.eq.s32.totalorder %s97, 0
      %p663 = por %p661, %p662
      %p664 = scmp.ne.s32.totalorder %s656, %s658
      %p665 = scmp.eq.s32.totalorder %s102, 1
      %p666 = por %p664, %p665
      %p667 = scmp.ne.s32.totalorder %s658, %s659
      %p668 = scmp.eq.s32.totalorder %s102, 0
      %p669 = por %p667, %p668
      %p670 = scmp.ne.s32.totalorder %s658, %s659
      %p671 = scmp.eq.s32.totalorder %s103, 1
      %p672 = por %p670, %p671
      %p674 = scmp.ne.s32.totalorder %s659, %s673
      %p675 = scmp.eq.s32.totalorder %s103, 0
      %p676 = por %p674, %p675
      %s678 = sadd.s32 %s677, 1
      %p681 = scmp.eq.s32.totalorder %s97, 1
      %p682 = scmp.ne.s32.totalorder %s677, %s679
      %p683 = scmp.eq.s32.totalorder %s97, 0
      %p684 = por %p682, %p683
      %p685 = scmp.ne.s32.totalorder %s677, %s679
      %p686 = scmp.eq.s32.totalorder %s102, 1
      %p687 = por %p685, %p686
      %p688 = scmp.ne.s32.totalorder %s679, %s680
      %p689 = scmp.eq.s32.totalorder %s102, 0
      %p690 = por %p688, %p689
      %p691 = scmp.ne.s32.totalorder %s679, %s680
      %p692 = scmp.eq.s32.totalorder %s103, 1
      %p693 = por %p691, %p692
      %p695 = scmp.ne.s32.totalorder %s680, %s694
      %p696 = scmp.eq.s32.totalorder %s103, 0
      %p697 = por %p695, %p696
      %s699 = sadd.s32 %s698, 1
      %p702 = scmp.eq.s32.totalorder %s97, 1
      %p703 = scmp.ne.s32.totalorder %s698, %s700
      %p704 = scmp.eq.s32.totalorder %s97, 0
      %p705 = por %p703, %p704
      %p706 = scmp.ne.s32.totalorder %s698, %s700
      %p707 = scmp.eq.s32.totalorder %s102, 1
      %p708 = por %p706, %p707
      %p709 = scmp.ne.s32.totalorder %s700, %s701
      %p710 = scmp.eq.s32.totalorder %s102, 0
      %p711 = por %p709, %p710
      %p712 = scmp.ne.s32.totalorder %s700, %s701
      %p713 = scmp.eq.s32.totalorder %s103, 1
      %p714 = por %p712, %p713
      %p716 = scmp.ne.s32.totalorder %s701, %s715
      %p717 = scmp.eq.s32.totalorder %s103, 0
      %p718 = por %p716, %p717
      %s720 = sadd.s32 %s719, 1
      %p723 = scmp.eq.s32.totalorder %s97, 1
      %p724 = scmp.ne.s32.totalorder %s719, %s721
      %p725 = scmp.eq.s32.totalorder %s97, 0
      %p726 = por %p724, %p725
      %p727 = scmp.ne.s32.totalorder %s719, %s721
      %p728 = scmp.eq.s32.totalorder %s102, 1
      %p729 = por %p727, %p728
      %p730 = scmp.ne.s32.totalorder %s721, %s722
      %p731 = scmp.eq.s32.totalorder %s102, 0
      %p732 = por %p730, %p731
      %p733 = scmp.ne.s32.totalorder %s721, %s722
      %p734 = scmp.eq.s32.totalorder %s103, 1
      %p735 = por %p733, %p734
      %p737 = scmp.ne.s32.totalorder %s722, %s736
      %p738 = scmp.eq.s32.totalorder %s103, 0
      %p739 = por %p737, %p738
      %s741 = sadd.s32 %s740, 1
      %p744 = scmp.eq.s32.totalorder %s97, 1
      %p745 = scmp.ne.s32.totalorder %s740, %s742
      %p746 = scmp.eq.s32.totalorder %s97, 0
      %p747 = por %p745, %p746
      %p748 = scmp.ne.s32.totalorder %s740, %s742
      %p749 = scmp.eq.s32.totalorder %s102, 1
      %p750 = por %p748, %p749
      %p751 = scmp.ne.s32.totalorder %s742, %s743
      %p752 = scmp.eq.s32.totalorder %s102, 0
      %p753 = por %p751, %p752
      %p754 = scmp.ne.s32.totalorder %s742, %s743
      %p755 = scmp.eq.s32.totalorder %s103, 1
      %p756 = por %p754, %p755
      %p758 = scmp.ne.s32.totalorder %s743, %s757
      %p759 = scmp.eq.s32.totalorder %s103, 0
      %p760 = por %p758, %p759
      %s762 = sadd.s32 %s761, 1
      %p765 = scmp.eq.s32.totalorder %s97, 1
      %p766 = scmp.ne.s32.totalorder %s761, %s763
      %p767 = scmp.eq.s32.totalorder %s97, 0
      %p768 = por %p766, %p767
      %p769 = scmp.ne.s32.totalorder %s761, %s763
      %p770 = scmp.eq.s32.totalorder %s102, 1
      %p771 = por %p769, %p770
      %p772 = scmp.ne.s32.totalorder %s763, %s764
      %p773 = scmp.eq.s32.totalorder %s102, 0
      %p774 = por %p772, %p773
      %p775 = scmp.ne.s32.totalorder %s763, %s764
      %p776 = scmp.eq.s32.totalorder %s103, 1
      %p777 = por %p775, %p776
      %p779 = scmp.ne.s32.totalorder %s764, %s778
      %p780 = scmp.eq.s32.totalorder %s103, 0
      %p781 = por %p779, %p780
      %s783 = sadd.s32 %s782, 1
      %p786 = scmp.eq.s32.totalorder %s97, 1
      %p787 = scmp.ne.s32.totalorder %s782, %s784
      %p788 = scmp.eq.s32.totalorder %s97, 0
      %p789 = por %p787, %p788
      %p790 = scmp.ne.s32.totalorder %s782, %s784
      %p791 = scmp.eq.s32.totalorder %s102, 1
      %p792 = por %p790, %p791
      %p793 = scmp.ne.s32.totalorder %s784, %s785
      %p794 = scmp.eq.s32.totalorder %s102, 0
      %p795 = por %p793, %p794
      %p796 = scmp.ne.s32.totalorder %s784, %s785
      %p797 = scmp.eq.s32.totalorder %s103, 1
      %p798 = por %p796, %p797
      %p800 = scmp.ne.s32.totalorder %s785, %s799
      %p801 = scmp.eq.s32.totalorder %s103, 0
      %p802 = por %p800, %p801
      %s804 = sadd.s32 %s803, 1
      %p807 = scmp.eq.s32.totalorder %s97, 1
      %p808 = scmp.ne.s32.totalorder %s803, %s805
      %p809 = scmp.eq.s32.totalorder %s97, 0
      %p810 = por %p808, %p809
      %p811 = scmp.ne.s32.totalorder %s803, %s805
      %p812 = scmp.eq.s32.totalorder %s102, 1
      %p813 = por %p811, %p812
      %p814 = scmp.ne.s32.totalorder %s805, %s806
      %p815 = scmp.eq.s32.totalorder %s102, 0
      %p816 = por %p814, %p815
      %p817 = scmp.ne.s32.totalorder %s805, %s806
      %p818 = scmp.eq.s32.totalorder %s103, 1
      %p819 = por %p817, %p818
      %p821 = scmp.ne.s32.totalorder %s806, %s820
      %p822 = scmp.eq.s32.totalorder %s103, 0
      %p823 = por %p821, %p822
      %s825 = sadd.s32 %s824, 1
      %p828 = scmp.eq.s32.totalorder %s97, 1
      %p829 = scmp.ne.s32.totalorder %s824, %s826
      %p830 = scmp.eq.s32.totalorder %s97, 0
      %p831 = por %p829, %p830
      %p832 = scmp.ne.s32.totalorder %s824, %s826
      %p833 = scmp.eq.s32.totalorder %s102, 1
      %p834 = por %p832, %p833
      %p835 = scmp.ne.s32.totalorder %s826, %s827
      %p836 = scmp.eq.s32.totalorder %s102, 0
      %p837 = por %p835, %p836
      %p838 = scmp.ne.s32.totalorder %s826, %s827
      %p839 = scmp.eq.s32.totalorder %s103, 1
      %p840 = por %p838, %p839
      %p842 = scmp.ne.s32.totalorder %s827, %s841
      %p843 = scmp.eq.s32.totalorder %s103, 0
      %p844 = por %p842, %p843
      %s846 = sadd.s32 %s845, 1
      %p849 = scmp.eq.s32.totalorder %s97, 1
      %p850 = scmp.ne.s32.totalorder %s845, %s847
      %p851 = scmp.eq.s32.totalorder %s97, 0
      %p852 = por %p850, %p851
      %p853 = scmp.ne.s32.totalorder %s845, %s847
      %p854 = scmp.eq.s32.totalorder %s102, 1
      %p855 = por %p853, %p854
      %p856 = scmp.ne.s32.totalorder %s847, %s848
      %p857 = scmp.eq.s32.totalorder %s102, 0
      %p858 = por %p856, %p857
      %p859 = scmp.ne.s32.totalorder %s847, %s848
      %p860 = scmp.eq.s32.totalorder %s103, 1
      %p861 = por %p859, %p860
      %p863 = scmp.ne.s32.totalorder %s848, %s862
      %p864 = scmp.eq.s32.totalorder %s103, 0
      %p865 = por %p863, %p864
      %s867 = sadd.s32 %s866, 1
      %p870 = scmp.eq.s32.totalorder %s97, 1
      %p871 = scmp.ne.s32.totalorder %s866, %s868
      %p872 = scmp.eq.s32.totalorder %s97, 0
      %p873 = por %p871, %p872
      %p874 = scmp.ne.s32.totalorder %s866, %s868
      %p875 = scmp.eq.s32.totalorder %s102, 1
      %p876 = por %p874, %p875
      %p877 = scmp.ne.s32.totalorder %s868, %s869
      %p878 = scmp.eq.s32.totalorder %s102, 0
      %p879 = por %p877, %p878
      %p880 = scmp.ne.s32.totalorder %s868, %s869
      %p881 = scmp.eq.s32.totalorder %s103, 1
      %p882 = por %p880, %p881
      %p884 = scmp.ne.s32.totalorder %s869, %s883
      %p885 = scmp.eq.s32.totalorder %s103, 0
      %p886 = por %p884, %p885
      %s887 = ssub.s32 %s97, %s104
      %p888 = scmp.eq.s32.totalorder %s887, 0
      %s890 = sadd.s32 %s889, 1
      %s891 = scalar_select %p888, %s889, %s890
      %p894 = pneg %p888
      %p895 = scmp.eq.s32.totalorder %s97, 1
      %p896 = por %p894, %p895
      %p897 = scmp.ne.s32.totalorder %s889, %s892
      %p898 = scmp.eq.s32.totalorder %s97, 0
      %p899 = por %p897, %p898
      %p900 = scmp.ne.s32.totalorder %s889, %s892
      %p901 = scmp.eq.s32.totalorder %s102, 1
      %p902 = por %p900, %p901
      %p903 = scmp.ne.s32.totalorder %s892, %s893
      %p904 = scmp.eq.s32.totalorder %s102, 0
      %p905 = por %p903, %p904
      %p906 = scmp.ne.s32.totalorder %s892, %s893
      %p907 = scmp.eq.s32.totalorder %s103, 1
      %p908 = por %p906, %p907
      %p910 = scmp.ne.s32.totalorder %s893, %s909
      %p911 = scmp.eq.s32.totalorder %s103, 0
      %p912 = por %p910, %p911
      %s913 = ssub.s32 %s97, %s104
      %p914 = scmp.eq.s32.totalorder %s913, 0
      %s916 = sadd.s32 %s915, 1
      %s917 = scalar_select %p914, %s915, %s916
      %p920 = pneg %p914
      %p921 = scmp.eq.s32.totalorder %s97, 1
      %p922 = por %p920, %p921
      %p923 = scmp.ne.s32.totalorder %s915, %s918
      %p924 = scmp.eq.s32.totalorder %s97, 0
      %p925 = por %p923, %p924
      %p926 = scmp.ne.s32.totalorder %s915, %s918
      %p927 = scmp.eq.s32.totalorder %s102, 1
      %p928 = por %p926, %p927
      %p929 = scmp.ne.s32.totalorder %s918, %s919
      %p930 = scmp.eq.s32.totalorder %s102, 0
      %p931 = por %p929, %p930
      %p932 = scmp.ne.s32.totalorder %s918, %s919
      %p933 = scmp.eq.s32.totalorder %s103, 1
      %p934 = por %p932, %p933
      %p936 = scmp.ne.s32.totalorder %s919, %s935
      %p937 = scmp.eq.s32.totalorder %s103, 0
      %p938 = por %p936, %p937
      %p939 = scmp.le.s32.totalorder 1, %s97
      %p940 = scmp.lt.s32.totalorder %s97, 3
      %p941 = pnand %p939, %p940
      %p942 = pneg %p941
      // Predicated region
      $region9: #{tpu_custom_call.1} parent=5 // pred_check
        _
      $region10: #{tpu_custom_call.1} parent=5 // pred_check_branch
        %944 = sbr.rel (%p941) target = $region12
      $region11: #{tpu_custom_call.1} parent=5 // pred_region
        %s945 = ssub.s32 %s97, 1
        // Predicated region
        $region13: #{tpu_custom_call.1} parent=11 // pred_check
          %p946 = pneg %p144
        $region14: #{tpu_custom_call.1} parent=11 // pred_check_branch
          %948 = sbr.rel (%p946) target = $region16
        $region15: #{tpu_custom_call.1} parent=11 // pred_region
          _
        $region16: #{tpu_custom_call.1} parent=11 // pred_fallthru
          _
        // Predicated region
        $region17: #{tpu_custom_call.1} parent=11 // pred_check
          %p949 = pneg %p165
        $region18: #{tpu_custom_call.1} parent=11 // pred_check_branch
          %951 = sbr.rel (%p949) target = $region20
        $region19: #{tpu_custom_call.1} parent=11 // pred_region
          _
        $region20: #{tpu_custom_call.1} parent=11 // pred_fallthru
          _
        // Predicated region
        $region21: #{tpu_custom_call.1} parent=11 // pred_check
          %p952 = pneg %p186
        $region22: #{tpu_custom_call.1} parent=11 // pred_check_branch
          %954 = sbr.rel (%p952) target = $region24
        $region23: #{tpu_custom_call.1} parent=11 // pred_region
          _
        $region24: #{tpu_custom_call.1} parent=11 // pred_fallthru
          _
        // Predicated region
        $region25: #{tpu_custom_call.1} parent=11 // pred_check
          %p955 = pneg %p207
        $region26: #{tpu_custom_call.1} parent=11 // pred_check_branch
          %957 = sbr.rel (%p955) target = $region28
        $region27: #{tpu_custom_call.1} parent=11 // pred_region
          _
        $region28: #{tpu_custom_call.1} parent=11 // pred_fallthru
          _
        // Predicated region
        $region29: #{tpu_custom_call.1} parent=11 // pred_check
          %p958 = pneg %p228
        $region30: #{tpu_custom_call.1} parent=11 // pred_check_branch
          %960 = sbr.rel (%p958) target = $region32
        $region31: #{tpu_custom_call.1} parent=11 // pred_region
          %s962 = ssub.s32 16, 16
          %963 = vsyncadd [#allocation3], %s962
          %s965 = sshll.u32 [#allocation2], 4
          %s966 = int_to_ptr.vmem [resolvable:$true] %s965
          %968 = dma.hbm_to_vmem [thread:$0]  %s11, 16, %s966, [#allocation3]
        $region32: #{tpu_custom_call.1} parent=11 // pred_fallthru
          _
        // Predicated region
        $region33: #{tpu_custom_call.1} parent=11 // pred_check
          %p969 = pneg %p249
        $region34: #{tpu_custom_call.1} parent=11 // pred_check_branch
          %971 = sbr.rel (%p969) target = $region36
        $region35: #{tpu_custom_call.1} parent=11 // pred_region
          %s973 = ssub.s32 16, 16
          %974 = vsyncadd [#allocation6], %s973
          %s976 = sshll.u32 [#allocation5], 4
          %s977 = int_to_ptr.vmem [resolvable:$true] %s976
          %979 = dma.hbm_to_vmem [thread:$0]  %s13, 16, %s977, [#allocation6]
        $region36: #{tpu_custom_call.1} parent=11 // pred_fallthru
          _
        // Predicated region
        $region37: #{tpu_custom_call.1} parent=11 // pred_check
          %p980 = pneg %p270
        $region38: #{tpu_custom_call.1} parent=11 // pred_check_branch
          %982 = sbr.rel (%p980) target = $region40
        $region39: #{tpu_custom_call.1} parent=11 // pred_region
          _
        $region40: #{tpu_custom_call.1} parent=11 // pred_fallthru
          _
        // Predicated region
        $region41: #{tpu_custom_call.1} parent=11 // pred_check
          %p983 = pneg %p291
        $region42: #{tpu_custom_call.1} parent=11 // pred_check_branch
          %985 = sbr.rel (%p983) target = $region44
        $region43: #{tpu_custom_call.1} parent=11 // pred_region
          %s987 = ssub.s32 16, 16
          %988 = vsyncadd [#allocation6], %s987
          %s990 = sshll.u32 [#allocation7], 4
          %s991 = int_to_ptr.vmem [resolvable:$true] %s990
          %993 = dma.hbm_to_vmem [thread:$0]  %s17, 16, %s991, [#allocation6]
        $region44: #{tpu_custom_call.1} parent=11 // pred_fallthru
          _
        // Predicated region
        $region45: #{tpu_custom_call.1} parent=11 // pred_check
          %p994 = pneg %p312
        $region46: #{tpu_custom_call.1} parent=11 // pred_check_branch
          %996 = sbr.rel (%p994) target = $region48
        $region47: #{tpu_custom_call.1} parent=11 // pred_region
          _
        $region48: #{tpu_custom_call.1} parent=11 // pred_fallthru
          _
        // Predicated region
        $region49: #{tpu_custom_call.1} parent=11 // pred_check
          %p997 = pneg %p333
        $region50: #{tpu_custom_call.1} parent=11 // pred_check_branch
          %999 = sbr.rel (%p997) target = $region52
        $region51: #{tpu_custom_call.1} parent=11 // pred_region
          %s1001 = ssub.s32 16, 16
          %1002 = vsyncadd [#allocation9], %s1001
          %s1004 = sshll.u32 [#allocation8], 4
          %s1005 = int_to_ptr.vmem [resolvable:$true] %s1004
          %1007 = dma.hbm_to_vmem [thread:$0]  %s21, 16, %s1005, [#allocation9]
        $region52: #{tpu_custom_call.1} parent=11 // pred_fallthru
          _
        // Predicated region
        $region53: #{tpu_custom_call.1} parent=11 // pred_check
          %p1008 = pneg %p354
        $region54: #{tpu_custom_call.1} parent=11 // pred_check_branch
          %1010 = sbr.rel (%p1008) target = $region56
        $region55: #{tpu_custom_call.1} parent=11 // pred_region
          %s1012 = ssub.s32 16, 16
          %1013 = vsyncadd [#allocation9], %s1012
          %s1015 = sshll.u32 [#allocation10], 4
          %s1016 = int_to_ptr.vmem [resolvable:$true] %s1015
          %1018 = dma.hbm_to_vmem [thread:$0]  %s23, 16, %s1016, [#allocation9]
        $region56: #{tpu_custom_call.1} parent=11 // pred_fallthru
          _
        // Predicated region
        $region57: #{tpu_custom_call.1} parent=11 // pred_check
          %p1019 = pneg %p375
        $region58: #{tpu_custom_call.1} parent=11 // pred_check_branch
          %1021 = sbr.rel (%p1019) target = $region60
        $region59: #{tpu_custom_call.1} parent=11 // pred_region
          %s1023 = ssub.s32 16, 16
          %1024 = vsyncadd [#allocation12], %s1023
          %s1026 = sshll.u32 [#allocation11], 4
          %s1027 = int_to_ptr.vmem [resolvable:$true] %s1026
          %1029 = dma.hbm_to_vmem [thread:$0]  %s25, 16, %s1027, [#allocation12]
        $region60: #{tpu_custom_call.1} parent=11 // pred_fallthru
          _
        // Predicated region
        $region61: #{tpu_custom_call.1} parent=11 // pred_check
          %p1030 = pneg %p396
        $region62: #{tpu_custom_call.1} parent=11 // pred_check_branch
          %1032 = sbr.rel (%p1030) target = $region64
        $region63: #{tpu_custom_call.1} parent=11 // pred_region
          _
        $region64: #{tpu_custom_call.1} parent=11 // pred_fallthru
          _
        // Predicated region
        $region65: #{tpu_custom_call.1} parent=11 // pred_check
          %p1033 = pneg %p417
        $region66: #{tpu_custom_call.1} parent=11 // pred_check_branch
          %1035 = sbr.rel (%p1033) target = $region68
        $region67: #{tpu_custom_call.1} parent=11 // pred_region
          _
        $region68: #{tpu_custom_call.1} parent=11 // pred_fallthru
          _
        // Predicated region
        $region69: #{tpu_custom_call.1} parent=11 // pred_check
          %p1036 = pneg %p438
        $region70: #{tpu_custom_call.1} parent=11 // pred_check_branch
          %1038 = sbr.rel (%p1036) target = $region72
        $region71: #{tpu_custom_call.1} parent=11 // pred_region
          %s1040 = ssub.s32 128, 128
          %1041 = vsyncadd [#allocation12], %s1040
          %s1043 = sshll.u32 [#allocation13], 4
          %s1044 = int_to_ptr.vmem [resolvable:$true] %s1043
          %1046 = dma.hbm_to_vmem [thread:$0]  %s31, 128, %s1044, [#allocation12]
        $region72: #{tpu_custom_call.1} parent=11 // pred_fallthru
          _
        // Predicated region
        $region73: #{tpu_custom_call.1} parent=11 // pred_check
          %p1047 = pneg %p459
        $region74: #{tpu_custom_call.1} parent=11 // pred_check_branch
          %1049 = sbr.rel (%p1047) target = $region76
        $region75: #{tpu_custom_call.1} parent=11 // pred_region
          %s1051 = ssub.s32 16, 16
          %1052 = vsyncadd [#allocation15], %s1051
          %s1054 = sshll.u32 [#allocation14], 4
          %s1055 = int_to_ptr.vmem [resolvable:$true] %s1054
          %1057 = dma.hbm_to_vmem [thread:$0]  %s33, 16, %s1055, [#allocation15]
        $region76: #{tpu_custom_call.1} parent=11 // pred_fallthru
          _
        // Predicated region
        $region77: #{tpu_custom_call.1} parent=11 // pred_check
          %p1058 = pneg %p480
        $region78: #{tpu_custom_call.1} parent=11 // pred_check_branch
          %1060 = sbr.rel (%p1058) target = $region80
        $region79: #{tpu_custom_call.1} parent=11 // pred_region
          _
        $region80: #{tpu_custom_call.1} parent=11 // pred_fallthru
          _
        // Predicated region
        $region81: #{tpu_custom_call.1} parent=11 // pred_check
          %p1061 = pneg %p501
        $region82: #{tpu_custom_call.1} parent=11 // pred_check_branch
          %1063 = sbr.rel (%p1061) target = $region84
        $region83: #{tpu_custom_call.1} parent=11 // pred_region
          %s1065 = ssub.s32 16, 16
          %1066 = vsyncadd [#allocation15], %s1065
          %s1068 = sshll.u32 [#allocation16], 4
          %s1069 = int_to_ptr.vmem [resolvable:$true] %s1068
          %1071 = dma.hbm_to_vmem [thread:$0]  %s37, 16, %s1069, [#allocation15]
        $region84: #{tpu_custom_call.1} parent=11 // pred_fallthru
          _
        // Predicated region
        $region85: #{tpu_custom_call.1} parent=11 // pred_check
          %p1072 = pneg %p522
        $region86: #{tpu_custom_call.1} parent=11 // pred_check_branch
          %1074 = sbr.rel (%p1072) target = $region88
        $region87: #{tpu_custom_call.1} parent=11 // pred_region
          _
        $region88: #{tpu_custom_call.1} parent=11 // pred_fallthru
          _
        // Predicated region
        $region89: #{tpu_custom_call.1} parent=11 // pred_check
          %p1075 = pneg %p543
        $region90: #{tpu_custom_call.1} parent=11 // pred_check_branch
          %1077 = sbr.rel (%p1075) target = $region92
        $region91: #{tpu_custom_call.1} parent=11 // pred_region
          %s1079 = ssub.s32 16, 16
          %1080 = vsyncadd [#allocation18], %s1079
          %s1082 = sshll.u32 [#allocation17], 4
          %s1083 = int_to_ptr.vmem [resolvable:$true] %s1082
          %1085 = dma.hbm_to_vmem [thread:$0]  %s41, 16, %s1083, [#allocation18]
        $region92: #{tpu_custom_call.1} parent=11 // pred_fallthru
          _
        // Predicated region
        $region93: #{tpu_custom_call.1} parent=11 // pred_check
          %p1086 = pneg %p564
        $region94: #{tpu_custom_call.1} parent=11 // pred_check_branch
          %1088 = sbr.rel (%p1086) target = $region96
        $region95: #{tpu_custom_call.1} parent=11 // pred_region
          _
        $region96: #{tpu_custom_call.1} parent=11 // pred_fallthru
          _
        // Predicated region
        $region97: #{tpu_custom_call.1} parent=11 // pred_check
          %p1089 = pneg %p585
        $region98: #{tpu_custom_call.1} parent=11 // pred_check_branch
          %1091 = sbr.rel (%p1089) target = $region100
        $region99: #{tpu_custom_call.1} parent=11 // pred_region
          %s1093 = ssub.s32 64, 64
          %1094 = vsyncadd [#allocation18], %s1093
          %s1096 = sshll.u32 [#allocation19], 4
          %s1097 = int_to_ptr.vmem [resolvable:$true] %s1096
          %1099 = dma.hbm_to_vmem [thread:$0]  %s45, 64, %s1097, [#allocation18]
        $region100: #{tpu_custom_call.1} parent=11 // pred_fallthru
          _
        // Predicated region
        $region101: #{tpu_custom_call.1} parent=11 // pred_check
          %p1100 = pneg %p606
        $region102: #{tpu_custom_call.1} parent=11 // pred_check_branch
          %1102 = sbr.rel (%p1100) target = $region104
        $region103: #{tpu_custom_call.1} parent=11 // pred_region
          %s1104 = ssub.s32 16, 16
          %1105 = vsyncadd [#allocation21], %s1104
          %s1107 = sshll.u32 [#allocation20], 4
          %s1108 = int_to_ptr.vmem [resolvable:$true] %s1107
          %1110 = dma.hbm_to_vmem [thread:$0]  %s47, 16, %s1108, [#allocation21]
        $region104: #{tpu_custom_call.1} parent=11 // pred_fallthru
          _
        // Predicated region
        $region105: #{tpu_custom_call.1} parent=11 // pred_check
          %p1111 = pneg %p627
        $region106: #{tpu_custom_call.1} parent=11 // pred_check_branch
          %1113 = sbr.rel (%p1111) target = $region108
        $region107: #{tpu_custom_call.1} parent=11 // pred_region
          %s1115 = ssub.s32 16, 16
          %1116 = vsyncadd [#allocation21], %s1115
          %s1118 = sshll.u32 [#allocation22], 4
          %s1119 = int_to_ptr.vmem [resolvable:$true] %s1118
          %1121 = dma.hbm_to_vmem [thread:$0]  %s49, 16, %s1119, [#allocation21]
        $region108: #{tpu_custom_call.1} parent=11 // pred_fallthru
          _
        // Predicated region
        $region109: #{tpu_custom_call.1} parent=11 // pred_check
          %p1122 = pneg %p648
        $region110: #{tpu_custom_call.1} parent=11 // pred_check_branch
          %1124 = sbr.rel (%p1122) target = $region112
        $region111: #{tpu_custom_call.1} parent=11 // pred_region
          _
        $region112: #{tpu_custom_call.1} parent=11 // pred_fallthru
          _
        // Predicated region
        $region113: #{tpu_custom_call.1} parent=11 // pred_check
          %p1125 = pneg %p669
        $region114: #{tpu_custom_call.1} parent=11 // pred_check_branch
          %1127 = sbr.rel (%p1125) target = $region116
        $region115: #{tpu_custom_call.1} parent=11 // pred_region
          _
        $region116: #{tpu_custom_call.1} parent=11 // pred_fallthru
          _
        // Predicated region
        $region117: #{tpu_custom_call.1} parent=11 // pred_check
          %p1128 = pneg %p690
        $region118: #{tpu_custom_call.1} parent=11 // pred_check_branch
          %1130 = sbr.rel (%p1128) target = $region120
        $region119: #{tpu_custom_call.1} parent=11 // pred_region
          _
        $region120: #{tpu_custom_call.1} parent=11 // pred_fallthru
          _
        // Predicated region
        $region121: #{tpu_custom_call.1} parent=11 // pred_check
          %p1131 = pneg %p711
        $region122: #{tpu_custom_call.1} parent=11 // pred_check_branch
          %1133 = sbr.rel (%p1131) target = $region124
        $region123: #{tpu_custom_call.1} parent=11 // pred_region
          _
        $region124: #{tpu_custom_call.1} parent=11 // pred_fallthru
          _
        // Predicated region
        $region125: #{tpu_custom_call.1} parent=11 // pred_check
          %p1134 = pneg %p732
        $region126: #{tpu_custom_call.1} parent=11 // pred_check_branch
          %1136 = sbr.rel (%p1134) target = $region128
        $region127: #{tpu_custom_call.1} parent=11 // pred_region
          _
        $region128: #{tpu_custom_call.1} parent=11 // pred_fallthru
          _
        // Predicated region
        $region129: #{tpu_custom_call.1} parent=11 // pred_check
          %p1137 = pneg %p753
        $region130: #{tpu_custom_call.1} parent=11 // pred_check_branch
          %1139 = sbr.rel (%p1137) target = $region132
        $region131: #{tpu_custom_call.1} parent=11 // pred_region
          _
        $region132: #{tpu_custom_call.1} parent=11 // pred_fallthru
          _
        // Predicated region
        $region133: #{tpu_custom_call.1} parent=11 // pred_check
          %p1140 = pneg %p774
        $region134: #{tpu_custom_call.1} parent=11 // pred_check_branch
          %1142 = sbr.rel (%p1140) target = $region136
        $region135: #{tpu_custom_call.1} parent=11 // pred_region
          _
        $region136: #{tpu_custom_call.1} parent=11 // pred_fallthru
          _
        // Predicated region
        $region137: #{tpu_custom_call.1} parent=11 // pred_check
          %p1143 = pneg %p795
        $region138: #{tpu_custom_call.1} parent=11 // pred_check_branch
          %1145 = sbr.rel (%p1143) target = $region140
        $region139: #{tpu_custom_call.1} parent=11 // pred_region
          _
        $region140: #{tpu_custom_call.1} parent=11 // pred_fallthru
          _
        // Predicated region
        $region141: #{tpu_custom_call.1} parent=11 // pred_check
          %p1146 = pneg %p816
        $region142: #{tpu_custom_call.1} parent=11 // pred_check_branch
          %1148 = sbr.rel (%p1146) target = $region144
        $region143: #{tpu_custom_call.1} parent=11 // pred_region
          _
        $region144: #{tpu_custom_call.1} parent=11 // pred_fallthru
          _
        // Predicated region
        $region145: #{tpu_custom_call.1} parent=11 // pred_check
          %p1149 = pneg %p837
        $region146: #{tpu_custom_call.1} parent=11 // pred_check_branch
          %1151 = sbr.rel (%p1149) target = $region148
        $region147: #{tpu_custom_call.1} parent=11 // pred_region
          _
        $region148: #{tpu_custom_call.1} parent=11 // pred_fallthru
          _
        // Predicated region
        $region149: #{tpu_custom_call.1} parent=11 // pred_check
          %p1152 = pneg %p858
        $region150: #{tpu_custom_call.1} parent=11 // pred_check_branch
          %1154 = sbr.rel (%p1152) target = $region152
        $region151: #{tpu_custom_call.1} parent=11 // pred_region
          _
        $region152: #{tpu_custom_call.1} parent=11 // pred_fallthru
          _
        // Predicated region
        $region153: #{tpu_custom_call.1} parent=11 // pred_check
          %p1155 = pneg %p879
        $region154: #{tpu_custom_call.1} parent=11 // pred_check_branch
          %1157 = sbr.rel (%p1155) target = $region156
        $region155: #{tpu_custom_call.1} parent=11 // pred_region
          _
        $region156: #{tpu_custom_call.1} parent=11 // pred_fallthru
          _
      $region12: #{tpu_custom_call.1} parent=5 // pred_fallthru
        _
      %p1158 = scmp.lt.s32.totalorder %s97, 2
      // Predicated region
      $region157: #{tpu_custom_call.1} parent=5 // pred_check
        %p1159 = pneg %p1158
      $region158: #{tpu_custom_call.1} parent=5 // pred_check_branch
        %1161 = sbr.rel (%p1159) target = $region160
      $region159: #{tpu_custom_call.1} parent=5 // pred_region
        // Predicated region
        $region161: #{tpu_custom_call.1} parent=159 // pred_check
          %p1162 = pneg %p117
        $region162: #{tpu_custom_call.1} parent=159 // pred_check_branch
          %1164 = sbr.rel (%p1162) target = $region164
        $region163: #{tpu_custom_call.1} parent=159 // pred_region
          %p1165 = scmp.lt.s32.totalorder %s97, 1
          %s1166 = scalar_select %p1165, %s97, 1
          %s1167 = smul.addr %s1166, 8
          %s1168 = smul.addr %s1167, 8
          %s1169 = scalar_lea.vmem %s1, %s1168
        $region164: #{tpu_custom_call.1} parent=159 // pred_fallthru
          _
      $region160: #{tpu_custom_call.1} parent=5 // pred_fallthru
        _
      %p1170 = scmp.le.s32.totalorder 1, %s97
      %p1171 = scmp.lt.s32.totalorder %s97, 3
      %p1172 = pnand %p1170, %p1171
      %p1173 = pneg %p1172
      // Predicated region
      $region165: #{tpu_custom_call.1} parent=5 // pred_check
        _
      $region166: #{tpu_custom_call.1} parent=5 // pred_check_branch
        %1175 = sbr.rel (%p1172) target = $region168
      $region167: #{tpu_custom_call.1} parent=5 // pred_region
        %s1176 = ssub.s32 %s97, 1
        // Predicated region
        $region169: #{tpu_custom_call.1} parent=167 // pred_check
          %p1177 = pneg %p228
        $region170: #{tpu_custom_call.1} parent=167 // pred_check_branch
          %1179 = sbr.rel (%p1177) target = $region172
        $region171: #{tpu_custom_call.1} parent=167 // pred_region
          %1180 = dma.done [#allocation3], 16
        $region172: #{tpu_custom_call.1} parent=167 // pred_fallthru
          _
        // Predicated region
        $region173: #{tpu_custom_call.1} parent=167 // pred_check
          %p1181 = pneg %p249
        $region174: #{tpu_custom_call.1} parent=167 // pred_check_branch
          %1183 = sbr.rel (%p1181) target = $region176
        $region175: #{tpu_custom_call.1} parent=167 // pred_region
          %1184 = dma.done [#allocation6], 16
        $region176: #{tpu_custom_call.1} parent=167 // pred_fallthru
          _
        // Predicated region
        $region177: #{tpu_custom_call.1} parent=167 // pred_check
          %p1185 = pneg %p291
        $region178: #{tpu_custom_call.1} parent=167 // pred_check_branch
          %1187 = sbr.rel (%p1185) target = $region180
        $region179: #{tpu_custom_call.1} parent=167 // pred_region
          %1188 = dma.done [#allocation6], 16
        $region180: #{tpu_custom_call.1} parent=167 // pred_fallthru
          _
        // Predicated region
        $region181: #{tpu_custom_call.1} parent=167 // pred_check
          %p1189 = pneg %p333
        $region182: #{tpu_custom_call.1} parent=167 // pred_check_branch
          %1191 = sbr.rel (%p1189) target = $region184
        $region183: #{tpu_custom_call.1} parent=167 // pred_region
          %1192 = dma.done [#allocation9], 16
        $region184: #{tpu_custom_call.1} parent=167 // pred_fallthru
          _
        // Predicated region
        $region185: #{tpu_custom_call.1} parent=167 // pred_check
          %p1193 = pneg %p354
        $region186: #{tpu_custom_call.1} parent=167 // pred_check_branch
          %1195 = sbr.rel (%p1193) target = $region188
        $region187: #{tpu_custom_call.1} parent=167 // pred_region
          %1196 = dma.done [#allocation9], 16
        $region188: #{tpu_custom_call.1} parent=167 // pred_fallthru
          _
        // Predicated region
        $region189: #{tpu_custom_call.1} parent=167 // pred_check
          %p1197 = pneg %p375
        $region190: #{tpu_custom_call.1} parent=167 // pred_check_branch
          %1199 = sbr.rel (%p1197) target = $region192
        $region191: #{tpu_custom_call.1} parent=167 // pred_region
          %1200 = dma.done [#allocation12], 16
        $region192: #{tpu_custom_call.1} parent=167 // pred_fallthru
          _
        // Predicated region
        $region193: #{tpu_custom_call.1} parent=167 // pred_check
          %p1201 = pneg %p438
        $region194: #{tpu_custom_call.1} parent=167 // pred_check_branch
          %1203 = sbr.rel (%p1201) target = $region196
        $region195: #{tpu_custom_call.1} parent=167 // pred_region
          %1204 = dma.done [#allocation12], 128
        $region196: #{tpu_custom_call.1} parent=167 // pred_fallthru
          _
        // Predicated region
        $region197: #{tpu_custom_call.1} parent=167 // pred_check
          %p1205 = pneg %p459
        $region198: #{tpu_custom_call.1} parent=167 // pred_check_branch
          %1207 = sbr.rel (%p1205) target = $region200
        $region199: #{tpu_custom_call.1} parent=167 // pred_region
          %1208 = dma.done [#allocation15], 16
        $region200: #{tpu_custom_call.1} parent=167 // pred_fallthru
          _
        // Predicated region
        $region201: #{tpu_custom_call.1} parent=167 // pred_check
          %p1209 = pneg %p501
        $region202: #{tpu_custom_call.1} parent=167 // pred_check_branch
          %1211 = sbr.rel (%p1209) target = $region204
        $region203: #{tpu_custom_call.1} parent=167 // pred_region
          %1212 = dma.done [#allocation15], 16
        $region204: #{tpu_custom_call.1} parent=167 // pred_fallthru
          _
        // Predicated region
        $region205: #{tpu_custom_call.1} parent=167 // pred_check
          %p1213 = pneg %p543
        $region206: #{tpu_custom_call.1} parent=167 // pred_check_branch
          %1215 = sbr.rel (%p1213) target = $region208
        $region207: #{tpu_custom_call.1} parent=167 // pred_region
          %1216 = dma.done [#allocation18], 16
        $region208: #{tpu_custom_call.1} parent=167 // pred_fallthru
          _
        // Predicated region
        $region209: #{tpu_custom_call.1} parent=167 // pred_check
          %p1217 = pneg %p585
        $region210: #{tpu_custom_call.1} parent=167 // pred_check_branch
          %1219 = sbr.rel (%p1217) target = $region212
        $region211: #{tpu_custom_call.1} parent=167 // pred_region
          %1220 = dma.done [#allocation18], 64
        $region212: #{tpu_custom_call.1} parent=167 // pred_fallthru
          _
        // Predicated region
        $region213: #{tpu_custom_call.1} parent=167 // pred_check
          %p1221 = pneg %p606
        $region214: #{tpu_custom_call.1} parent=167 // pred_check_branch
          %1223 = sbr.rel (%p1221) target = $region216
        $region215: #{tpu_custom_call.1} parent=167 // pred_region
          %1224 = dma.done [#allocation21], 16
        $region216: #{tpu_custom_call.1} parent=167 // pred_fallthru
          _
        // Predicated region
        $region217: #{tpu_custom_call.1} parent=167 // pred_check
          %p1225 = pneg %p627
        $region218: #{tpu_custom_call.1} parent=167 // pred_check_branch
          %1227 = sbr.rel (%p1225) target = $region220
        $region219: #{tpu_custom_call.1} parent=167 // pred_region
          %1228 = dma.done [#allocation21], 16
        $region220: #{tpu_custom_call.1} parent=167 // pred_fallthru
          _
        %p1229 = scmp.lt.s32.totalorder %s102, 1
        %s1230 = scalar_select %p1229, %s102, 1
        %s1231 = smul.addr %s1230, 8
        %s1232 = smul.addr %s1231, 8
        %s1233 = scalar_lea.vmem %s1, %s1232
        %p1234 = pneg %p123
        %p1235 = pneg %p120
        %p1236 = pneg %p144
        %p1237 = pneg %p141
        %p1238 = pneg %p165
        %p1239 = pneg %p162
        %p1240 = pneg %p186
        %p1241 = pneg %p183
        %p1242 = pneg %p207
        %p1243 = pneg %p204
        %p1244 = pneg %p228
        %p1245 = pneg %p225
        %p1246 = pneg %p249
        %p1247 = pneg %p246
        %p1248 = pneg %p270
        %p1249 = pneg %p267
        %p1250 = pneg %p291
        %p1251 = pneg %p288
        %p1252 = pneg %p312
        %p1253 = pneg %p309
        %p1254 = pneg %p333
        %p1255 = pneg %p330
        %p1256 = pneg %p354
        %p1257 = pneg %p351
        %p1258 = pneg %p375
        %p1259 = pneg %p372
        %p1260 = pneg %p396
        %p1261 = pneg %p393
        %p1262 = pneg %p417
        %p1263 = pneg %p414
        %p1264 = pneg %p438
        %p1265 = pneg %p435
        %p1266 = pneg %p459
        %p1267 = pneg %p456
        %p1268 = pneg %p480
        %p1269 = pneg %p477
        %p1270 = pneg %p501
        %p1271 = pneg %p498
        %p1272 = pneg %p522
        %p1273 = pneg %p519
        %p1274 = pneg %p543
        %p1275 = pneg %p540
        %p1276 = pneg %p564
        %p1277 = pneg %p561
        %p1278 = pneg %p585
        %p1279 = pneg %p582
        %p1280 = pneg %p606
        %p1281 = pneg %p603
        %p1282 = pneg %p627
        %p1283 = pneg %p624
        %p1284 = pneg %p648
        %p1285 = pneg %p645
        %p1286 = pneg %p669
        %p1287 = pneg %p666
        %p1288 = pneg %p690
        %p1289 = pneg %p687
        %p1290 = pneg %p711
        %p1291 = pneg %p708
        %p1292 = pneg %p732
        %p1293 = pneg %p729
        %p1294 = pneg %p753
        %p1295 = pneg %p750
        %p1296 = pneg %p774
        %p1297 = pneg %p771
        %p1298 = pneg %p795
        %p1299 = pneg %p792
        %p1300 = pneg %p816
        %p1301 = pneg %p813
        %p1302 = pneg %p837
        %p1303 = pneg %p834
        %p1304 = pneg %p858
        %p1305 = pneg %p855
        %p1306 = pneg %p879
        %p1307 = pneg %p876
        %p1308 = pneg %p905
        %p1309 = pneg %p902
        %s1310 = sand.u32 %s892, 1
        %s1311 = scalar_lea.sflag [#allocation4], %s1310
        %s1312 = sand.u32 %s892, 1
        %s1313 = smul.addr %s1312, 4
        %s1314 = scalar_lea.vmem [#allocation23], %s1313
        %p1315 = pneg %p931
        %p1316 = pneg %p928
        %s1317 = sand.u32 %s918, 1
        %s1318 = scalar_lea.sflag [#allocation25], %s1317
        %s1319 = sand.u32 %s918, 1
        %s1320 = smul.addr %s1319, 4
        %s1321 = scalar_lea.vmem [#allocation24], %s1320
        %p1322 = scmp.lt.s32.totalorder %s102, 1
        %s1323 = scalar_select %p1322, %s102, 1
        %s1324 = smul.addr %s1323, 8
        %s1325 = smul.addr %s1324, 8
        %s1326 = scalar_lea.vmem %s1, %s1325
        %v1327 = vld [vmem:[%s29] sm:$0xff]
        %v1328 = vld [vmem:[%s29 + $0x8] sm:$0xff]
        %v1329 = vld [vmem:[%s29 + $0x10] sm:$0xff]
        %v1330 = vld [vmem:[%s29 + $0x18] sm:$0xff]
        %v1331 = vld [vmem:[#allocation20] sm:$0x1]
        %v1332 = vld [vmem:[#allocation22] sm:$0x1]
        %v1333 = vld [vmem:[#allocation14] sm:$0x1]
        %v1334 = vld [vmem:[#allocation16] sm:$0x1]
        %v1335 = vld [vmem:[#allocation17] sm:$0x1]
        %v1336 = vld [vmem:[%s55] sm:$0x1]
        %v1337 = vld [vmem:[%s57] sm:$0x1]
        %v1338 = vld [vmem:[%s59] sm:$0x1]
        %v1339 = vld [vmem:[%s61] sm:$0x1]
        %v1340 = vld [vmem:[%s65] sm:$0x1]
        %v1341 = vld [vmem:[%s69] sm:$0x1]
        %v1342 = vld [vmem:[%s1326] sm:$0xff]
        %v1343 = vld [vmem:[%s1326 + $0x8] sm:$0xff]
        %v1344 = vld [vmem:[%s1326 + $0x10] sm:$0xff]
        %v1345 = vld [vmem:[%s1326 + $0x18] sm:$0xff]
        %v1346 = vld [vmem:[%s1326 + $0x20] sm:$0xff]
        %v1347 = vld [vmem:[%s1326 + $0x28] sm:$0xff]
        %v1348 = vld [vmem:[%s1326 + $0x30] sm:$0xff]
        %v1349 = vld [vmem:[%s1326 + $0x38] sm:$0xff]
        %v1350 = vld [vmem:[#allocation2] sm:$0x1]
        %v1351 = vld [vmem:[#allocation5] sm:$0x1]
        %vm1352 = vcmask 261120
        %v1353 = vsel %vm1352, %v1342, 0.0
        %1354 = vadd.xlane.f32.xlu0 %v1353
        %v1355 = vpop.xlane.xlu0 %1354
        %v1356 = vsel %vm1352, %v1343, 0.0
        %1357 = vadd.xlane.f32.xlu0 %v1356
        %v1358 = vpop.xlane.xlu0 %1357
        %v1359 = vsel %vm1352, %v1344, 0.0
        %1360 = vadd.xlane.f32.xlu0 %v1359
        %v1361 = vpop.xlane.xlu0 %1360
        %v1362 = vsel %vm1352, %v1345, 0.0
        %1363 = vadd.xlane.f32.xlu0 %v1362
        %v1364 = vpop.xlane.xlu0 %1363
        %v1365 = vsel %vm1352, %v1346, 0.0
        %1366 = vadd.xlane.f32.xlu0 %v1365
        %v1367 = vpop.xlane.xlu0 %1366
        %v1368 = vsel %vm1352, %v1347, 0.0
        %1369 = vadd.xlane.f32.xlu0 %v1368
        %v1370 = vpop.xlane.xlu0 %1369
        %v1371 = vsel %vm1352, %v1348, 0.0
        %1372 = vadd.xlane.f32.xlu0 %v1371
        %v1373 = vpop.xlane.xlu0 %1372
        %v1374 = vsel %vm1352, %v1349, 0.0
        %1375 = vadd.xlane.f32.xlu0 %v1374
        %v1376 = vpop.xlane.xlu0 %1375
        %v1377 = vrcp.pop 32.0
        %v1378 = vmul.f32 %v1355, %v1377
        %v1379 = vmul.f32 %v1358, %v1377
        %v1380 = vmul.f32 %v1361, %v1377
        %v1381 = vmul.f32 %v1364, %v1377
        %v1382 = vmul.f32 %v1367, %v1377
        %v1383 = vmul.f32 %v1370, %v1377
        %v1384 = vmul.f32 %v1373, %v1377
        %v1385 = vmul.f32 %v1376, %v1377
        %v1386 = vsub.f32 %v1342, %v1378
        %v1387 = vsub.f32 %v1343, %v1379
        %v1388 = vsub.f32 %v1344, %v1380
        %v1389 = vsub.f32 %v1345, %v1381
        %v1390 = vsub.f32 %v1346, %v1382
        %v1391 = vsub.f32 %v1347, %v1383
        %v1392 = vsub.f32 %v1348, %v1384
        %v1393 = vsub.f32 %v1349, %v1385
        %v1394 = vmul.f32 %v1386, %v1386
        %v1395 = vmul.f32 %v1387, %v1387
        %v1396 = vmul.f32 %v1388, %v1388
        %v1397 = vmul.f32 %v1389, %v1389
        %v1398 = vmul.f32 %v1390, %v1390
        %v1399 = vmul.f32 %v1391, %v1391
        %v1400 = vmul.f32 %v1392, %v1392
        %v1401 = vmul.f32 %v1393, %v1393
        %v1402 = vsel %vm1352, %v1394, 0.0
        %1403 = vadd.xlane.f32.xlu0 %v1402
        %v1404 = vpop.xlane.xlu0 %1403
        %v1405 = vsel %vm1352, %v1395, 0.0
        %1406 = vadd.xlane.f32.xlu0 %v1405
        %v1407 = vpop.xlane.xlu0 %1406
        %v1408 = vsel %vm1352, %v1396, 0.0
        %1409 = vadd.xlane.f32.xlu0 %v1408
        %v1410 = vpop.xlane.xlu0 %1409
        %v1411 = vsel %vm1352, %v1397, 0.0
        %1412 = vadd.xlane.f32.xlu0 %v1411
        %v1413 = vpop.xlane.xlu0 %1412
        %v1414 = vsel %vm1352, %v1398, 0.0
        %1415 = vadd.xlane.f32.xlu0 %v1414
        %v1416 = vpop.xlane.xlu0 %1415
        %v1417 = vsel %vm1352, %v1399, 0.0
        %1418 = vadd.xlane.f32.xlu0 %v1417
        %v1419 = vpop.xlane.xlu0 %1418
        %v1420 = vsel %vm1352, %v1400, 0.0
        %1421 = vadd.xlane.f32.xlu0 %v1420
        %v1422 = vpop.xlane.xlu0 %1421
        %v1423 = vsel %vm1352, %v1401, 0.0
        %1424 = vadd.xlane.f32.xlu0 %v1423
        %v1425 = vpop.xlane.xlu0 %1424
        %v1426 = vmul.f32 %v1404, %v1377
        %v1427 = vmul.f32 %v1407, %v1377
        %v1428 = vmul.f32 %v1410, %v1377
        %v1429 = vmul.f32 %v1413, %v1377
        %v1430 = vmul.f32 %v1416, %v1377
        %v1431 = vmul.f32 %v1419, %v1377
        %v1432 = vmul.f32 %v1422, %v1377
        %v1433 = vmul.f32 %v1425, %v1377
        %v1434 = vadd.f32 %v1426, 1e-05
        %v1435 = vadd.f32 %v1427, 1e-05
        %v1436 = vadd.f32 %v1428, 1e-05
        %v1437 = vadd.f32 %v1429, 1e-05
        %v1438 = vadd.f32 %v1430, 1e-05
        %v1439 = vadd.f32 %v1431, 1e-05
        %v1440 = vadd.f32 %v1432, 1e-05
        %v1441 = vadd.f32 %v1433, 1e-05
        %v1442 = vrsqrt.pop %v1434
        %v1443 = vrsqrt.pop %v1435
        %v1444 = vrsqrt.pop %v1436
        %v1445 = vrsqrt.pop %v1437
        %v1446 = vrsqrt.pop %v1438
        %v1447 = vrsqrt.pop %v1439
        %v1448 = vrsqrt.pop %v1440
        %v1449 = vrsqrt.pop %v1441
        %v1450 = vmul.f32 %v1386, %v1442
        %v1451 = vmul.f32 %v1387, %v1443
        %v1452 = vmul.f32 %v1388, %v1444
        %v1453 = vmul.f32 %v1389, %v1445
        %v1454 = vmul.f32 %v1390, %v1446
        %v1455 = vmul.f32 %v1391, %v1447
        %v1456 = vmul.f32 %v1392, %v1448
        %v1457 = vmul.f32 %v1393, %v1449
        %v1459 = vlaneseq
        %v1460 = vshrl.u32 %v1459, 7
        %v1461 = vsub.s32 0, %v1460
        %v1462 = vrot.slane %v1350, %v1461
        %v1464 = vmul.f32 %v1450, %v1462
        %v1465 = vmul.f32 %v1451, %v1462
        %v1466 = vmul.f32 %v1452, %v1462
        %v1467 = vmul.f32 %v1453, %v1462
        %v1468 = vmul.f32 %v1454, %v1462
        %v1469 = vmul.f32 %v1455, %v1462
        %v1470 = vmul.f32 %v1456, %v1462
        %v1471 = vmul.f32 %v1457, %v1462
        %v1473 = vlaneseq
        %v1474 = vshrl.u32 %v1473, 7
        %v1475 = vsub.s32 0, %v1474
        %v1476 = vrot.slane %v1351, %v1475
        %v1478 = vadd.f32 %v1464, %v1476
        %v1479 = vadd.f32 %v1465, %v1476
        %v1480 = vadd.f32 %v1466, %v1476
        %v1481 = vadd.f32 %v1467, %v1476
        %v1482 = vadd.f32 %v1468, %v1476
        %v1483 = vadd.f32 %v1469, %v1476
        %v1484 = vadd.f32 %v1470, %v1476
        %v1485 = vadd.f32 %v1471, %v1476
        %v1486 = vld [vmem:[%s15] sm:$0xff]
        %v1487 = vld [vmem:[%s15 + $0x8] sm:$0xff]
        %v1488 = vld [vmem:[%s15 + $0x10] sm:$0xff]
        %v1489 = vld [vmem:[%s15 + $0x18] sm:$0xff]
        %v1490 = vld [vmem:[#allocation7] sm:$0x1]
        %v1492 = vlaneseq
        %v1493 = vshrl.u32 %v1492, 7
        %v1494 = vsub.s32 0, %v1493
        %v1495 = vrot.slane %v1490, %v1494
        %v1498 = vsel %vm1352, %v1478, 0
        %v1501 = vsel %vm1352, %v1479, 0
        %v1504 = vsel %vm1352, %v1480, 0
        %v1507 = vsel %vm1352, %v1481, 0
        %v1510 = vsel %vm1352, %v1482, 0
        %v1513 = vsel %vm1352, %v1483, 0
        %v1516 = vsel %vm1352, %v1484, 0
        %v1519 = vsel %vm1352, %v1485, 0
        %1521 = vmatprep.subr.mxu0 0.0
        %1522 = vmatpush1.msra.mxu0 %v1486
        %1523 = vmatprep.subr.mxu0 0.0
        %1524 = vmatpush1.msra.mxu0 %v1487
        %1525 = vmatprep.subr.mxu0 0.0
        %1526 = vmatpush1.msra.mxu0 %v1488
        %1527 = vmatprep.subr.mxu0 0.0
        %1528 = vmatpush1.msra.mxu0 %v1489
        %1529 = vmatprep.subr.mxu0 0.0
        %1530 = vmatpush1.msra.mxu0 0.0
        %1531 = vmatprep.subr.mxu0 0.0
        %1532 = vmatpush1.msra.mxu0 0.0
        %1533 = vmatprep.subr.mxu0 0.0
        %1534 = vmatpush1.msra.mxu0 0.0
        %1535 = vmatprep.subr.mxu0 0.0
        %1536 = vmatpush1.msra.mxu0 0.0
        %1537 = vmatprep.subr.mxu0 0.0
        %1538 = vmatpush1.msra.mxu0 0.0
        %1539 = vmatprep.subr.mxu0 0.0
        %1540 = vmatpush1.msra.mxu0 0.0
        %1541 = vmatprep.subr.mxu0 0.0
        %1542 = vmatpush1.msra.mxu0 0.0
        %1543 = vmatprep.subr.mxu0 0.0
        %1544 = vmatpush1.msra.mxu0 0.0
        %1545 = vmatprep.subr.mxu0 0.0
        %1546 = vmatpush1.msra.mxu0 0.0
        %1547 = vmatprep.subr.mxu0 0.0
        %1548 = vmatpush1.msra.mxu0 0.0
        %1549 = vmatprep.subr.mxu0 0.0
        %1550 = vmatpush1.msra.mxu0 0.0
        %1551 = vmatprep.subr.mxu0 0.0
        %1552 = vmatpush1.msra.mxu0 0.0
        %1553 = vmatprep.subr.mxu0 0.0
        %1554 = vmatpush1.msra.mxu0 0.0
        %1555 = vmatprep.subr.mxu0 0.0
        %1556 = vmatpush1.msra.mxu0 0.0
        %1557 = vmatprep.subr.mxu0 0.0
        %1558 = vmatpush1.msra.mxu0 0.0
        %1559 = vmatprep.subr.mxu0 0.0
        %1560 = vmatpush1.msra.mxu0 0.0
        %1561 = vmatprep.subr.mxu0 0.0
        %1562 = vmatpush1.msra.mxu0 0.0
        %1563 = vmatprep.subr.mxu0 0.0
        %1564 = vmatpush1.msra.mxu0 0.0
        %1565 = vmatprep.subr.mxu0 0.0
        %1566 = vmatpush1.msra.mxu0 0.0
        %1567 = vmatprep.subr.mxu0 0.0
        %1568 = vmatpush1.msra.mxu0 0.0
        %1569 = vmatprep.subr.mxu0 0.0
        %1570 = vmatpush1.msra.mxu0 0.0
        %1571 = vmatprep.subr.mxu0 0.0
        %1572 = vmatpush1.msra.mxu0 0.0
        %1573 = vmatprep.subr.mxu0 0.0
        %1574 = vmatpush1.msra.mxu0 0.0
        %1575 = vmatprep.subr.mxu0 0.0
        %1576 = vmatpush1.msra.mxu0 0.0
        %1577 = vmatprep.subr.mxu0 0.0
        %1578 = vmatpush1.msra.mxu0 0.0
        %1579 = vmatprep.subr.mxu0 0.0
        %1580 = vmatpush1.msra.mxu0 0.0
        %1581 = vmatprep.subr.mxu0 0.0
        %1582 = vmatpush1.msra.mxu0 0.0
        %1583 = vmatprep.subr.mxu0 0.0
        %1584 = vmatpush1.msra.mxu0 0.0
        %1585 = vmatprep.mubr.f32.mxu0 0.0
        %1586 = vmatmul.mubr.f32.gmra.mrb[0].mxu0 %v1498
        %v1587 = vpop.f32.mrb[0].mxu0
        %v1588 = vadd.f32 %v1495, %v1587
        %v1589 = vpop.f32.mrb[0].mxu0
        %1590 = vmatprep.mubr.f32.mxu0 0.0
        %1591 = vmatmul.mubr.f32.gmra.mrb[0].mxu0 %v1501
        %v1592 = vpop.f32.mrb[0].mxu0
        %v1593 = vadd.f32 %v1495, %v1592
        %v1594 = vpop.f32.mrb[0].mxu0
        %1595 = vmatprep.mubr.f32.mxu0 0.0
        %1596 = vmatmul.mubr.f32.gmra.mrb[0].mxu0 %v1504
        %v1597 = vpop.f32.mrb[0].mxu0
        %v1598 = vadd.f32 %v1495, %v1597
        %v1599 = vpop.f32.mrb[0].mxu0
        %1600 = vmatprep.mubr.f32.mxu0 0.0
        %1601 = vmatmul.mubr.f32.gmra.mrb[0].mxu0 %v1507
        %v1602 = vpop.f32.mrb[0].mxu0
        %v1603 = vadd.f32 %v1495, %v1602
        %v1604 = vpop.f32.mrb[0].mxu0
        %1605 = vmatprep.mubr.f32.mxu0 0.0
        %1606 = vmatmul.mubr.f32.gmra.mrb[0].mxu0 %v1510
        %v1607 = vpop.f32.mrb[0].mxu0
        %v1608 = vadd.f32 %v1495, %v1607
        %v1609 = vpop.f32.mrb[0].mxu0
        %1610 = vmatprep.mubr.f32.mxu0 0.0
        %1611 = vmatmul.mubr.f32.gmra.mrb[0].mxu0 %v1513
        %v1612 = vpop.f32.mrb[0].mxu0
        %v1613 = vadd.f32 %v1495, %v1612
        %v1614 = vpop.f32.mrb[0].mxu0
        %1615 = vmatprep.mubr.f32.mxu0 0.0
        %1616 = vmatmul.mubr.f32.gmra.mrb[0].mxu0 %v1516
        %v1617 = vpop.f32.mrb[0].mxu0
        %v1618 = vadd.f32 %v1495, %v1617
        %v1619 = vpop.f32.mrb[0].mxu0
        %1620 = vmatprep.mubr.f32.mxu0 0.0
        %1621 = vmatmul.mubr.f32.gmra.mrb[0].mxu0 %v1519
        %v1622 = vpop.f32.mrb[0].mxu0
        %v1623 = vadd.f32 %v1495, %v1622
        %v1624 = vpop.f32.mrb[0].mxu0
        %1625 = vdwg.mxu0
        %v1626 = vmax.f32 %v1588, 0.0
        %v1627 = vmax.f32 %v1593, 0.0
        %v1628 = vmax.f32 %v1598, 0.0
        %v1629 = vmax.f32 %v1603, 0.0
        %v1630 = vmax.f32 %v1608, 0.0
        %v1631 = vmax.f32 %v1613, 0.0
        %v1632 = vmax.f32 %v1618, 0.0
        %v1633 = vmax.f32 %v1623, 0.0
        %v1634 = vld [vmem:[%s19] sm:$0xff]
        %v1635 = vld [vmem:[%s19 + $0x8] sm:$0xff]
        %v1636 = vld [vmem:[%s19 + $0x10] sm:$0xff]
        %v1637 = vld [vmem:[%s19 + $0x18] sm:$0xff]
        %v1638 = vld [vmem:[#allocation8] sm:$0x1]
        %v1640 = vlaneseq
        %v1641 = vshrl.u32 %v1640, 7
        %v1642 = vsub.s32 0, %v1641
        %v1643 = vrot.slane %v1638, %v1642
        %v1646 = vsel %vm1352, %v1626, 0
        %v1649 = vsel %vm1352, %v1627, 0
        %v1652 = vsel %vm1352, %v1628, 0
        %v1655 = vsel %vm1352, %v1629, 0
        %v1658 = vsel %vm1352, %v1630, 0
        %v1661 = vsel %vm1352, %v1631, 0
        %v1664 = vsel %vm1352, %v1632, 0
        %v1667 = vsel %vm1352, %v1633, 0
        %1669 = vmatprep.subr.mxu0 0.0
        %1670 = vmatpush1.msra.mxu0 %v1634
        %1671 = vmatprep.subr.mxu0 0.0
        %1672 = vmatpush1.msra.mxu0 %v1635
        %1673 = vmatprep.subr.mxu0 0.0
        %1674 = vmatpush1.msra.mxu0 %v1636
        %1675 = vmatprep.subr.mxu0 0.0
        %1676 = vmatpush1.msra.mxu0 %v1637
        %1677 = vmatprep.subr.mxu0 0.0
        %1678 = vmatpush1.msra.mxu0 0.0
        %1679 = vmatprep.subr.mxu0 0.0
        %1680 = vmatpush1.msra.mxu0 0.0
        %1681 = vmatprep.subr.mxu0 0.0
        %1682 = vmatpush1.msra.mxu0 0.0
        %1683 = vmatprep.subr.mxu0 0.0
        %1684 = vmatpush1.msra.mxu0 0.0
        %1685 = vmatprep.subr.mxu0 0.0
        %1686 = vmatpush1.msra.mxu0 0.0
        %1687 = vmatprep.subr.mxu0 0.0
        %1688 = vmatpush1.msra.mxu0 0.0
        %1689 = vmatprep.subr.mxu0 0.0
        %1690 = vmatpush1.msra.mxu0 0.0
        %1691 = vmatprep.subr.mxu0 0.0
        %1692 = vmatpush1.msra.mxu0 0.0
        %1693 = vmatprep.subr.mxu0 0.0
        %1694 = vmatpush1.msra.mxu0 0.0
        %1695 = vmatprep.subr.mxu0 0.0
        %1696 = vmatpush1.msra.mxu0 0.0
        %1697 = vmatprep.subr.mxu0 0.0
        %1698 = vmatpush1.msra.mxu0 0.0
        %1699 = vmatprep.subr.mxu0 0.0
        %1700 = vmatpush1.msra.mxu0 0.0
        %1701 = vmatprep.subr.mxu0 0.0
        %1702 = vmatpush1.msra.mxu0 0.0
        %1703 = vmatprep.subr.mxu0 0.0
        %1704 = vmatpush1.msra.mxu0 0.0
        %1705 = vmatprep.subr.mxu0 0.0
        %1706 = vmatpush1.msra.mxu0 0.0
        %1707 = vmatprep.subr.mxu0 0.0
        %1708 = vmatpush1.msra.mxu0 0.0
        %1709 = vmatprep.subr.mxu0 0.0
        %1710 = vmatpush1.msra.mxu0 0.0
        %1711 = vmatprep.subr.mxu0 0.0
        %1712 = vmatpush1.msra.mxu0 0.0
        %1713 = vmatprep.subr.mxu0 0.0
        %1714 = vmatpush1.msra.mxu0 0.0
        %1715 = vmatprep.subr.mxu0 0.0
        %1716 = vmatpush1.msra.mxu0 0.0
        %1717 = vmatprep.subr.mxu0 0.0
        %1718 = vmatpush1.msra.mxu0 0.0
        %1719 = vmatprep.subr.mxu0 0.0
        %1720 = vmatpush1.msra.mxu0 0.0
        %1721 = vmatprep.subr.mxu0 0.0
        %1722 = vmatpush1.msra.mxu0 0.0
        %1723 = vmatprep.subr.mxu0 0.0
        %1724 = vmatpush1.msra.mxu0 0.0
        %1725 = vmatprep.subr.mxu0 0.0
        %1726 = vmatpush1.msra.mxu0 0.0
        %1727 = vmatprep.subr.mxu0 0.0
        %1728 = vmatpush1.msra.mxu0 0.0
        %1729 = vmatprep.subr.mxu0 0.0
        %1730 = vmatpush1.msra.mxu0 0.0
        %1731 = vmatprep.subr.mxu0 0.0
        %1732 = vmatpush1.msra.mxu0 0.0
        %1733 = vmatprep.mubr.f32.mxu0 0.0
        %1734 = vmatmul.mubr.f32.gmra.mrb[0].mxu0 %v1646
        %v1735 = vpop.f32.mrb[0].mxu0
        %v1736 = vadd.f32 %v1643, %v1735
        %v1737 = vpop.f32.mrb[0].mxu0
        %1738 = vmatprep.mubr.f32.mxu0 0.0
        %1739 = vmatmul.mubr.f32.gmra.mrb[0].mxu0 %v1649
        %v1740 = vpop.f32.mrb[0].mxu0
        %v1741 = vadd.f32 %v1643, %v1740
        %v1742 = vpop.f32.mrb[0].mxu0
        %1743 = vmatprep.mubr.f32.mxu0 0.0
        %1744 = vmatmul.mubr.f32.gmra.mrb[0].mxu0 %v1652
        %v1745 = vpop.f32.mrb[0].mxu0
        %v1746 = vadd.f32 %v1643, %v1745
        %v1747 = vpop.f32.mrb[0].mxu0
        %1748 = vmatprep.mubr.f32.mxu0 0.0
        %1749 = vmatmul.mubr.f32.gmra.mrb[0].mxu0 %v1655
        %v1750 = vpop.f32.mrb[0].mxu0
        %v1751 = vadd.f32 %v1643, %v1750
        %v1752 = vpop.f32.mrb[0].mxu0
        %1753 = vmatprep.mubr.f32.mxu0 0.0
        %1754 = vmatmul.mubr.f32.gmra.mrb[0].mxu0 %v1658
        %v1755 = vpop.f32.mrb[0].mxu0
        %v1756 = vadd.f32 %v1643, %v1755
        %v1757 = vpop.f32.mrb[0].mxu0
        %1758 = vmatprep.mubr.f32.mxu0 0.0
        %1759 = vmatmul.mubr.f32.gmra.mrb[0].mxu0 %v1661
        %v1760 = vpop.f32.mrb[0].mxu0
        %v1761 = vadd.f32 %v1643, %v1760
        %v1762 = vpop.f32.mrb[0].mxu0
        %1763 = vmatprep.mubr.f32.mxu0 0.0
        %1764 = vmatmul.mubr.f32.gmra.mrb[0].mxu0 %v1664
        %v1765 = vpop.f32.mrb[0].mxu0
        %v1766 = vadd.f32 %v1643, %v1765
        %v1767 = vpop.f32.mrb[0].mxu0
        %1768 = vmatprep.mubr.f32.mxu0 0.0
        %1769 = vmatmul.mubr.f32.gmra.mrb[0].mxu0 %v1667
        %v1770 = vpop.f32.mrb[0].mxu0
        %v1771 = vadd.f32 %v1643, %v1770
        %v1772 = vpop.f32.mrb[0].mxu0
        %1773 = vdwg.mxu0
        %v1774 = vld [vmem:[#allocation10] sm:$0x1]
        %v1775 = vld [vmem:[#allocation11] sm:$0x1]
        %v1776 = vsel %vm1352, %v1736, 0.0
        %1777 = vadd.xlane.f32.xlu0 %v1776
        %v1778 = vpop.xlane.xlu0 %1777
        %v1779 = vsel %vm1352, %v1741, 0.0
        %1780 = vadd.xlane.f32.xlu0 %v1779
        %v1781 = vpop.xlane.xlu0 %1780
        %v1782 = vsel %vm1352, %v1746, 0.0
        %1783 = vadd.xlane.f32.xlu0 %v1782
        %v1784 = vpop.xlane.xlu0 %1783
        %v1785 = vsel %vm1352, %v1751, 0.0
        %1786 = vadd.xlane.f32.xlu0 %v1785
        %v1787 = vpop.xlane.xlu0 %1786
        %v1788 = vsel %vm1352, %v1756, 0.0
        %1789 = vadd.xlane.f32.xlu0 %v1788
        %v1790 = vpop.xlane.xlu0 %1789
        %v1791 = vsel %vm1352, %v1761, 0.0
        %1792 = vadd.xlane.f32.xlu0 %v1791
        %v1793 = vpop.xlane.xlu0 %1792
        %v1794 = vsel %vm1352, %v1766, 0.0
        %1795 = vadd.xlane.f32.xlu0 %v1794
        %v1796 = vpop.xlane.xlu0 %1795
        %v1797 = vsel %vm1352, %v1771, 0.0
        %1798 = vadd.xlane.f32.xlu0 %v1797
        %v1799 = vpop.xlane.xlu0 %1798
        %v1800 = vmul.f32 %v1778, %v1377
        %v1801 = vmul.f32 %v1781, %v1377
        %v1802 = vmul.f32 %v1784, %v1377
        %v1803 = vmul.f32 %v1787, %v1377
        %v1804 = vmul.f32 %v1790, %v1377
        %v1805 = vmul.f32 %v1793, %v1377
        %v1806 = vmul.f32 %v1796, %v1377
        %v1807 = vmul.f32 %v1799, %v1377
        %v1808 = vsub.f32 %v1736, %v1800
        %v1809 = vsub.f32 %v1741, %v1801
        %v1810 = vsub.f32 %v1746, %v1802
        %v1811 = vsub.f32 %v1751, %v1803
        %v1812 = vsub.f32 %v1756, %v1804
        %v1813 = vsub.f32 %v1761, %v1805
        %v1814 = vsub.f32 %v1766, %v1806
        %v1815 = vsub.f32 %v1771, %v1807
        %v1816 = vmul.f32 %v1808, %v1808
        %v1817 = vmul.f32 %v1809, %v1809
        %v1818 = vmul.f32 %v1810, %v1810
        %v1819 = vmul.f32 %v1811, %v1811
        %v1820 = vmul.f32 %v1812, %v1812
        %v1821 = vmul.f32 %v1813, %v1813
        %v1822 = vmul.f32 %v1814, %v1814
        %v1823 = vmul.f32 %v1815, %v1815
        %v1824 = vsel %vm1352, %v1816, 0.0
        %1825 = vadd.xlane.f32.xlu0 %v1824
        %v1826 = vpop.xlane.xlu0 %1825
        %v1827 = vsel %vm1352, %v1817, 0.0
        %1828 = vadd.xlane.f32.xlu0 %v1827
        %v1829 = vpop.xlane.xlu0 %1828
        %v1830 = vsel %vm1352, %v1818, 0.0
        %1831 = vadd.xlane.f32.xlu0 %v1830
        %v1832 = vpop.xlane.xlu0 %1831
        %v1833 = vsel %vm1352, %v1819, 0.0
        %1834 = vadd.xlane.f32.xlu0 %v1833
        %v1835 = vpop.xlane.xlu0 %1834
        %v1836 = vsel %vm1352, %v1820, 0.0
        %1837 = vadd.xlane.f32.xlu0 %v1836
        %v1838 = vpop.xlane.xlu0 %1837
        %v1839 = vsel %vm1352, %v1821, 0.0
        %1840 = vadd.xlane.f32.xlu0 %v1839
        %v1841 = vpop.xlane.xlu0 %1840
        %v1842 = vsel %vm1352, %v1822, 0.0
        %1843 = vadd.xlane.f32.xlu0 %v1842
        %v1844 = vpop.xlane.xlu0 %1843
        %v1845 = vsel %vm1352, %v1823, 0.0
        %1846 = vadd.xlane.f32.xlu0 %v1845
        %v1847 = vpop.xlane.xlu0 %1846
        %v1848 = vmul.f32 %v1826, %v1377
        %v1849 = vmul.f32 %v1829, %v1377
        %v1850 = vmul.f32 %v1832, %v1377
        %v1851 = vmul.f32 %v1835, %v1377
        %v1852 = vmul.f32 %v1838, %v1377
        %v1853 = vmul.f32 %v1841, %v1377
        %v1854 = vmul.f32 %v1844, %v1377
        %v1855 = vmul.f32 %v1847, %v1377
        %v1856 = vadd.f32 %v1848, 1e-05
        %v1857 = vadd.f32 %v1849, 1e-05
        %v1858 = vadd.f32 %v1850, 1e-05
        %v1859 = vadd.f32 %v1851, 1e-05
        %v1860 = vadd.f32 %v1852, 1e-05
        %v1861 = vadd.f32 %v1853, 1e-05
        %v1862 = vadd.f32 %v1854, 1e-05
        %v1863 = vadd.f32 %v1855, 1e-05
        %v1864 = vrsqrt.pop %v1856
        %v1865 = vrsqrt.pop %v1857
        %v1866 = vrsqrt.pop %v1858
        %v1867 = vrsqrt.pop %v1859
        %v1868 = vrsqrt.pop %v1860
        %v1869 = vrsqrt.pop %v1861
        %v1870 = vrsqrt.pop %v1862
        %v1871 = vrsqrt.pop %v1863
        %v1872 = vmul.f32 %v1808, %v1864
        %v1873 = vmul.f32 %v1809, %v1865
        %v1874 = vmul.f32 %v1810, %v1866
        %v1875 = vmul.f32 %v1811, %v1867
        %v1876 = vmul.f32 %v1812, %v1868
        %v1877 = vmul.f32 %v1813, %v1869
        %v1878 = vmul.f32 %v1814, %v1870
        %v1879 = vmul.f32 %v1815, %v1871
        %v1881 = vlaneseq
        %v1882 = vshrl.u32 %v1881, 7
        %v1883 = vsub.s32 0, %v1882
        %v1884 = vrot.slane %v1774, %v1883
        %v1886 = vmul.f32 %v1872, %v1884
        %v1887 = vmul.f32 %v1873, %v1884
        %v1888 = vmul.f32 %v1874, %v1884
        %v1889 = vmul.f32 %v1875, %v1884
        %v1890 = vmul.f32 %v1876, %v1884
        %v1891 = vmul.f32 %v1877, %v1884
        %v1892 = vmul.f32 %v1878, %v1884
        %v1893 = vmul.f32 %v1879, %v1884
        %v1895 = vlaneseq
        %v1896 = vshrl.u32 %v1895, 7
        %v1897 = vsub.s32 0, %v1896
        %v1898 = vrot.slane %v1775, %v1897
        %v1900 = vadd.f32 %v1886, %v1898
        %v1901 = vadd.f32 %v1887, %v1898
        %v1902 = vadd.f32 %v1888, %v1898
        %v1903 = vadd.f32 %v1889, %v1898
        %v1904 = vadd.f32 %v1890, %v1898
        %v1905 = vadd.f32 %v1891, %v1898
        %v1906 = vadd.f32 %v1892, %v1898
        %v1907 = vadd.f32 %v1893, %v1898
        %v1908 = vld [vmem:[%s27] sm:$0xff]
        %v1909 = vld [vmem:[%s27 + $0x8] sm:$0xff]
        %v1910 = vld [vmem:[%s27 + $0x10] sm:$0xff]
        %v1911 = vld [vmem:[%s27 + $0x18] sm:$0xff]
        %v1912 = vld [vmem:[%s27 + $0x20] sm:$0xff]
        %v1913 = vld [vmem:[%s27 + $0x28] sm:$0xff]
        %v1914 = vld [vmem:[%s27 + $0x30] sm:$0xff]
        %v1915 = vld [vmem:[%s27 + $0x38] sm:$0xff]
        %v1917 = vsel %vm1352, %v1900, 0
        %v1920 = vsel %vm1352, %v1901, 0
        %v1923 = vsel %vm1352, %v1902, 0
        %v1926 = vsel %vm1352, %v1903, 0
        %v1929 = vsel %vm1352, %v1904, 0
        %v1932 = vsel %vm1352, %v1905, 0
        %v1935 = vsel %vm1352, %v1906, 0
        %v1938 = vsel %vm1352, %v1907, 0
        %1940 = vmatprep.subr.mxu0 %v1909
        %1941 = vmatpush1.msra.mxu0 %v1908
        %1942 = vmatprep.subr.mxu0 %v1911
        %1943 = vmatpush1.msra.mxu0 %v1910
        %1944 = vmatprep.subr.mxu0 %v1913
        %1945 = vmatpush1.msra.mxu0 %v1912
        %1946 = vmatprep.subr.mxu0 %v1915
        %1947 = vmatpush1.msra.mxu0 %v1914
        %1948 = vmatprep.subr.mxu0 0.0
        %1949 = vmatpush1.msra.mxu0 0.0
        %1950 = vmatprep.subr.mxu0 0.0
        %1951 = vmatpush1.msra.mxu0 0.0
        %1952 = vmatprep.subr.mxu0 0.0
        %1953 = vmatpush1.msra.mxu0 0.0
        %1954 = vmatprep.subr.mxu0 0.0
        %1955 = vmatpush1.msra.mxu0 0.0
        %1956 = vmatprep.subr.mxu0 0.0
        %1957 = vmatpush1.msra.mxu0 0.0
        %1958 = vmatprep.subr.mxu0 0.0
        %1959 = vmatpush1.msra.mxu0 0.0
        %1960 = vmatprep.subr.mxu0 0.0
        %1961 = vmatpush1.msra.mxu0 0.0
        %1962 = vmatprep.subr.mxu0 0.0
        %1963 = vmatpush1.msra.mxu0 0.0
        %1964 = vmatprep.subr.mxu0 0.0
        %1965 = vmatpush1.msra.mxu0 0.0
        %1966 = vmatprep.subr.mxu0 0.0
        %1967 = vmatpush1.msra.mxu0 0.0
        %1968 = vmatprep.subr.mxu0 0.0
        %1969 = vmatpush1.msra.mxu0 0.0
        %1970 = vmatprep.subr.mxu0 0.0
        %1971 = vmatpush1.msra.mxu0 0.0
        %1972 = vmatprep.subr.mxu0 0.0
        %1973 = vmatpush1.msra.mxu0 0.0
        %1974 = vmatprep.subr.mxu0 0.0
        %1975 = vmatpush1.msra.mxu0 0.0
        %1976 = vmatprep.subr.mxu0 0.0
        %1977 = vmatpush1.msra.mxu0 0.0
        %1978 = vmatprep.subr.mxu0 0.0
        %1979 = vmatpush1.msra.mxu0 0.0
        %1980 = vmatprep.subr.mxu0 0.0
        %1981 = vmatpush1.msra.mxu0 0.0
        %1982 = vmatprep.subr.mxu0 0.0
        %1983 = vmatpush1.msra.mxu0 0.0
        %1984 = vmatprep.subr.mxu0 0.0
        %1985 = vmatpush1.msra.mxu0 0.0
        %1986 = vmatprep.subr.mxu0 0.0
        %1987 = vmatpush1.msra.mxu0 0.0
        %1988 = vmatprep.subr.mxu0 0.0
        %1989 = vmatpush1.msra.mxu0 0.0
        %1990 = vmatprep.subr.mxu0 0.0
        %1991 = vmatpush1.msra.mxu0 0.0
        %1992 = vmatprep.subr.mxu0 0.0
        %1993 = vmatpush1.msra.mxu0 0.0
        %1994 = vmatprep.subr.mxu0 0.0
        %1995 = vmatpush1.msra.mxu0 0.0
        %1996 = vmatprep.subr.mxu0 0.0
        %1997 = vmatpush1.msra.mxu0 0.0
        %1998 = vmatprep.subr.mxu0 0.0
        %1999 = vmatpush1.msra.mxu0 0.0
        %2000 = vmatprep.subr.mxu0 0.0
        %2001 = vmatpush1.msra.mxu0 0.0
        %2002 = vmatprep.subr.mxu0 0.0
        %2003 = vmatpush1.msra.mxu0 0.0
        %2004 = vmatprep.mubr.f32.mxu0 0.0
        %2005 = vmatmul.mubr.f32.gmra.mrb[0].mxu0 %v1917
        %v2006 = vpop.f32.mrb[0].mxu0
        %v2007 = vadd.f32 0.0, %v2006
        %v2008 = vpop.f32.mrb[0].mxu0
        %v2009 = vadd.f32 0.0, %v2008
        %2010 = vmatprep.mubr.f32.mxu0 0.0
        %2011 = vmatmul.mubr.f32.gmra.mrb[0].mxu0 %v1920
        %v2012 = vpop.f32.mrb[0].mxu0
        %v2013 = vadd.f32 0.0, %v2012
        %v2014 = vpop.f32.mrb[0].mxu0
        %v2015 = vadd.f32 0.0, %v2014
        %2016 = vmatprep.mubr.f32.mxu0 0.0
        %2017 = vmatmul.mubr.f32.gmra.mrb[0].mxu0 %v1923
        %v2018 = vpop.f32.mrb[0].mxu0
        %v2019 = vadd.f32 0.0, %v2018
        %v2020 = vpop.f32.mrb[0].mxu0
        %v2021 = vadd.f32 0.0, %v2020
        %2022 = vmatprep.mubr.f32.mxu0 0.0
        %2023 = vmatmul.mubr.f32.gmra.mrb[0].mxu0 %v1926
        %v2024 = vpop.f32.mrb[0].mxu0
        %v2025 = vadd.f32 0.0, %v2024
        %v2026 = vpop.f32.mrb[0].mxu0
        %v2027 = vadd.f32 0.0, %v2026
        %2028 = vmatprep.mubr.f32.mxu0 0.0
        %2029 = vmatmul.mubr.f32.gmra.mrb[0].mxu0 %v1929
        %v2030 = vpop.f32.mrb[0].mxu0
        %v2031 = vadd.f32 0.0, %v2030
        %v2032 = vpop.f32.mrb[0].mxu0
        %v2033 = vadd.f32 0.0, %v2032
        %2034 = vmatprep.mubr.f32.mxu0 0.0
        %2035 = vmatmul.mubr.f32.gmra.mrb[0].mxu0 %v1932
        %v2036 = vpop.f32.mrb[0].mxu0
        %v2037 = vadd.f32 0.0, %v2036
        %v2038 = vpop.f32.mrb[0].mxu0
        %v2039 = vadd.f32 0.0, %v2038
        %2040 = vmatprep.mubr.f32.mxu0 0.0
        %2041 = vmatmul.mubr.f32.gmra.mrb[0].mxu0 %v1935
        %v2042 = vpop.f32.mrb[0].mxu0
        %v2043 = vadd.f32 0.0, %v2042
        %v2044 = vpop.f32.mrb[0].mxu0
        %v2045 = vadd.f32 0.0, %v2044
        %2046 = vmatprep.mubr.f32.mxu0 0.0
        %2047 = vmatmul.mubr.f32.gmra.mrb[0].mxu0 %v1938
        %v2048 = vpop.f32.mrb[0].mxu0
        %v2049 = vadd.f32 0.0, %v2048
        %v2050 = vpop.f32.mrb[0].mxu0
        %v2051 = vadd.f32 0.0, %v2050
        %2052 = vdwg.mxu0
        %v2053 = vld [vmem:[%s3] sm:$0xff]
        %v2054 = vld [vmem:[%s3 + $0x8] sm:$0xff]
        %v2055 = vld [vmem:[%s3 + $0x10] sm:$0xff]
        %v2056 = vld [vmem:[%s3 + $0x18] sm:$0xff]
        %v2057 = vld [vmem:[%s3 + $0x20] sm:$0xff]
        %v2058 = vld [vmem:[%s3 + $0x28] sm:$0xff]
        %v2059 = vld [vmem:[%s3 + $0x30] sm:$0xff]
        %v2060 = vld [vmem:[%s3 + $0x38] sm:$0xff]
        %v2061 = vld [vmem:[%s5] sm:$0xf]
        %v2062 = vld [vmem:[%s7] sm:$0x1]
        %v2063 = vld [vmem:[%s9] sm:$0x1]
        %v2064 = vmul.f32 %v2063, 5.0
        %v2065 = vrcp.pop %v2064
        %v2066 = vmul.f32 1.0, %v2065
        %vm2067 = vcmask 257024
        %v2068 = vsel %vm2067, %v2061, 0.0
        %2069 = vadd.xlane.f32.xlu0 %v2068
        %v2070 = vpop.xlane.xlu0 %2069
        %v2071 = vmul.f32 %v2070, %v1377
        %v2072 = vsub.f32 %v2061, %v2071
        %v2073 = vmul.f32 %v2072, %v2072
        %v2074 = vsel %vm2067, %v2073, 0.0
        %2075 = vadd.xlane.f32.xlu0 %v2074
        %v2076 = vpop.xlane.xlu0 %2075
        %v2077 = vmul.f32 %v2076, %v1377
        %v2078 = vadd.f32 %v2077, 1e-05
        %v2079 = vrsqrt.pop %v2078
        %v2080 = vmul.f32 %v2072, %v2079
        %v2082 = vlaneseq
        %v2083 = vshrl.u32 %v2082, 7
        %v2084 = vsub.s32 0, %v2083
        %v2085 = vrot.slane %v1331, %v2084
        %v2087 = vmul.f32 %v2080, %v2085
        %v2089 = vlaneseq
        %v2090 = vshrl.u32 %v2089, 7
        %v2091 = vsub.s32 0, %v2090
        %v2092 = vrot.slane %v1332, %v2091
        %v2094 = vadd.f32 %v2087, %v2092
        %v2096 = vsel %vm1352, %v2094, 0
        %2098 = vmatprep.subr.mxu0 0.0
        %2099 = vmatpush1.msra.mxu0 %v1327
        %2100 = vmatprep.subr.mxu0 0.0
        %2101 = vmatpush1.msra.mxu0 %v1328
        %2102 = vmatprep.subr.mxu0 0.0
        %2103 = vmatpush1.msra.mxu0 %v1329
        %2104 = vmatprep.subr.mxu0 0.0
        %2105 = vmatpush1.msra.mxu0 %v1330
        %2106 = vmatprep.subr.mxu0 0.0
        %2107 = vmatpush1.msra.mxu0 0.0
        %2108 = vmatprep.subr.mxu0 0.0
        %2109 = vmatpush1.msra.mxu0 0.0
        %2110 = vmatprep.subr.mxu0 0.0
        %2111 = vmatpush1.msra.mxu0 0.0
        %2112 = vmatprep.subr.mxu0 0.0
        %2113 = vmatpush1.msra.mxu0 0.0
        %2114 = vmatprep.subr.mxu0 0.0
        %2115 = vmatpush1.msra.mxu0 0.0
        %2116 = vmatprep.subr.mxu0 0.0
        %2117 = vmatpush1.msra.mxu0 0.0
        %2118 = vmatprep.subr.mxu0 0.0
        %2119 = vmatpush1.msra.mxu0 0.0
        %2120 = vmatprep.subr.mxu0 0.0
        %2121 = vmatpush1.msra.mxu0 0.0
        %2122 = vmatprep.subr.mxu0 0.0
        %2123 = vmatpush1.msra.mxu0 0.0
        %2124 = vmatprep.subr.mxu0 0.0
        %2125 = vmatpush1.msra.mxu0 0.0
        %2126 = vmatprep.subr.mxu0 0.0
        %2127 = vmatpush1.msra.mxu0 0.0
        %2128 = vmatprep.subr.mxu0 0.0
        %2129 = vmatpush1.msra.mxu0 0.0
        %2130 = vmatprep.subr.mxu0 0.0
        %2131 = vmatpush1.msra.mxu0 0.0
        %2132 = vmatprep.subr.mxu0 0.0
        %2133 = vmatpush1.msra.mxu0 0.0
        %2134 = vmatprep.subr.mxu0 0.0
        %2135 = vmatpush1.msra.mxu0 0.0
        %2136 = vmatprep.subr.mxu0 0.0
        %2137 = vmatpush1.msra.mxu0 0.0
        %2138 = vmatprep.subr.mxu0 0.0
        %2139 = vmatpush1.msra.mxu0 0.0
        %2140 = vmatprep.subr.mxu0 0.0
        %2141 = vmatpush1.msra.mxu0 0.0
        %2142 = vmatprep.subr.mxu0 0.0
        %2143 = vmatpush1.msra.mxu0 0.0
        %2144 = vmatprep.subr.mxu0 0.0
        %2145 = vmatpush1.msra.mxu0 0.0
        %2146 = vmatprep.subr.mxu0 0.0
        %2147 = vmatpush1.msra.mxu0 0.0
        %2148 = vmatprep.subr.mxu0 0.0
        %2149 = vmatpush1.msra.mxu0 0.0
        %2150 = vmatprep.subr.mxu0 0.0
        %2151 = vmatpush1.msra.mxu0 0.0
        %2152 = vmatprep.subr.mxu0 0.0
        %2153 = vmatpush1.msra.mxu0 0.0
        %2154 = vmatprep.subr.mxu0 0.0
        %2155 = vmatpush1.msra.mxu0 0.0
        %2156 = vmatprep.subr.mxu0 0.0
        %2157 = vmatpush1.msra.mxu0 0.0
        %2158 = vmatprep.subr.mxu0 0.0
        %2159 = vmatpush1.msra.mxu0 0.0
        %2160 = vmatprep.subr.mxu0 0.0
        %2161 = vmatpush1.msra.mxu0 0.0
        %2162 = vmatprep.mubr.f32.mxu0 0.0
        %2163 = vmatmul.mubr.f32.gmra.mrb[0].mxu0 %v2096
        %v2164 = vpop.f32.mrb[0].mxu0
        %v2165 = vadd.f32 0.0, %v2164
        %v2166 = vpop.f32.mrb[0].mxu0
        %2167 = vdwg.mxu0
        %v2169 = vrot.slane %v2165, 1
        %2170 = vrot.lane.b32.xlu0 %v2169, 32
        %v2171 = vpop.permute.xlu0 %2170
        %v2173 = vrot.slane %v2165, 2
        %2174 = vrot.lane.b32.xlu0 %v2173, 64
        %v2175 = vpop.permute.xlu0 %2174
        %v2177 = vrot.slane %v2165, 3
        %2178 = vrot.lane.b32.xlu0 %v2177, 96
        %v2179 = vpop.permute.xlu0 %2178
        %v2181 = vsel %vm1352, %v2165, %v2171
        %vm2182 = vcmask 523264
        %v2183 = vsel %vm2182, %v2181, %v2175
        %vm2184 = vcmask 785408
        %v2185 = vsel %vm2184, %v2183, %v2179
        %v2187 = vlaneseq
        %v2188 = vshrl.u32 %v2187, 7
        %v2189 = vsub.s32 0, %v2188
        %v2190 = vrot.slane %v2062, %v2189
        %v2192 = vsub.f32 %v2053, %v2190
        %v2193 = vsub.f32 %v2054, %v2190
        %v2194 = vsub.f32 %v2055, %v2190
        %v2195 = vsub.f32 %v2056, %v2190
        %v2196 = vsub.f32 %v2057, %v2190
        %v2197 = vsub.f32 %v2058, %v2190
        %v2198 = vsub.f32 %v2059, %v2190
        %v2199 = vsub.f32 %v2060, %v2190
        %v2201 = vlaneseq
        %v2202 = vshrl.u32 %v2201, 7
        %v2203 = vsub.s32 0, %v2202
        %v2204 = vrot.slane %v2066, %v2203
        %v2206 = vmul.f32 %v2192, %v2204
        %v2207 = vmul.f32 %v2193, %v2204
        %v2208 = vmul.f32 %v2194, %v2204
        %v2209 = vmul.f32 %v2195, %v2204
        %v2210 = vmul.f32 %v2196, %v2204
        %v2211 = vmul.f32 %v2197, %v2204
        %v2212 = vmul.f32 %v2198, %v2204
        %v2213 = vmul.f32 %v2199, %v2204
        %v2214 = vld [vmem:[#allocation13] sm:$0xff]
        %v2216 = vlaneseq
        %v2217 = vshrl.u32 %v2216, 7
        %v2218 = vsub.s32 0, %v2217
        %v2219 = vrot.slane %v1333, %v2218
        %vm2221 = vcmask 64512
        %v2223 = vsel %vm2221, %v2206, 0
        %v2226 = vsel %vm2221, %v2207, 0
        %v2229 = vsel %vm2221, %v2208, 0
        %v2232 = vsel %vm2221, %v2209, 0
        %v2235 = vsel %vm2221, %v2210, 0
        %v2238 = vsel %vm2221, %v2211, 0
        %v2241 = vsel %vm2221, %v2212, 0
        %v2244 = vsel %vm2221, %v2213, 0
        %2246 = vmatprep.subr.mxu0 0.0
        %2247 = vmatpush1.msra.mxu0 %v2214
        %2248 = vmatprep.subr.mxu0 0.0
        %2249 = vmatpush1.msra.mxu0 0.0
        %2250 = vmatprep.subr.mxu0 0.0
        %2251 = vmatpush1.msra.mxu0 0.0
        %2252 = vmatprep.subr.mxu0 0.0
        %2253 = vmatpush1.msra.mxu0 0.0
        %2254 = vmatprep.subr.mxu0 0.0
        %2255 = vmatpush1.msra.mxu0 0.0
        %2256 = vmatprep.subr.mxu0 0.0
        %2257 = vmatpush1.msra.mxu0 0.0
        %2258 = vmatprep.subr.mxu0 0.0
        %2259 = vmatpush1.msra.mxu0 0.0
        %2260 = vmatprep.subr.mxu0 0.0
        %2261 = vmatpush1.msra.mxu0 0.0
        %2262 = vmatprep.subr.mxu0 0.0
        %2263 = vmatpush1.msra.mxu0 0.0
        %2264 = vmatprep.subr.mxu0 0.0
        %2265 = vmatpush1.msra.mxu0 0.0
        %2266 = vmatprep.subr.mxu0 0.0
        %2267 = vmatpush1.msra.mxu0 0.0
        %2268 = vmatprep.subr.mxu0 0.0
        %2269 = vmatpush1.msra.mxu0 0.0
        %2270 = vmatprep.subr.mxu0 0.0
        %2271 = vmatpush1.msra.mxu0 0.0
        %2272 = vmatprep.subr.mxu0 0.0
        %2273 = vmatpush1.msra.mxu0 0.0
        %2274 = vmatprep.subr.mxu0 0.0
        %2275 = vmatpush1.msra.mxu0 0.0
        %2276 = vmatprep.subr.mxu0 0.0
        %2277 = vmatpush1.msra.mxu0 0.0
        %2278 = vmatprep.subr.mxu0 0.0
        %2279 = vmatpush1.msra.mxu0 0.0
        %2280 = vmatprep.subr.mxu0 0.0
        %2281 = vmatpush1.msra.mxu0 0.0
        %2282 = vmatprep.subr.mxu0 0.0
        %2283 = vmatpush1.msra.mxu0 0.0
        %2284 = vmatprep.subr.mxu0 0.0
        %2285 = vmatpush1.msra.mxu0 0.0
        %2286 = vmatprep.subr.mxu0 0.0
        %2287 = vmatpush1.msra.mxu0 0.0
        %2288 = vmatprep.subr.mxu0 0.0
        %2289 = vmatpush1.msra.mxu0 0.0
        %2290 = vmatprep.subr.mxu0 0.0
        %2291 = vmatpush1.msra.mxu0 0.0
        %2292 = vmatprep.subr.mxu0 0.0
        %2293 = vmatpush1.msra.mxu0 0.0
        %2294 = vmatprep.subr.mxu0 0.0
        %2295 = vmatpush1.msra.mxu0 0.0
        %2296 = vmatprep.subr.mxu0 0.0
        %2297 = vmatpush1.msra.mxu0 0.0
        %2298 = vmatprep.subr.mxu0 0.0
        %2299 = vmatpush1.msra.mxu0 0.0
        %2300 = vmatprep.subr.mxu0 0.0
        %2301 = vmatpush1.msra.mxu0 0.0
        %2302 = vmatprep.subr.mxu0 0.0
        %2303 = vmatpush1.msra.mxu0 0.0
        %2304 = vmatprep.subr.mxu0 0.0
        %2305 = vmatpush1.msra.mxu0 0.0
        %2306 = vmatprep.subr.mxu0 0.0
        %2307 = vmatpush1.msra.mxu0 0.0
        %2308 = vmatprep.subr.mxu0 0.0
        %2309 = vmatpush1.msra.mxu0 0.0
        %2310 = vmatprep.mubr.f32.mxu0 0.0
        %2311 = vmatmul.mubr.f32.gmra.mrb[0].mxu0 %v2223
        %v2312 = vpop.f32.mrb[0].mxu0
        %v2313 = vadd.f32 %v2219, %v2312
        %v2314 = vpop.f32.mrb[0].mxu0
        %2315 = vmatprep.mubr.f32.mxu0 0.0
        %2316 = vmatmul.mubr.f32.gmra.mrb[0].mxu0 %v2226
        %v2317 = vpop.f32.mrb[0].mxu0
        %v2318 = vadd.f32 %v2219, %v2317
        %v2319 = vpop.f32.mrb[0].mxu0
        %2320 = vmatprep.mubr.f32.mxu0 0.0
        %2321 = vmatmul.mubr.f32.gmra.mrb[0].mxu0 %v2229
        %v2322 = vpop.f32.mrb[0].mxu0
        %v2323 = vadd.f32 %v2219, %v2322
        %v2324 = vpop.f32.mrb[0].mxu0
        %2325 = vmatprep.mubr.f32.mxu0 0.0
        %2326 = vmatmul.mubr.f32.gmra.mrb[0].mxu0 %v2232
        %v2327 = vpop.f32.mrb[0].mxu0
        %v2328 = vadd.f32 %v2219, %v2327
        %v2329 = vpop.f32.mrb[0].mxu0
        %2330 = vmatprep.mubr.f32.mxu0 0.0
        %2331 = vmatmul.mubr.f32.gmra.mrb[0].mxu0 %v2235
        %v2332 = vpop.f32.mrb[0].mxu0
        %v2333 = vadd.f32 %v2219, %v2332
        %v2334 = vpop.f32.mrb[0].mxu0
        %2335 = vmatprep.mubr.f32.mxu0 0.0
        %2336 = vmatmul.mubr.f32.gmra.mrb[0].mxu0 %v2238
        %v2337 = vpop.f32.mrb[0].mxu0
        %v2338 = vadd.f32 %v2219, %v2337
        %v2339 = vpop.f32.mrb[0].mxu0
        %2340 = vmatprep.mubr.f32.mxu0 0.0
        %2341 = vmatmul.mubr.f32.gmra.mrb[0].mxu0 %v2241
        %v2342 = vpop.f32.mrb[0].mxu0
        %v2343 = vadd.f32 %v2219, %v2342
        %v2344 = vpop.f32.mrb[0].mxu0
        %2345 = vmatprep.mubr.f32.mxu0 0.0
        %2346 = vmatmul.mubr.f32.gmra.mrb[0].mxu0 %v2244
        %v2347 = vpop.f32.mrb[0].mxu0
        %v2348 = vadd.f32 %v2219, %v2347
        %v2349 = vpop.f32.mrb[0].mxu0
        %2350 = vdwg.mxu0
        %v2351 = vadd.f32 %v2007, %v2313
        %v2352 = vadd.f32 %v2013, %v2318
        %v2353 = vadd.f32 %v2019, %v2323
        %v2354 = vadd.f32 %v2025, %v2328
        %v2355 = vadd.f32 %v2031, %v2333
        %v2356 = vadd.f32 %v2037, %v2338
        %v2357 = vadd.f32 %v2043, %v2343
        %v2358 = vadd.f32 %v2049, %v2348
        %v2359 = vadd.f32 %v2009, %v2313
        %v2360 = vadd.f32 %v2015, %v2318
        %v2361 = vadd.f32 %v2021, %v2323
        %v2362 = vadd.f32 %v2027, %v2328
        %v2363 = vadd.f32 %v2033, %v2333
        %v2364 = vadd.f32 %v2039, %v2338
        %v2365 = vadd.f32 %v2045, %v2343
        %v2366 = vadd.f32 %v2051, %v2348
        %v2367 = vld [vmem:[%s35] sm:$0xff]
        %v2368 = vld [vmem:[%s35 + $0x8] sm:$0xff]
        %v2369 = vld [vmem:[%s35 + $0x10] sm:$0xff]
        %v2370 = vld [vmem:[%s35 + $0x18] sm:$0xff]
        %v2371 = vld [vmem:[%s35 + $0x20] sm:$0xff]
        %v2372 = vld [vmem:[%s35 + $0x28] sm:$0xff]
        %v2373 = vld [vmem:[%s35 + $0x30] sm:$0xff]
        %v2374 = vld [vmem:[%s35 + $0x38] sm:$0xff]
        %v2375 = vld [vmem:[%s35 + $0x40] sm:$0xff]
        %v2376 = vld [vmem:[%s35 + $0x48] sm:$0xff]
        %v2377 = vld [vmem:[%s35 + $0x50] sm:$0xff]
        %v2378 = vld [vmem:[%s35 + $0x58] sm:$0xff]
        %v2379 = vld [vmem:[%s35 + $0x60] sm:$0xff]
        %v2380 = vld [vmem:[%s35 + $0x68] sm:$0xff]
        %v2381 = vld [vmem:[%s35 + $0x70] sm:$0xff]
        %v2382 = vld [vmem:[%s35 + $0x78] sm:$0xff]
        %v2384 = vlaneseq
        %v2385 = vshrl.u32 %v2384, 7
        %v2386 = vsub.s32 0, %v2385
        %v2387 = vrot.slane %v1334, %v2386
        %2389 = vmatprep.subr.mxu0 0.0
        %2390 = vmatpush1.msra.mxu0 %v2367
        %2391 = vmatprep.subr.mxu0 0.0
        %2392 = vmatpush1.msra.mxu0 %v2368
        %2393 = vmatprep.subr.mxu0 0.0
        %2394 = vmatpush1.msra.mxu0 %v2369
        %2395 = vmatprep.subr.mxu0 0.0
        %2396 = vmatpush1.msra.mxu0 %v2370
        %2397 = vmatprep.subr.mxu0 0.0
        %2398 = vmatpush1.msra.mxu0 %v2371
        %2399 = vmatprep.subr.mxu0 0.0
        %2400 = vmatpush1.msra.mxu0 %v2372
        %2401 = vmatprep.subr.mxu0 0.0
        %2402 = vmatpush1.msra.mxu0 %v2373
        %2403 = vmatprep.subr.mxu0 0.0
        %2404 = vmatpush1.msra.mxu0 %v2374
        %2405 = vmatprep.subr.mxu0 0.0
        %2406 = vmatpush1.msra.mxu0 %v2375
        %2407 = vmatprep.subr.mxu0 0.0
        %2408 = vmatpush1.msra.mxu0 %v2376
        %2409 = vmatprep.subr.mxu0 0.0
        %2410 = vmatpush1.msra.mxu0 %v2377
        %2411 = vmatprep.subr.mxu0 0.0
        %2412 = vmatpush1.msra.mxu0 %v2378
        %2413 = vmatprep.subr.mxu0 0.0
        %2414 = vmatpush1.msra.mxu0 %v2379
        %2415 = vmatprep.subr.mxu0 0.0
        %2416 = vmatpush1.msra.mxu0 %v2380
        %2417 = vmatprep.subr.mxu0 0.0
        %2418 = vmatpush1.msra.mxu0 %v2381
        %2419 = vmatprep.subr.mxu0 0.0
        %2420 = vmatpush1.msra.mxu0 %v2382
        %2421 = vmatprep.subr.mxu0 0.0
        %2422 = vmatpush1.msra.mxu0 0.0
        %2423 = vmatprep.subr.mxu0 0.0
        %2424 = vmatpush1.msra.mxu0 0.0
        %2425 = vmatprep.subr.mxu0 0.0
        %2426 = vmatpush1.msra.mxu0 0.0
        %2427 = vmatprep.subr.mxu0 0.0
        %2428 = vmatpush1.msra.mxu0 0.0
        %2429 = vmatprep.subr.mxu0 0.0
        %2430 = vmatpush1.msra.mxu0 0.0
        %2431 = vmatprep.subr.mxu0 0.0
        %2432 = vmatpush1.msra.mxu0 0.0
        %2433 = vmatprep.subr.mxu0 0.0
        %2434 = vmatpush1.msra.mxu0 0.0
        %2435 = vmatprep.subr.mxu0 0.0
        %2436 = vmatpush1.msra.mxu0 0.0
        %2437 = vmatprep.subr.mxu0 0.0
        %2438 = vmatpush1.msra.mxu0 0.0
        %2439 = vmatprep.subr.mxu0 0.0
        %2440 = vmatpush1.msra.mxu0 0.0
        %2441 = vmatprep.subr.mxu0 0.0
        %2442 = vmatpush1.msra.mxu0 0.0
        %2443 = vmatprep.subr.mxu0 0.0
        %2444 = vmatpush1.msra.mxu0 0.0
        %2445 = vmatprep.subr.mxu0 0.0
        %2446 = vmatpush1.msra.mxu0 0.0
        %2447 = vmatprep.subr.mxu0 0.0
        %2448 = vmatpush1.msra.mxu0 0.0
        %2449 = vmatprep.subr.mxu0 0.0
        %2450 = vmatpush1.msra.mxu0 0.0
        %2451 = vmatprep.subr.mxu0 0.0
        %2452 = vmatpush1.msra.mxu0 0.0
        %2453 = vmatprep.mubr.f32.mxu0 0.0
        %2454 = vmatmul.mubr.f32.gmra.mrb[0].mxu0 %v2351
        %v2455 = vpop.f32.mrb[0].mxu0
        %v2456 = vadd.f32 %v2387, %v2455
        %v2457 = vpop.f32.mrb[0].mxu0
        %2458 = vmatprep.mubr.f32.mxu0 0.0
        %2459 = vmatmul.mubr.f32.gmra.mrb[0].mxu0 %v2352
        %v2460 = vpop.f32.mrb[0].mxu0
        %v2461 = vadd.f32 %v2387, %v2460
        %v2462 = vpop.f32.mrb[0].mxu0
        %2463 = vmatprep.mubr.f32.mxu0 0.0
        %2464 = vmatmul.mubr.f32.gmra.mrb[0].mxu0 %v2353
        %v2465 = vpop.f32.mrb[0].mxu0
        %v2466 = vadd.f32 %v2387, %v2465
        %v2467 = vpop.f32.mrb[0].mxu0
        %2468 = vmatprep.mubr.f32.mxu0 0.0
        %2469 = vmatmul.mubr.f32.gmra.mrb[0].mxu0 %v2354
        %v2470 = vpop.f32.mrb[0].mxu0
        %v2471 = vadd.f32 %v2387, %v2470
        %v2472 = vpop.f32.mrb[0].mxu0
        %2473 = vmatprep.mubr.f32.mxu0 0.0
        %2474 = vmatmul.mubr.f32.gmra.mrb[0].mxu0 %v2355
        %v2475 = vpop.f32.mrb[0].mxu0
        %v2476 = vadd.f32 %v2387, %v2475
        %v2477 = vpop.f32.mrb[0].mxu0
        %2478 = vmatprep.mubr.f32.mxu0 0.0
        %2479 = vmatmul.mubr.f32.gmra.mrb[0].mxu0 %v2356
        %v2480 = vpop.f32.mrb[0].mxu0
        %v2481 = vadd.f32 %v2387, %v2480
        %v2482 = vpop.f32.mrb[0].mxu0
        %2483 = vmatprep.mubr.f32.mxu0 0.0
        %2484 = vmatmul.mubr.f32.gmra.mrb[0].mxu0 %v2357
        %v2485 = vpop.f32.mrb[0].mxu0
        %v2486 = vadd.f32 %v2387, %v2485
        %v2487 = vpop.f32.mrb[0].mxu0
        %2488 = vmatprep.mubr.f32.mxu0 0.0
        %2489 = vmatmul.mubr.f32.gmra.mrb[0].mxu0 %v2358
        %v2490 = vpop.f32.mrb[0].mxu0
        %v2491 = vadd.f32 %v2387, %v2490
        %v2492 = vpop.f32.mrb[0].mxu0
        %2493 = vmatprep.mubr.f32.mxu0 0.0
        %2494 = vmatmul.mubr.f32.gmra.mrb[0].mxu0 %v2359
        %v2495 = vpop.f32.mrb[0].mxu0
        %v2496 = vadd.f32 %v2387, %v2495
        %v2497 = vpop.f32.mrb[0].mxu0
        %2498 = vmatprep.mubr.f32.mxu0 0.0
        %2499 = vmatmul.mubr.f32.gmra.mrb[0].mxu0 %v2360
        %v2500 = vpop.f32.mrb[0].mxu0
        %v2501 = vadd.f32 %v2387, %v2500
        %v2502 = vpop.f32.mrb[0].mxu0
        %2503 = vmatprep.mubr.f32.mxu0 0.0
        %2504 = vmatmul.mubr.f32.gmra.mrb[0].mxu0 %v2361
        %v2505 = vpop.f32.mrb[0].mxu0
        %v2506 = vadd.f32 %v2387, %v2505
        %v2507 = vpop.f32.mrb[0].mxu0
        %2508 = vmatprep.mubr.f32.mxu0 0.0
        %2509 = vmatmul.mubr.f32.gmra.mrb[0].mxu0 %v2362
        %v2510 = vpop.f32.mrb[0].mxu0
        %v2511 = vadd.f32 %v2387, %v2510
        %v2512 = vpop.f32.mrb[0].mxu0
        %2513 = vmatprep.mubr.f32.mxu0 0.0
        %2514 = vmatmul.mubr.f32.gmra.mrb[0].mxu0 %v2363
        %v2515 = vpop.f32.mrb[0].mxu0
        %v2516 = vadd.f32 %v2387, %v2515
        %v2517 = vpop.f32.mrb[0].mxu0
        %2518 = vmatprep.mubr.f32.mxu0 0.0
        %2519 = vmatmul.mubr.f32.gmra.mrb[0].mxu0 %v2364
        %v2520 = vpop.f32.mrb[0].mxu0
        %v2521 = vadd.f32 %v2387, %v2520
        %v2522 = vpop.f32.mrb[0].mxu0
        %2523 = vmatprep.mubr.f32.mxu0 0.0
        %2524 = vmatmul.mubr.f32.gmra.mrb[0].mxu0 %v2365
        %v2525 = vpop.f32.mrb[0].mxu0
        %v2526 = vadd.f32 %v2387, %v2525
        %v2527 = vpop.f32.mrb[0].mxu0
        %2528 = vmatprep.mubr.f32.mxu0 0.0
        %2529 = vmatmul.mubr.f32.gmra.mrb[0].mxu0 %v2366
        %v2530 = vpop.f32.mrb[0].mxu0
        %v2531 = vadd.f32 %v2387, %v2530
        %v2532 = vpop.f32.mrb[0].mxu0
        %2533 = vdwg.mxu0
        %v2534 = vmax.f32 %v2456, 0.0
        %v2535 = vmax.f32 %v2461, 0.0
        %v2536 = vmax.f32 %v2466, 0.0
        %v2537 = vmax.f32 %v2471, 0.0
        %v2538 = vmax.f32 %v2476, 0.0
        %v2539 = vmax.f32 %v2481, 0.0
        %v2540 = vmax.f32 %v2486, 0.0
        %v2541 = vmax.f32 %v2491, 0.0
        %v2542 = vmax.f32 %v2496, 0.0
        %v2543 = vmax.f32 %v2501, 0.0
        %v2544 = vmax.f32 %v2506, 0.0
        %v2545 = vmax.f32 %v2511, 0.0
        %v2546 = vmax.f32 %v2516, 0.0
        %v2547 = vmax.f32 %v2521, 0.0
        %v2548 = vmax.f32 %v2526, 0.0
        %v2549 = vmax.f32 %v2531, 0.0
        %v2550 = vld [vmem:[%s39] sm:$0xff]
        %v2551 = vld [vmem:[%s39 + $0x8] sm:$0xff]
        %v2552 = vld [vmem:[%s39 + $0x10] sm:$0xff]
        %v2553 = vld [vmem:[%s39 + $0x18] sm:$0xff]
        %v2554 = vld [vmem:[%s39 + $0x20] sm:$0xff]
        %v2555 = vld [vmem:[%s39 + $0x28] sm:$0xff]
        %v2556 = vld [vmem:[%s39 + $0x30] sm:$0xff]
        %v2557 = vld [vmem:[%s39 + $0x38] sm:$0xff]
        %v2558 = vld [vmem:[%s39 + $0x40] sm:$0xff]
        %v2559 = vld [vmem:[%s39 + $0x48] sm:$0xff]
        %v2560 = vld [vmem:[%s39 + $0x50] sm:$0xff]
        %v2561 = vld [vmem:[%s39 + $0x58] sm:$0xff]
        %v2562 = vld [vmem:[%s39 + $0x60] sm:$0xff]
        %v2563 = vld [vmem:[%s39 + $0x68] sm:$0xff]
        %v2564 = vld [vmem:[%s39 + $0x70] sm:$0xff]
        %v2565 = vld [vmem:[%s39 + $0x78] sm:$0xff]
        %v2567 = vlaneseq
        %v2568 = vshrl.u32 %v2567, 7
        %v2569 = vsub.s32 0, %v2568
        %v2570 = vrot.slane %v1335, %v2569
        %2572 = vmatprep.subr.mxu0 0.0
        %2573 = vmatpush1.msra.mxu0 %v2550
        %2574 = vmatprep.subr.mxu0 0.0
        %2575 = vmatpush1.msra.mxu0 %v2551
        %2576 = vmatprep.subr.mxu0 0.0
        %2577 = vmatpush1.msra.mxu0 %v2552
        %2578 = vmatprep.subr.mxu0 0.0
        %2579 = vmatpush1.msra.mxu0 %v2553
        %2580 = vmatprep.subr.mxu0 0.0
        %2581 = vmatpush1.msra.mxu0 %v2554
        %2582 = vmatprep.subr.mxu0 0.0
        %2583 = vmatpush1.msra.mxu0 %v2555
        %2584 = vmatprep.subr.mxu0 0.0
        %2585 = vmatpush1.msra.mxu0 %v2556
        %2586 = vmatprep.subr.mxu0 0.0
        %2587 = vmatpush1.msra.mxu0 %v2557
        %2588 = vmatprep.subr.mxu0 0.0
        %2589 = vmatpush1.msra.mxu0 %v2558
        %2590 = vmatprep.subr.mxu0 0.0
        %2591 = vmatpush1.msra.mxu0 %v2559
        %2592 = vmatprep.subr.mxu0 0.0
        %2593 = vmatpush1.msra.mxu0 %v2560
        %2594 = vmatprep.subr.mxu0 0.0
        %2595 = vmatpush1.msra.mxu0 %v2561
        %2596 = vmatprep.subr.mxu0 0.0
        %2597 = vmatpush1.msra.mxu0 %v2562
        %2598 = vmatprep.subr.mxu0 0.0
        %2599 = vmatpush1.msra.mxu0 %v2563
        %2600 = vmatprep.subr.mxu0 0.0
        %2601 = vmatpush1.msra.mxu0 %v2564
        %2602 = vmatprep.subr.mxu0 0.0
        %2603 = vmatpush1.msra.mxu0 %v2565
        %2604 = vmatprep.subr.mxu0 0.0
        %2605 = vmatpush1.msra.mxu0 0.0
        %2606 = vmatprep.subr.mxu0 0.0
        %2607 = vmatpush1.msra.mxu0 0.0
        %2608 = vmatprep.subr.mxu0 0.0
        %2609 = vmatpush1.msra.mxu0 0.0
        %2610 = vmatprep.subr.mxu0 0.0
        %2611 = vmatpush1.msra.mxu0 0.0
        %2612 = vmatprep.subr.mxu0 0.0
        %2613 = vmatpush1.msra.mxu0 0.0
        %2614 = vmatprep.subr.mxu0 0.0
        %2615 = vmatpush1.msra.mxu0 0.0
        %2616 = vmatprep.subr.mxu0 0.0
        %2617 = vmatpush1.msra.mxu0 0.0
        %2618 = vmatprep.subr.mxu0 0.0
        %2619 = vmatpush1.msra.mxu0 0.0
        %2620 = vmatprep.subr.mxu0 0.0
        %2621 = vmatpush1.msra.mxu0 0.0
        %2622 = vmatprep.subr.mxu0 0.0
        %2623 = vmatpush1.msra.mxu0 0.0
        %2624 = vmatprep.subr.mxu0 0.0
        %2625 = vmatpush1.msra.mxu0 0.0
        %2626 = vmatprep.subr.mxu0 0.0
        %2627 = vmatpush1.msra.mxu0 0.0
        %2628 = vmatprep.subr.mxu0 0.0
        %2629 = vmatpush1.msra.mxu0 0.0
        %2630 = vmatprep.subr.mxu0 0.0
        %2631 = vmatpush1.msra.mxu0 0.0
        %2632 = vmatprep.subr.mxu0 0.0
        %2633 = vmatpush1.msra.mxu0 0.0
        %2634 = vmatprep.subr.mxu0 0.0
        %2635 = vmatpush1.msra.mxu0 0.0
        %2636 = vmatprep.mubr.f32.mxu0 0.0
        %2637 = vmatmul.mubr.f32.gmra.mrb[0].mxu0 %v2534
        %v2638 = vpop.f32.mrb[0].mxu0
        %v2639 = vadd.f32 %v2570, %v2638
        %v2640 = vpop.f32.mrb[0].mxu0
        %2641 = vmatprep.mubr.f32.mxu0 0.0
        %2642 = vmatmul.mubr.f32.gmra.mrb[0].mxu0 %v2535
        %v2643 = vpop.f32.mrb[0].mxu0
        %v2644 = vadd.f32 %v2570, %v2643
        %v2645 = vpop.f32.mrb[0].mxu0
        %2646 = vmatprep.mubr.f32.mxu0 0.0
        %2647 = vmatmul.mubr.f32.gmra.mrb[0].mxu0 %v2536
        %v2648 = vpop.f32.mrb[0].mxu0
        %v2649 = vadd.f32 %v2570, %v2648
        %v2650 = vpop.f32.mrb[0].mxu0
        %2651 = vmatprep.mubr.f32.mxu0 0.0
        %2652 = vmatmul.mubr.f32.gmra.mrb[0].mxu0 %v2537
        %v2653 = vpop.f32.mrb[0].mxu0
        %v2654 = vadd.f32 %v2570, %v2653
        %v2655 = vpop.f32.mrb[0].mxu0
        %2656 = vmatprep.mubr.f32.mxu0 0.0
        %2657 = vmatmul.mubr.f32.gmra.mrb[0].mxu0 %v2538
        %v2658 = vpop.f32.mrb[0].mxu0
        %v2659 = vadd.f32 %v2570, %v2658
        %v2660 = vpop.f32.mrb[0].mxu0
        %2661 = vmatprep.mubr.f32.mxu0 0.0
        %2662 = vmatmul.mubr.f32.gmra.mrb[0].mxu0 %v2539
        %v2663 = vpop.f32.mrb[0].mxu0
        %v2664 = vadd.f32 %v2570, %v2663
        %v2665 = vpop.f32.mrb[0].mxu0
        %2666 = vmatprep.mubr.f32.mxu0 0.0
        %2667 = vmatmul.mubr.f32.gmra.mrb[0].mxu0 %v2540
        %v2668 = vpop.f32.mrb[0].mxu0
        %v2669 = vadd.f32 %v2570, %v2668
        %v2670 = vpop.f32.mrb[0].mxu0
        %2671 = vmatprep.mubr.f32.mxu0 0.0
        %2672 = vmatmul.mubr.f32.gmra.mrb[0].mxu0 %v2541
        %v2673 = vpop.f32.mrb[0].mxu0
        %v2674 = vadd.f32 %v2570, %v2673
        %v2675 = vpop.f32.mrb[0].mxu0
        %2676 = vmatprep.mubr.f32.mxu0 0.0
        %2677 = vmatmul.mubr.f32.gmra.mrb[0].mxu0 %v2542
        %v2678 = vpop.f32.mrb[0].mxu0
        %v2679 = vadd.f32 %v2570, %v2678
        %v2680 = vpop.f32.mrb[0].mxu0
        %2681 = vmatprep.mubr.f32.mxu0 0.0
        %2682 = vmatmul.mubr.f32.gmra.mrb[0].mxu0 %v2543
        %v2683 = vpop.f32.mrb[0].mxu0
        %v2684 = vadd.f32 %v2570, %v2683
        %v2685 = vpop.f32.mrb[0].mxu0
        %2686 = vmatprep.mubr.f32.mxu0 0.0
        %2687 = vmatmul.mubr.f32.gmra.mrb[0].mxu0 %v2544
        %v2688 = vpop.f32.mrb[0].mxu0
        %v2689 = vadd.f32 %v2570, %v2688
        %v2690 = vpop.f32.mrb[0].mxu0
        %2691 = vmatprep.mubr.f32.mxu0 0.0
        %2692 = vmatmul.mubr.f32.gmra.mrb[0].mxu0 %v2545
        %v2693 = vpop.f32.mrb[0].mxu0
        %v2694 = vadd.f32 %v2570, %v2693
        %v2695 = vpop.f32.mrb[0].mxu0
        %2696 = vmatprep.mubr.f32.mxu0 0.0
        %2697 = vmatmul.mubr.f32.gmra.mrb[0].mxu0 %v2546
        %v2698 = vpop.f32.mrb[0].mxu0
        %v2699 = vadd.f32 %v2570, %v2698
        %v2700 = vpop.f32.mrb[0].mxu0
        %2701 = vmatprep.mubr.f32.mxu0 0.0
        %2702 = vmatmul.mubr.f32.gmra.mrb[0].mxu0 %v2547
        %v2703 = vpop.f32.mrb[0].mxu0
        %v2704 = vadd.f32 %v2570, %v2703
        %v2705 = vpop.f32.mrb[0].mxu0
        %2706 = vmatprep.mubr.f32.mxu0 0.0
        %2707 = vmatmul.mubr.f32.gmra.mrb[0].mxu0 %v2548
        %v2708 = vpop.f32.mrb[0].mxu0
        %v2709 = vadd.f32 %v2570, %v2708
        %v2710 = vpop.f32.mrb[0].mxu0
        %2711 = vmatprep.mubr.f32.mxu0 0.0
        %2712 = vmatmul.mubr.f32.gmra.mrb[0].mxu0 %v2549
        %v2713 = vpop.f32.mrb[0].mxu0
        %v2714 = vadd.f32 %v2570, %v2713
        %v2715 = vpop.f32.mrb[0].mxu0
        %2716 = vdwg.mxu0
        %v2717 = vlaneseq
        %v2718 = vshrl.u32 %v2717, 7
        %v2719 = vsub.s32 0, %v2718
        %v2720 = vrot.slane %v2185, %v2719
        %v2721 = vmul.f32 %v2639, %v2720
        %v2722 = vmul.f32 %v2644, %v2720
        %v2723 = vmul.f32 %v2649, %v2720
        %v2724 = vmul.f32 %v2654, %v2720
        %v2725 = vmul.f32 %v2659, %v2720
        %v2726 = vmul.f32 %v2664, %v2720
        %v2727 = vmul.f32 %v2669, %v2720
        %v2728 = vmul.f32 %v2674, %v2720
        %v2729 = vld [vmem:[%s43] sm:$0xff]
        %v2730 = vld [vmem:[%s43 + $0x8] sm:$0xff]
        %v2731 = vld [vmem:[%s43 + $0x10] sm:$0xff]
        %v2732 = vld [vmem:[%s43 + $0x18] sm:$0xff]
        %v2733 = vld [vmem:[%s43 + $0x20] sm:$0xff]
        %v2734 = vld [vmem:[%s43 + $0x28] sm:$0xff]
        %v2735 = vld [vmem:[%s43 + $0x30] sm:$0xff]
        %v2736 = vld [vmem:[%s43 + $0x38] sm:$0xff]
        %v2737 = vld [vmem:[%s43 + $0x40] sm:$0xff]
        %v2738 = vld [vmem:[%s43 + $0x48] sm:$0xff]
        %v2739 = vld [vmem:[%s43 + $0x50] sm:$0xff]
        %v2740 = vld [vmem:[%s43 + $0x58] sm:$0xff]
        %v2741 = vld [vmem:[%s43 + $0x60] sm:$0xff]
        %v2742 = vld [vmem:[%s43 + $0x68] sm:$0xff]
        %v2743 = vld [vmem:[%s43 + $0x70] sm:$0xff]
        %v2744 = vld [vmem:[%s43 + $0x78] sm:$0xff]
        %2745 = vmatprep.subr.mxu0 0.0
        %2746 = vmatpush1.msra.mxu0 %v2729
        %2747 = vmatprep.subr.mxu0 0.0
        %2748 = vmatpush1.msra.mxu0 %v2730
        %2749 = vmatprep.subr.mxu0 0.0
        %2750 = vmatpush1.msra.mxu0 %v2731
        %2751 = vmatprep.subr.mxu0 0.0
        %2752 = vmatpush1.msra.mxu0 %v2732
        %2753 = vmatprep.subr.mxu0 0.0
        %2754 = vmatpush1.msra.mxu0 %v2733
        %2755 = vmatprep.subr.mxu0 0.0
        %2756 = vmatpush1.msra.mxu0 %v2734
        %2757 = vmatprep.subr.mxu0 0.0
        %2758 = vmatpush1.msra.mxu0 %v2735
        %2759 = vmatprep.subr.mxu0 0.0
        %2760 = vmatpush1.msra.mxu0 %v2736
        %2761 = vmatprep.subr.mxu0 0.0
        %2762 = vmatpush1.msra.mxu0 %v2737
        %2763 = vmatprep.subr.mxu0 0.0
        %2764 = vmatpush1.msra.mxu0 %v2738
        %2765 = vmatprep.subr.mxu0 0.0
        %2766 = vmatpush1.msra.mxu0 %v2739
        %2767 = vmatprep.subr.mxu0 0.0
        %2768 = vmatpush1.msra.mxu0 %v2740
        %2769 = vmatprep.subr.mxu0 0.0
        %2770 = vmatpush1.msra.mxu0 %v2741
        %2771 = vmatprep.subr.mxu0 0.0
        %2772 = vmatpush1.msra.mxu0 %v2742
        %2773 = vmatprep.subr.mxu0 0.0
        %2774 = vmatpush1.msra.mxu0 %v2743
        %2775 = vmatprep.subr.mxu0 0.0
        %2776 = vmatpush1.msra.mxu0 %v2744
        %2777 = vmatprep.subr.mxu0 0.0
        %2778 = vmatpush1.msra.mxu0 0.0
        %2779 = vmatprep.subr.mxu0 0.0
        %2780 = vmatpush1.msra.mxu0 0.0
        %2781 = vmatprep.subr.mxu0 0.0
        %2782 = vmatpush1.msra.mxu0 0.0
        %2783 = vmatprep.subr.mxu0 0.0
        %2784 = vmatpush1.msra.mxu0 0.0
        %2785 = vmatprep.subr.mxu0 0.0
        %2786 = vmatpush1.msra.mxu0 0.0
        %2787 = vmatprep.subr.mxu0 0.0
        %2788 = vmatpush1.msra.mxu0 0.0
        %2789 = vmatprep.subr.mxu0 0.0
        %2790 = vmatpush1.msra.mxu0 0.0
        %2791 = vmatprep.subr.mxu0 0.0
        %2792 = vmatpush1.msra.mxu0 0.0
        %2793 = vmatprep.subr.mxu0 0.0
        %2794 = vmatpush1.msra.mxu0 0.0
        %2795 = vmatprep.subr.mxu0 0.0
        %2796 = vmatpush1.msra.mxu0 0.0
        %2797 = vmatprep.subr.mxu0 0.0
        %2798 = vmatpush1.msra.mxu0 0.0
        %2799 = vmatprep.subr.mxu0 0.0
        %2800 = vmatpush1.msra.mxu0 0.0
        %2801 = vmatprep.subr.mxu0 0.0
        %2802 = vmatpush1.msra.mxu0 0.0
        %2803 = vmatprep.subr.mxu0 0.0
        %2804 = vmatpush1.msra.mxu0 0.0
        %2805 = vmatprep.subr.mxu0 0.0
        %2806 = vmatpush1.msra.mxu0 0.0
        %2807 = vmatprep.subr.mxu0 0.0
        %2808 = vmatpush1.msra.mxu0 0.0
        %2809 = vmatprep.mubr.f32.mxu0 0.0
        %2810 = vmatmul.mubr.f32.gmra.mrb[0].mxu0 %v2721
        %v2811 = vpop.f32.mrb[0].mxu0
        %v2812 = vadd.f32 0.0, %v2811
        %v2813 = vpop.f32.mrb[0].mxu0
        %2814 = vmatprep.mubr.f32.mxu0 0.0
        %2815 = vmatmul.mubr.f32.gmra.mrb[0].mxu0 %v2722
        %v2816 = vpop.f32.mrb[0].mxu0
        %v2817 = vadd.f32 0.0, %v2816
        %v2818 = vpop.f32.mrb[0].mxu0
        %2819 = vmatprep.mubr.f32.mxu0 0.0
        %2820 = vmatmul.mubr.f32.gmra.mrb[0].mxu0 %v2723
        %v2821 = vpop.f32.mrb[0].mxu0
        %v2822 = vadd.f32 0.0, %v2821
        %v2823 = vpop.f32.mrb[0].mxu0
        %2824 = vmatprep.mubr.f32.mxu0 0.0
        %2825 = vmatmul.mubr.f32.gmra.mrb[0].mxu0 %v2724
        %v2826 = vpop.f32.mrb[0].mxu0
        %v2827 = vadd.f32 0.0, %v2826
        %v2828 = vpop.f32.mrb[0].mxu0
        %2829 = vmatprep.mubr.f32.mxu0 0.0
        %2830 = vmatmul.mubr.f32.gmra.mrb[0].mxu0 %v2725
        %v2831 = vpop.f32.mrb[0].mxu0
        %v2832 = vadd.f32 0.0, %v2831
        %v2833 = vpop.f32.mrb[0].mxu0
        %2834 = vmatprep.mubr.f32.mxu0 0.0
        %2835 = vmatmul.mubr.f32.gmra.mrb[0].mxu0 %v2726
        %v2836 = vpop.f32.mrb[0].mxu0
        %v2837 = vadd.f32 0.0, %v2836
        %v2838 = vpop.f32.mrb[0].mxu0
        %2839 = vmatprep.mubr.f32.mxu0 0.0
        %2840 = vmatmul.mubr.f32.gmra.mrb[0].mxu0 %v2727
        %v2841 = vpop.f32.mrb[0].mxu0
        %v2842 = vadd.f32 0.0, %v2841
        %v2843 = vpop.f32.mrb[0].mxu0
        %2844 = vmatprep.mubr.f32.mxu0 0.0
        %2845 = vmatmul.mubr.f32.gmra.mrb[0].mxu0 %v2728
        %v2846 = vpop.f32.mrb[0].mxu0
        %v2847 = vadd.f32 0.0, %v2846
        %v2848 = vpop.f32.mrb[0].mxu0
        %2849 = vdwg.mxu0
        %v2850 = vmul.f32 %v2812, 0.17677669
        %v2851 = vmul.f32 %v2817, 0.17677669
        %v2852 = vmul.f32 %v2822, 0.17677669
        %v2853 = vmul.f32 %v2827, 0.17677669
        %v2854 = vmul.f32 %v2832, 0.17677669
        %v2855 = vmul.f32 %v2837, 0.17677669
        %v2856 = vmul.f32 %v2842, 0.17677669
        %v2857 = vmul.f32 %v2847, 0.17677669
        %vm2858 = vcmask 31744
        %v2859 = vsel %vm2858, %v2850, -inf
        %2860 = vmax.xlane.f32.xlu0 %v2859
        %v2861 = vpop.xlane.xlu0 %2860
        %v2862 = vsel %vm2858, %v2851, -inf
        %2863 = vmax.xlane.f32.xlu0 %v2862
        %v2864 = vpop.xlane.xlu0 %2863
        %v2865 = vsel %vm2858, %v2852, -inf
        %2866 = vmax.xlane.f32.xlu0 %v2865
        %v2867 = vpop.xlane.xlu0 %2866
        %v2868 = vsel %vm2858, %v2853, -inf
        %2869 = vmax.xlane.f32.xlu0 %v2868
        %v2870 = vpop.xlane.xlu0 %2869
        %v2871 = vsel %vm2858, %v2854, -inf
        %2872 = vmax.xlane.f32.xlu0 %v2871
        %v2873 = vpop.xlane.xlu0 %2872
        %v2874 = vsel %vm2858, %v2855, -inf
        %2875 = vmax.xlane.f32.xlu0 %v2874
        %v2876 = vpop.xlane.xlu0 %2875
        %v2877 = vsel %vm2858, %v2856, -inf
        %2878 = vmax.xlane.f32.xlu0 %v2877
        %v2879 = vpop.xlane.xlu0 %2878
        %v2880 = vsel %vm2858, %v2857, -inf
        %2881 = vmax.xlane.f32.xlu0 %v2880
        %v2882 = vpop.xlane.xlu0 %2881
        %v2883 = vsub.f32 %v2850, %v2861
        %v2884 = vsub.f32 %v2851, %v2864
        %v2885 = vsub.f32 %v2852, %v2867
        %v2886 = vsub.f32 %v2853, %v2870
        %v2887 = vsub.f32 %v2854, %v2873
        %v2888 = vsub.f32 %v2855, %v2876
        %v2889 = vsub.f32 %v2856, %v2879
        %v2890 = vsub.f32 %v2857, %v2882
        %v2891 = vmul.f32 %v2883, 1.442695
        %v2892 = vpow.pop %v2891
        %v2893 = vmul.f32 %v2884, 1.442695
        %v2894 = vpow.pop %v2893
        %v2895 = vmul.f32 %v2885, 1.442695
        %v2896 = vpow.pop %v2895
        %v2897 = vmul.f32 %v2886, 1.442695
        %v2898 = vpow.pop %v2897
        %v2899 = vmul.f32 %v2887, 1.442695
        %v2900 = vpow.pop %v2899
        %v2901 = vmul.f32 %v2888, 1.442695
        %v2902 = vpow.pop %v2901
        %v2903 = vmul.f32 %v2889, 1.442695
        %v2904 = vpow.pop %v2903
        %v2905 = vmul.f32 %v2890, 1.442695
        %v2906 = vpow.pop %v2905
        %v2907 = vsel %vm2858, %v2892, 0.0
        %2908 = vadd.xlane.f32.xlu0 %v2907
        %v2909 = vpop.xlane.xlu0 %2908
        %v2910 = vsel %vm2858, %v2894, 0.0
        %2911 = vadd.xlane.f32.xlu0 %v2910
        %v2912 = vpop.xlane.xlu0 %2911
        %v2913 = vsel %vm2858, %v2896, 0.0
        %2914 = vadd.xlane.f32.xlu0 %v2913
        %v2915 = vpop.xlane.xlu0 %2914
        %v2916 = vsel %vm2858, %v2898, 0.0
        %2917 = vadd.xlane.f32.xlu0 %v2916
        %v2918 = vpop.xlane.xlu0 %2917
        %v2919 = vsel %vm2858, %v2900, 0.0
        %2920 = vadd.xlane.f32.xlu0 %v2919
        %v2921 = vpop.xlane.xlu0 %2920
        %v2922 = vsel %vm2858, %v2902, 0.0
        %2923 = vadd.xlane.f32.xlu0 %v2922
        %v2924 = vpop.xlane.xlu0 %2923
        %v2925 = vsel %vm2858, %v2904, 0.0
        %2926 = vadd.xlane.f32.xlu0 %v2925
        %v2927 = vpop.xlane.xlu0 %2926
        %v2928 = vsel %vm2858, %v2906, 0.0
        %2929 = vadd.xlane.f32.xlu0 %v2928
        %v2930 = vpop.xlane.xlu0 %2929
        %v2931 = vrcp.pop %v2909
        %v2932 = vrcp.pop %v2912
        %v2933 = vrcp.pop %v2915
        %v2934 = vrcp.pop %v2918
        %v2935 = vrcp.pop %v2921
        %v2936 = vrcp.pop %v2924
        %v2937 = vrcp.pop %v2927
        %v2938 = vrcp.pop %v2930
        %v2939 = vmul.f32 %v2892, %v2931
        %v2940 = vmul.f32 %v2894, %v2932
        %v2941 = vmul.f32 %v2896, %v2933
        %v2942 = vmul.f32 %v2898, %v2934
        %v2943 = vmul.f32 %v2900, %v2935
        %v2944 = vmul.f32 %v2902, %v2936
        %v2945 = vmul.f32 %v2904, %v2937
        %v2946 = vmul.f32 %v2906, %v2938
        %v2947 = vadd.f32 %v2939, 1e-08
        %v2948 = vadd.f32 %v2940, 1e-08
        %v2949 = vadd.f32 %v2941, 1e-08
        %v2950 = vadd.f32 %v2942, 1e-08
        %v2951 = vadd.f32 %v2943, 1e-08
        %v2952 = vadd.f32 %v2944, 1e-08
        %v2953 = vadd.f32 %v2945, 1e-08
        %v2954 = vadd.f32 %v2946, 1e-08
        %v2955 = vsel %vm2858, %v2947, 0.0
        %v2956 = vsel %vm2858, %v2948, 0.0
        %v2957 = vadd.f32 %v2955, %v2956
        %v2958 = vsel %vm2858, %v2949, 0.0
        %v2959 = vadd.f32 %v2957, %v2958
        %v2960 = vsel %vm2858, %v2950, 0.0
        %v2961 = vadd.f32 %v2959, %v2960
        %v2962 = vsel %vm2858, %v2951, 0.0
        %v2963 = vadd.f32 %v2961, %v2962
        %v2964 = vsel %vm2858, %v2952, 0.0
        %v2965 = vadd.f32 %v2963, %v2964
        %v2966 = vsel %vm2858, %v2953, 0.0
        %v2967 = vadd.f32 %v2965, %v2966
        %v2968 = vsel %vm2858, %v2954, 0.0
        %v2969 = vadd.f32 %v2967, %v2968
        %v2970 = vrot.slane %v2969, 4
        %v2971 = vadd.f32 %v2969, %v2970
        %v2972 = vrot.slane %v2971, 2
        %v2973 = vadd.f32 %v2971, %v2972
        %v2974 = vrot.slane %v2973, 1
        %v2975 = vadd.f32 %v2973, %v2974
        %v2976 = vrcp.pop %v2975
        %v2977 = vmul.f32 %v2947, %v2976
        %v2978 = vmul.f32 %v2948, %v2976
        %v2979 = vmul.f32 %v2949, %v2976
        %v2980 = vmul.f32 %v2950, %v2976
        %v2981 = vmul.f32 %v2951, %v2976
        %v2982 = vmul.f32 %v2952, %v2976
        %v2983 = vmul.f32 %v2953, %v2976
        %v2984 = vmul.f32 %v2954, %v2976
        %v2985 = vld [vmem:[#allocation19] sm:$0xf]
        %v2987 = vsel %vm2858, %v2977, 0
        %v2990 = vsel %vm2858, %v2978, 0
        %v2993 = vsel %vm2858, %v2979, 0
        %v2996 = vsel %vm2858, %v2980, 0
        %v2999 = vsel %vm2858, %v2981, 0
        %v3002 = vsel %vm2858, %v2982, 0
        %v3005 = vsel %vm2858, %v2983, 0
        %v3008 = vsel %vm2858, %v2984, 0
        %vm3010 = vcmask 1043456
        %v3012 = vsel %vm3010, %v2985, 0
        %3014 = vmatprep.subr.mxu0 0.0
        %3015 = vmatpush1.msra.mxu0 %v3012
        %3016 = vmatprep.subr.mxu0 0.0
        %3017 = vmatpush1.msra.mxu0 0.0
        %3018 = vmatprep.subr.mxu0 0.0
        %3019 = vmatpush1.msra.mxu0 0.0
        %3020 = vmatprep.subr.mxu0 0.0
        %3021 = vmatpush1.msra.mxu0 0.0
        %3022 = vmatprep.subr.mxu0 0.0
        %3023 = vmatpush1.msra.mxu0 0.0
        %3024 = vmatprep.subr.mxu0 0.0
        %3025 = vmatpush1.msra.mxu0 0.0
        %3026 = vmatprep.subr.mxu0 0.0
        %3027 = vmatpush1.msra.mxu0 0.0
        %3028 = vmatprep.subr.mxu0 0.0
        %3029 = vmatpush1.msra.mxu0 0.0
        %3030 = vmatprep.subr.mxu0 0.0
        %3031 = vmatpush1.msra.mxu0 0.0
        %3032 = vmatprep.subr.mxu0 0.0
        %3033 = vmatpush1.msra.mxu0 0.0
        %3034 = vmatprep.subr.mxu0 0.0
        %3035 = vmatpush1.msra.mxu0 0.0
        %3036 = vmatprep.subr.mxu0 0.0
        %3037 = vmatpush1.msra.mxu0 0.0
        %3038 = vmatprep.subr.mxu0 0.0
        %3039 = vmatpush1.msra.mxu0 0.0
        %3040 = vmatprep.subr.mxu0 0.0
        %3041 = vmatpush1.msra.mxu0 0.0
        %3042 = vmatprep.subr.mxu0 0.0
        %3043 = vmatpush1.msra.mxu0 0.0
        %3044 = vmatprep.subr.mxu0 0.0
        %3045 = vmatpush1.msra.mxu0 0.0
        %3046 = vmatprep.subr.mxu0 0.0
        %3047 = vmatpush1.msra.mxu0 0.0
        %3048 = vmatprep.subr.mxu0 0.0
        %3049 = vmatpush1.msra.mxu0 0.0
        %3050 = vmatprep.subr.mxu0 0.0
        %3051 = vmatpush1.msra.mxu0 0.0
        %3052 = vmatprep.subr.mxu0 0.0
        %3053 = vmatpush1.msra.mxu0 0.0
        %3054 = vmatprep.subr.mxu0 0.0
        %3055 = vmatpush1.msra.mxu0 0.0
        %3056 = vmatprep.subr.mxu0 0.0
        %3057 = vmatpush1.msra.mxu0 0.0
        %3058 = vmatprep.subr.mxu0 0.0
        %3059 = vmatpush1.msra.mxu0 0.0
        %3060 = vmatprep.subr.mxu0 0.0
        %3061 = vmatpush1.msra.mxu0 0.0
        %3062 = vmatprep.subr.mxu0 0.0
        %3063 = vmatpush1.msra.mxu0 0.0
        %3064 = vmatprep.subr.mxu0 0.0
        %3065 = vmatpush1.msra.mxu0 0.0
        %3066 = vmatprep.subr.mxu0 0.0
        %3067 = vmatpush1.msra.mxu0 0.0
        %3068 = vmatprep.subr.mxu0 0.0
        %3069 = vmatpush1.msra.mxu0 0.0
        %3070 = vmatprep.subr.mxu0 0.0
        %3071 = vmatpush1.msra.mxu0 0.0
        %3072 = vmatprep.subr.mxu0 0.0
        %3073 = vmatpush1.msra.mxu0 0.0
        %3074 = vmatprep.subr.mxu0 0.0
        %3075 = vmatpush1.msra.mxu0 0.0
        %3076 = vmatprep.subr.mxu0 0.0
        %3077 = vmatpush1.msra.mxu0 0.0
        %3078 = vmatprep.mubr.f32.mxu0 0.0
        %3079 = vmatmul.mubr.f32.gmra.mrb[0].mxu0 %v2987
        %v3080 = vpop.f32.mrb[0].mxu0
        %v3081 = vadd.f32 0.0, %v3080
        %v3082 = vpop.f32.mrb[0].mxu0
        %3083 = vmatprep.mubr.f32.mxu0 0.0
        %3084 = vmatmul.mubr.f32.gmra.mrb[0].mxu0 %v2990
        %v3085 = vpop.f32.mrb[0].mxu0
        %v3086 = vadd.f32 0.0, %v3085
        %v3087 = vpop.f32.mrb[0].mxu0
        %3088 = vmatprep.mubr.f32.mxu0 0.0
        %3089 = vmatmul.mubr.f32.gmra.mrb[0].mxu0 %v2993
        %v3090 = vpop.f32.mrb[0].mxu0
        %v3091 = vadd.f32 0.0, %v3090
        %v3092 = vpop.f32.mrb[0].mxu0
        %3093 = vmatprep.mubr.f32.mxu0 0.0
        %3094 = vmatmul.mubr.f32.gmra.mrb[0].mxu0 %v2996
        %v3095 = vpop.f32.mrb[0].mxu0
        %v3096 = vadd.f32 0.0, %v3095
        %v3097 = vpop.f32.mrb[0].mxu0
        %3098 = vmatprep.mubr.f32.mxu0 0.0
        %3099 = vmatmul.mubr.f32.gmra.mrb[0].mxu0 %v2999
        %v3100 = vpop.f32.mrb[0].mxu0
        %v3101 = vadd.f32 0.0, %v3100
        %v3102 = vpop.f32.mrb[0].mxu0
        %3103 = vmatprep.mubr.f32.mxu0 0.0
        %3104 = vmatmul.mubr.f32.gmra.mrb[0].mxu0 %v3002
        %v3105 = vpop.f32.mrb[0].mxu0
        %v3106 = vadd.f32 0.0, %v3105
        %v3107 = vpop.f32.mrb[0].mxu0
        %3108 = vmatprep.mubr.f32.mxu0 0.0
        %3109 = vmatmul.mubr.f32.gmra.mrb[0].mxu0 %v3005
        %v3110 = vpop.f32.mrb[0].mxu0
        %v3111 = vadd.f32 0.0, %v3110
        %v3112 = vpop.f32.mrb[0].mxu0
        %3113 = vmatprep.mubr.f32.mxu0 0.0
        %3114 = vmatmul.mubr.f32.gmra.mrb[0].mxu0 %v3008
        %v3115 = vpop.f32.mrb[0].mxu0
        %v3116 = vadd.f32 0.0, %v3115
        %v3117 = vpop.f32.mrb[0].mxu0
        %3118 = vdwg.mxu0
        %v3119 = vmul.f32 %v3081, %v2679
        %v3120 = vmul.f32 %v3086, %v2684
        %v3121 = vmul.f32 %v3091, %v2689
        %v3122 = vmul.f32 %v3096, %v2694
        %v3123 = vmul.f32 %v3101, %v2699
        %v3124 = vmul.f32 %v3106, %v2704
        %v3125 = vmul.f32 %v3111, %v2709
        %v3126 = vmul.f32 %v3116, %v2714
        %v3127 = vadd.f32 %v3119, %v3120
        %v3128 = vadd.f32 %v3127, %v3121
        %v3129 = vadd.f32 %v3128, %v3122
        %v3130 = vadd.f32 %v3129, %v3123
        %v3131 = vadd.f32 %v3130, %v3124
        %v3132 = vadd.f32 %v3131, %v3125
        %v3133 = vadd.f32 %v3132, %v3126
        %v3134 = vrot.slane %v3133, 4
        %v3135 = vadd.f32 %v3133, %v3134
        %v3136 = vrot.slane %v3135, 2
        %v3137 = vadd.f32 %v3135, %v3136
        %v3138 = vrot.slane %v3137, 1
        %v3139 = vadd.f32 %v3137, %v3138
        %3141 = vrot.lane.b32.xlu0 %v3139, 96
        %v3142 = vpop.permute.xlu0 %3141
        %3144 = vrot.lane.b32.xlu0 %v3139, 64
        %v3145 = vpop.permute.xlu0 %3144
        %3147 = vrot.lane.b32.xlu0 %v3139, 32
        %v3148 = vpop.permute.xlu0 %3147
        %vm3150 = vcmask 1040384
        %v3151 = vsel %vm3150, %v3139, %v3142
        %vm3152 = vcmask 1041408
        %v3153 = vsel %vm3152, %v3151, %v3145
        %vm3154 = vcmask 1042432
        %v3155 = vsel %vm3154, %v3153, %v3148
        %3156 = vrot.lane.b32.xlu0 %v2977, 4
        %v3157 = vpop.permute.xlu0 %3156
        %3158 = vrot.lane.b32.xlu0 %v2978, 4
        %v3159 = vpop.permute.xlu0 %3158
        %3160 = vrot.lane.b32.xlu0 %v2979, 4
        %v3161 = vpop.permute.xlu0 %3160
        %3162 = vrot.lane.b32.xlu0 %v2980, 4
        %v3163 = vpop.permute.xlu0 %3162
        %3164 = vrot.lane.b32.xlu0 %v2981, 4
        %v3165 = vpop.permute.xlu0 %3164
        %3166 = vrot.lane.b32.xlu0 %v2982, 4
        %v3167 = vpop.permute.xlu0 %3166
        %3168 = vrot.lane.b32.xlu0 %v2983, 4
        %v3169 = vpop.permute.xlu0 %3168
        %3170 = vrot.lane.b32.xlu0 %v2984, 4
        %v3171 = vpop.permute.xlu0 %3170
        %v3180 = vsel %vm2858, %v2977, %v3157
        %v3181 = vsel %vm2858, %v2978, %v3159
        %v3182 = vsel %vm2858, %v2979, %v3161
        %v3183 = vsel %vm2858, %v2980, %v3163
        %v3184 = vsel %vm2858, %v2981, %v3165
        %v3185 = vsel %vm2858, %v2982, %v3167
        %v3186 = vsel %vm2858, %v2983, %v3169
        %v3187 = vsel %vm2858, %v2984, %v3171
        %v3188 = vmul.f32 %v3180, %v2053
        %v3189 = vmul.f32 %v3181, %v2054
        %v3190 = vmul.f32 %v3182, %v2055
        %v3191 = vmul.f32 %v3183, %v2056
        %v3192 = vmul.f32 %v3184, %v2057
        %v3193 = vmul.f32 %v3185, %v2058
        %v3194 = vmul.f32 %v3186, %v2059
        %v3195 = vmul.f32 %v3187, %v2060
        %v3196 = vsel %vm2221, %v3188, 0.0
        %v3197 = vsel %vm2221, %v3189, 0.0
        %v3198 = vadd.f32 %v3196, %v3197
        %v3199 = vsel %vm2221, %v3190, 0.0
        %v3200 = vadd.f32 %v3198, %v3199
        %v3201 = vsel %vm2221, %v3191, 0.0
        %v3202 = vadd.f32 %v3200, %v3201
        %v3203 = vsel %vm2221, %v3192, 0.0
        %v3204 = vadd.f32 %v3202, %v3203
        %v3205 = vsel %vm2221, %v3193, 0.0
        %v3206 = vadd.f32 %v3204, %v3205
        %v3207 = vsel %vm2221, %v3194, 0.0
        %v3208 = vadd.f32 %v3206, %v3207
        %v3209 = vsel %vm2221, %v3195, 0.0
        %v3210 = vadd.f32 %v3208, %v3209
        %v3211 = vrot.slane %v3210, 4
        %v3212 = vadd.f32 %v3210, %v3211
        %v3213 = vrot.slane %v3212, 2
        %v3214 = vadd.f32 %v3212, %v3213
        %v3215 = vrot.slane %v3214, 1
        %v3216 = vadd.f32 %v3214, %v3215
        %v3217 = vsub.f32 %v2053, %v3216
        %v3218 = vsub.f32 %v2054, %v3216
        %v3219 = vsub.f32 %v2055, %v3216
        %v3220 = vsub.f32 %v2056, %v3216
        %v3221 = vsub.f32 %v2057, %v3216
        %v3222 = vsub.f32 %v2058, %v3216
        %v3223 = vsub.f32 %v2059, %v3216
        %v3224 = vsub.f32 %v2060, %v3216
        %v3225 = vmul.f32 %v3180, %v3217
        %v3226 = vmul.f32 %v3181, %v3218
        %v3227 = vmul.f32 %v3182, %v3219
        %v3228 = vmul.f32 %v3183, %v3220
        %v3229 = vmul.f32 %v3184, %v3221
        %v3230 = vmul.f32 %v3185, %v3222
        %v3231 = vmul.f32 %v3186, %v3223
        %v3232 = vmul.f32 %v3187, %v3224
        %v3233 = vmul.f32 %v3225, %v3217
        %v3234 = vmul.f32 %v3226, %v3218
        %v3235 = vmul.f32 %v3227, %v3219
        %v3236 = vmul.f32 %v3228, %v3220
        %v3237 = vmul.f32 %v3229, %v3221
        %v3238 = vmul.f32 %v3230, %v3222
        %v3239 = vmul.f32 %v3231, %v3223
        %v3240 = vmul.f32 %v3232, %v3224
        %v3241 = vsel %vm2221, %v3233, 0.0
        %v3242 = vsel %vm2221, %v3234, 0.0
        %v3243 = vadd.f32 %v3241, %v3242
        %v3244 = vsel %vm2221, %v3235, 0.0
        %v3245 = vadd.f32 %v3243, %v3244
        %v3246 = vsel %vm2221, %v3236, 0.0
        %v3247 = vadd.f32 %v3245, %v3246
        %v3248 = vsel %vm2221, %v3237, 0.0
        %v3249 = vadd.f32 %v3247, %v3248
        %v3250 = vsel %vm2221, %v3238, 0.0
        %v3251 = vadd.f32 %v3249, %v3250
        %v3252 = vsel %vm2221, %v3239, 0.0
        %v3253 = vadd.f32 %v3251, %v3252
        %v3254 = vsel %vm2221, %v3240, 0.0
        %v3255 = vadd.f32 %v3253, %v3254
        %v3256 = vrot.slane %v3255, 4
        %v3257 = vadd.f32 %v3255, %v3256
        %v3258 = vrot.slane %v3257, 2
        %v3259 = vadd.f32 %v3257, %v3258
        %v3260 = vrot.slane %v3259, 1
        %v3261 = vadd.f32 %v3259, %v3260
        %v3262 = vrsqrt.pop %v3261
        %v3263 = vmul.f32 %v3261, %v3262
        %vm3264 = vcmp.eq.f32.partialorder %v3261, inf
        %v3265 = vsel %vm3264, %v3261, %v3263
        %vm3266 = vcmp.eq.f32.partialorder %v3261, 0.0
        %v3267 = vand.u32 %v3261, 2147483648
        %v3268 = vsel %vm3266, %v3267, %v3265
        %v3269 = vmul.f32 %v3268, 5.0
        %v3270 = vrcp.pop %v3269
        %v3271 = vmul.f32 1.0, %v3270
        %v3272 = vld [vmem:[%s51] sm:$0xff]
        %v3273 = vld [vmem:[%s51 + $0x8] sm:$0xff]
        %v3274 = vld [vmem:[%s51 + $0x10] sm:$0xff]
        %v3275 = vld [vmem:[%s51 + $0x18] sm:$0xff]
        %v3277 = vlaneseq
        %v3278 = vshrl.u32 %v3277, 7
        %v3279 = vsub.s32 0, %v3278
        %v3280 = vrot.slane %v1336, %v3279
        %v3283 = vsel %vm1352, %v3155, 0
        %3285 = vmatprep.subr.mxu0 0.0
        %3286 = vmatpush1.msra.mxu0 %v3272
        %3287 = vmatprep.subr.mxu0 0.0
        %3288 = vmatpush1.msra.mxu0 %v3273
        %3289 = vmatprep.subr.mxu0 0.0
        %3290 = vmatpush1.msra.mxu0 %v3274
        %3291 = vmatprep.subr.mxu0 0.0
        %3292 = vmatpush1.msra.mxu0 %v3275
        %3293 = vmatprep.subr.mxu0 0.0
        %3294 = vmatpush1.msra.mxu0 0.0
        %3295 = vmatprep.subr.mxu0 0.0
        %3296 = vmatpush1.msra.mxu0 0.0
        %3297 = vmatprep.subr.mxu0 0.0
        %3298 = vmatpush1.msra.mxu0 0.0
        %3299 = vmatprep.subr.mxu0 0.0
        %3300 = vmatpush1.msra.mxu0 0.0
        %3301 = vmatprep.subr.mxu0 0.0
        %3302 = vmatpush1.msra.mxu0 0.0
        %3303 = vmatprep.subr.mxu0 0.0
        %3304 = vmatpush1.msra.mxu0 0.0
        %3305 = vmatprep.subr.mxu0 0.0
        %3306 = vmatpush1.msra.mxu0 0.0
        %3307 = vmatprep.subr.mxu0 0.0
        %3308 = vmatpush1.msra.mxu0 0.0
        %3309 = vmatprep.subr.mxu0 0.0
        %3310 = vmatpush1.msra.mxu0 0.0
        %3311 = vmatprep.subr.mxu0 0.0
        %3312 = vmatpush1.msra.mxu0 0.0
        %3313 = vmatprep.subr.mxu0 0.0
        %3314 = vmatpush1.msra.mxu0 0.0
        %3315 = vmatprep.subr.mxu0 0.0
        %3316 = vmatpush1.msra.mxu0 0.0
        %3317 = vmatprep.subr.mxu0 0.0
        %3318 = vmatpush1.msra.mxu0 0.0
        %3319 = vmatprep.subr.mxu0 0.0
        %3320 = vmatpush1.msra.mxu0 0.0
        %3321 = vmatprep.subr.mxu0 0.0
        %3322 = vmatpush1.msra.mxu0 0.0
        %3323 = vmatprep.subr.mxu0 0.0
        %3324 = vmatpush1.msra.mxu0 0.0
        %3325 = vmatprep.subr.mxu0 0.0
        %3326 = vmatpush1.msra.mxu0 0.0
        %3327 = vmatprep.subr.mxu0 0.0
        %3328 = vmatpush1.msra.mxu0 0.0
        %3329 = vmatprep.subr.mxu0 0.0
        %3330 = vmatpush1.msra.mxu0 0.0
        %3331 = vmatprep.subr.mxu0 0.0
        %3332 = vmatpush1.msra.mxu0 0.0
        %3333 = vmatprep.subr.mxu0 0.0
        %3334 = vmatpush1.msra.mxu0 0.0
        %3335 = vmatprep.subr.mxu0 0.0
        %3336 = vmatpush1.msra.mxu0 0.0
        %3337 = vmatprep.subr.mxu0 0.0
        %3338 = vmatpush1.msra.mxu0 0.0
        %3339 = vmatprep.subr.mxu0 0.0
        %3340 = vmatpush1.msra.mxu0 0.0
        %3341 = vmatprep.subr.mxu0 0.0
        %3342 = vmatpush1.msra.mxu0 0.0
        %3343 = vmatprep.subr.mxu0 0.0
        %3344 = vmatpush1.msra.mxu0 0.0
        %3345 = vmatprep.subr.mxu0 0.0
        %3346 = vmatpush1.msra.mxu0 0.0
        %3347 = vmatprep.subr.mxu0 0.0
        %3348 = vmatpush1.msra.mxu0 0.0
        %3349 = vmatprep.mubr.f32.mxu0 0.0
        %3350 = vmatmul.mubr.f32.gmra.mrb[0].mxu0 %v3283
        %v3351 = vpop.f32.mrb[0].mxu0
        %v3352 = vadd.f32 %v3280, %v3351
        %v3353 = vpop.f32.mrb[0].mxu0
        %3354 = vdwg.mxu0
        %v3355 = vld [vmem:[%s53] sm:$0xff]
        %v3356 = vld [vmem:[%s53 + $0x8] sm:$0xff]
        %v3357 = vld [vmem:[%s53 + $0x10] sm:$0xff]
        %v3358 = vld [vmem:[%s53 + $0x18] sm:$0xff]
        %v3360 = vlaneseq
        %v3361 = vshrl.u32 %v3360, 7
        %v3362 = vsub.s32 0, %v3361
        %v3363 = vrot.slane %v1337, %v3362
        %v3366 = vsel %vm1352, %v2061, 0
        %3368 = vmatprep.subr.mxu0 0.0
        %3369 = vmatpush1.msra.mxu0 %v3355
        %3370 = vmatprep.subr.mxu0 0.0
        %3371 = vmatpush1.msra.mxu0 %v3356
        %3372 = vmatprep.subr.mxu0 0.0
        %3373 = vmatpush1.msra.mxu0 %v3357
        %3374 = vmatprep.subr.mxu0 0.0
        %3375 = vmatpush1.msra.mxu0 %v3358
        %3376 = vmatprep.subr.mxu0 0.0
        %3377 = vmatpush1.msra.mxu0 0.0
        %3378 = vmatprep.subr.mxu0 0.0
        %3379 = vmatpush1.msra.mxu0 0.0
        %3380 = vmatprep.subr.mxu0 0.0
        %3381 = vmatpush1.msra.mxu0 0.0
        %3382 = vmatprep.subr.mxu0 0.0
        %3383 = vmatpush1.msra.mxu0 0.0
        %3384 = vmatprep.subr.mxu0 0.0
        %3385 = vmatpush1.msra.mxu0 0.0
        %3386 = vmatprep.subr.mxu0 0.0
        %3387 = vmatpush1.msra.mxu0 0.0
        %3388 = vmatprep.subr.mxu0 0.0
        %3389 = vmatpush1.msra.mxu0 0.0
        %3390 = vmatprep.subr.mxu0 0.0
        %3391 = vmatpush1.msra.mxu0 0.0
        %3392 = vmatprep.subr.mxu0 0.0
        %3393 = vmatpush1.msra.mxu0 0.0
        %3394 = vmatprep.subr.mxu0 0.0
        %3395 = vmatpush1.msra.mxu0 0.0
        %3396 = vmatprep.subr.mxu0 0.0
        %3397 = vmatpush1.msra.mxu0 0.0
        %3398 = vmatprep.subr.mxu0 0.0
        %3399 = vmatpush1.msra.mxu0 0.0
        %3400 = vmatprep.subr.mxu0 0.0
        %3401 = vmatpush1.msra.mxu0 0.0
        %3402 = vmatprep.subr.mxu0 0.0
        %3403 = vmatpush1.msra.mxu0 0.0
        %3404 = vmatprep.subr.mxu0 0.0
        %3405 = vmatpush1.msra.mxu0 0.0
        %3406 = vmatprep.subr.mxu0 0.0
        %3407 = vmatpush1.msra.mxu0 0.0
        %3408 = vmatprep.subr.mxu0 0.0
        %3409 = vmatpush1.msra.mxu0 0.0
        %3410 = vmatprep.subr.mxu0 0.0
        %3411 = vmatpush1.msra.mxu0 0.0
        %3412 = vmatprep.subr.mxu0 0.0
        %3413 = vmatpush1.msra.mxu0 0.0
        %3414 = vmatprep.subr.mxu0 0.0
        %3415 = vmatpush1.msra.mxu0 0.0
        %3416 = vmatprep.subr.mxu0 0.0
        %3417 = vmatpush1.msra.mxu0 0.0
        %3418 = vmatprep.subr.mxu0 0.0
        %3419 = vmatpush1.msra.mxu0 0.0
        %3420 = vmatprep.subr.mxu0 0.0
        %3421 = vmatpush1.msra.mxu0 0.0
        %3422 = vmatprep.subr.mxu0 0.0
        %3423 = vmatpush1.msra.mxu0 0.0
        %3424 = vmatprep.subr.mxu0 0.0
        %3425 = vmatpush1.msra.mxu0 0.0
        %3426 = vmatprep.subr.mxu0 0.0
        %3427 = vmatpush1.msra.mxu0 0.0
        %3428 = vmatprep.subr.mxu0 0.0
        %3429 = vmatpush1.msra.mxu0 0.0
        %3430 = vmatprep.subr.mxu0 0.0
        %3431 = vmatpush1.msra.mxu0 0.0
        %3432 = vmatprep.mubr.f32.mxu0 0.0
        %3433 = vmatmul.mubr.f32.gmra.mrb[0].mxu0 %v3366
        %v3434 = vpop.f32.mrb[0].mxu0
        %v3435 = vadd.f32 %v3363, %v3434
        %v3436 = vpop.f32.mrb[0].mxu0
        %3437 = vdwg.mxu0
        %v3438 = vadd.f32 %v3352, %v3435
        %v3439 = vxor.u32 %v3438, 2147483648
        %v3440 = vmul.f32 %v3439, 1.442695
        %v3441 = vpow.pop %v3440
        %v3442 = vadd.f32 %v3441, 1.0
        %v3443 = vrcp.pop %v3442
        %v3444 = vmul.f32 1.0, %v3443
        %3446 = vrot.lane.b32.xlu0 %v3435, 64
        %v3447 = vpop.permute.xlu0 %3446
        %v3449 = vmul.f32 %v3444, %v3447
        %3451 = vrot.lane.b32.xlu0 %v3449, 64
        %v3452 = vpop.permute.xlu0 %3451
        %v3454 = vadd.f32 %v3352, %v3452
        %v3455 = vtanh.pop %v3454
        %v3456 = vsub.f32 1.0, %v3444
        %3458 = vrot.lane.b32.xlu0 %v3455, 96
        %v3459 = vpop.permute.xlu0 %3458
        %v3461 = vmul.f32 %v3456, %v3459
        %3462 = vrot.lane.b32.xlu0 %v2061, 32
        %v3463 = vpop.permute.xlu0 %3462
        %v3465 = vmul.f32 %v3444, %v3463
        %v3466 = vadd.f32 %v3461, %v3465
        %3468 = vrot.lane.b32.xlu0 %v3466, 96
        %v3469 = vpop.permute.xlu0 %3468
        %v3471 = vsel %vm2067, %v3469, 0.0
        %3472 = vadd.xlane.f32.xlu0 %v3471
        %v3473 = vpop.xlane.xlu0 %3472
        %v3474 = vmul.f32 %v3473, %v1377
        %v3475 = vsub.f32 %v3466, %v3474
        %v3476 = vmul.f32 %v3475, %v3475
        %3478 = vrot.lane.b32.xlu0 %v3476, 96
        %v3479 = vpop.permute.xlu0 %3478
        %v3481 = vsel %vm2067, %v3479, 0.0
        %3482 = vadd.xlane.f32.xlu0 %v3481
        %v3483 = vpop.xlane.xlu0 %3482
        %v3484 = vmul.f32 %v3483, %v1377
        %v3485 = vadd.f32 %v3484, 1e-05
        %v3486 = vrsqrt.pop %v3485
        %v3487 = vmul.f32 %v3475, %v3486
        %v3489 = vlaneseq
        %v3490 = vshrl.u32 %v3489, 7
        %v3491 = vsub.s32 0, %v3490
        %v3492 = vrot.slane %v1338, %v3491
        %3493 = vrot.lane.b32.xlu0 %v3492, 32
        %v3494 = vpop.permute.xlu0 %3493
        %v3496 = vmul.f32 %v3487, %v3494
        %v3498 = vlaneseq
        %v3499 = vshrl.u32 %v3498, 7
        %v3500 = vsub.s32 0, %v3499
        %v3501 = vrot.slane %v1339, %v3500
        %3502 = vrot.lane.b32.xlu0 %v3501, 32
        %v3503 = vpop.permute.xlu0 %3502
        %v3505 = vadd.f32 %v3496, %v3503
        %v3506 = vld [vmem:[%s63] sm:$0xff]
        %v3507 = vld [vmem:[%s63 + $0x8] sm:$0xff]
        %v3508 = vld [vmem:[%s63 + $0x10] sm:$0xff]
        %v3509 = vld [vmem:[%s63 + $0x18] sm:$0xff]
        %v3511 = vlaneseq
        %v3512 = vshrl.u32 %v3511, 7
        %v3513 = vsub.s32 0, %v3512
        %v3514 = vrot.slane %v1340, %v3513
        %3517 = vrot.lane.b32.xlu0 %v3505, 96
        %v3518 = vpop.permute.xlu0 %3517
        %v3519 = vsel %vm1352, %v3518, 0
        %3521 = vmatprep.subr.mxu0 0.0
        %3522 = vmatpush1.msra.mxu0 %v3506
        %3523 = vmatprep.subr.mxu0 0.0
        %3524 = vmatpush1.msra.mxu0 %v3507
        %3525 = vmatprep.subr.mxu0 0.0
        %3526 = vmatpush1.msra.mxu0 %v3508
        %3527 = vmatprep.subr.mxu0 0.0
        %3528 = vmatpush1.msra.mxu0 %v3509
        %3529 = vmatprep.subr.mxu0 0.0
        %3530 = vmatpush1.msra.mxu0 0.0
        %3531 = vmatprep.subr.mxu0 0.0
        %3532 = vmatpush1.msra.mxu0 0.0
        %3533 = vmatprep.subr.mxu0 0.0
        %3534 = vmatpush1.msra.mxu0 0.0
        %3535 = vmatprep.subr.mxu0 0.0
        %3536 = vmatpush1.msra.mxu0 0.0
        %3537 = vmatprep.subr.mxu0 0.0
        %3538 = vmatpush1.msra.mxu0 0.0
        %3539 = vmatprep.subr.mxu0 0.0
        %3540 = vmatpush1.msra.mxu0 0.0
        %3541 = vmatprep.subr.mxu0 0.0
        %3542 = vmatpush1.msra.mxu0 0.0
        %3543 = vmatprep.subr.mxu0 0.0
        %3544 = vmatpush1.msra.mxu0 0.0
        %3545 = vmatprep.subr.mxu0 0.0
        %3546 = vmatpush1.msra.mxu0 0.0
        %3547 = vmatprep.subr.mxu0 0.0
        %3548 = vmatpush1.msra.mxu0 0.0
        %3549 = vmatprep.subr.mxu0 0.0
        %3550 = vmatpush1.msra.mxu0 0.0
        %3551 = vmatprep.subr.mxu0 0.0
        %3552 = vmatpush1.msra.mxu0 0.0
        %3553 = vmatprep.subr.mxu0 0.0
        %3554 = vmatpush1.msra.mxu0 0.0
        %3555 = vmatprep.subr.mxu0 0.0
        %3556 = vmatpush1.msra.mxu0 0.0
        %3557 = vmatprep.subr.mxu0 0.0
        %3558 = vmatpush1.msra.mxu0 0.0
        %3559 = vmatprep.subr.mxu0 0.0
        %3560 = vmatpush1.msra.mxu0 0.0
        %3561 = vmatprep.subr.mxu0 0.0
        %3562 = vmatpush1.msra.mxu0 0.0
        %3563 = vmatprep.subr.mxu0 0.0
        %3564 = vmatpush1.msra.mxu0 0.0
        %3565 = vmatprep.subr.mxu0 0.0
        %3566 = vmatpush1.msra.mxu0 0.0
        %3567 = vmatprep.subr.mxu0 0.0
        %3568 = vmatpush1.msra.mxu0 0.0
        %3569 = vmatprep.subr.mxu0 0.0
        %3570 = vmatpush1.msra.mxu0 0.0
        %3571 = vmatprep.subr.mxu0 0.0
        %3572 = vmatpush1.msra.mxu0 0.0
        %3573 = vmatprep.subr.mxu0 0.0
        %3574 = vmatpush1.msra.mxu0 0.0
        %3575 = vmatprep.subr.mxu0 0.0
        %3576 = vmatpush1.msra.mxu0 0.0
        %3577 = vmatprep.subr.mxu0 0.0
        %3578 = vmatpush1.msra.mxu0 0.0
        %3579 = vmatprep.subr.mxu0 0.0
        %3580 = vmatpush1.msra.mxu0 0.0
        %3581 = vmatprep.subr.mxu0 0.0
        %3582 = vmatpush1.msra.mxu0 0.0
        %3583 = vmatprep.subr.mxu0 0.0
        %3584 = vmatpush1.msra.mxu0 0.0
        %3585 = vmatprep.mubr.f32.mxu0 0.0
        %3586 = vmatmul.mubr.f32.gmra.mrb[0].mxu0 %v3519
        %v3587 = vpop.f32.mrb[0].mxu0
        %v3588 = vadd.f32 %v3514, %v3587
        %v3589 = vpop.f32.mrb[0].mxu0
        %3590 = vdwg.mxu0
        %v3591 = vmax.f32 %v3588, 0.0
        %v3592 = vld [vmem:[%s67] sm:$0xff]
        %v3593 = vld [vmem:[%s67 + $0x8] sm:$0xff]
        %v3594 = vld [vmem:[%s67 + $0x10] sm:$0xff]
        %v3595 = vld [vmem:[%s67 + $0x18] sm:$0xff]
        %v3596 = vld [vmem:[%s67 + $0x20] sm:$0xff]
        %v3597 = vld [vmem:[%s67 + $0x28] sm:$0xff]
        %v3598 = vld [vmem:[%s67 + $0x30] sm:$0xff]
        %v3599 = vld [vmem:[%s67 + $0x38] sm:$0xff]
        %v3600 = vld [vmem:[%s67 + $0x40] sm:$0xff]
        %v3601 = vld [vmem:[%s67 + $0x48] sm:$0xff]
        %v3602 = vld [vmem:[%s67 + $0x50] sm:$0xff]
        %v3603 = vld [vmem:[%s67 + $0x58] sm:$0xff]
        %v3604 = vld [vmem:[%s67 + $0x60] sm:$0xff]
        %v3605 = vld [vmem:[%s67 + $0x68] sm:$0xff]
        %v3606 = vld [vmem:[%s67 + $0x70] sm:$0xff]
        %v3607 = vld [vmem:[%s67 + $0x78] sm:$0xff]
        %v3609 = vlaneseq
        %v3610 = vshrl.u32 %v3609, 7
        %v3611 = vsub.s32 0, %v3610
        %v3612 = vrot.slane %v1341, %v3611
        %3614 = vmatprep.subr.mxu0 0.0
        %3615 = vmatpush1.msra.mxu0 %v3592
        %3616 = vmatprep.subr.mxu0 0.0
        %3617 = vmatpush1.msra.mxu0 %v3593
        %3618 = vmatprep.subr.mxu0 0.0
        %3619 = vmatpush1.msra.mxu0 %v3594
        %3620 = vmatprep.subr.mxu0 0.0
        %3621 = vmatpush1.msra.mxu0 %v3595
        %3622 = vmatprep.subr.mxu0 0.0
        %3623 = vmatpush1.msra.mxu0 %v3596
        %3624 = vmatprep.subr.mxu0 0.0
        %3625 = vmatpush1.msra.mxu0 %v3597
        %3626 = vmatprep.subr.mxu0 0.0
        %3627 = vmatpush1.msra.mxu0 %v3598
        %3628 = vmatprep.subr.mxu0 0.0
        %3629 = vmatpush1.msra.mxu0 %v3599
        %3630 = vmatprep.subr.mxu0 0.0
        %3631 = vmatpush1.msra.mxu0 %v3600
        %3632 = vmatprep.subr.mxu0 0.0
        %3633 = vmatpush1.msra.mxu0 %v3601
        %3634 = vmatprep.subr.mxu0 0.0
        %3635 = vmatpush1.msra.mxu0 %v3602
        %3636 = vmatprep.subr.mxu0 0.0
        %3637 = vmatpush1.msra.mxu0 %v3603
        %3638 = vmatprep.subr.mxu0 0.0
        %3639 = vmatpush1.msra.mxu0 %v3604
        %3640 = vmatprep.subr.mxu0 0.0
        %3641 = vmatpush1.msra.mxu0 %v3605
        %3642 = vmatprep.subr.mxu0 0.0
        %3643 = vmatpush1.msra.mxu0 %v3606
        %3644 = vmatprep.subr.mxu0 0.0
        %3645 = vmatpush1.msra.mxu0 %v3607
        %3646 = vmatprep.subr.mxu0 0.0
        %3647 = vmatpush1.msra.mxu0 0.0
        %3648 = vmatprep.subr.mxu0 0.0
        %3649 = vmatpush1.msra.mxu0 0.0
        %3650 = vmatprep.subr.mxu0 0.0
        %3651 = vmatpush1.msra.mxu0 0.0
        %3652 = vmatprep.subr.mxu0 0.0
        %3653 = vmatpush1.msra.mxu0 0.0
        %3654 = vmatprep.subr.mxu0 0.0
        %3655 = vmatpush1.msra.mxu0 0.0
        %3656 = vmatprep.subr.mxu0 0.0
        %3657 = vmatpush1.msra.mxu0 0.0
        %3658 = vmatprep.subr.mxu0 0.0
        %3659 = vmatpush1.msra.mxu0 0.0
        %3660 = vmatprep.subr.mxu0 0.0
        %3661 = vmatpush1.msra.mxu0 0.0
        %3662 = vmatprep.subr.mxu0 0.0
        %3663 = vmatpush1.msra.mxu0 0.0
        %3664 = vmatprep.subr.mxu0 0.0
        %3665 = vmatpush1.msra.mxu0 0.0
        %3666 = vmatprep.subr.mxu0 0.0
        %3667 = vmatpush1.msra.mxu0 0.0
        %3668 = vmatprep.subr.mxu0 0.0
        %3669 = vmatpush1.msra.mxu0 0.0
        %3670 = vmatprep.subr.mxu0 0.0
        %3671 = vmatpush1.msra.mxu0 0.0
        %3672 = vmatprep.subr.mxu0 0.0
        %3673 = vmatpush1.msra.mxu0 0.0
        %3674 = vmatprep.subr.mxu0 0.0
        %3675 = vmatpush1.msra.mxu0 0.0
        %3676 = vmatprep.subr.mxu0 0.0
        %3677 = vmatpush1.msra.mxu0 0.0
        %3678 = vmatprep.mubr.f32.mxu0 0.0
        %3679 = vmatmul.mubr.f32.gmra.mrb[0].mxu0 %v3591
        %v3680 = vpop.f32.mrb[0].mxu0
        %v3681 = vadd.f32 %v3612, %v3680
        %v3682 = vpop.f32.mrb[0].mxu0
        %3683 = vdwg.mxu0
        %v3684 = vadd.f32 %v3681, %v3469
        %v3685 = vsel %vm2067, %v3684, 0.0
        %3686 = vadd.xlane.f32.xlu0 %v3685
        %v3687 = vpop.xlane.xlu0 %3686
        %v3688 = vmul.f32 %v3687, %v1377
        %v3689 = vsub.f32 %v3684, %v3688
        %v3690 = vmul.f32 %v3689, %v3689
        %v3691 = vsel %vm2067, %v3690, 0.0
        %3692 = vadd.xlane.f32.xlu0 %v3691
        %v3693 = vpop.xlane.xlu0 %3692
        %v3694 = vmul.f32 %v3693, %v1377
        %v3695 = vadd.f32 %v3694, 1e-05
        %v3696 = vrsqrt.pop %v3695
        %v3697 = vmul.f32 %v3689, %v3696
        %v3698 = vmul.f32 %v3697, %v2085
        %v3699 = vadd.f32 %v3698, %v2092
        %v3701 = vsel %vm1352, %v3699, 0
        %3703 = vmatprep.subr.mxu0 0.0
        %3704 = vmatpush1.msra.mxu0 %v1327
        %3705 = vmatprep.subr.mxu0 0.0
        %3706 = vmatpush1.msra.mxu0 %v1328
        %3707 = vmatprep.subr.mxu0 0.0
        %3708 = vmatpush1.msra.mxu0 %v1329
        %3709 = vmatprep.subr.mxu0 0.0
        %3710 = vmatpush1.msra.mxu0 %v1330
        %3711 = vmatprep.subr.mxu0 0.0
        %3712 = vmatpush1.msra.mxu0 0.0
        %3713 = vmatprep.subr.mxu0 0.0
        %3714 = vmatpush1.msra.mxu0 0.0
        %3715 = vmatprep.subr.mxu0 0.0
        %3716 = vmatpush1.msra.mxu0 0.0
        %3717 = vmatprep.subr.mxu0 0.0
        %3718 = vmatpush1.msra.mxu0 0.0
        %3719 = vmatprep.subr.mxu0 0.0
        %3720 = vmatpush1.msra.mxu0 0.0
        %3721 = vmatprep.subr.mxu0 0.0
        %3722 = vmatpush1.msra.mxu0 0.0
        %3723 = vmatprep.subr.mxu0 0.0
        %3724 = vmatpush1.msra.mxu0 0.0
        %3725 = vmatprep.subr.mxu0 0.0
        %3726 = vmatpush1.msra.mxu0 0.0
        %3727 = vmatprep.subr.mxu0 0.0
        %3728 = vmatpush1.msra.mxu0 0.0
        %3729 = vmatprep.subr.mxu0 0.0
        %3730 = vmatpush1.msra.mxu0 0.0
        %3731 = vmatprep.subr.mxu0 0.0
        %3732 = vmatpush1.msra.mxu0 0.0
        %3733 = vmatprep.subr.mxu0 0.0
        %3734 = vmatpush1.msra.mxu0 0.0
        %3735 = vmatprep.subr.mxu0 0.0
        %3736 = vmatpush1.msra.mxu0 0.0
        %3737 = vmatprep.subr.mxu0 0.0
        %3738 = vmatpush1.msra.mxu0 0.0
        %3739 = vmatprep.subr.mxu0 0.0
        %3740 = vmatpush1.msra.mxu0 0.0
        %3741 = vmatprep.subr.mxu0 0.0
        %3742 = vmatpush1.msra.mxu0 0.0
        %3743 = vmatprep.subr.mxu0 0.0
        %3744 = vmatpush1.msra.mxu0 0.0
        %3745 = vmatprep.subr.mxu0 0.0
        %3746 = vmatpush1.msra.mxu0 0.0
        %3747 = vmatprep.subr.mxu0 0.0
        %3748 = vmatpush1.msra.mxu0 0.0
        %3749 = vmatprep.subr.mxu0 0.0
        %3750 = vmatpush1.msra.mxu0 0.0
        %3751 = vmatprep.subr.mxu0 0.0
        %3752 = vmatpush1.msra.mxu0 0.0
        %3753 = vmatprep.subr.mxu0 0.0
        %3754 = vmatpush1.msra.mxu0 0.0
        %3755 = vmatprep.subr.mxu0 0.0
        %3756 = vmatpush1.msra.mxu0 0.0
        %3757 = vmatprep.subr.mxu0 0.0
        %3758 = vmatpush1.msra.mxu0 0.0
        %3759 = vmatprep.subr.mxu0 0.0
        %3760 = vmatpush1.msra.mxu0 0.0
        %3761 = vmatprep.subr.mxu0 0.0
        %3762 = vmatpush1.msra.mxu0 0.0
        %3763 = vmatprep.subr.mxu0 0.0
        %3764 = vmatpush1.msra.mxu0 0.0
        %3765 = vmatprep.subr.mxu0 0.0
        %3766 = vmatpush1.msra.mxu0 0.0
        %3767 = vmatprep.mubr.f32.mxu0 0.0
        %3768 = vmatmul.mubr.f32.gmra.mrb[0].mxu0 %v3701
        %v3769 = vpop.f32.mrb[0].mxu0
        %v3770 = vadd.f32 0.0, %v3769
        %v3771 = vpop.f32.mrb[0].mxu0
        %3772 = vdwg.mxu0
        %v3774 = vrot.slane %v3770, 1
        %3775 = vrot.lane.b32.xlu0 %v3774, 32
        %v3776 = vpop.permute.xlu0 %3775
        %v3778 = vrot.slane %v3770, 2
        %3779 = vrot.lane.b32.xlu0 %v3778, 64
        %v3780 = vpop.permute.xlu0 %3779
        %v3782 = vrot.slane %v3770, 3
        %3783 = vrot.lane.b32.xlu0 %v3782, 96
        %v3784 = vpop.permute.xlu0 %3783
        %v3786 = vsel %vm1352, %v3770, %v3776
        %v3787 = vsel %vm2182, %v3786, %v3780
        %v3788 = vsel %vm2184, %v3787, %v3784
        %v3789 = vmul.f32 %v3217, %v3271
        %v3790 = vmul.f32 %v3218, %v3271
        %v3791 = vmul.f32 %v3219, %v3271
        %v3792 = vmul.f32 %v3220, %v3271
        %v3793 = vmul.f32 %v3221, %v3271
        %v3794 = vmul.f32 %v3222, %v3271
        %v3795 = vmul.f32 %v3223, %v3271
        %v3796 = vmul.f32 %v3224, %v3271
        %v3798 = vsel %vm2221, %v3789, 0
        %v3801 = vsel %vm2221, %v3790, 0
        %v3804 = vsel %vm2221, %v3791, 0
        %v3807 = vsel %vm2221, %v3792, 0
        %v3810 = vsel %vm2221, %v3793, 0
        %v3813 = vsel %vm2221, %v3794, 0
        %v3816 = vsel %vm2221, %v3795, 0
        %v3819 = vsel %vm2221, %v3796, 0
        %3821 = vmatprep.subr.mxu0 0.0
        %3822 = vmatpush1.msra.mxu0 %v2214
        %3823 = vmatprep.subr.mxu0 0.0
        %3824 = vmatpush1.msra.mxu0 0.0
        %3825 = vmatprep.subr.mxu0 0.0
        %3826 = vmatpush1.msra.mxu0 0.0
        %3827 = vmatprep.subr.mxu0 0.0
        %3828 = vmatpush1.msra.mxu0 0.0
        %3829 = vmatprep.subr.mxu0 0.0
        %3830 = vmatpush1.msra.mxu0 0.0
        %3831 = vmatprep.subr.mxu0 0.0
        %3832 = vmatpush1.msra.mxu0 0.0
        %3833 = vmatprep.subr.mxu0 0.0
        %3834 = vmatpush1.msra.mxu0 0.0
        %3835 = vmatprep.subr.mxu0 0.0
        %3836 = vmatpush1.msra.mxu0 0.0
        %3837 = vmatprep.subr.mxu0 0.0
        %3838 = vmatpush1.msra.mxu0 0.0
        %3839 = vmatprep.subr.mxu0 0.0
        %3840 = vmatpush1.msra.mxu0 0.0
        %3841 = vmatprep.subr.mxu0 0.0
        %3842 = vmatpush1.msra.mxu0 0.0
        %3843 = vmatprep.subr.mxu0 0.0
        %3844 = vmatpush1.msra.mxu0 0.0
        %3845 = vmatprep.subr.mxu0 0.0
        %3846 = vmatpush1.msra.mxu0 0.0
        %3847 = vmatprep.subr.mxu0 0.0
        %3848 = vmatpush1.msra.mxu0 0.0
        %3849 = vmatprep.subr.mxu0 0.0
        %3850 = vmatpush1.msra.mxu0 0.0
        %3851 = vmatprep.subr.mxu0 0.0
        %3852 = vmatpush1.msra.mxu0 0.0
        %3853 = vmatprep.subr.mxu0 0.0
        %3854 = vmatpush1.msra.mxu0 0.0
        %3855 = vmatprep.subr.mxu0 0.0
        %3856 = vmatpush1.msra.mxu0 0.0
        %3857 = vmatprep.subr.mxu0 0.0
        %3858 = vmatpush1.msra.mxu0 0.0
        %3859 = vmatprep.subr.mxu0 0.0
        %3860 = vmatpush1.msra.mxu0 0.0
        %3861 = vmatprep.subr.mxu0 0.0
        %3862 = vmatpush1.msra.mxu0 0.0
        %3863 = vmatprep.subr.mxu0 0.0
        %3864 = vmatpush1.msra.mxu0 0.0
        %3865 = vmatprep.subr.mxu0 0.0
        %3866 = vmatpush1.msra.mxu0 0.0
        %3867 = vmatprep.subr.mxu0 0.0
        %3868 = vmatpush1.msra.mxu0 0.0
        %3869 = vmatprep.subr.mxu0 0.0
        %3870 = vmatpush1.msra.mxu0 0.0
        %3871 = vmatprep.subr.mxu0 0.0
        %3872 = vmatpush1.msra.mxu0 0.0
        %3873 = vmatprep.subr.mxu0 0.0
        %3874 = vmatpush1.msra.mxu0 0.0
        %3875 = vmatprep.subr.mxu0 0.0
        %3876 = vmatpush1.msra.mxu0 0.0
        %3877 = vmatprep.subr.mxu0 0.0
        %3878 = vmatpush1.msra.mxu0 0.0
        %3879 = vmatprep.subr.mxu0 0.0
        %3880 = vmatpush1.msra.mxu0 0.0
        %3881 = vmatprep.subr.mxu0 0.0
        %3882 = vmatpush1.msra.mxu0 0.0
        %3883 = vmatprep.subr.mxu0 0.0
        %3884 = vmatpush1.msra.mxu0 0.0
        %3885 = vmatprep.mubr.f32.mxu0 0.0
        %3886 = vmatmul.mubr.f32.gmra.mrb[0].mxu0 %v3798
        %v3887 = vpop.f32.mrb[0].mxu0
        %v3888 = vadd.f32 %v2219, %v3887
        %v3889 = vpop.f32.mrb[0].mxu0
        %3890 = vmatprep.mubr.f32.mxu0 0.0
        %3891 = vmatmul.mubr.f32.gmra.mrb[0].mxu0 %v3801
        %v3892 = vpop.f32.mrb[0].mxu0
        %v3893 = vadd.f32 %v2219, %v3892
        %v3894 = vpop.f32.mrb[0].mxu0
        %3895 = vmatprep.mubr.f32.mxu0 0.0
        %3896 = vmatmul.mubr.f32.gmra.mrb[0].mxu0 %v3804
        %v3897 = vpop.f32.mrb[0].mxu0
        %v3898 = vadd.f32 %v2219, %v3897
        %v3899 = vpop.f32.mrb[0].mxu0
        %3900 = vmatprep.mubr.f32.mxu0 0.0
        %3901 = vmatmul.mubr.f32.gmra.mrb[0].mxu0 %v3807
        %v3902 = vpop.f32.mrb[0].mxu0
        %v3903 = vadd.f32 %v2219, %v3902
        %v3904 = vpop.f32.mrb[0].mxu0
        %3905 = vmatprep.mubr.f32.mxu0 0.0
        %3906 = vmatmul.mubr.f32.gmra.mrb[0].mxu0 %v3810
        %v3907 = vpop.f32.mrb[0].mxu0
        %v3908 = vadd.f32 %v2219, %v3907
        %v3909 = vpop.f32.mrb[0].mxu0
        %3910 = vmatprep.mubr.f32.mxu0 0.0
        %3911 = vmatmul.mubr.f32.gmra.mrb[0].mxu0 %v3813
        %v3912 = vpop.f32.mrb[0].mxu0
        %v3913 = vadd.f32 %v2219, %v3912
        %v3914 = vpop.f32.mrb[0].mxu0
        %3915 = vmatprep.mubr.f32.mxu0 0.0
        %3916 = vmatmul.mubr.f32.gmra.mrb[0].mxu0 %v3816
        %v3917 = vpop.f32.mrb[0].mxu0
        %v3918 = vadd.f32 %v2219, %v3917
        %v3919 = vpop.f32.mrb[0].mxu0
        %3920 = vmatprep.mubr.f32.mxu0 0.0
        %3921 = vmatmul.mubr.f32.gmra.mrb[0].mxu0 %v3819
        %v3922 = vpop.f32.mrb[0].mxu0
        %v3923 = vadd.f32 %v2219, %v3922
        %v3924 = vpop.f32.mrb[0].mxu0
        %3925 = vdwg.mxu0
        %v3926 = vadd.f32 %v2007, %v3888
        %v3927 = vadd.f32 %v2013, %v3893
        %v3928 = vadd.f32 %v2019, %v3898
        %v3929 = vadd.f32 %v2025, %v3903
        %v3930 = vadd.f32 %v2031, %v3908
        %v3931 = vadd.f32 %v2037, %v3913
        %v3932 = vadd.f32 %v2043, %v3918
        %v3933 = vadd.f32 %v2049, %v3923
        %v3934 = vadd.f32 %v2009, %v3888
        %v3935 = vadd.f32 %v2015, %v3893
        %v3936 = vadd.f32 %v2021, %v3898
        %v3937 = vadd.f32 %v2027, %v3903
        %v3938 = vadd.f32 %v2033, %v3908
        %v3939 = vadd.f32 %v2039, %v3913
        %v3940 = vadd.f32 %v2045, %v3918
        %v3941 = vadd.f32 %v2051, %v3923
        %3942 = vmatprep.subr.mxu0 0.0
        %3943 = vmatpush1.msra.mxu0 %v2367
        %3944 = vmatprep.subr.mxu0 0.0
        %3945 = vmatpush1.msra.mxu0 %v2368
        %3946 = vmatprep.subr.mxu0 0.0
        %3947 = vmatpush1.msra.mxu0 %v2369
        %3948 = vmatprep.subr.mxu0 0.0
        %3949 = vmatpush1.msra.mxu0 %v2370
        %3950 = vmatprep.subr.mxu0 0.0
        %3951 = vmatpush1.msra.mxu0 %v2371
        %3952 = vmatprep.subr.mxu0 0.0
        %3953 = vmatpush1.msra.mxu0 %v2372
        %3954 = vmatprep.subr.mxu0 0.0
        %3955 = vmatpush1.msra.mxu0 %v2373
        %3956 = vmatprep.subr.mxu0 0.0
        %3957 = vmatpush1.msra.mxu0 %v2374
        %3958 = vmatprep.subr.mxu0 0.0
        %3959 = vmatpush1.msra.mxu0 %v2375
        %3960 = vmatprep.subr.mxu0 0.0
        %3961 = vmatpush1.msra.mxu0 %v2376
        %3962 = vmatprep.subr.mxu0 0.0
        %3963 = vmatpush1.msra.mxu0 %v2377
        %3964 = vmatprep.subr.mxu0 0.0
        %3965 = vmatpush1.msra.mxu0 %v2378
        %3966 = vmatprep.subr.mxu0 0.0
        %3967 = vmatpush1.msra.mxu0 %v2379
        %3968 = vmatprep.subr.mxu0 0.0
        %3969 = vmatpush1.msra.mxu0 %v2380
        %3970 = vmatprep.subr.mxu0 0.0
        %3971 = vmatpush1.msra.mxu0 %v2381
        %3972 = vmatprep.subr.mxu0 0.0
        %3973 = vmatpush1.msra.mxu0 %v2382
        %3974 = vmatprep.subr.mxu0 0.0
        %3975 = vmatpush1.msra.mxu0 0.0
        %3976 = vmatprep.subr.mxu0 0.0
        %3977 = vmatpush1.msra.mxu0 0.0
        %3978 = vmatprep.subr.mxu0 0.0
        %3979 = vmatpush1.msra.mxu0 0.0
        %3980 = vmatprep.subr.mxu0 0.0
        %3981 = vmatpush1.msra.mxu0 0.0
        %3982 = vmatprep.subr.mxu0 0.0
        %3983 = vmatpush1.msra.mxu0 0.0
        %3984 = vmatprep.subr.mxu0 0.0
        %3985 = vmatpush1.msra.mxu0 0.0
        %3986 = vmatprep.subr.mxu0 0.0
        %3987 = vmatpush1.msra.mxu0 0.0
        %3988 = vmatprep.subr.mxu0 0.0
        %3989 = vmatpush1.msra.mxu0 0.0
        %3990 = vmatprep.subr.mxu0 0.0
        %3991 = vmatpush1.msra.mxu0 0.0
        %3992 = vmatprep.subr.mxu0 0.0
        %3993 = vmatpush1.msra.mxu0 0.0
        %3994 = vmatprep.subr.mxu0 0.0
        %3995 = vmatpush1.msra.mxu0 0.0
        %3996 = vmatprep.subr.mxu0 0.0
        %3997 = vmatpush1.msra.mxu0 0.0
        %3998 = vmatprep.subr.mxu0 0.0
        %3999 = vmatpush1.msra.mxu0 0.0
        %4000 = vmatprep.subr.mxu0 0.0
        %4001 = vmatpush1.msra.mxu0 0.0
        %4002 = vmatprep.subr.mxu0 0.0
        %4003 = vmatpush1.msra.mxu0 0.0
        %4004 = vmatprep.subr.mxu0 0.0
        %4005 = vmatpush1.msra.mxu0 0.0
        %4006 = vmatprep.mubr.f32.mxu0 0.0
        %4007 = vmatmul.mubr.f32.gmra.mrb[0].mxu0 %v3926
        %v4008 = vpop.f32.mrb[0].mxu0
        %v4009 = vadd.f32 %v2387, %v4008
        %v4010 = vpop.f32.mrb[0].mxu0
        %4011 = vmatprep.mubr.f32.mxu0 0.0
        %4012 = vmatmul.mubr.f32.gmra.mrb[0].mxu0 %v3927
        %v4013 = vpop.f32.mrb[0].mxu0
        %v4014 = vadd.f32 %v2387, %v4013
        %v4015 = vpop.f32.mrb[0].mxu0
        %4016 = vmatprep.mubr.f32.mxu0 0.0
        %4017 = vmatmul.mubr.f32.gmra.mrb[0].mxu0 %v3928
        %v4018 = vpop.f32.mrb[0].mxu0
        %v4019 = vadd.f32 %v2387, %v4018
        %v4020 = vpop.f32.mrb[0].mxu0
        %4021 = vmatprep.mubr.f32.mxu0 0.0
        %4022 = vmatmul.mubr.f32.gmra.mrb[0].mxu0 %v3929
        %v4023 = vpop.f32.mrb[0].mxu0
        %v4024 = vadd.f32 %v2387, %v4023
        %v4025 = vpop.f32.mrb[0].mxu0
        %4026 = vmatprep.mubr.f32.mxu0 0.0
        %4027 = vmatmul.mubr.f32.gmra.mrb[0].mxu0 %v3930
        %v4028 = vpop.f32.mrb[0].mxu0
        %v4029 = vadd.f32 %v2387, %v4028
        %v4030 = vpop.f32.mrb[0].mxu0
        %4031 = vmatprep.mubr.f32.mxu0 0.0
        %4032 = vmatmul.mubr.f32.gmra.mrb[0].mxu0 %v3931
        %v4033 = vpop.f32.mrb[0].mxu0
        %v4034 = vadd.f32 %v2387, %v4033
        %v4035 = vpop.f32.mrb[0].mxu0
        %4036 = vmatprep.mubr.f32.mxu0 0.0
        %4037 = vmatmul.mubr.f32.gmra.mrb[0].mxu0 %v3932
        %v4038 = vpop.f32.mrb[0].mxu0
        %v4039 = vadd.f32 %v2387, %v4038
        %v4040 = vpop.f32.mrb[0].mxu0
        %4041 = vmatprep.mubr.f32.mxu0 0.0
        %4042 = vmatmul.mubr.f32.gmra.mrb[0].mxu0 %v3933
        %v4043 = vpop.f32.mrb[0].mxu0
        %v4044 = vadd.f32 %v2387, %v4043
        %v4045 = vpop.f32.mrb[0].mxu0
        %4046 = vmatprep.mubr.f32.mxu0 0.0
        %4047 = vmatmul.mubr.f32.gmra.mrb[0].mxu0 %v3934
        %v4048 = vpop.f32.mrb[0].mxu0
        %v4049 = vadd.f32 %v2387, %v4048
        %v4050 = vpop.f32.mrb[0].mxu0
        %4051 = vmatprep.mubr.f32.mxu0 0.0
        %4052 = vmatmul.mubr.f32.gmra.mrb[0].mxu0 %v3935
        %v4053 = vpop.f32.mrb[0].mxu0
        %v4054 = vadd.f32 %v2387, %v4053
        %v4055 = vpop.f32.mrb[0].mxu0
        %4056 = vmatprep.mubr.f32.mxu0 0.0
        %4057 = vmatmul.mubr.f32.gmra.mrb[0].mxu0 %v3936
        %v4058 = vpop.f32.mrb[0].mxu0
        %v4059 = vadd.f32 %v2387, %v4058
        %v4060 = vpop.f32.mrb[0].mxu0
        %4061 = vmatprep.mubr.f32.mxu0 0.0
        %4062 = vmatmul.mubr.f32.gmra.mrb[0].mxu0 %v3937
        %v4063 = vpop.f32.mrb[0].mxu0
        %v4064 = vadd.f32 %v2387, %v4063
        %v4065 = vpop.f32.mrb[0].mxu0
        %4066 = vmatprep.mubr.f32.mxu0 0.0
        %4067 = vmatmul.mubr.f32.gmra.mrb[0].mxu0 %v3938
        %v4068 = vpop.f32.mrb[0].mxu0
        %v4069 = vadd.f32 %v2387, %v4068
        %v4070 = vpop.f32.mrb[0].mxu0
        %4071 = vmatprep.mubr.f32.mxu0 0.0
        %4072 = vmatmul.mubr.f32.gmra.mrb[0].mxu0 %v3939
        %v4073 = vpop.f32.mrb[0].mxu0
        %v4074 = vadd.f32 %v2387, %v4073
        %v4075 = vpop.f32.mrb[0].mxu0
        %4076 = vmatprep.mubr.f32.mxu0 0.0
        %4077 = vmatmul.mubr.f32.gmra.mrb[0].mxu0 %v3940
        %v4078 = vpop.f32.mrb[0].mxu0
        %v4079 = vadd.f32 %v2387, %v4078
        %v4080 = vpop.f32.mrb[0].mxu0
        %4081 = vmatprep.mubr.f32.mxu0 0.0
        %4082 = vmatmul.mubr.f32.gmra.mrb[0].mxu0 %v3941
        %v4083 = vpop.f32.mrb[0].mxu0
        %v4084 = vadd.f32 %v2387, %v4083
        %v4085 = vpop.f32.mrb[0].mxu0
        %4086 = vdwg.mxu0
        %v4087 = vmax.f32 %v4009, 0.0
        %v4088 = vmax.f32 %v4014, 0.0
        %v4089 = vmax.f32 %v4019, 0.0
        %v4090 = vmax.f32 %v4024, 0.0
        %v4091 = vmax.f32 %v4029, 0.0
        %v4092 = vmax.f32 %v4034, 0.0
        %v4093 = vmax.f32 %v4039, 0.0
        %v4094 = vmax.f32 %v4044, 0.0
        %v4095 = vmax.f32 %v4049, 0.0
        %v4096 = vmax.f32 %v4054, 0.0
        %v4097 = vmax.f32 %v4059, 0.0
        %v4098 = vmax.f32 %v4064, 0.0
        %v4099 = vmax.f32 %v4069, 0.0
        %v4100 = vmax.f32 %v4074, 0.0
        %v4101 = vmax.f32 %v4079, 0.0
        %v4102 = vmax.f32 %v4084, 0.0
        %4103 = vmatprep.subr.mxu0 0.0
        %4104 = vmatpush1.msra.mxu0 %v2550
        %4105 = vmatprep.subr.mxu0 0.0
        %4106 = vmatpush1.msra.mxu0 %v2551
        %4107 = vmatprep.subr.mxu0 0.0
        %4108 = vmatpush1.msra.mxu0 %v2552
        %4109 = vmatprep.subr.mxu0 0.0
        %4110 = vmatpush1.msra.mxu0 %v2553
        %4111 = vmatprep.subr.mxu0 0.0
        %4112 = vmatpush1.msra.mxu0 %v2554
        %4113 = vmatprep.subr.mxu0 0.0
        %4114 = vmatpush1.msra.mxu0 %v2555
        %4115 = vmatprep.subr.mxu0 0.0
        %4116 = vmatpush1.msra.mxu0 %v2556
        %4117 = vmatprep.subr.mxu0 0.0
        %4118 = vmatpush1.msra.mxu0 %v2557
        %4119 = vmatprep.subr.mxu0 0.0
        %4120 = vmatpush1.msra.mxu0 %v2558
        %4121 = vmatprep.subr.mxu0 0.0
        %4122 = vmatpush1.msra.mxu0 %v2559
        %4123 = vmatprep.subr.mxu0 0.0
        %4124 = vmatpush1.msra.mxu0 %v2560
        %4125 = vmatprep.subr.mxu0 0.0
        %4126 = vmatpush1.msra.mxu0 %v2561
        %4127 = vmatprep.subr.mxu0 0.0
        %4128 = vmatpush1.msra.mxu0 %v2562
        %4129 = vmatprep.subr.mxu0 0.0
        %4130 = vmatpush1.msra.mxu0 %v2563
        %4131 = vmatprep.subr.mxu0 0.0
        %4132 = vmatpush1.msra.mxu0 %v2564
        %4133 = vmatprep.subr.mxu0 0.0
        %4134 = vmatpush1.msra.mxu0 %v2565
        %4135 = vmatprep.subr.mxu0 0.0
        %4136 = vmatpush1.msra.mxu0 0.0
        %4137 = vmatprep.subr.mxu0 0.0
        %4138 = vmatpush1.msra.mxu0 0.0
        %4139 = vmatprep.subr.mxu0 0.0
        %4140 = vmatpush1.msra.mxu0 0.0
        %4141 = vmatprep.subr.mxu0 0.0
        %4142 = vmatpush1.msra.mxu0 0.0
        %4143 = vmatprep.subr.mxu0 0.0
        %4144 = vmatpush1.msra.mxu0 0.0
        %4145 = vmatprep.subr.mxu0 0.0
        %4146 = vmatpush1.msra.mxu0 0.0
        %4147 = vmatprep.subr.mxu0 0.0
        %4148 = vmatpush1.msra.mxu0 0.0
        %4149 = vmatprep.subr.mxu0 0.0
        %4150 = vmatpush1.msra.mxu0 0.0
        %4151 = vmatprep.subr.mxu0 0.0
        %4152 = vmatpush1.msra.mxu0 0.0
        %4153 = vmatprep.subr.mxu0 0.0
        %4154 = vmatpush1.msra.mxu0 0.0
        %4155 = vmatprep.subr.mxu0 0.0
        %4156 = vmatpush1.msra.mxu0 0.0
        %4157 = vmatprep.subr.mxu0 0.0
        %4158 = vmatpush1.msra.mxu0 0.0
        %4159 = vmatprep.subr.mxu0 0.0
        %4160 = vmatpush1.msra.mxu0 0.0
        %4161 = vmatprep.subr.mxu0 0.0
        %4162 = vmatpush1.msra.mxu0 0.0
        %4163 = vmatprep.subr.mxu0 0.0
        %4164 = vmatpush1.msra.mxu0 0.0
        %4165 = vmatprep.subr.mxu0 0.0
        %4166 = vmatpush1.msra.mxu0 0.0
        %4167 = vmatprep.mubr.f32.mxu0 0.0
        %4168 = vmatmul.mubr.f32.gmra.mrb[0].mxu0 %v4087
        %v4169 = vpop.f32.mrb[0].mxu0
        %v4170 = vadd.f32 %v2570, %v4169
        %v4171 = vpop.f32.mrb[0].mxu0
        %4172 = vmatprep.mubr.f32.mxu0 0.0
        %4173 = vmatmul.mubr.f32.gmra.mrb[0].mxu0 %v4088
        %v4174 = vpop.f32.mrb[0].mxu0
        %v4175 = vadd.f32 %v2570, %v4174
        %v4176 = vpop.f32.mrb[0].mxu0
        %4177 = vmatprep.mubr.f32.mxu0 0.0
        %4178 = vmatmul.mubr.f32.gmra.mrb[0].mxu0 %v4089
        %v4179 = vpop.f32.mrb[0].mxu0
        %v4180 = vadd.f32 %v2570, %v4179
        %v4181 = vpop.f32.mrb[0].mxu0
        %4182 = vmatprep.mubr.f32.mxu0 0.0
        %4183 = vmatmul.mubr.f32.gmra.mrb[0].mxu0 %v4090
        %v4184 = vpop.f32.mrb[0].mxu0
        %v4185 = vadd.f32 %v2570, %v4184
        %v4186 = vpop.f32.mrb[0].mxu0
        %4187 = vmatprep.mubr.f32.mxu0 0.0
        %4188 = vmatmul.mubr.f32.gmra.mrb[0].mxu0 %v4091
        %v4189 = vpop.f32.mrb[0].mxu0
        %v4190 = vadd.f32 %v2570, %v4189
        %v4191 = vpop.f32.mrb[0].mxu0
        %4192 = vmatprep.mubr.f32.mxu0 0.0
        %4193 = vmatmul.mubr.f32.gmra.mrb[0].mxu0 %v4092
        %v4194 = vpop.f32.mrb[0].mxu0
        %v4195 = vadd.f32 %v2570, %v4194
        %v4196 = vpop.f32.mrb[0].mxu0
        %4197 = vmatprep.mubr.f32.mxu0 0.0
        %4198 = vmatmul.mubr.f32.gmra.mrb[0].mxu0 %v4093
        %v4199 = vpop.f32.mrb[0].mxu0
        %v4200 = vadd.f32 %v2570, %v4199
        %v4201 = vpop.f32.mrb[0].mxu0
        %4202 = vmatprep.mubr.f32.mxu0 0.0
        %4203 = vmatmul.mubr.f32.gmra.mrb[0].mxu0 %v4094
        %v4204 = vpop.f32.mrb[0].mxu0
        %v4205 = vadd.f32 %v2570, %v4204
        %v4206 = vpop.f32.mrb[0].mxu0
        %4207 = vmatprep.mubr.f32.mxu0 0.0
        %4208 = vmatmul.mubr.f32.gmra.mrb[0].mxu0 %v4095
        %v4209 = vpop.f32.mrb[0].mxu0
        %v4210 = vadd.f32 %v2570, %v4209
        %v4211 = vpop.f32.mrb[0].mxu0
        %4212 = vmatprep.mubr.f32.mxu0 0.0
        %4213 = vmatmul.mubr.f32.gmra.mrb[0].mxu0 %v4096
        %v4214 = vpop.f32.mrb[0].mxu0
        %v4215 = vadd.f32 %v2570, %v4214
        %v4216 = vpop.f32.mrb[0].mxu0
        %4217 = vmatprep.mubr.f32.mxu0 0.0
        %4218 = vmatmul.mubr.f32.gmra.mrb[0].mxu0 %v4097
        %v4219 = vpop.f32.mrb[0].mxu0
        %v4220 = vadd.f32 %v2570, %v4219
        %v4221 = vpop.f32.mrb[0].mxu0
        %4222 = vmatprep.mubr.f32.mxu0 0.0
        %4223 = vmatmul.mubr.f32.gmra.mrb[0].mxu0 %v4098
        %v4224 = vpop.f32.mrb[0].mxu0
        %v4225 = vadd.f32 %v2570, %v4224
        %v4226 = vpop.f32.mrb[0].mxu0
        %4227 = vmatprep.mubr.f32.mxu0 0.0
        %4228 = vmatmul.mubr.f32.gmra.mrb[0].mxu0 %v4099
        %v4229 = vpop.f32.mrb[0].mxu0
        %v4230 = vadd.f32 %v2570, %v4229
        %v4231 = vpop.f32.mrb[0].mxu0
        %4232 = vmatprep.mubr.f32.mxu0 0.0
        %4233 = vmatmul.mubr.f32.gmra.mrb[0].mxu0 %v4100
        %v4234 = vpop.f32.mrb[0].mxu0
        %v4235 = vadd.f32 %v2570, %v4234
        %v4236 = vpop.f32.mrb[0].mxu0
        %4237 = vmatprep.mubr.f32.mxu0 0.0
        %4238 = vmatmul.mubr.f32.gmra.mrb[0].mxu0 %v4101
        %v4239 = vpop.f32.mrb[0].mxu0
        %v4240 = vadd.f32 %v2570, %v4239
        %v4241 = vpop.f32.mrb[0].mxu0
        %4242 = vmatprep.mubr.f32.mxu0 0.0
        %4243 = vmatmul.mubr.f32.gmra.mrb[0].mxu0 %v4102
        %v4244 = vpop.f32.mrb[0].mxu0
        %v4245 = vadd.f32 %v2570, %v4244
        %v4246 = vpop.f32.mrb[0].mxu0
        %4247 = vdwg.mxu0
        %v4248 = vlaneseq
        %v4249 = vshrl.u32 %v4248, 7
        %v4250 = vsub.s32 0, %v4249
        %v4251 = vrot.slane %v3788, %v4250
        %v4252 = vmul.f32 %v4170, %v4251
        %v4253 = vmul.f32 %v4175, %v4251
        %v4254 = vmul.f32 %v4180, %v4251
        %v4255 = vmul.f32 %v4185, %v4251
        %v4256 = vmul.f32 %v4190, %v4251
        %v4257 = vmul.f32 %v4195, %v4251
        %v4258 = vmul.f32 %v4200, %v4251
        %v4259 = vmul.f32 %v4205, %v4251
        %4260 = vmatprep.subr.mxu0 0.0
        %4261 = vmatpush1.msra.mxu0 %v2729
        %4262 = vmatprep.subr.mxu0 0.0
        %4263 = vmatpush1.msra.mxu0 %v2730
        %4264 = vmatprep.subr.mxu0 0.0
        %4265 = vmatpush1.msra.mxu0 %v2731
        %4266 = vmatprep.subr.mxu0 0.0
        %4267 = vmatpush1.msra.mxu0 %v2732
        %4268 = vmatprep.subr.mxu0 0.0
        %4269 = vmatpush1.msra.mxu0 %v2733
        %4270 = vmatprep.subr.mxu0 0.0
        %4271 = vmatpush1.msra.mxu0 %v2734
        %4272 = vmatprep.subr.mxu0 0.0
        %4273 = vmatpush1.msra.mxu0 %v2735
        %4274 = vmatprep.subr.mxu0 0.0
        %4275 = vmatpush1.msra.mxu0 %v2736
        %4276 = vmatprep.subr.mxu0 0.0
        %4277 = vmatpush1.msra.mxu0 %v2737
        %4278 = vmatprep.subr.mxu0 0.0
        %4279 = vmatpush1.msra.mxu0 %v2738
        %4280 = vmatprep.subr.mxu0 0.0
        %4281 = vmatpush1.msra.mxu0 %v2739
        %4282 = vmatprep.subr.mxu0 0.0
        %4283 = vmatpush1.msra.mxu0 %v2740
        %4284 = vmatprep.subr.mxu0 0.0
        %4285 = vmatpush1.msra.mxu0 %v2741
        %4286 = vmatprep.subr.mxu0 0.0
        %4287 = vmatpush1.msra.mxu0 %v2742
        %4288 = vmatprep.subr.mxu0 0.0
        %4289 = vmatpush1.msra.mxu0 %v2743
        %4290 = vmatprep.subr.mxu0 0.0
        %4291 = vmatpush1.msra.mxu0 %v2744
        %4292 = vmatprep.subr.mxu0 0.0
        %4293 = vmatpush1.msra.mxu0 0.0
        %4294 = vmatprep.subr.mxu0 0.0
        %4295 = vmatpush1.msra.mxu0 0.0
        %4296 = vmatprep.subr.mxu0 0.0
        %4297 = vmatpush1.msra.mxu0 0.0
        %4298 = vmatprep.subr.mxu0 0.0
        %4299 = vmatpush1.msra.mxu0 0.0
        %4300 = vmatprep.subr.mxu0 0.0
        %4301 = vmatpush1.msra.mxu0 0.0
        %4302 = vmatprep.subr.mxu0 0.0
        %4303 = vmatpush1.msra.mxu0 0.0
        %4304 = vmatprep.subr.mxu0 0.0
        %4305 = vmatpush1.msra.mxu0 0.0
        %4306 = vmatprep.subr.mxu0 0.0
        %4307 = vmatpush1.msra.mxu0 0.0
        %4308 = vmatprep.subr.mxu0 0.0
        %4309 = vmatpush1.msra.mxu0 0.0
        %4310 = vmatprep.subr.mxu0 0.0
        %4311 = vmatpush1.msra.mxu0 0.0
        %4312 = vmatprep.subr.mxu0 0.0
        %4313 = vmatpush1.msra.mxu0 0.0
        %4314 = vmatprep.subr.mxu0 0.0
        %4315 = vmatpush1.msra.mxu0 0.0
        %4316 = vmatprep.subr.mxu0 0.0
        %4317 = vmatpush1.msra.mxu0 0.0
        %4318 = vmatprep.subr.mxu0 0.0
        %4319 = vmatpush1.msra.mxu0 0.0
        %4320 = vmatprep.subr.mxu0 0.0
        %4321 = vmatpush1.msra.mxu0 0.0
        %4322 = vmatprep.subr.mxu0 0.0
        %4323 = vmatpush1.msra.mxu0 0.0
        %4324 = vmatprep.mubr.f32.mxu0 0.0
        %4325 = vmatmul.mubr.f32.gmra.mrb[0].mxu0 %v4252
        %v4326 = vpop.f32.mrb[0].mxu0
        %v4327 = vadd.f32 0.0, %v4326
        %v4328 = vpop.f32.mrb[0].mxu0
        %4329 = vmatprep.mubr.f32.mxu0 0.0
        %4330 = vmatmul.mubr.f32.gmra.mrb[0].mxu0 %v4253
        %v4331 = vpop.f32.mrb[0].mxu0
        %v4332 = vadd.f32 0.0, %v4331
        %v4333 = vpop.f32.mrb[0].mxu0
        %4334 = vmatprep.mubr.f32.mxu0 0.0
        %4335 = vmatmul.mubr.f32.gmra.mrb[0].mxu0 %v4254
        %v4336 = vpop.f32.mrb[0].mxu0
        %v4337 = vadd.f32 0.0, %v4336
        %v4338 = vpop.f32.mrb[0].mxu0
        %4339 = vmatprep.mubr.f32.mxu0 0.0
        %4340 = vmatmul.mubr.f32.gmra.mrb[0].mxu0 %v4255
        %v4341 = vpop.f32.mrb[0].mxu0
        %v4342 = vadd.f32 0.0, %v4341
        %v4343 = vpop.f32.mrb[0].mxu0
        %4344 = vmatprep.mubr.f32.mxu0 0.0
        %4345 = vmatmul.mubr.f32.gmra.mrb[0].mxu0 %v4256
        %v4346 = vpop.f32.mrb[0].mxu0
        %v4347 = vadd.f32 0.0, %v4346
        %v4348 = vpop.f32.mrb[0].mxu0
        %4349 = vmatprep.mubr.f32.mxu0 0.0
        %4350 = vmatmul.mubr.f32.gmra.mrb[0].mxu0 %v4257
        %v4351 = vpop.f32.mrb[0].mxu0
        %v4352 = vadd.f32 0.0, %v4351
        %v4353 = vpop.f32.mrb[0].mxu0
        %4354 = vmatprep.mubr.f32.mxu0 0.0
        %4355 = vmatmul.mubr.f32.gmra.mrb[0].mxu0 %v4258
        %v4356 = vpop.f32.mrb[0].mxu0
        %v4357 = vadd.f32 0.0, %v4356
        %v4358 = vpop.f32.mrb[0].mxu0
        %4359 = vmatprep.mubr.f32.mxu0 0.0
        %4360 = vmatmul.mubr.f32.gmra.mrb[0].mxu0 %v4259
        %v4361 = vpop.f32.mrb[0].mxu0
        %v4362 = vadd.f32 0.0, %v4361
        %v4363 = vpop.f32.mrb[0].mxu0
        %4364 = vdwg.mxu0
        %v4365 = vmul.f32 %v4327, 0.17677669
        %v4366 = vmul.f32 %v4332, 0.17677669
        %v4367 = vmul.f32 %v4337, 0.17677669
        %v4368 = vmul.f32 %v4342, 0.17677669
        %v4369 = vmul.f32 %v4347, 0.17677669
        %v4370 = vmul.f32 %v4352, 0.17677669
        %v4371 = vmul.f32 %v4357, 0.17677669
        %v4372 = vmul.f32 %v4362, 0.17677669
        %v4373 = vsel %vm2858, %v4365, -inf
        %4374 = vmax.xlane.f32.xlu0 %v4373
        %v4375 = vpop.xlane.xlu0 %4374
        %v4376 = vsel %vm2858, %v4366, -inf
        %4377 = vmax.xlane.f32.xlu0 %v4376
        %v4378 = vpop.xlane.xlu0 %4377
        %v4379 = vsel %vm2858, %v4367, -inf
        %4380 = vmax.xlane.f32.xlu0 %v4379
        %v4381 = vpop.xlane.xlu0 %4380
        %v4382 = vsel %vm2858, %v4368, -inf
        %4383 = vmax.xlane.f32.xlu0 %v4382
        %v4384 = vpop.xlane.xlu0 %4383
        %v4385 = vsel %vm2858, %v4369, -inf
        %4386 = vmax.xlane.f32.xlu0 %v4385
        %v4387 = vpop.xlane.xlu0 %4386
        %v4388 = vsel %vm2858, %v4370, -inf
        %4389 = vmax.xlane.f32.xlu0 %v4388
        %v4390 = vpop.xlane.xlu0 %4389
        %v4391 = vsel %vm2858, %v4371, -inf
        %4392 = vmax.xlane.f32.xlu0 %v4391
        %v4393 = vpop.xlane.xlu0 %4392
        %v4394 = vsel %vm2858, %v4372, -inf
        %4395 = vmax.xlane.f32.xlu0 %v4394
        %v4396 = vpop.xlane.xlu0 %4395
        %v4397 = vsub.f32 %v4365, %v4375
        %v4398 = vsub.f32 %v4366, %v4378
        %v4399 = vsub.f32 %v4367, %v4381
        %v4400 = vsub.f32 %v4368, %v4384
        %v4401 = vsub.f32 %v4369, %v4387
        %v4402 = vsub.f32 %v4370, %v4390
        %v4403 = vsub.f32 %v4371, %v4393
        %v4404 = vsub.f32 %v4372, %v4396
        %v4405 = vmul.f32 %v4397, 1.442695
        %v4406 = vpow.pop %v4405
        %v4407 = vmul.f32 %v4398, 1.442695
        %v4408 = vpow.pop %v4407
        %v4409 = vmul.f32 %v4399, 1.442695
        %v4410 = vpow.pop %v4409
        %v4411 = vmul.f32 %v4400, 1.442695
        %v4412 = vpow.pop %v4411
        %v4413 = vmul.f32 %v4401, 1.442695
        %v4414 = vpow.pop %v4413
        %v4415 = vmul.f32 %v4402, 1.442695
        %v4416 = vpow.pop %v4415
        %v4417 = vmul.f32 %v4403, 1.442695
        %v4418 = vpow.pop %v4417
        %v4419 = vmul.f32 %v4404, 1.442695
        %v4420 = vpow.pop %v4419
        %v4421 = vsel %vm2858, %v4406, 0.0
        %4422 = vadd.xlane.f32.xlu0 %v4421
        %v4423 = vpop.xlane.xlu0 %4422
        %v4424 = vsel %vm2858, %v4408, 0.0
        %4425 = vadd.xlane.f32.xlu0 %v4424
        %v4426 = vpop.xlane.xlu0 %4425
        %v4427 = vsel %vm2858, %v4410, 0.0
        %4428 = vadd.xlane.f32.xlu0 %v4427
        %v4429 = vpop.xlane.xlu0 %4428
        %v4430 = vsel %vm2858, %v4412, 0.0
        %4431 = vadd.xlane.f32.xlu0 %v4430
        %v4432 = vpop.xlane.xlu0 %4431
        %v4433 = vsel %vm2858, %v4414, 0.0
        %4434 = vadd.xlane.f32.xlu0 %v4433
        %v4435 = vpop.xlane.xlu0 %4434
        %v4436 = vsel %vm2858, %v4416, 0.0
        %4437 = vadd.xlane.f32.xlu0 %v4436
        %v4438 = vpop.xlane.xlu0 %4437
        %v4439 = vsel %vm2858, %v4418, 0.0
        %4440 = vadd.xlane.f32.xlu0 %v4439
        %v4441 = vpop.xlane.xlu0 %4440
        %v4442 = vsel %vm2858, %v4420, 0.0
        %4443 = vadd.xlane.f32.xlu0 %v4442
        %v4444 = vpop.xlane.xlu0 %4443
        %v4445 = vrcp.pop %v4423
        %v4446 = vrcp.pop %v4426
        %v4447 = vrcp.pop %v4429
        %v4448 = vrcp.pop %v4432
        %v4449 = vrcp.pop %v4435
        %v4450 = vrcp.pop %v4438
        %v4451 = vrcp.pop %v4441
        %v4452 = vrcp.pop %v4444
        %v4453 = vmul.f32 %v4406, %v4445
        %v4454 = vmul.f32 %v4408, %v4446
        %v4455 = vmul.f32 %v4410, %v4447
        %v4456 = vmul.f32 %v4412, %v4448
        %v4457 = vmul.f32 %v4414, %v4449
        %v4458 = vmul.f32 %v4416, %v4450
        %v4459 = vmul.f32 %v4418, %v4451
        %v4460 = vmul.f32 %v4420, %v4452
        %v4461 = vadd.f32 %v4453, 1e-08
        %v4462 = vadd.f32 %v4454, 1e-08
        %v4463 = vadd.f32 %v4455, 1e-08
        %v4464 = vadd.f32 %v4456, 1e-08
        %v4465 = vadd.f32 %v4457, 1e-08
        %v4466 = vadd.f32 %v4458, 1e-08
        %v4467 = vadd.f32 %v4459, 1e-08
        %v4468 = vadd.f32 %v4460, 1e-08
        %v4469 = vsel %vm2858, %v4461, 0.0
        %v4470 = vsel %vm2858, %v4462, 0.0
        %v4471 = vadd.f32 %v4469, %v4470
        %v4472 = vsel %vm2858, %v4463, 0.0
        %v4473 = vadd.f32 %v4471, %v4472
        %v4474 = vsel %vm2858, %v4464, 0.0
        %v4475 = vadd.f32 %v4473, %v4474
        %v4476 = vsel %vm2858, %v4465, 0.0
        %v4477 = vadd.f32 %v4475, %v4476
        %v4478 = vsel %vm2858, %v4466, 0.0
        %v4479 = vadd.f32 %v4477, %v4478
        %v4480 = vsel %vm2858, %v4467, 0.0
        %v4481 = vadd.f32 %v4479, %v4480
        %v4482 = vsel %vm2858, %v4468, 0.0
        %v4483 = vadd.f32 %v4481, %v4482
        %v4484 = vrot.slane %v4483, 4
        %v4485 = vadd.f32 %v4483, %v4484
        %v4486 = vrot.slane %v4485, 2
        %v4487 = vadd.f32 %v4485, %v4486
        %v4488 = vrot.slane %v4487, 1
        %v4489 = vadd.f32 %v4487, %v4488
        %v4490 = vrcp.pop %v4489
        %v4491 = vmul.f32 %v4461, %v4490
        %v4492 = vmul.f32 %v4462, %v4490
        %v4493 = vmul.f32 %v4463, %v4490
        %v4494 = vmul.f32 %v4464, %v4490
        %v4495 = vmul.f32 %v4465, %v4490
        %v4496 = vmul.f32 %v4466, %v4490
        %v4497 = vmul.f32 %v4467, %v4490
        %v4498 = vmul.f32 %v4468, %v4490
        %v4500 = vsel %vm2858, %v4491, 0
        %v4503 = vsel %vm2858, %v4492, 0
        %v4506 = vsel %vm2858, %v4493, 0
        %v4509 = vsel %vm2858, %v4494, 0
        %v4512 = vsel %vm2858, %v4495, 0
        %v4515 = vsel %vm2858, %v4496, 0
        %v4518 = vsel %vm2858, %v4497, 0
        %v4521 = vsel %vm2858, %v4498, 0
        %4523 = vmatprep.subr.mxu0 0.0
        %4524 = vmatpush1.msra.mxu0 %v3012
        %4525 = vmatprep.subr.mxu0 0.0
        %4526 = vmatpush1.msra.mxu0 0.0
        %4527 = vmatprep.subr.mxu0 0.0
        %4528 = vmatpush1.msra.mxu0 0.0
        %4529 = vmatprep.subr.mxu0 0.0
        %4530 = vmatpush1.msra.mxu0 0.0
        %4531 = vmatprep.subr.mxu0 0.0
        %4532 = vmatpush1.msra.mxu0 0.0
        %4533 = vmatprep.subr.mxu0 0.0
        %4534 = vmatpush1.msra.mxu0 0.0
        %4535 = vmatprep.subr.mxu0 0.0
        %4536 = vmatpush1.msra.mxu0 0.0
        %4537 = vmatprep.subr.mxu0 0.0
        %4538 = vmatpush1.msra.mxu0 0.0
        %4539 = vmatprep.subr.mxu0 0.0
        %4540 = vmatpush1.msra.mxu0 0.0
        %4541 = vmatprep.subr.mxu0 0.0
        %4542 = vmatpush1.msra.mxu0 0.0
        %4543 = vmatprep.subr.mxu0 0.0
        %4544 = vmatpush1.msra.mxu0 0.0
        %4545 = vmatprep.subr.mxu0 0.0
        %4546 = vmatpush1.msra.mxu0 0.0
        %4547 = vmatprep.subr.mxu0 0.0
        %4548 = vmatpush1.msra.mxu0 0.0
        %4549 = vmatprep.subr.mxu0 0.0
        %4550 = vmatpush1.msra.mxu0 0.0
        %4551 = vmatprep.subr.mxu0 0.0
        %4552 = vmatpush1.msra.mxu0 0.0
        %4553 = vmatprep.subr.mxu0 0.0
        %4554 = vmatpush1.msra.mxu0 0.0
        %4555 = vmatprep.subr.mxu0 0.0
        %4556 = vmatpush1.msra.mxu0 0.0
        %4557 = vmatprep.subr.mxu0 0.0
        %4558 = vmatpush1.msra.mxu0 0.0
        %4559 = vmatprep.subr.mxu0 0.0
        %4560 = vmatpush1.msra.mxu0 0.0
        %4561 = vmatprep.subr.mxu0 0.0
        %4562 = vmatpush1.msra.mxu0 0.0
        %4563 = vmatprep.subr.mxu0 0.0
        %4564 = vmatpush1.msra.mxu0 0.0
        %4565 = vmatprep.subr.mxu0 0.0
        %4566 = vmatpush1.msra.mxu0 0.0
        %4567 = vmatprep.subr.mxu0 0.0
        %4568 = vmatpush1.msra.mxu0 0.0
        %4569 = vmatprep.subr.mxu0 0.0
        %4570 = vmatpush1.msra.mxu0 0.0
        %4571 = vmatprep.subr.mxu0 0.0
        %4572 = vmatpush1.msra.mxu0 0.0
        %4573 = vmatprep.subr.mxu0 0.0
        %4574 = vmatpush1.msra.mxu0 0.0
        %4575 = vmatprep.subr.mxu0 0.0
        %4576 = vmatpush1.msra.mxu0 0.0
        %4577 = vmatprep.subr.mxu0 0.0
        %4578 = vmatpush1.msra.mxu0 0.0
        %4579 = vmatprep.subr.mxu0 0.0
        %4580 = vmatpush1.msra.mxu0 0.0
        %4581 = vmatprep.subr.mxu0 0.0
        %4582 = vmatpush1.msra.mxu0 0.0
        %4583 = vmatprep.subr.mxu0 0.0
        %4584 = vmatpush1.msra.mxu0 0.0
        %4585 = vmatprep.subr.mxu0 0.0
        %4586 = vmatpush1.msra.mxu0 0.0
        %4587 = vmatprep.mubr.f32.mxu0 0.0
        %4588 = vmatmul.mubr.f32.gmra.mrb[0].mxu0 %v4500
        %v4589 = vpop.f32.mrb[0].mxu0
        %v4590 = vadd.f32 0.0, %v4589
        %v4591 = vpop.f32.mrb[0].mxu0
        %4592 = vmatprep.mubr.f32.mxu0 0.0
        %4593 = vmatmul.mubr.f32.gmra.mrb[0].mxu0 %v4503
        %v4594 = vpop.f32.mrb[0].mxu0
        %v4595 = vadd.f32 0.0, %v4594
        %v4596 = vpop.f32.mrb[0].mxu0
        %4597 = vmatprep.mubr.f32.mxu0 0.0
        %4598 = vmatmul.mubr.f32.gmra.mrb[0].mxu0 %v4506
        %v4599 = vpop.f32.mrb[0].mxu0
        %v4600 = vadd.f32 0.0, %v4599
        %v4601 = vpop.f32.mrb[0].mxu0
        %4602 = vmatprep.mubr.f32.mxu0 0.0
        %4603 = vmatmul.mubr.f32.gmra.mrb[0].mxu0 %v4509
        %v4604 = vpop.f32.mrb[0].mxu0
        %v4605 = vadd.f32 0.0, %v4604
        %v4606 = vpop.f32.mrb[0].mxu0
        %4607 = vmatprep.mubr.f32.mxu0 0.0
        %4608 = vmatmul.mubr.f32.gmra.mrb[0].mxu0 %v4512
        %v4609 = vpop.f32.mrb[0].mxu0
        %v4610 = vadd.f32 0.0, %v4609
        %v4611 = vpop.f32.mrb[0].mxu0
        %4612 = vmatprep.mubr.f32.mxu0 0.0
        %4613 = vmatmul.mubr.f32.gmra.mrb[0].mxu0 %v4515
        %v4614 = vpop.f32.mrb[0].mxu0
        %v4615 = vadd.f32 0.0, %v4614
        %v4616 = vpop.f32.mrb[0].mxu0
        %4617 = vmatprep.mubr.f32.mxu0 0.0
        %4618 = vmatmul.mubr.f32.gmra.mrb[0].mxu0 %v4518
        %v4619 = vpop.f32.mrb[0].mxu0
        %v4620 = vadd.f32 0.0, %v4619
        %v4621 = vpop.f32.mrb[0].mxu0
        %4622 = vmatprep.mubr.f32.mxu0 0.0
        %4623 = vmatmul.mubr.f32.gmra.mrb[0].mxu0 %v4521
        %v4624 = vpop.f32.mrb[0].mxu0
        %v4625 = vadd.f32 0.0, %v4624
        %v4626 = vpop.f32.mrb[0].mxu0
        %4627 = vdwg.mxu0
        %v4628 = vmul.f32 %v4590, %v4210
        %v4629 = vmul.f32 %v4595, %v4215
        %v4630 = vmul.f32 %v4600, %v4220
        %v4631 = vmul.f32 %v4605, %v4225
        %v4632 = vmul.f32 %v4610, %v4230
        %v4633 = vmul.f32 %v4615, %v4235
        %v4634 = vmul.f32 %v4620, %v4240
        %v4635 = vmul.f32 %v4625, %v4245
        %v4636 = vadd.f32 %v4628, %v4629
        %v4637 = vadd.f32 %v4636, %v4630
        %v4638 = vadd.f32 %v4637, %v4631
        %v4639 = vadd.f32 %v4638, %v4632
        %v4640 = vadd.f32 %v4639, %v4633
        %v4641 = vadd.f32 %v4640, %v4634
        %v4642 = vadd.f32 %v4641, %v4635
        %v4643 = vrot.slane %v4642, 4
        %v4644 = vadd.f32 %v4642, %v4643
        %v4645 = vrot.slane %v4644, 2
        %v4646 = vadd.f32 %v4644, %v4645
        %v4647 = vrot.slane %v4646, 1
        %v4648 = vadd.f32 %v4646, %v4647
        %4650 = vrot.lane.b32.xlu0 %v4648, 96
        %v4651 = vpop.permute.xlu0 %4650
        %4653 = vrot.lane.b32.xlu0 %v4648, 64
        %v4654 = vpop.permute.xlu0 %4653
        %4656 = vrot.lane.b32.xlu0 %v4648, 32
        %v4657 = vpop.permute.xlu0 %4656
        %v4659 = vsel %vm3150, %v4648, %v4651
        %v4660 = vsel %vm3152, %v4659, %v4654
        %v4661 = vsel %vm3154, %v4660, %v4657
        %4662 = vrot.lane.b32.xlu0 %v4491, 4
        %v4663 = vpop.permute.xlu0 %4662
        %4664 = vrot.lane.b32.xlu0 %v4492, 4
        %v4665 = vpop.permute.xlu0 %4664
        %4666 = vrot.lane.b32.xlu0 %v4493, 4
        %v4667 = vpop.permute.xlu0 %4666
        %4668 = vrot.lane.b32.xlu0 %v4494, 4
        %v4669 = vpop.permute.xlu0 %4668
        %4670 = vrot.lane.b32.xlu0 %v4495, 4
        %v4671 = vpop.permute.xlu0 %4670
        %4672 = vrot.lane.b32.xlu0 %v4496, 4
        %v4673 = vpop.permute.xlu0 %4672
        %4674 = vrot.lane.b32.xlu0 %v4497, 4
        %v4675 = vpop.permute.xlu0 %4674
        %4676 = vrot.lane.b32.xlu0 %v4498, 4
        %v4677 = vpop.permute.xlu0 %4676
        %v4686 = vsel %vm2858, %v4491, %v4663
        %v4687 = vsel %vm2858, %v4492, %v4665
        %v4688 = vsel %vm2858, %v4493, %v4667
        %v4689 = vsel %vm2858, %v4494, %v4669
        %v4690 = vsel %vm2858, %v4495, %v4671
        %v4691 = vsel %vm2858, %v4496, %v4673
        %v4692 = vsel %vm2858, %v4497, %v4675
        %v4693 = vsel %vm2858, %v4498, %v4677
        %v4694 = vmul.f32 %v4686, %v2053
        %v4695 = vmul.f32 %v4687, %v2054
        %v4696 = vmul.f32 %v4688, %v2055
        %v4697 = vmul.f32 %v4689, %v2056
        %v4698 = vmul.f32 %v4690, %v2057
        %v4699 = vmul.f32 %v4691, %v2058
        %v4700 = vmul.f32 %v4692, %v2059
        %v4701 = vmul.f32 %v4693, %v2060
        %v4702 = vsel %vm2221, %v4694, 0.0
        %v4703 = vsel %vm2221, %v4695, 0.0
        %v4704 = vadd.f32 %v4702, %v4703
        %v4705 = vsel %vm2221, %v4696, 0.0
        %v4706 = vadd.f32 %v4704, %v4705
        %v4707 = vsel %vm2221, %v4697, 0.0
        %v4708 = vadd.f32 %v4706, %v4707
        %v4709 = vsel %vm2221, %v4698, 0.0
        %v4710 = vadd.f32 %v4708, %v4709
        %v4711 = vsel %vm2221, %v4699, 0.0
        %v4712 = vadd.f32 %v4710, %v4711
        %v4713 = vsel %vm2221, %v4700, 0.0
        %v4714 = vadd.f32 %v4712, %v4713
        %v4715 = vsel %vm2221, %v4701, 0.0
        %v4716 = vadd.f32 %v4714, %v4715
        %v4717 = vrot.slane %v4716, 4
        %v4718 = vadd.f32 %v4716, %v4717
        %v4719 = vrot.slane %v4718, 2
        %v4720 = vadd.f32 %v4718, %v4719
        %v4721 = vrot.slane %v4720, 1
        %v4722 = vadd.f32 %v4720, %v4721
        %v4723 = vsub.f32 %v2053, %v4722
        %v4724 = vsub.f32 %v2054, %v4722
        %v4725 = vsub.f32 %v2055, %v4722
        %v4726 = vsub.f32 %v2056, %v4722
        %v4727 = vsub.f32 %v2057, %v4722
        %v4728 = vsub.f32 %v2058, %v4722
        %v4729 = vsub.f32 %v2059, %v4722
        %v4730 = vsub.f32 %v2060, %v4722
        %v4731 = vmul.f32 %v4686, %v4723
        %v4732 = vmul.f32 %v4687, %v4724
        %v4733 = vmul.f32 %v4688, %v4725
        %v4734 = vmul.f32 %v4689, %v4726
        %v4735 = vmul.f32 %v4690, %v4727
        %v4736 = vmul.f32 %v4691, %v4728
        %v4737 = vmul.f32 %v4692, %v4729
        %v4738 = vmul.f32 %v4693, %v4730
        %v4739 = vmul.f32 %v4731, %v4723
        %v4740 = vmul.f32 %v4732, %v4724
        %v4741 = vmul.f32 %v4733, %v4725
        %v4742 = vmul.f32 %v4734, %v4726
        %v4743 = vmul.f32 %v4735, %v4727
        %v4744 = vmul.f32 %v4736, %v4728
        %v4745 = vmul.f32 %v4737, %v4729
        %v4746 = vmul.f32 %v4738, %v4730
        %v4747 = vsel %vm2221, %v4739, 0.0
        %v4748 = vsel %vm2221, %v4740, 0.0
        %v4749 = vadd.f32 %v4747, %v4748
        %v4750 = vsel %vm2221, %v4741, 0.0
        %v4751 = vadd.f32 %v4749, %v4750
        %v4752 = vsel %vm2221, %v4742, 0.0
        %v4753 = vadd.f32 %v4751, %v4752
        %v4754 = vsel %vm2221, %v4743, 0.0
        %v4755 = vadd.f32 %v4753, %v4754
        %v4756 = vsel %vm2221, %v4744, 0.0
        %v4757 = vadd.f32 %v4755, %v4756
        %v4758 = vsel %vm2221, %v4745, 0.0
        %v4759 = vadd.f32 %v4757, %v4758
        %v4760 = vsel %vm2221, %v4746, 0.0
        %v4761 = vadd.f32 %v4759, %v4760
        %v4762 = vrot.slane %v4761, 4
        %v4763 = vadd.f32 %v4761, %v4762
        %v4764 = vrot.slane %v4763, 2
        %v4765 = vadd.f32 %v4763, %v4764
        %v4766 = vrot.slane %v4765, 1
        %v4767 = vadd.f32 %v4765, %v4766
        %v4768 = vrsqrt.pop %v4767
        %v4769 = vmul.f32 %v4767, %v4768
        %vm4770 = vcmp.eq.f32.partialorder %v4767, inf
        %v4771 = vsel %vm4770, %v4767, %v4769
        %vm4772 = vcmp.eq.f32.partialorder %v4767, 0.0
        %v4773 = vand.u32 %v4767, 2147483648
        %v4774 = vsel %vm4772, %v4773, %v4771
        %v4775 = vmul.f32 %v4774, 5.0
        %v4776 = vrcp.pop %v4775
        %v4777 = vmul.f32 1.0, %v4776
        %v4779 = vsel %vm1352, %v4661, 0
        %4781 = vmatprep.subr.mxu0 0.0
        %4782 = vmatpush1.msra.mxu0 %v3272
        %4783 = vmatprep.subr.mxu0 0.0
        %4784 = vmatpush1.msra.mxu0 %v3273
        %4785 = vmatprep.subr.mxu0 0.0
        %4786 = vmatpush1.msra.mxu0 %v3274
        %4787 = vmatprep.subr.mxu0 0.0
        %4788 = vmatpush1.msra.mxu0 %v3275
        %4789 = vmatprep.subr.mxu0 0.0
        %4790 = vmatpush1.msra.mxu0 0.0
        %4791 = vmatprep.subr.mxu0 0.0
        %4792 = vmatpush1.msra.mxu0 0.0
        %4793 = vmatprep.subr.mxu0 0.0
        %4794 = vmatpush1.msra.mxu0 0.0
        %4795 = vmatprep.subr.mxu0 0.0
        %4796 = vmatpush1.msra.mxu0 0.0
        %4797 = vmatprep.subr.mxu0 0.0
        %4798 = vmatpush1.msra.mxu0 0.0
        %4799 = vmatprep.subr.mxu0 0.0
        %4800 = vmatpush1.msra.mxu0 0.0
        %4801 = vmatprep.subr.mxu0 0.0
        %4802 = vmatpush1.msra.mxu0 0.0
        %4803 = vmatprep.subr.mxu0 0.0
        %4804 = vmatpush1.msra.mxu0 0.0
        %4805 = vmatprep.subr.mxu0 0.0
        %4806 = vmatpush1.msra.mxu0 0.0
        %4807 = vmatprep.subr.mxu0 0.0
        %4808 = vmatpush1.msra.mxu0 0.0
        %4809 = vmatprep.subr.mxu0 0.0
        %4810 = vmatpush1.msra.mxu0 0.0
        %4811 = vmatprep.subr.mxu0 0.0
        %4812 = vmatpush1.msra.mxu0 0.0
        %4813 = vmatprep.subr.mxu0 0.0
        %4814 = vmatpush1.msra.mxu0 0.0
        %4815 = vmatprep.subr.mxu0 0.0
        %4816 = vmatpush1.msra.mxu0 0.0
        %4817 = vmatprep.subr.mxu0 0.0
        %4818 = vmatpush1.msra.mxu0 0.0
        %4819 = vmatprep.subr.mxu0 0.0
        %4820 = vmatpush1.msra.mxu0 0.0
        %4821 = vmatprep.subr.mxu0 0.0
        %4822 = vmatpush1.msra.mxu0 0.0
        %4823 = vmatprep.subr.mxu0 0.0
        %4824 = vmatpush1.msra.mxu0 0.0
        %4825 = vmatprep.subr.mxu0 0.0
        %4826 = vmatpush1.msra.mxu0 0.0
        %4827 = vmatprep.subr.mxu0 0.0
        %4828 = vmatpush1.msra.mxu0 0.0
        %4829 = vmatprep.subr.mxu0 0.0
        %4830 = vmatpush1.msra.mxu0 0.0
        %4831 = vmatprep.subr.mxu0 0.0
        %4832 = vmatpush1.msra.mxu0 0.0
        %4833 = vmatprep.subr.mxu0 0.0
        %4834 = vmatpush1.msra.mxu0 0.0
        %4835 = vmatprep.subr.mxu0 0.0
        %4836 = vmatpush1.msra.mxu0 0.0
        %4837 = vmatprep.subr.mxu0 0.0
        %4838 = vmatpush1.msra.mxu0 0.0
        %4839 = vmatprep.subr.mxu0 0.0
        %4840 = vmatpush1.msra.mxu0 0.0
        %4841 = vmatprep.subr.mxu0 0.0
        %4842 = vmatpush1.msra.mxu0 0.0
        %4843 = vmatprep.subr.mxu0 0.0
        %4844 = vmatpush1.msra.mxu0 0.0
        %4845 = vmatprep.mubr.f32.mxu0 0.0
        %4846 = vmatmul.mubr.f32.gmra.mrb[0].mxu0 %v4779
        %v4847 = vpop.f32.mrb[0].mxu0
        %v4848 = vadd.f32 %v3280, %v4847
        %v4849 = vpop.f32.mrb[0].mxu0
        %4850 = vdwg.mxu0
        %v4852 = vsel %vm1352, %v3684, 0
        %4854 = vmatprep.subr.mxu0 0.0
        %4855 = vmatpush1.msra.mxu0 %v3355
        %4856 = vmatprep.subr.mxu0 0.0
        %4857 = vmatpush1.msra.mxu0 %v3356
        %4858 = vmatprep.subr.mxu0 0.0
        %4859 = vmatpush1.msra.mxu0 %v3357
        %4860 = vmatprep.subr.mxu0 0.0
        %4861 = vmatpush1.msra.mxu0 %v3358
        %4862 = vmatprep.subr.mxu0 0.0
        %4863 = vmatpush1.msra.mxu0 0.0
        %4864 = vmatprep.subr.mxu0 0.0
        %4865 = vmatpush1.msra.mxu0 0.0
        %4866 = vmatprep.subr.mxu0 0.0
        %4867 = vmatpush1.msra.mxu0 0.0
        %4868 = vmatprep.subr.mxu0 0.0
        %4869 = vmatpush1.msra.mxu0 0.0
        %4870 = vmatprep.subr.mxu0 0.0
        %4871 = vmatpush1.msra.mxu0 0.0
        %4872 = vmatprep.subr.mxu0 0.0
        %4873 = vmatpush1.msra.mxu0 0.0
        %4874 = vmatprep.subr.mxu0 0.0
        %4875 = vmatpush1.msra.mxu0 0.0
        %4876 = vmatprep.subr.mxu0 0.0
        %4877 = vmatpush1.msra.mxu0 0.0
        %4878 = vmatprep.subr.mxu0 0.0
        %4879 = vmatpush1.msra.mxu0 0.0
        %4880 = vmatprep.subr.mxu0 0.0
        %4881 = vmatpush1.msra.mxu0 0.0
        %4882 = vmatprep.subr.mxu0 0.0
        %4883 = vmatpush1.msra.mxu0 0.0
        %4884 = vmatprep.subr.mxu0 0.0
        %4885 = vmatpush1.msra.mxu0 0.0
        %4886 = vmatprep.subr.mxu0 0.0
        %4887 = vmatpush1.msra.mxu0 0.0
        %4888 = vmatprep.subr.mxu0 0.0
        %4889 = vmatpush1.msra.mxu0 0.0
        %4890 = vmatprep.subr.mxu0 0.0
        %4891 = vmatpush1.msra.mxu0 0.0
        %4892 = vmatprep.subr.mxu0 0.0
        %4893 = vmatpush1.msra.mxu0 0.0
        %4894 = vmatprep.subr.mxu0 0.0
        %4895 = vmatpush1.msra.mxu0 0.0
        %4896 = vmatprep.subr.mxu0 0.0
        %4897 = vmatpush1.msra.mxu0 0.0
        %4898 = vmatprep.subr.mxu0 0.0
        %4899 = vmatpush1.msra.mxu0 0.0
        %4900 = vmatprep.subr.mxu0 0.0
        %4901 = vmatpush1.msra.mxu0 0.0
        %4902 = vmatprep.subr.mxu0 0.0
        %4903 = vmatpush1.msra.mxu0 0.0
        %4904 = vmatprep.subr.mxu0 0.0
        %4905 = vmatpush1.msra.mxu0 0.0
        %4906 = vmatprep.subr.mxu0 0.0
        %4907 = vmatpush1.msra.mxu0 0.0
        %4908 = vmatprep.subr.mxu0 0.0
        %4909 = vmatpush1.msra.mxu0 0.0
        %4910 = vmatprep.subr.mxu0 0.0
        %4911 = vmatpush1.msra.mxu0 0.0
        %4912 = vmatprep.subr.mxu0 0.0
        %4913 = vmatpush1.msra.mxu0 0.0
        %4914 = vmatprep.subr.mxu0 0.0
        %4915 = vmatpush1.msra.mxu0 0.0
        %4916 = vmatprep.subr.mxu0 0.0
        %4917 = vmatpush1.msra.mxu0 0.0
        %4918 = vmatprep.mubr.f32.mxu0 0.0
        %4919 = vmatmul.mubr.f32.gmra.mrb[0].mxu0 %v4852
        %v4920 = vpop.f32.mrb[0].mxu0
        %v4921 = vadd.f32 %v3363, %v4920
        %v4922 = vpop.f32.mrb[0].mxu0
        %4923 = vdwg.mxu0
        %v4924 = vadd.f32 %v4848, %v4921
        %v4925 = vxor.u32 %v4924, 2147483648
        %v4926 = vmul.f32 %v4925, 1.442695
        %v4927 = vpow.pop %v4926
        %v4928 = vadd.f32 %v4927, 1.0
        %v4929 = vrcp.pop %v4928
        %v4930 = vmul.f32 1.0, %v4929
        %4932 = vrot.lane.b32.xlu0 %v4921, 64
        %v4933 = vpop.permute.xlu0 %4932
        %v4935 = vmul.f32 %v4930, %v4933
        %4937 = vrot.lane.b32.xlu0 %v4935, 64
        %v4938 = vpop.permute.xlu0 %4937
        %v4940 = vadd.f32 %v4848, %v4938
        %v4941 = vtanh.pop %v4940
        %v4942 = vsub.f32 1.0, %v4930
        %4944 = vrot.lane.b32.xlu0 %v4941, 96
        %v4945 = vpop.permute.xlu0 %4944
        %v4947 = vmul.f32 %v4942, %v4945
        %4948 = vrot.lane.b32.xlu0 %v3684, 32
        %v4949 = vpop.permute.xlu0 %4948
        %v4951 = vmul.f32 %v4930, %v4949
        %v4952 = vadd.f32 %v4947, %v4951
        %4954 = vrot.lane.b32.xlu0 %v4952, 96
        %v4955 = vpop.permute.xlu0 %4954
        %v4957 = vsel %vm2067, %v4955, 0.0
        %4958 = vadd.xlane.f32.xlu0 %v4957
        %v4959 = vpop.xlane.xlu0 %4958
        %v4960 = vmul.f32 %v4959, %v1377
        %v4961 = vsub.f32 %v4952, %v4960
        %v4962 = vmul.f32 %v4961, %v4961
        %4964 = vrot.lane.b32.xlu0 %v4962, 96
        %v4965 = vpop.permute.xlu0 %4964
        %v4967 = vsel %vm2067, %v4965, 0.0
        %4968 = vadd.xlane.f32.xlu0 %v4967
        %v4969 = vpop.xlane.xlu0 %4968
        %v4970 = vmul.f32 %v4969, %v1377
        %v4971 = vadd.f32 %v4970, 1e-05
        %v4972 = vrsqrt.pop %v4971
        %v4973 = vmul.f32 %v4961, %v4972
        %v4974 = vmul.f32 %v4973, %v3494
        %v4975 = vadd.f32 %v4974, %v3503
        %4977 = vrot.lane.b32.xlu0 %v4975, 96
        %v4978 = vpop.permute.xlu0 %4977
        %v4979 = vsel %vm1352, %v4978, 0
        %4981 = vmatprep.subr.mxu0 0.0
        %4982 = vmatpush1.msra.mxu0 %v3506
        %4983 = vmatprep.subr.mxu0 0.0
        %4984 = vmatpush1.msra.mxu0 %v3507
        %4985 = vmatprep.subr.mxu0 0.0
        %4986 = vmatpush1.msra.mxu0 %v3508
        %4987 = vmatprep.subr.mxu0 0.0
        %4988 = vmatpush1.msra.mxu0 %v3509
        %4989 = vmatprep.subr.mxu0 0.0
        %4990 = vmatpush1.msra.mxu0 0.0
        %4991 = vmatprep.subr.mxu0 0.0
        %4992 = vmatpush1.msra.mxu0 0.0
        %4993 = vmatprep.subr.mxu0 0.0
        %4994 = vmatpush1.msra.mxu0 0.0
        %4995 = vmatprep.subr.mxu0 0.0
        %4996 = vmatpush1.msra.mxu0 0.0
        %4997 = vmatprep.subr.mxu0 0.0
        %4998 = vmatpush1.msra.mxu0 0.0
        %4999 = vmatprep.subr.mxu0 0.0
        %5000 = vmatpush1.msra.mxu0 0.0
        %5001 = vmatprep.subr.mxu0 0.0
        %5002 = vmatpush1.msra.mxu0 0.0
        %5003 = vmatprep.subr.mxu0 0.0
        %5004 = vmatpush1.msra.mxu0 0.0
        %5005 = vmatprep.subr.mxu0 0.0
        %5006 = vmatpush1.msra.mxu0 0.0
        %5007 = vmatprep.subr.mxu0 0.0
        %5008 = vmatpush1.msra.mxu0 0.0
        %5009 = vmatprep.subr.mxu0 0.0
        %5010 = vmatpush1.msra.mxu0 0.0
        %5011 = vmatprep.subr.mxu0 0.0
        %5012 = vmatpush1.msra.mxu0 0.0
        %5013 = vmatprep.subr.mxu0 0.0
        %5014 = vmatpush1.msra.mxu0 0.0
        %5015 = vmatprep.subr.mxu0 0.0
        %5016 = vmatpush1.msra.mxu0 0.0
        %5017 = vmatprep.subr.mxu0 0.0
        %5018 = vmatpush1.msra.mxu0 0.0
        %5019 = vmatprep.subr.mxu0 0.0
        %5020 = vmatpush1.msra.mxu0 0.0
        %5021 = vmatprep.subr.mxu0 0.0
        %5022 = vmatpush1.msra.mxu0 0.0
        %5023 = vmatprep.subr.mxu0 0.0
        %5024 = vmatpush1.msra.mxu0 0.0
        %5025 = vmatprep.subr.mxu0 0.0
        %5026 = vmatpush1.msra.mxu0 0.0
        %5027 = vmatprep.subr.mxu0 0.0
        %5028 = vmatpush1.msra.mxu0 0.0
        %5029 = vmatprep.subr.mxu0 0.0
        %5030 = vmatpush1.msra.mxu0 0.0
        %5031 = vmatprep.subr.mxu0 0.0
        %5032 = vmatpush1.msra.mxu0 0.0
        %5033 = vmatprep.subr.mxu0 0.0
        %5034 = vmatpush1.msra.mxu0 0.0
        %5035 = vmatprep.subr.mxu0 0.0
        %5036 = vmatpush1.msra.mxu0 0.0
        %5037 = vmatprep.subr.mxu0 0.0
        %5038 = vmatpush1.msra.mxu0 0.0
        %5039 = vmatprep.subr.mxu0 0.0
        %5040 = vmatpush1.msra.mxu0 0.0
        %5041 = vmatprep.subr.mxu0 0.0
        %5042 = vmatpush1.msra.mxu0 0.0
        %5043 = vmatprep.subr.mxu0 0.0
        %5044 = vmatpush1.msra.mxu0 0.0
        %5045 = vmatprep.mubr.f32.mxu0 0.0
        %5046 = vmatmul.mubr.f32.gmra.mrb[0].mxu0 %v4979
        %v5047 = vpop.f32.mrb[0].mxu0
        %v5048 = vadd.f32 %v3514, %v5047
        %v5049 = vpop.f32.mrb[0].mxu0
        %5050 = vdwg.mxu0
        %v5051 = vmax.f32 %v5048, 0.0
        %5052 = vmatprep.subr.mxu0 0.0
        %5053 = vmatpush1.msra.mxu0 %v3592
        %5054 = vmatprep.subr.mxu0 0.0
        %5055 = vmatpush1.msra.mxu0 %v3593
        %5056 = vmatprep.subr.mxu0 0.0
        %5057 = vmatpush1.msra.mxu0 %v3594
        %5058 = vmatprep.subr.mxu0 0.0
        %5059 = vmatpush1.msra.mxu0 %v3595
        %5060 = vmatprep.subr.mxu0 0.0
        %5061 = vmatpush1.msra.mxu0 %v3596
        %5062 = vmatprep.subr.mxu0 0.0
        %5063 = vmatpush1.msra.mxu0 %v3597
        %5064 = vmatprep.subr.mxu0 0.0
        %5065 = vmatpush1.msra.mxu0 %v3598
        %5066 = vmatprep.subr.mxu0 0.0
        %5067 = vmatpush1.msra.mxu0 %v3599
        %5068 = vmatprep.subr.mxu0 0.0
        %5069 = vmatpush1.msra.mxu0 %v3600
        %5070 = vmatprep.subr.mxu0 0.0
        %5071 = vmatpush1.msra.mxu0 %v3601
        %5072 = vmatprep.subr.mxu0 0.0
        %5073 = vmatpush1.msra.mxu0 %v3602
        %5074 = vmatprep.subr.mxu0 0.0
        %5075 = vmatpush1.msra.mxu0 %v3603
        %5076 = vmatprep.subr.mxu0 0.0
        %5077 = vmatpush1.msra.mxu0 %v3604
        %5078 = vmatprep.subr.mxu0 0.0
        %5079 = vmatpush1.msra.mxu0 %v3605
        %5080 = vmatprep.subr.mxu0 0.0
        %5081 = vmatpush1.msra.mxu0 %v3606
        %5082 = vmatprep.subr.mxu0 0.0
        %5083 = vmatpush1.msra.mxu0 %v3607
        %5084 = vmatprep.subr.mxu0 0.0
        %5085 = vmatpush1.msra.mxu0 0.0
        %5086 = vmatprep.subr.mxu0 0.0
        %5087 = vmatpush1.msra.mxu0 0.0
        %5088 = vmatprep.subr.mxu0 0.0
        %5089 = vmatpush1.msra.mxu0 0.0
        %5090 = vmatprep.subr.mxu0 0.0
        %5091 = vmatpush1.msra.mxu0 0.0
        %5092 = vmatprep.subr.mxu0 0.0
        %5093 = vmatpush1.msra.mxu0 0.0
        %5094 = vmatprep.subr.mxu0 0.0
        %5095 = vmatpush1.msra.mxu0 0.0
        %5096 = vmatprep.subr.mxu0 0.0
        %5097 = vmatpush1.msra.mxu0 0.0
        %5098 = vmatprep.subr.mxu0 0.0
        %5099 = vmatpush1.msra.mxu0 0.0
        %5100 = vmatprep.subr.mxu0 0.0
        %5101 = vmatpush1.msra.mxu0 0.0
        %5102 = vmatprep.subr.mxu0 0.0
        %5103 = vmatpush1.msra.mxu0 0.0
        %5104 = vmatprep.subr.mxu0 0.0
        %5105 = vmatpush1.msra.mxu0 0.0
        %5106 = vmatprep.subr.mxu0 0.0
        %5107 = vmatpush1.msra.mxu0 0.0
        %5108 = vmatprep.subr.mxu0 0.0
        %5109 = vmatpush1.msra.mxu0 0.0
        %5110 = vmatprep.subr.mxu0 0.0
        %5111 = vmatpush1.msra.mxu0 0.0
        %5112 = vmatprep.subr.mxu0 0.0
        %5113 = vmatpush1.msra.mxu0 0.0
        %5114 = vmatprep.subr.mxu0 0.0
        %5115 = vmatpush1.msra.mxu0 0.0
        %5116 = vmatprep.mubr.f32.mxu0 0.0
        %5117 = vmatmul.mubr.f32.gmra.mrb[0].mxu0 %v5051
        %v5118 = vpop.f32.mrb[0].mxu0
        %v5119 = vadd.f32 %v3612, %v5118
        %v5120 = vpop.f32.mrb[0].mxu0
        %5121 = vdwg.mxu0
        %v5122 = vadd.f32 %v5119, %v4955
        %v5123 = vsel %vm2067, %v5122, 0.0
        %5124 = vadd.xlane.f32.xlu0 %v5123
        %v5125 = vpop.xlane.xlu0 %5124
        %v5126 = vmul.f32 %v5125, %v1377
        %v5127 = vsub.f32 %v5122, %v5126
        %v5128 = vmul.f32 %v5127, %v5127
        %v5129 = vsel %vm2067, %v5128, 0.0
        %5130 = vadd.xlane.f32.xlu0 %v5129
        %v5131 = vpop.xlane.xlu0 %5130
        %v5132 = vmul.f32 %v5131, %v1377
        %v5133 = vadd.f32 %v5132, 1e-05
        %v5134 = vrsqrt.pop %v5133
        %v5135 = vmul.f32 %v5127, %v5134
        %v5136 = vmul.f32 %v5135, %v2085
        %v5137 = vadd.f32 %v5136, %v2092
        %v5139 = vsel %vm1352, %v5137, 0
        %5141 = vmatprep.subr.mxu0 0.0
        %5142 = vmatpush1.msra.mxu0 %v1327
        %5143 = vmatprep.subr.mxu0 0.0
        %5144 = vmatpush1.msra.mxu0 %v1328
        %5145 = vmatprep.subr.mxu0 0.0
        %5146 = vmatpush1.msra.mxu0 %v1329
        %5147 = vmatprep.subr.mxu0 0.0
        %5148 = vmatpush1.msra.mxu0 %v1330
        %5149 = vmatprep.subr.mxu0 0.0
        %5150 = vmatpush1.msra.mxu0 0.0
        %5151 = vmatprep.subr.mxu0 0.0
        %5152 = vmatpush1.msra.mxu0 0.0
        %5153 = vmatprep.subr.mxu0 0.0
        %5154 = vmatpush1.msra.mxu0 0.0
        %5155 = vmatprep.subr.mxu0 0.0
        %5156 = vmatpush1.msra.mxu0 0.0
        %5157 = vmatprep.subr.mxu0 0.0
        %5158 = vmatpush1.msra.mxu0 0.0
        %5159 = vmatprep.subr.mxu0 0.0
        %5160 = vmatpush1.msra.mxu0 0.0
        %5161 = vmatprep.subr.mxu0 0.0
        %5162 = vmatpush1.msra.mxu0 0.0
        %5163 = vmatprep.subr.mxu0 0.0
        %5164 = vmatpush1.msra.mxu0 0.0
        %5165 = vmatprep.subr.mxu0 0.0
        %5166 = vmatpush1.msra.mxu0 0.0
        %5167 = vmatprep.subr.mxu0 0.0
        %5168 = vmatpush1.msra.mxu0 0.0
        %5169 = vmatprep.subr.mxu0 0.0
        %5170 = vmatpush1.msra.mxu0 0.0
        %5171 = vmatprep.subr.mxu0 0.0
        %5172 = vmatpush1.msra.mxu0 0.0
        %5173 = vmatprep.subr.mxu0 0.0
        %5174 = vmatpush1.msra.mxu0 0.0
        %5175 = vmatprep.subr.mxu0 0.0
        %5176 = vmatpush1.msra.mxu0 0.0
        %5177 = vmatprep.subr.mxu0 0.0
        %5178 = vmatpush1.msra.mxu0 0.0
        %5179 = vmatprep.subr.mxu0 0.0
        %5180 = vmatpush1.msra.mxu0 0.0
        %5181 = vmatprep.subr.mxu0 0.0
        %5182 = vmatpush1.msra.mxu0 0.0
        %5183 = vmatprep.subr.mxu0 0.0
        %5184 = vmatpush1.msra.mxu0 0.0
        %5185 = vmatprep.subr.mxu0 0.0
        %5186 = vmatpush1.msra.mxu0 0.0
        %5187 = vmatprep.subr.mxu0 0.0
        %5188 = vmatpush1.msra.mxu0 0.0
        %5189 = vmatprep.subr.mxu0 0.0
        %5190 = vmatpush1.msra.mxu0 0.0
        %5191 = vmatprep.subr.mxu0 0.0
        %5192 = vmatpush1.msra.mxu0 0.0
        %5193 = vmatprep.subr.mxu0 0.0
        %5194 = vmatpush1.msra.mxu0 0.0
        %5195 = vmatprep.subr.mxu0 0.0
        %5196 = vmatpush1.msra.mxu0 0.0
        %5197 = vmatprep.subr.mxu0 0.0
        %5198 = vmatpush1.msra.mxu0 0.0
        %5199 = vmatprep.subr.mxu0 0.0
        %5200 = vmatpush1.msra.mxu0 0.0
        %5201 = vmatprep.subr.mxu0 0.0
        %5202 = vmatpush1.msra.mxu0 0.0
        %5203 = vmatprep.subr.mxu0 0.0
        %5204 = vmatpush1.msra.mxu0 0.0
        %5205 = vmatprep.mubr.f32.mxu0 0.0
        %5206 = vmatmul.mubr.f32.gmra.mrb[0].mxu0 %v5139
        %v5207 = vpop.f32.mrb[0].mxu0
        %v5208 = vadd.f32 0.0, %v5207
        %v5209 = vpop.f32.mrb[0].mxu0
        %5210 = vdwg.mxu0
        %v5212 = vrot.slane %v5208, 1
        %5213 = vrot.lane.b32.xlu0 %v5212, 32
        %v5214 = vpop.permute.xlu0 %5213
        %v5216 = vrot.slane %v5208, 2
        %5217 = vrot.lane.b32.xlu0 %v5216, 64
        %v5218 = vpop.permute.xlu0 %5217
        %v5220 = vrot.slane %v5208, 3
        %5221 = vrot.lane.b32.xlu0 %v5220, 96
        %v5222 = vpop.permute.xlu0 %5221
        %v5224 = vsel %vm1352, %v5208, %v5214
        %v5225 = vsel %vm2182, %v5224, %v5218
        %v5226 = vsel %vm2184, %v5225, %v5222
        %v5227 = vmul.f32 %v4723, %v4777
        %v5228 = vmul.f32 %v4724, %v4777
        %v5229 = vmul.f32 %v4725, %v4777
        %v5230 = vmul.f32 %v4726, %v4777
        %v5231 = vmul.f32 %v4727, %v4777
        %v5232 = vmul.f32 %v4728, %v4777
        %v5233 = vmul.f32 %v4729, %v4777
        %v5234 = vmul.f32 %v4730, %v4777
        %v5236 = vsel %vm2221, %v5227, 0
        %v5239 = vsel %vm2221, %v5228, 0
        %v5242 = vsel %vm2221, %v5229, 0
        %v5245 = vsel %vm2221, %v5230, 0
        %v5248 = vsel %vm2221, %v5231, 0
        %v5251 = vsel %vm2221, %v5232, 0
        %v5254 = vsel %vm2221, %v5233, 0
        %v5257 = vsel %vm2221, %v5234, 0
        %5259 = vmatprep.subr.mxu0 0.0
        %5260 = vmatpush1.msra.mxu0 %v2214
        %5261 = vmatprep.subr.mxu0 0.0
        %5262 = vmatpush1.msra.mxu0 0.0
        %5263 = vmatprep.subr.mxu0 0.0
        %5264 = vmatpush1.msra.mxu0 0.0
        %5265 = vmatprep.subr.mxu0 0.0
        %5266 = vmatpush1.msra.mxu0 0.0
        %5267 = vmatprep.subr.mxu0 0.0
        %5268 = vmatpush1.msra.mxu0 0.0
        %5269 = vmatprep.subr.mxu0 0.0
        %5270 = vmatpush1.msra.mxu0 0.0
        %5271 = vmatprep.subr.mxu0 0.0
        %5272 = vmatpush1.msra.mxu0 0.0
        %5273 = vmatprep.subr.mxu0 0.0
        %5274 = vmatpush1.msra.mxu0 0.0
        %5275 = vmatprep.subr.mxu0 0.0
        %5276 = vmatpush1.msra.mxu0 0.0
        %5277 = vmatprep.subr.mxu0 0.0
        %5278 = vmatpush1.msra.mxu0 0.0
        %5279 = vmatprep.subr.mxu0 0.0
        %5280 = vmatpush1.msra.mxu0 0.0
        %5281 = vmatprep.subr.mxu0 0.0
        %5282 = vmatpush1.msra.mxu0 0.0
        %5283 = vmatprep.subr.mxu0 0.0
        %5284 = vmatpush1.msra.mxu0 0.0
        %5285 = vmatprep.subr.mxu0 0.0
        %5286 = vmatpush1.msra.mxu0 0.0
        %5287 = vmatprep.subr.mxu0 0.0
        %5288 = vmatpush1.msra.mxu0 0.0
        %5289 = vmatprep.subr.mxu0 0.0
        %5290 = vmatpush1.msra.mxu0 0.0
        %5291 = vmatprep.subr.mxu0 0.0
        %5292 = vmatpush1.msra.mxu0 0.0
        %5293 = vmatprep.subr.mxu0 0.0
        %5294 = vmatpush1.msra.mxu0 0.0
        %5295 = vmatprep.subr.mxu0 0.0
        %5296 = vmatpush1.msra.mxu0 0.0
        %5297 = vmatprep.subr.mxu0 0.0
        %5298 = vmatpush1.msra.mxu0 0.0
        %5299 = vmatprep.subr.mxu0 0.0
        %5300 = vmatpush1.msra.mxu0 0.0
        %5301 = vmatprep.subr.mxu0 0.0
        %5302 = vmatpush1.msra.mxu0 0.0
        %5303 = vmatprep.subr.mxu0 0.0
        %5304 = vmatpush1.msra.mxu0 0.0
        %5305 = vmatprep.subr.mxu0 0.0
        %5306 = vmatpush1.msra.mxu0 0.0
        %5307 = vmatprep.subr.mxu0 0.0
        %5308 = vmatpush1.msra.mxu0 0.0
        %5309 = vmatprep.subr.mxu0 0.0
        %5310 = vmatpush1.msra.mxu0 0.0
        %5311 = vmatprep.subr.mxu0 0.0
        %5312 = vmatpush1.msra.mxu0 0.0
        %5313 = vmatprep.subr.mxu0 0.0
        %5314 = vmatpush1.msra.mxu0 0.0
        %5315 = vmatprep.subr.mxu0 0.0
        %5316 = vmatpush1.msra.mxu0 0.0
        %5317 = vmatprep.subr.mxu0 0.0
        %5318 = vmatpush1.msra.mxu0 0.0
        %5319 = vmatprep.subr.mxu0 0.0
        %5320 = vmatpush1.msra.mxu0 0.0
        %5321 = vmatprep.subr.mxu0 0.0
        %5322 = vmatpush1.msra.mxu0 0.0
        %5323 = vmatprep.mubr.f32.mxu0 0.0
        %5324 = vmatmul.mubr.f32.gmra.mrb[0].mxu0 %v5236
        %v5325 = vpop.f32.mrb[0].mxu0
        %v5326 = vadd.f32 %v2219, %v5325
        %v5327 = vpop.f32.mrb[0].mxu0
        %5328 = vmatprep.mubr.f32.mxu0 0.0
        %5329 = vmatmul.mubr.f32.gmra.mrb[0].mxu0 %v5239
        %v5330 = vpop.f32.mrb[0].mxu0
        %v5331 = vadd.f32 %v2219, %v5330
        %v5332 = vpop.f32.mrb[0].mxu0
        %5333 = vmatprep.mubr.f32.mxu0 0.0
        %5334 = vmatmul.mubr.f32.gmra.mrb[0].mxu0 %v5242
        %v5335 = vpop.f32.mrb[0].mxu0
        %v5336 = vadd.f32 %v2219, %v5335
        %v5337 = vpop.f32.mrb[0].mxu0
        %5338 = vmatprep.mubr.f32.mxu0 0.0
        %5339 = vmatmul.mubr.f32.gmra.mrb[0].mxu0 %v5245
        %v5340 = vpop.f32.mrb[0].mxu0
        %v5341 = vadd.f32 %v2219, %v5340
        %v5342 = vpop.f32.mrb[0].mxu0
        %5343 = vmatprep.mubr.f32.mxu0 0.0
        %5344 = vmatmul.mubr.f32.gmra.mrb[0].mxu0 %v5248
        %v5345 = vpop.f32.mrb[0].mxu0
        %v5346 = vadd.f32 %v2219, %v5345
        %v5347 = vpop.f32.mrb[0].mxu0
        %5348 = vmatprep.mubr.f32.mxu0 0.0
        %5349 = vmatmul.mubr.f32.gmra.mrb[0].mxu0 %v5251
        %v5350 = vpop.f32.mrb[0].mxu0
        %v5351 = vadd.f32 %v2219, %v5350
        %v5352 = vpop.f32.mrb[0].mxu0
        %5353 = vmatprep.mubr.f32.mxu0 0.0
        %5354 = vmatmul.mubr.f32.gmra.mrb[0].mxu0 %v5254
        %v5355 = vpop.f32.mrb[0].mxu0
        %v5356 = vadd.f32 %v2219, %v5355
        %v5357 = vpop.f32.mrb[0].mxu0
        %5358 = vmatprep.mubr.f32.mxu0 0.0
        %5359 = vmatmul.mubr.f32.gmra.mrb[0].mxu0 %v5257
        %v5360 = vpop.f32.mrb[0].mxu0
        %v5361 = vadd.f32 %v2219, %v5360
        %v5362 = vpop.f32.mrb[0].mxu0
        %5363 = vdwg.mxu0
        %v5364 = vadd.f32 %v2007, %v5326
        %v5365 = vadd.f32 %v2013, %v5331
        %v5366 = vadd.f32 %v2019, %v5336
        %v5367 = vadd.f32 %v2025, %v5341
        %v5368 = vadd.f32 %v2031, %v5346
        %v5369 = vadd.f32 %v2037, %v5351
        %v5370 = vadd.f32 %v2043, %v5356
        %v5371 = vadd.f32 %v2049, %v5361
        %v5372 = vadd.f32 %v2009, %v5326
        %v5373 = vadd.f32 %v2015, %v5331
        %v5374 = vadd.f32 %v2021, %v5336
        %v5375 = vadd.f32 %v2027, %v5341
        %v5376 = vadd.f32 %v2033, %v5346
        %v5377 = vadd.f32 %v2039, %v5351
        %v5378 = vadd.f32 %v2045, %v5356
        %v5379 = vadd.f32 %v2051, %v5361
        %5380 = vmatprep.subr.mxu0 0.0
        %5381 = vmatpush1.msra.mxu0 %v2367
        %5382 = vmatprep.subr.mxu0 0.0
        %5383 = vmatpush1.msra.mxu0 %v2368
        %5384 = vmatprep.subr.mxu0 0.0
        %5385 = vmatpush1.msra.mxu0 %v2369
        %5386 = vmatprep.subr.mxu0 0.0
        %5387 = vmatpush1.msra.mxu0 %v2370
        %5388 = vmatprep.subr.mxu0 0.0
        %5389 = vmatpush1.msra.mxu0 %v2371
        %5390 = vmatprep.subr.mxu0 0.0
        %5391 = vmatpush1.msra.mxu0 %v2372
        %5392 = vmatprep.subr.mxu0 0.0
        %5393 = vmatpush1.msra.mxu0 %v2373
        %5394 = vmatprep.subr.mxu0 0.0
        %5395 = vmatpush1.msra.mxu0 %v2374
        %5396 = vmatprep.subr.mxu0 0.0
        %5397 = vmatpush1.msra.mxu0 %v2375
        %5398 = vmatprep.subr.mxu0 0.0
        %5399 = vmatpush1.msra.mxu0 %v2376
        %5400 = vmatprep.subr.mxu0 0.0
        %5401 = vmatpush1.msra.mxu0 %v2377
        %5402 = vmatprep.subr.mxu0 0.0
        %5403 = vmatpush1.msra.mxu0 %v2378
        %5404 = vmatprep.subr.mxu0 0.0
        %5405 = vmatpush1.msra.mxu0 %v2379
        %5406 = vmatprep.subr.mxu0 0.0
        %5407 = vmatpush1.msra.mxu0 %v2380
        %5408 = vmatprep.subr.mxu0 0.0
        %5409 = vmatpush1.msra.mxu0 %v2381
        %5410 = vmatprep.subr.mxu0 0.0
        %5411 = vmatpush1.msra.mxu0 %v2382
        %5412 = vmatprep.subr.mxu0 0.0
        %5413 = vmatpush1.msra.mxu0 0.0
        %5414 = vmatprep.subr.mxu0 0.0
        %5415 = vmatpush1.msra.mxu0 0.0
        %5416 = vmatprep.subr.mxu0 0.0
        %5417 = vmatpush1.msra.mxu0 0.0
        %5418 = vmatprep.subr.mxu0 0.0
        %5419 = vmatpush1.msra.mxu0 0.0
        %5420 = vmatprep.subr.mxu0 0.0
        %5421 = vmatpush1.msra.mxu0 0.0
        %5422 = vmatprep.subr.mxu0 0.0
        %5423 = vmatpush1.msra.mxu0 0.0
        %5424 = vmatprep.subr.mxu0 0.0
        %5425 = vmatpush1.msra.mxu0 0.0
        %5426 = vmatprep.subr.mxu0 0.0
        %5427 = vmatpush1.msra.mxu0 0.0
        %5428 = vmatprep.subr.mxu0 0.0
        %5429 = vmatpush1.msra.mxu0 0.0
        %5430 = vmatprep.subr.mxu0 0.0
        %5431 = vmatpush1.msra.mxu0 0.0
        %5432 = vmatprep.subr.mxu0 0.0
        %5433 = vmatpush1.msra.mxu0 0.0
        %5434 = vmatprep.subr.mxu0 0.0
        %5435 = vmatpush1.msra.mxu0 0.0
        %5436 = vmatprep.subr.mxu0 0.0
        %5437 = vmatpush1.msra.mxu0 0.0
        %5438 = vmatprep.subr.mxu0 0.0
        %5439 = vmatpush1.msra.mxu0 0.0
        %5440 = vmatprep.subr.mxu0 0.0
        %5441 = vmatpush1.msra.mxu0 0.0
        %5442 = vmatprep.subr.mxu0 0.0
        %5443 = vmatpush1.msra.mxu0 0.0
        %5444 = vmatprep.mubr.f32.mxu0 0.0
        %5445 = vmatmul.mubr.f32.gmra.mrb[0].mxu0 %v5364
        %v5446 = vpop.f32.mrb[0].mxu0
        %v5447 = vadd.f32 %v2387, %v5446
        %v5448 = vpop.f32.mrb[0].mxu0
        %5449 = vmatprep.mubr.f32.mxu0 0.0
        %5450 = vmatmul.mubr.f32.gmra.mrb[0].mxu0 %v5365
        %v5451 = vpop.f32.mrb[0].mxu0
        %v5452 = vadd.f32 %v2387, %v5451
        %v5453 = vpop.f32.mrb[0].mxu0
        %5454 = vmatprep.mubr.f32.mxu0 0.0
        %5455 = vmatmul.mubr.f32.gmra.mrb[0].mxu0 %v5366
        %v5456 = vpop.f32.mrb[0].mxu0
        %v5457 = vadd.f32 %v2387, %v5456
        %v5458 = vpop.f32.mrb[0].mxu0
        %5459 = vmatprep.mubr.f32.mxu0 0.0
        %5460 = vmatmul.mubr.f32.gmra.mrb[0].mxu0 %v5367
        %v5461 = vpop.f32.mrb[0].mxu0
        %v5462 = vadd.f32 %v2387, %v5461
        %v5463 = vpop.f32.mrb[0].mxu0
        %5464 = vmatprep.mubr.f32.mxu0 0.0
        %5465 = vmatmul.mubr.f32.gmra.mrb[0].mxu0 %v5368
        %v5466 = vpop.f32.mrb[0].mxu0
        %v5467 = vadd.f32 %v2387, %v5466
        %v5468 = vpop.f32.mrb[0].mxu0
        %5469 = vmatprep.mubr.f32.mxu0 0.0
        %5470 = vmatmul.mubr.f32.gmra.mrb[0].mxu0 %v5369
        %v5471 = vpop.f32.mrb[0].mxu0
        %v5472 = vadd.f32 %v2387, %v5471
        %v5473 = vpop.f32.mrb[0].mxu0
        %5474 = vmatprep.mubr.f32.mxu0 0.0
        %5475 = vmatmul.mubr.f32.gmra.mrb[0].mxu0 %v5370
        %v5476 = vpop.f32.mrb[0].mxu0
        %v5477 = vadd.f32 %v2387, %v5476
        %v5478 = vpop.f32.mrb[0].mxu0
        %5479 = vmatprep.mubr.f32.mxu0 0.0
        %5480 = vmatmul.mubr.f32.gmra.mrb[0].mxu0 %v5371
        %v5481 = vpop.f32.mrb[0].mxu0
        %v5482 = vadd.f32 %v2387, %v5481
        %v5483 = vpop.f32.mrb[0].mxu0
        %5484 = vmatprep.mubr.f32.mxu0 0.0
        %5485 = vmatmul.mubr.f32.gmra.mrb[0].mxu0 %v5372
        %v5486 = vpop.f32.mrb[0].mxu0
        %v5487 = vadd.f32 %v2387, %v5486
        %v5488 = vpop.f32.mrb[0].mxu0
        %5489 = vmatprep.mubr.f32.mxu0 0.0
        %5490 = vmatmul.mubr.f32.gmra.mrb[0].mxu0 %v5373
        %v5491 = vpop.f32.mrb[0].mxu0
        %v5492 = vadd.f32 %v2387, %v5491
        %v5493 = vpop.f32.mrb[0].mxu0
        %5494 = vmatprep.mubr.f32.mxu0 0.0
        %5495 = vmatmul.mubr.f32.gmra.mrb[0].mxu0 %v5374
        %v5496 = vpop.f32.mrb[0].mxu0
        %v5497 = vadd.f32 %v2387, %v5496
        %v5498 = vpop.f32.mrb[0].mxu0
        %5499 = vmatprep.mubr.f32.mxu0 0.0
        %5500 = vmatmul.mubr.f32.gmra.mrb[0].mxu0 %v5375
        %v5501 = vpop.f32.mrb[0].mxu0
        %v5502 = vadd.f32 %v2387, %v5501
        %v5503 = vpop.f32.mrb[0].mxu0
        %5504 = vmatprep.mubr.f32.mxu0 0.0
        %5505 = vmatmul.mubr.f32.gmra.mrb[0].mxu0 %v5376
        %v5506 = vpop.f32.mrb[0].mxu0
        %v5507 = vadd.f32 %v2387, %v5506
        %v5508 = vpop.f32.mrb[0].mxu0
        %5509 = vmatprep.mubr.f32.mxu0 0.0
        %5510 = vmatmul.mubr.f32.gmra.mrb[0].mxu0 %v5377
        %v5511 = vpop.f32.mrb[0].mxu0
        %v5512 = vadd.f32 %v2387, %v5511
        %v5513 = vpop.f32.mrb[0].mxu0
        %5514 = vmatprep.mubr.f32.mxu0 0.0
        %5515 = vmatmul.mubr.f32.gmra.mrb[0].mxu0 %v5378
        %v5516 = vpop.f32.mrb[0].mxu0
        %v5517 = vadd.f32 %v2387, %v5516
        %v5518 = vpop.f32.mrb[0].mxu0
        %5519 = vmatprep.mubr.f32.mxu0 0.0
        %5520 = vmatmul.mubr.f32.gmra.mrb[0].mxu0 %v5379
        %v5521 = vpop.f32.mrb[0].mxu0
        %v5522 = vadd.f32 %v2387, %v5521
        %v5523 = vpop.f32.mrb[0].mxu0
        %5524 = vdwg.mxu0
        %v5525 = vmax.f32 %v5447, 0.0
        %v5526 = vmax.f32 %v5452, 0.0
        %v5527 = vmax.f32 %v5457, 0.0
        %v5528 = vmax.f32 %v5462, 0.0
        %v5529 = vmax.f32 %v5467, 0.0
        %v5530 = vmax.f32 %v5472, 0.0
        %v5531 = vmax.f32 %v5477, 0.0
        %v5532 = vmax.f32 %v5482, 0.0
        %v5533 = vmax.f32 %v5487, 0.0
        %v5534 = vmax.f32 %v5492, 0.0
        %v5535 = vmax.f32 %v5497, 0.0
        %v5536 = vmax.f32 %v5502, 0.0
        %v5537 = vmax.f32 %v5507, 0.0
        %v5538 = vmax.f32 %v5512, 0.0
        %v5539 = vmax.f32 %v5517, 0.0
        %v5540 = vmax.f32 %v5522, 0.0
        %5541 = vmatprep.subr.mxu0 0.0
        %5542 = vmatpush1.msra.mxu0 %v2550
        %5543 = vmatprep.subr.mxu0 0.0
        %5544 = vmatpush1.msra.mxu0 %v2551
        %5545 = vmatprep.subr.mxu0 0.0
        %5546 = vmatpush1.msra.mxu0 %v2552
        %5547 = vmatprep.subr.mxu0 0.0
        %5548 = vmatpush1.msra.mxu0 %v2553
        %5549 = vmatprep.subr.mxu0 0.0
        %5550 = vmatpush1.msra.mxu0 %v2554
        %5551 = vmatprep.subr.mxu0 0.0
        %5552 = vmatpush1.msra.mxu0 %v2555
        %5553 = vmatprep.subr.mxu0 0.0
        %5554 = vmatpush1.msra.mxu0 %v2556
        %5555 = vmatprep.subr.mxu0 0.0
        %5556 = vmatpush1.msra.mxu0 %v2557
        %5557 = vmatprep.subr.mxu0 0.0
        %5558 = vmatpush1.msra.mxu0 %v2558
        %5559 = vmatprep.subr.mxu0 0.0
        %5560 = vmatpush1.msra.mxu0 %v2559
        %5561 = vmatprep.subr.mxu0 0.0
        %5562 = vmatpush1.msra.mxu0 %v2560
        %5563 = vmatprep.subr.mxu0 0.0
        %5564 = vmatpush1.msra.mxu0 %v2561
        %5565 = vmatprep.subr.mxu0 0.0
        %5566 = vmatpush1.msra.mxu0 %v2562
        %5567 = vmatprep.subr.mxu0 0.0
        %5568 = vmatpush1.msra.mxu0 %v2563
        %5569 = vmatprep.subr.mxu0 0.0
        %5570 = vmatpush1.msra.mxu0 %v2564
        %5571 = vmatprep.subr.mxu0 0.0
        %5572 = vmatpush1.msra.mxu0 %v2565
        %5573 = vmatprep.subr.mxu0 0.0
        %5574 = vmatpush1.msra.mxu0 0.0
        %5575 = vmatprep.subr.mxu0 0.0
        %5576 = vmatpush1.msra.mxu0 0.0
        %5577 = vmatprep.subr.mxu0 0.0
        %5578 = vmatpush1.msra.mxu0 0.0
        %5579 = vmatprep.subr.mxu0 0.0
        %5580 = vmatpush1.msra.mxu0 0.0
        %5581 = vmatprep.subr.mxu0 0.0
        %5582 = vmatpush1.msra.mxu0 0.0
        %5583 = vmatprep.subr.mxu0 0.0
        %5584 = vmatpush1.msra.mxu0 0.0
        %5585 = vmatprep.subr.mxu0 0.0
        %5586 = vmatpush1.msra.mxu0 0.0
        %5587 = vmatprep.subr.mxu0 0.0
        %5588 = vmatpush1.msra.mxu0 0.0
        %5589 = vmatprep.subr.mxu0 0.0
        %5590 = vmatpush1.msra.mxu0 0.0
        %5591 = vmatprep.subr.mxu0 0.0
        %5592 = vmatpush1.msra.mxu0 0.0
        %5593 = vmatprep.subr.mxu0 0.0
        %5594 = vmatpush1.msra.mxu0 0.0
        %5595 = vmatprep.subr.mxu0 0.0
        %5596 = vmatpush1.msra.mxu0 0.0
        %5597 = vmatprep.subr.mxu0 0.0
        %5598 = vmatpush1.msra.mxu0 0.0
        %5599 = vmatprep.subr.mxu0 0.0
        %5600 = vmatpush1.msra.mxu0 0.0
        %5601 = vmatprep.subr.mxu0 0.0
        %5602 = vmatpush1.msra.mxu0 0.0
        %5603 = vmatprep.subr.mxu0 0.0
        %5604 = vmatpush1.msra.mxu0 0.0
        %5605 = vmatprep.mubr.f32.mxu0 0.0
        %5606 = vmatmul.mubr.f32.gmra.mrb[0].mxu0 %v5525
        %v5607 = vpop.f32.mrb[0].mxu0
        %v5608 = vadd.f32 %v2570, %v5607
        %v5609 = vpop.f32.mrb[0].mxu0
        %5610 = vmatprep.mubr.f32.mxu0 0.0
        %5611 = vmatmul.mubr.f32.gmra.mrb[0].mxu0 %v5526
        %v5612 = vpop.f32.mrb[0].mxu0
        %v5613 = vadd.f32 %v2570, %v5612
        %v5614 = vpop.f32.mrb[0].mxu0
        %5615 = vmatprep.mubr.f32.mxu0 0.0
        %5616 = vmatmul.mubr.f32.gmra.mrb[0].mxu0 %v5527
        %v5617 = vpop.f32.mrb[0].mxu0
        %v5618 = vadd.f32 %v2570, %v5617
        %v5619 = vpop.f32.mrb[0].mxu0
        %5620 = vmatprep.mubr.f32.mxu0 0.0
        %5621 = vmatmul.mubr.f32.gmra.mrb[0].mxu0 %v5528
        %v5622 = vpop.f32.mrb[0].mxu0
        %v5623 = vadd.f32 %v2570, %v5622
        %v5624 = vpop.f32.mrb[0].mxu0
        %5625 = vmatprep.mubr.f32.mxu0 0.0
        %5626 = vmatmul.mubr.f32.gmra.mrb[0].mxu0 %v5529
        %v5627 = vpop.f32.mrb[0].mxu0
        %v5628 = vadd.f32 %v2570, %v5627
        %v5629 = vpop.f32.mrb[0].mxu0
        %5630 = vmatprep.mubr.f32.mxu0 0.0
        %5631 = vmatmul.mubr.f32.gmra.mrb[0].mxu0 %v5530
        %v5632 = vpop.f32.mrb[0].mxu0
        %v5633 = vadd.f32 %v2570, %v5632
        %v5634 = vpop.f32.mrb[0].mxu0
        %5635 = vmatprep.mubr.f32.mxu0 0.0
        %5636 = vmatmul.mubr.f32.gmra.mrb[0].mxu0 %v5531
        %v5637 = vpop.f32.mrb[0].mxu0
        %v5638 = vadd.f32 %v2570, %v5637
        %v5639 = vpop.f32.mrb[0].mxu0
        %5640 = vmatprep.mubr.f32.mxu0 0.0
        %5641 = vmatmul.mubr.f32.gmra.mrb[0].mxu0 %v5532
        %v5642 = vpop.f32.mrb[0].mxu0
        %v5643 = vadd.f32 %v2570, %v5642
        %v5644 = vpop.f32.mrb[0].mxu0
        %5645 = vmatprep.mubr.f32.mxu0 0.0
        %5646 = vmatmul.mubr.f32.gmra.mrb[0].mxu0 %v5533
        %v5647 = vpop.f32.mrb[0].mxu0
        %v5648 = vpop.f32.mrb[0].mxu0
        %5649 = vmatprep.mubr.f32.mxu0 0.0
        %5650 = vmatmul.mubr.f32.gmra.mrb[0].mxu0 %v5534
        %v5651 = vpop.f32.mrb[0].mxu0
        %v5652 = vpop.f32.mrb[0].mxu0
        %5653 = vmatprep.mubr.f32.mxu0 0.0
        %5654 = vmatmul.mubr.f32.gmra.mrb[0].mxu0 %v5535
        %v5655 = vpop.f32.mrb[0].mxu0
        %v5656 = vpop.f32.mrb[0].mxu0
        %5657 = vmatprep.mubr.f32.mxu0 0.0
        %5658 = vmatmul.mubr.f32.gmra.mrb[0].mxu0 %v5536
        %v5659 = vpop.f32.mrb[0].mxu0
        %v5660 = vpop.f32.mrb[0].mxu0
        %5661 = vmatprep.mubr.f32.mxu0 0.0
        %5662 = vmatmul.mubr.f32.gmra.mrb[0].mxu0 %v5537
        %v5663 = vpop.f32.mrb[0].mxu0
        %v5664 = vpop.f32.mrb[0].mxu0
        %5665 = vmatprep.mubr.f32.mxu0 0.0
        %5666 = vmatmul.mubr.f32.gmra.mrb[0].mxu0 %v5538
        %v5667 = vpop.f32.mrb[0].mxu0
        %v5668 = vpop.f32.mrb[0].mxu0
        %5669 = vmatprep.mubr.f32.mxu0 0.0
        %5670 = vmatmul.mubr.f32.gmra.mrb[0].mxu0 %v5539
        %v5671 = vpop.f32.mrb[0].mxu0
        %v5672 = vpop.f32.mrb[0].mxu0
        %5673 = vmatprep.mubr.f32.mxu0 0.0
        %5674 = vmatmul.mubr.f32.gmra.mrb[0].mxu0 %v5540
        %v5675 = vpop.f32.mrb[0].mxu0
        %v5676 = vpop.f32.mrb[0].mxu0
        %5677 = vdwg.mxu0
        %v5678 = vlaneseq
        %v5679 = vshrl.u32 %v5678, 7
        %v5680 = vsub.s32 0, %v5679
        %v5681 = vrot.slane %v5226, %v5680
        %v5682 = vmul.f32 %v5608, %v5681
        %v5683 = vmul.f32 %v5613, %v5681
        %v5684 = vmul.f32 %v5618, %v5681
        %v5685 = vmul.f32 %v5623, %v5681
        %v5686 = vmul.f32 %v5628, %v5681
        %v5687 = vmul.f32 %v5633, %v5681
        %v5688 = vmul.f32 %v5638, %v5681
        %v5689 = vmul.f32 %v5643, %v5681
        %5690 = vmatprep.subr.mxu0 0.0
        %5691 = vmatpush1.msra.mxu0 %v2729
        %5692 = vmatprep.subr.mxu0 0.0
        %5693 = vmatpush1.msra.mxu0 %v2730
        %5694 = vmatprep.subr.mxu0 0.0
        %5695 = vmatpush1.msra.mxu0 %v2731
        %5696 = vmatprep.subr.mxu0 0.0
        %5697 = vmatpush1.msra.mxu0 %v2732
        %5698 = vmatprep.subr.mxu0 0.0
        %5699 = vmatpush1.msra.mxu0 %v2733
        %5700 = vmatprep.subr.mxu0 0.0
        %5701 = vmatpush1.msra.mxu0 %v2734
        %5702 = vmatprep.subr.mxu0 0.0
        %5703 = vmatpush1.msra.mxu0 %v2735
        %5704 = vmatprep.subr.mxu0 0.0
        %5705 = vmatpush1.msra.mxu0 %v2736
        %5706 = vmatprep.subr.mxu0 0.0
        %5707 = vmatpush1.msra.mxu0 %v2737
        %5708 = vmatprep.subr.mxu0 0.0
        %5709 = vmatpush1.msra.mxu0 %v2738
        %5710 = vmatprep.subr.mxu0 0.0
        %5711 = vmatpush1.msra.mxu0 %v2739
        %5712 = vmatprep.subr.mxu0 0.0
        %5713 = vmatpush1.msra.mxu0 %v2740
        %5714 = vmatprep.subr.mxu0 0.0
        %5715 = vmatpush1.msra.mxu0 %v2741
        %5716 = vmatprep.subr.mxu0 0.0
        %5717 = vmatpush1.msra.mxu0 %v2742
        %5718 = vmatprep.subr.mxu0 0.0
        %5719 = vmatpush1.msra.mxu0 %v2743
        %5720 = vmatprep.subr.mxu0 0.0
        %5721 = vmatpush1.msra.mxu0 %v2744
        %5722 = vmatprep.subr.mxu0 0.0
        %5723 = vmatpush1.msra.mxu0 0.0
        %5724 = vmatprep.subr.mxu0 0.0
        %5725 = vmatpush1.msra.mxu0 0.0
        %5726 = vmatprep.subr.mxu0 0.0
        %5727 = vmatpush1.msra.mxu0 0.0
        %5728 = vmatprep.subr.mxu0 0.0
        %5729 = vmatpush1.msra.mxu0 0.0
        %5730 = vmatprep.subr.mxu0 0.0
        %5731 = vmatpush1.msra.mxu0 0.0
        %5732 = vmatprep.subr.mxu0 0.0
        %5733 = vmatpush1.msra.mxu0 0.0
        %5734 = vmatprep.subr.mxu0 0.0
        %5735 = vmatpush1.msra.mxu0 0.0
        %5736 = vmatprep.subr.mxu0 0.0
        %5737 = vmatpush1.msra.mxu0 0.0
        %5738 = vmatprep.subr.mxu0 0.0
        %5739 = vmatpush1.msra.mxu0 0.0
        %5740 = vmatprep.subr.mxu0 0.0
        %5741 = vmatpush1.msra.mxu0 0.0
        %5742 = vmatprep.subr.mxu0 0.0
        %5743 = vmatpush1.msra.mxu0 0.0
        %5744 = vmatprep.subr.mxu0 0.0
        %5745 = vmatpush1.msra.mxu0 0.0
        %5746 = vmatprep.subr.mxu0 0.0
        %5747 = vmatpush1.msra.mxu0 0.0
        %5748 = vmatprep.subr.mxu0 0.0
        %5749 = vmatpush1.msra.mxu0 0.0
        %5750 = vmatprep.subr.mxu0 0.0
        %5751 = vmatpush1.msra.mxu0 0.0
        %5752 = vmatprep.subr.mxu0 0.0
        %5753 = vmatpush1.msra.mxu0 0.0
        %5754 = vmatprep.mubr.f32.mxu0 0.0
        %5755 = vmatmul.mubr.f32.gmra.mrb[0].mxu0 %v5682
        %v5756 = vpop.f32.mrb[0].mxu0
        %v5757 = vadd.f32 0.0, %v5756
        %v5758 = vpop.f32.mrb[0].mxu0
        %5759 = vmatprep.mubr.f32.mxu0 0.0
        %5760 = vmatmul.mubr.f32.gmra.mrb[0].mxu0 %v5683
        %v5761 = vpop.f32.mrb[0].mxu0
        %v5762 = vadd.f32 0.0, %v5761
        %v5763 = vpop.f32.mrb[0].mxu0
        %5764 = vmatprep.mubr.f32.mxu0 0.0
        %5765 = vmatmul.mubr.f32.gmra.mrb[0].mxu0 %v5684
        %v5766 = vpop.f32.mrb[0].mxu0
        %v5767 = vadd.f32 0.0, %v5766
        %v5768 = vpop.f32.mrb[0].mxu0
        %5769 = vmatprep.mubr.f32.mxu0 0.0
        %5770 = vmatmul.mubr.f32.gmra.mrb[0].mxu0 %v5685
        %v5771 = vpop.f32.mrb[0].mxu0
        %v5772 = vadd.f32 0.0, %v5771
        %v5773 = vpop.f32.mrb[0].mxu0
        %5774 = vmatprep.mubr.f32.mxu0 0.0
        %5775 = vmatmul.mubr.f32.gmra.mrb[0].mxu0 %v5686
        %v5776 = vpop.f32.mrb[0].mxu0
        %v5777 = vadd.f32 0.0, %v5776
        %v5778 = vpop.f32.mrb[0].mxu0
        %5779 = vmatprep.mubr.f32.mxu0 0.0
        %5780 = vmatmul.mubr.f32.gmra.mrb[0].mxu0 %v5687
        %v5781 = vpop.f32.mrb[0].mxu0
        %v5782 = vadd.f32 0.0, %v5781
        %v5783 = vpop.f32.mrb[0].mxu0
        %5784 = vmatprep.mubr.f32.mxu0 0.0
        %5785 = vmatmul.mubr.f32.gmra.mrb[0].mxu0 %v5688
        %v5786 = vpop.f32.mrb[0].mxu0
        %v5787 = vadd.f32 0.0, %v5786
        %v5788 = vpop.f32.mrb[0].mxu0
        %5789 = vmatprep.mubr.f32.mxu0 0.0
        %5790 = vmatmul.mubr.f32.gmra.mrb[0].mxu0 %v5689
        %v5791 = vpop.f32.mrb[0].mxu0
        %v5792 = vadd.f32 0.0, %v5791
        %v5793 = vpop.f32.mrb[0].mxu0
        %5794 = vdwg.mxu0
        %v5795 = vmul.f32 %v5757, 0.17677669
        %v5796 = vmul.f32 %v5762, 0.17677669
        %v5797 = vmul.f32 %v5767, 0.17677669
        %v5798 = vmul.f32 %v5772, 0.17677669
        %v5799 = vmul.f32 %v5777, 0.17677669
        %v5800 = vmul.f32 %v5782, 0.17677669
        %v5801 = vmul.f32 %v5787, 0.17677669
        %v5802 = vmul.f32 %v5792, 0.17677669
        %v5803 = vsel %vm2858, %v5795, -inf
        %5804 = vmax.xlane.f32.xlu0 %v5803
        %v5805 = vpop.xlane.xlu0 %5804
        %v5806 = vsel %vm2858, %v5796, -inf
        %5807 = vmax.xlane.f32.xlu0 %v5806
        %v5808 = vpop.xlane.xlu0 %5807
        %v5809 = vsel %vm2858, %v5797, -inf
        %5810 = vmax.xlane.f32.xlu0 %v5809
        %v5811 = vpop.xlane.xlu0 %5810
        %v5812 = vsel %vm2858, %v5798, -inf
        %5813 = vmax.xlane.f32.xlu0 %v5812
        %v5814 = vpop.xlane.xlu0 %5813
        %v5815 = vsel %vm2858, %v5799, -inf
        %5816 = vmax.xlane.f32.xlu0 %v5815
        %v5817 = vpop.xlane.xlu0 %5816
        %v5818 = vsel %vm2858, %v5800, -inf
        %5819 = vmax.xlane.f32.xlu0 %v5818
        %v5820 = vpop.xlane.xlu0 %5819
        %v5821 = vsel %vm2858, %v5801, -inf
        %5822 = vmax.xlane.f32.xlu0 %v5821
        %v5823 = vpop.xlane.xlu0 %5822
        %v5824 = vsel %vm2858, %v5802, -inf
        %5825 = vmax.xlane.f32.xlu0 %v5824
        %v5826 = vpop.xlane.xlu0 %5825
        %v5827 = vsub.f32 %v5795, %v5805
        %v5828 = vsub.f32 %v5796, %v5808
        %v5829 = vsub.f32 %v5797, %v5811
        %v5830 = vsub.f32 %v5798, %v5814
        %v5831 = vsub.f32 %v5799, %v5817
        %v5832 = vsub.f32 %v5800, %v5820
        %v5833 = vsub.f32 %v5801, %v5823
        %v5834 = vsub.f32 %v5802, %v5826
        %v5835 = vmul.f32 %v5827, 1.442695
        %v5836 = vpow.pop %v5835
        %v5837 = vmul.f32 %v5828, 1.442695
        %v5838 = vpow.pop %v5837
        %v5839 = vmul.f32 %v5829, 1.442695
        %v5840 = vpow.pop %v5839
        %v5841 = vmul.f32 %v5830, 1.442695
        %v5842 = vpow.pop %v5841
        %v5843 = vmul.f32 %v5831, 1.442695
        %v5844 = vpow.pop %v5843
        %v5845 = vmul.f32 %v5832, 1.442695
        %v5846 = vpow.pop %v5845
        %v5847 = vmul.f32 %v5833, 1.442695
        %v5848 = vpow.pop %v5847
        %v5849 = vmul.f32 %v5834, 1.442695
        %v5850 = vpow.pop %v5849
        %v5851 = vsel %vm2858, %v5836, 0.0
        %5852 = vadd.xlane.f32.xlu0 %v5851
        %v5853 = vpop.xlane.xlu0 %5852
        %v5854 = vsel %vm2858, %v5838, 0.0
        %5855 = vadd.xlane.f32.xlu0 %v5854
        %v5856 = vpop.xlane.xlu0 %5855
        %v5857 = vsel %vm2858, %v5840, 0.0
        %5858 = vadd.xlane.f32.xlu0 %v5857
        %v5859 = vpop.xlane.xlu0 %5858
        %v5860 = vsel %vm2858, %v5842, 0.0
        %5861 = vadd.xlane.f32.xlu0 %v5860
        %v5862 = vpop.xlane.xlu0 %5861
        %v5863 = vsel %vm2858, %v5844, 0.0
        %5864 = vadd.xlane.f32.xlu0 %v5863
        %v5865 = vpop.xlane.xlu0 %5864
        %v5866 = vsel %vm2858, %v5846, 0.0
        %5867 = vadd.xlane.f32.xlu0 %v5866
        %v5868 = vpop.xlane.xlu0 %5867
        %v5869 = vsel %vm2858, %v5848, 0.0
        %5870 = vadd.xlane.f32.xlu0 %v5869
        %v5871 = vpop.xlane.xlu0 %5870
        %v5872 = vsel %vm2858, %v5850, 0.0
        %5873 = vadd.xlane.f32.xlu0 %v5872
        %v5874 = vpop.xlane.xlu0 %5873
        %v5875 = vrcp.pop %v5853
        %v5876 = vrcp.pop %v5856
        %v5877 = vrcp.pop %v5859
        %v5878 = vrcp.pop %v5862
        %v5879 = vrcp.pop %v5865
        %v5880 = vrcp.pop %v5868
        %v5881 = vrcp.pop %v5871
        %v5882 = vrcp.pop %v5874
        %v5883 = vmul.f32 %v5836, %v5875
        %v5884 = vmul.f32 %v5838, %v5876
        %v5885 = vmul.f32 %v5840, %v5877
        %v5886 = vmul.f32 %v5842, %v5878
        %v5887 = vmul.f32 %v5844, %v5879
        %v5888 = vmul.f32 %v5846, %v5880
        %v5889 = vmul.f32 %v5848, %v5881
        %v5890 = vmul.f32 %v5850, %v5882
        %v5891 = vadd.f32 %v5883, 1e-08
        %v5892 = vadd.f32 %v5884, 1e-08
        %v5893 = vadd.f32 %v5885, 1e-08
        %v5894 = vadd.f32 %v5886, 1e-08
        %v5895 = vadd.f32 %v5887, 1e-08
        %v5896 = vadd.f32 %v5888, 1e-08
        %v5897 = vadd.f32 %v5889, 1e-08
        %v5898 = vadd.f32 %v5890, 1e-08
        %v5899 = vsel %vm2858, %v5891, 0.0
        %v5900 = vsel %vm2858, %v5892, 0.0
        %v5901 = vadd.f32 %v5899, %v5900
        %v5902 = vsel %vm2858, %v5893, 0.0
        %v5903 = vadd.f32 %v5901, %v5902
        %v5904 = vsel %vm2858, %v5894, 0.0
        %v5905 = vadd.f32 %v5903, %v5904
        %v5906 = vsel %vm2858, %v5895, 0.0
        %v5907 = vadd.f32 %v5905, %v5906
        %v5908 = vsel %vm2858, %v5896, 0.0
        %v5909 = vadd.f32 %v5907, %v5908
        %v5910 = vsel %vm2858, %v5897, 0.0
        %v5911 = vadd.f32 %v5909, %v5910
        %v5912 = vsel %vm2858, %v5898, 0.0
        %v5913 = vadd.f32 %v5911, %v5912
        %v5914 = vrot.slane %v5913, 4
        %v5915 = vadd.f32 %v5913, %v5914
        %v5916 = vrot.slane %v5915, 2
        %v5917 = vadd.f32 %v5915, %v5916
        %v5918 = vrot.slane %v5917, 1
        %v5919 = vadd.f32 %v5917, %v5918
        %v5920 = vrcp.pop %v5919
        %v5921 = vmul.f32 %v5891, %v5920
        %v5922 = vmul.f32 %v5892, %v5920
        %v5923 = vmul.f32 %v5893, %v5920
        %v5924 = vmul.f32 %v5894, %v5920
        %v5925 = vmul.f32 %v5895, %v5920
        %v5926 = vmul.f32 %v5896, %v5920
        %v5927 = vmul.f32 %v5897, %v5920
        %v5928 = vmul.f32 %v5898, %v5920
        %v5929 = vld [vmem:[%s71] sm:$0xff]
        %v5930 = vld [vmem:[%s71 + $0x8] sm:$0xff]
        %v5931 = vld [vmem:[%s71 + $0x10] sm:$0xff]
        %v5932 = vld [vmem:[%s71 + $0x18] sm:$0xff]
        %v5933 = vld [vmem:[%s73] sm:$0x1]
        %v5935 = vlaneseq
        %v5936 = vshrl.u32 %v5935, 7
        %v5937 = vsub.s32 0, %v5936
        %v5938 = vrot.slane %v5933, %v5937
        %v5941 = vsel %vm1352, %v5122, 0
        %5943 = vmatprep.subr.mxu0 0.0
        %5944 = vmatpush1.msra.mxu0 %v5929
        %5945 = vmatprep.subr.mxu0 0.0
        %5946 = vmatpush1.msra.mxu0 %v5930
        %5947 = vmatprep.subr.mxu0 0.0
        %5948 = vmatpush1.msra.mxu0 %v5931
        %5949 = vmatprep.subr.mxu0 0.0
        %5950 = vmatpush1.msra.mxu0 %v5932
        %5951 = vmatprep.subr.mxu0 0.0
        %5952 = vmatpush1.msra.mxu0 0.0
        %5953 = vmatprep.subr.mxu0 0.0
        %5954 = vmatpush1.msra.mxu0 0.0
        %5955 = vmatprep.subr.mxu0 0.0
        %5956 = vmatpush1.msra.mxu0 0.0
        %5957 = vmatprep.subr.mxu0 0.0
        %5958 = vmatpush1.msra.mxu0 0.0
        %5959 = vmatprep.subr.mxu0 0.0
        %5960 = vmatpush1.msra.mxu0 0.0
        %5961 = vmatprep.subr.mxu0 0.0
        %5962 = vmatpush1.msra.mxu0 0.0
        %5963 = vmatprep.subr.mxu0 0.0
        %5964 = vmatpush1.msra.mxu0 0.0
        %5965 = vmatprep.subr.mxu0 0.0
        %5966 = vmatpush1.msra.mxu0 0.0
        %5967 = vmatprep.subr.mxu0 0.0
        %5968 = vmatpush1.msra.mxu0 0.0
        %5969 = vmatprep.subr.mxu0 0.0
        %5970 = vmatpush1.msra.mxu0 0.0
        %5971 = vmatprep.subr.mxu0 0.0
        %5972 = vmatpush1.msra.mxu0 0.0
        %5973 = vmatprep.subr.mxu0 0.0
        %5974 = vmatpush1.msra.mxu0 0.0
        %5975 = vmatprep.subr.mxu0 0.0
        %5976 = vmatpush1.msra.mxu0 0.0
        %5977 = vmatprep.subr.mxu0 0.0
        %5978 = vmatpush1.msra.mxu0 0.0
        %5979 = vmatprep.subr.mxu0 0.0
        %5980 = vmatpush1.msra.mxu0 0.0
        %5981 = vmatprep.subr.mxu0 0.0
        %5982 = vmatpush1.msra.mxu0 0.0
        %5983 = vmatprep.subr.mxu0 0.0
        %5984 = vmatpush1.msra.mxu0 0.0
        %5985 = vmatprep.subr.mxu0 0.0
        %5986 = vmatpush1.msra.mxu0 0.0
        %5987 = vmatprep.subr.mxu0 0.0
        %5988 = vmatpush1.msra.mxu0 0.0
        %5989 = vmatprep.subr.mxu0 0.0
        %5990 = vmatpush1.msra.mxu0 0.0
        %5991 = vmatprep.subr.mxu0 0.0
        %5992 = vmatpush1.msra.mxu0 0.0
        %5993 = vmatprep.subr.mxu0 0.0
        %5994 = vmatpush1.msra.mxu0 0.0
        %5995 = vmatprep.subr.mxu0 0.0
        %5996 = vmatpush1.msra.mxu0 0.0
        %5997 = vmatprep.subr.mxu0 0.0
        %5998 = vmatpush1.msra.mxu0 0.0
        %5999 = vmatprep.subr.mxu0 0.0
        %6000 = vmatpush1.msra.mxu0 0.0
        %6001 = vmatprep.subr.mxu0 0.0
        %6002 = vmatpush1.msra.mxu0 0.0
        %6003 = vmatprep.subr.mxu0 0.0
        %6004 = vmatpush1.msra.mxu0 0.0
        %6005 = vmatprep.subr.mxu0 0.0
        %6006 = vmatpush1.msra.mxu0 0.0
        %6007 = vmatprep.mubr.f32.mxu0 0.0
        %6008 = vmatmul.mubr.f32.gmra.mrb[0].mxu0 %v5941
        %v6009 = vpop.f32.mrb[0].mxu0
        %v6010 = vadd.f32 %v5938, %v6009
        %v6011 = vpop.f32.mrb[0].mxu0
        %6012 = vdwg.mxu0
        %6013 = vst.msk [vmem:[%s1314] sm:$0xf] %vm2067, %v6010
        %v6014 = vlaneseq
        %v6015 = vshrl.u32 %v6014, 7
        %v6016 = vadd.s32 %v6015, 8
        %v6017 = vadd.s32 %v6015, 16
        %v6018 = vadd.s32 %v6015, 24
        %v6019 = vadd.s32 %v6015, 32
        %v6020 = vadd.s32 %v6015, 40
        %v6021 = vadd.s32 %v6015, 48
        %v6022 = vadd.s32 %v6015, 56
        %v6023 = vlaneseq
        %v6024 = vand.u32 %v6023, 127
        %vm6025 = vcmp.eq.s32.totalorder %v6015, %v6024
        %vm6026 = vcmp.eq.s32.totalorder %v6016, %v6024
        %vm6027 = vcmp.eq.s32.totalorder %v6017, %v6024
        %vm6028 = vcmp.eq.s32.totalorder %v6018, %v6024
        %vm6029 = vcmp.eq.s32.totalorder %v6019, %v6024
        %vm6030 = vcmp.eq.s32.totalorder %v6020, %v6024
        %vm6031 = vcmp.eq.s32.totalorder %v6021, %v6024
        %vm6032 = vcmp.eq.s32.totalorder %v6022, %v6024
        %v6033 = vsel %vm6025, 1, 0
        %v6034 = vsel %vm6026, 1, 0
        %v6035 = vsel %vm6027, 1, 0
        %v6036 = vsel %vm6028, 1, 0
        %v6037 = vsel %vm6029, 1, 0
        %v6038 = vsel %vm6030, 1, 0
        %v6039 = vsel %vm6031, 1, 0
        %v6040 = vsel %vm6032, 1, 0
        %v6041 = vcvt.s32.f32 %v6033
        %v6042 = vcvt.s32.f32 %v6034
        %v6043 = vcvt.s32.f32 %v6035
        %v6044 = vcvt.s32.f32 %v6036
        %v6045 = vcvt.s32.f32 %v6037
        %v6046 = vcvt.s32.f32 %v6038
        %v6047 = vcvt.s32.f32 %v6039
        %v6048 = vcvt.s32.f32 %v6040
        %6050 = vset.pattern.permute.xlu0 0
        %6051 = vperm.xlu0 %6050, %v5921
        %v6052 = vpop.permute.xlu0 %6051
        %6055 = vset.pattern.permute.xlu0 0
        %6056 = vperm.xlu0 %6055, %v5922
        %v6057 = vpop.permute.xlu0 %6056
        %6060 = vset.pattern.permute.xlu0 0
        %6061 = vperm.xlu0 %6060, %v5923
        %v6062 = vpop.permute.xlu0 %6061
        %6065 = vset.pattern.permute.xlu0 0
        %6066 = vperm.xlu0 %6065, %v5924
        %v6067 = vpop.permute.xlu0 %6066
        %6070 = vset.pattern.permute.xlu0 0
        %6071 = vperm.xlu0 %6070, %v5925
        %v6072 = vpop.permute.xlu0 %6071
        %6075 = vset.pattern.permute.xlu0 0
        %6076 = vperm.xlu0 %6075, %v5926
        %v6077 = vpop.permute.xlu0 %6076
        %6080 = vset.pattern.permute.xlu0 0
        %6081 = vperm.xlu0 %6080, %v5927
        %v6082 = vpop.permute.xlu0 %6081
        %6085 = vset.pattern.permute.xlu0 0
        %6086 = vperm.xlu0 %6085, %v5928
        %v6087 = vpop.permute.xlu0 %6086
        %v6089 = vmul.f32 %v6052, %v6041
        %v6090 = vmul.f32 %v6057, %v6042
        %v6091 = vmul.f32 %v6062, %v6043
        %v6092 = vmul.f32 %v6067, %v6044
        %v6093 = vmul.f32 %v6072, %v6045
        %v6094 = vmul.f32 %v6077, %v6046
        %v6095 = vmul.f32 %v6082, %v6047
        %v6096 = vmul.f32 %v6087, %v6048
        %v6097 = vsel %vm2182, %v6089, 0.0
        %v6098 = vsel %vm2182, %v6090, 0.0
        %v6099 = vadd.f32 %v6097, %v6098
        %v6100 = vsel %vm2182, %v6091, 0.0
        %v6101 = vadd.f32 %v6099, %v6100
        %v6102 = vsel %vm2182, %v6092, 0.0
        %v6103 = vadd.f32 %v6101, %v6102
        %v6104 = vsel %vm2182, %v6093, 0.0
        %v6105 = vadd.f32 %v6103, %v6104
        %v6106 = vsel %vm2182, %v6094, 0.0
        %v6107 = vadd.f32 %v6105, %v6106
        %v6108 = vsel %vm2182, %v6095, 0.0
        %v6109 = vadd.f32 %v6107, %v6108
        %v6110 = vsel %vm2182, %v6096, 0.0
        %v6111 = vadd.f32 %v6109, %v6110
        %v6112 = vrot.slane %v6111, 4
        %v6113 = vadd.f32 %v6111, %v6112
        %v6114 = vrot.slane %v6113, 2
        %v6115 = vadd.f32 %v6113, %v6114
        %v6116 = vrot.slane %v6115, 1
        %v6117 = vadd.f32 %v6115, %v6116
        %6118 = vset.pattern.permute.xlu0 1
        %6119 = vperm.xlu0 %6118, %v5921
        %v6120 = vpop.permute.xlu0 %6119
        %6122 = vset.pattern.permute.xlu0 1
        %6123 = vperm.xlu0 %6122, %v5922
        %v6124 = vpop.permute.xlu0 %6123
        %6126 = vset.pattern.permute.xlu0 1
        %6127 = vperm.xlu0 %6126, %v5923
        %v6128 = vpop.permute.xlu0 %6127
        %6130 = vset.pattern.permute.xlu0 1
        %6131 = vperm.xlu0 %6130, %v5924
        %v6132 = vpop.permute.xlu0 %6131
        %6134 = vset.pattern.permute.xlu0 1
        %6135 = vperm.xlu0 %6134, %v5925
        %v6136 = vpop.permute.xlu0 %6135
        %6138 = vset.pattern.permute.xlu0 1
        %6139 = vperm.xlu0 %6138, %v5926
        %v6140 = vpop.permute.xlu0 %6139
        %6142 = vset.pattern.permute.xlu0 1
        %6143 = vperm.xlu0 %6142, %v5927
        %v6144 = vpop.permute.xlu0 %6143
        %6146 = vset.pattern.permute.xlu0 1
        %6147 = vperm.xlu0 %6146, %v5928
        %v6148 = vpop.permute.xlu0 %6147
        %v6150 = vmul.f32 %v6120, %v6041
        %v6151 = vmul.f32 %v6124, %v6042
        %v6152 = vmul.f32 %v6128, %v6043
        %v6153 = vmul.f32 %v6132, %v6044
        %v6154 = vmul.f32 %v6136, %v6045
        %v6155 = vmul.f32 %v6140, %v6046
        %v6156 = vmul.f32 %v6144, %v6047
        %v6157 = vmul.f32 %v6148, %v6048
        %v6158 = vsel %vm2182, %v6150, 0.0
        %v6159 = vsel %vm2182, %v6151, 0.0
        %v6160 = vadd.f32 %v6158, %v6159
        %v6161 = vsel %vm2182, %v6152, 0.0
        %v6162 = vadd.f32 %v6160, %v6161
        %v6163 = vsel %vm2182, %v6153, 0.0
        %v6164 = vadd.f32 %v6162, %v6163
        %v6165 = vsel %vm2182, %v6154, 0.0
        %v6166 = vadd.f32 %v6164, %v6165
        %v6167 = vsel %vm2182, %v6155, 0.0
        %v6168 = vadd.f32 %v6166, %v6167
        %v6169 = vsel %vm2182, %v6156, 0.0
        %v6170 = vadd.f32 %v6168, %v6169
        %v6171 = vsel %vm2182, %v6157, 0.0
        %v6172 = vadd.f32 %v6170, %v6171
        %v6173 = vrot.slane %v6172, 4
        %v6174 = vadd.f32 %v6172, %v6173
        %v6175 = vrot.slane %v6174, 2
        %v6176 = vadd.f32 %v6174, %v6175
        %v6177 = vrot.slane %v6176, 1
        %v6178 = vadd.f32 %v6176, %v6177
        %6179 = vset.pattern.permute.xlu0 2
        %6180 = vperm.xlu0 %6179, %v5921
        %v6181 = vpop.permute.xlu0 %6180
        %6183 = vset.pattern.permute.xlu0 2
        %6184 = vperm.xlu0 %6183, %v5922
        %v6185 = vpop.permute.xlu0 %6184
        %6187 = vset.pattern.permute.xlu0 2
        %6188 = vperm.xlu0 %6187, %v5923
        %v6189 = vpop.permute.xlu0 %6188
        %6191 = vset.pattern.permute.xlu0 2
        %6192 = vperm.xlu0 %6191, %v5924
        %v6193 = vpop.permute.xlu0 %6192
        %6195 = vset.pattern.permute.xlu0 2
        %6196 = vperm.xlu0 %6195, %v5925
        %v6197 = vpop.permute.xlu0 %6196
        %6199 = vset.pattern.permute.xlu0 2
        %6200 = vperm.xlu0 %6199, %v5926
        %v6201 = vpop.permute.xlu0 %6200
        %6203 = vset.pattern.permute.xlu0 2
        %6204 = vperm.xlu0 %6203, %v5927
        %v6205 = vpop.permute.xlu0 %6204
        %6207 = vset.pattern.permute.xlu0 2
        %6208 = vperm.xlu0 %6207, %v5928
        %v6209 = vpop.permute.xlu0 %6208
        %v6211 = vmul.f32 %v6181, %v6041
        %v6212 = vmul.f32 %v6185, %v6042
        %v6213 = vmul.f32 %v6189, %v6043
        %v6214 = vmul.f32 %v6193, %v6044
        %v6215 = vmul.f32 %v6197, %v6045
        %v6216 = vmul.f32 %v6201, %v6046
        %v6217 = vmul.f32 %v6205, %v6047
        %v6218 = vmul.f32 %v6209, %v6048
        %v6219 = vsel %vm2182, %v6211, 0.0
        %v6220 = vsel %vm2182, %v6212, 0.0
        %v6221 = vadd.f32 %v6219, %v6220
        %v6222 = vsel %vm2182, %v6213, 0.0
        %v6223 = vadd.f32 %v6221, %v6222
        %v6224 = vsel %vm2182, %v6214, 0.0
        %v6225 = vadd.f32 %v6223, %v6224
        %v6226 = vsel %vm2182, %v6215, 0.0
        %v6227 = vadd.f32 %v6225, %v6226
        %v6228 = vsel %vm2182, %v6216, 0.0
        %v6229 = vadd.f32 %v6227, %v6228
        %v6230 = vsel %vm2182, %v6217, 0.0
        %v6231 = vadd.f32 %v6229, %v6230
        %v6232 = vsel %vm2182, %v6218, 0.0
        %v6233 = vadd.f32 %v6231, %v6232
        %v6234 = vrot.slane %v6233, 4
        %v6235 = vadd.f32 %v6233, %v6234
        %v6236 = vrot.slane %v6235, 2
        %v6237 = vadd.f32 %v6235, %v6236
        %v6238 = vrot.slane %v6237, 1
        %v6239 = vadd.f32 %v6237, %v6238
        %6240 = vset.pattern.permute.xlu0 3
        %6241 = vperm.xlu0 %6240, %v5921
        %v6242 = vpop.permute.xlu0 %6241
        %6244 = vset.pattern.permute.xlu0 3
        %6245 = vperm.xlu0 %6244, %v5922
        %v6246 = vpop.permute.xlu0 %6245
        %6248 = vset.pattern.permute.xlu0 3
        %6249 = vperm.xlu0 %6248, %v5923
        %v6250 = vpop.permute.xlu0 %6249
        %6252 = vset.pattern.permute.xlu0 3
        %6253 = vperm.xlu0 %6252, %v5924
        %v6254 = vpop.permute.xlu0 %6253
        %6256 = vset.pattern.permute.xlu0 3
        %6257 = vperm.xlu0 %6256, %v5925
        %v6258 = vpop.permute.xlu0 %6257
        %6260 = vset.pattern.permute.xlu0 3
        %6261 = vperm.xlu0 %6260, %v5926
        %v6262 = vpop.permute.xlu0 %6261
        %6264 = vset.pattern.permute.xlu0 3
        %6265 = vperm.xlu0 %6264, %v5927
        %v6266 = vpop.permute.xlu0 %6265
        %6268 = vset.pattern.permute.xlu0 3
        %6269 = vperm.xlu0 %6268, %v5928
        %v6270 = vpop.permute.xlu0 %6269
        %v6272 = vmul.f32 %v6242, %v6041
        %v6273 = vmul.f32 %v6246, %v6042
        %v6274 = vmul.f32 %v6250, %v6043
        %v6275 = vmul.f32 %v6254, %v6044
        %v6276 = vmul.f32 %v6258, %v6045
        %v6277 = vmul.f32 %v6262, %v6046
        %v6278 = vmul.f32 %v6266, %v6047
        %v6279 = vmul.f32 %v6270, %v6048
        %v6280 = vsel %vm2182, %v6272, 0.0
        %v6281 = vsel %vm2182, %v6273, 0.0
        %v6282 = vadd.f32 %v6280, %v6281
        %v6283 = vsel %vm2182, %v6274, 0.0
        %v6284 = vadd.f32 %v6282, %v6283
        %v6285 = vsel %vm2182, %v6275, 0.0
        %v6286 = vadd.f32 %v6284, %v6285
        %v6287 = vsel %vm2182, %v6276, 0.0
        %v6288 = vadd.f32 %v6286, %v6287
        %v6289 = vsel %vm2182, %v6277, 0.0
        %v6290 = vadd.f32 %v6288, %v6289
        %v6291 = vsel %vm2182, %v6278, 0.0
        %v6292 = vadd.f32 %v6290, %v6291
        %v6293 = vsel %vm2182, %v6279, 0.0
        %v6294 = vadd.f32 %v6292, %v6293
        %v6295 = vrot.slane %v6294, 4
        %v6296 = vadd.f32 %v6294, %v6295
        %v6297 = vrot.slane %v6296, 2
        %v6298 = vadd.f32 %v6296, %v6297
        %v6299 = vrot.slane %v6298, 1
        %v6300 = vadd.f32 %v6298, %v6299
        %v6301 = vsel %vm3150, %v6117, %v6178
        %v6302 = vsel %vm3152, %v6301, %v6239
        %v6303 = vsel %vm3154, %v6302, %v6300
        %vm6304 = vcmask 519168
        %6305 = vst.msk [vmem:[%s1321] sm:$0xf] %vm6304, %v6303
        %s6306 = sand.u32 %s892, 1
        %s6307 = scalar_lea.sflag [#allocation4], %s6306
        %s6308 = sand.u32 %s892, 1
        %s6309 = smul.addr %s6308, 4
        %s6310 = scalar_lea.vmem [#allocation23], %s6309
        %s6311 = sand.u32 %s918, 1
        %s6312 = scalar_lea.sflag [#allocation25], %s6311
        %s6313 = sand.u32 %s918, 1
        %s6314 = smul.addr %s6313, 4
        %s6315 = scalar_lea.vmem [#allocation24], %s6314
        // Predicated region
        $region221: #{tpu_custom_call.1} parent=167 // pred_check
          %p6316 = pneg %p902
        $region222: #{tpu_custom_call.1} parent=167 // pred_check_branch
          %6318 = sbr.rel (%p6316) target = $region224
        $region223: #{tpu_custom_call.1} parent=167 // pred_region
          %s6320 = ssub.s32 64, 64
          %6321 = vsyncadd %s6307, %s6320
          %s6322 = smul.addr %s102, 64
          %s6323 = scalar_lea.hbm %s75, %s6322
          %s6325 = sshll.u32 %s6310, 4
          %s6326 = int_to_ptr.vmem [resolvable:$true] %s6325
          %6328 = dma.vmem_to_hbm [thread:$0]  %s6326, 64, %s6323, %s6307
        $region224: #{tpu_custom_call.1} parent=167 // pred_fallthru
          _
        // Predicated region
        $region225: #{tpu_custom_call.1} parent=167 // pred_check
          %p6329 = pneg %p928
        $region226: #{tpu_custom_call.1} parent=167 // pred_check_branch
          %6331 = sbr.rel (%p6329) target = $region228
        $region227: #{tpu_custom_call.1} parent=167 // pred_region
          %s6333 = ssub.s32 64, 64
          %6334 = vsyncadd %s6312, %s6333
          %s6335 = smul.addr %s102, 64
          %s6336 = scalar_lea.hbm %s77, %s6335
          %s6338 = sshll.u32 %s6315, 4
          %s6339 = int_to_ptr.vmem [resolvable:$true] %s6338
          %6341 = dma.vmem_to_hbm [thread:$0]  %s6339, 64, %s6336, %s6312
        $region228: #{tpu_custom_call.1} parent=167 // pred_fallthru
          _
      $region168: #{tpu_custom_call.1} parent=5 // pred_fallthru
        _
      %p6342 = scmp.le.s32.totalorder 2, %s97
      // Predicated region
      $region229: #{tpu_custom_call.1} parent=5 // pred_check
        %p6343 = pneg %p6342
      $region230: #{tpu_custom_call.1} parent=5 // pred_check_branch
        %6345 = sbr.rel (%p6343) target = $region232
      $region231: #{tpu_custom_call.1} parent=5 // pred_region
        %s6346 = ssub.s32 %s97, 2
        // Predicated region
        $region233: #{tpu_custom_call.1} parent=231 // pred_check
          %p6347 = pneg %p908
        $region234: #{tpu_custom_call.1} parent=231 // pred_check_branch
          %6349 = sbr.rel (%p6347) target = $region236
        $region235: #{tpu_custom_call.1} parent=231 // pred_region
          %s6350 = sand.u32 %s893, 1
          %s6351 = scalar_lea.sflag [#allocation4], %s6350
          %s6352 = sand.u32 %s893, 1
          %s6353 = smul.addr %s6352, 4
          %s6354 = scalar_lea.vmem [#allocation23], %s6353
          %6355 = dma.done %s6351, 64
        $region236: #{tpu_custom_call.1} parent=231 // pred_fallthru
          _
        // Predicated region
        $region237: #{tpu_custom_call.1} parent=231 // pred_check
          %p6356 = pneg %p934
        $region238: #{tpu_custom_call.1} parent=231 // pred_check_branch
          %6358 = sbr.rel (%p6356) target = $region240
        $region239: #{tpu_custom_call.1} parent=231 // pred_region
          %s6359 = sand.u32 %s919, 1
          %s6360 = scalar_lea.sflag [#allocation25], %s6359
          %s6361 = sand.u32 %s919, 1
          %s6362 = smul.addr %s6361, 4
          %s6363 = scalar_lea.vmem [#allocation24], %s6362
          %6364 = dma.done %s6360, 64
        $region240: #{tpu_custom_call.1} parent=231 // pred_fallthru
          _
      $region232: #{tpu_custom_call.1} parent=5 // pred_fallthru
        _
    $region6: #{tpu_custom_call.1} parent=1 // loop_footer
      %s101 = sadd.s32 1, %s97
    $region7: #{tpu_custom_call.1} parent=1 // loop_footer_branch
      %96 = sbr.rel target = $region3
    $region8: #{tpu_custom_call.1} parent=1 // loop_exit
      _
    %6365 = vsyncpa [#allocation3], 1
    %s6366 = scalar_lea.sflag [#allocation3], 1
    %6367 = vsyncpa %s6366, 1
    %6368 = vsyncpa [#allocation6], 1
    %6369 = vsyncpa [#allocation9], 1
    %6370 = vsyncpa [#allocation12], 1
    %6371 = vsyncpa [#allocation15], 1
    %6372 = vsyncpa [#allocation18], 1
    %6373 = vsyncpa [#allocation21], 1
    %6374 = vsyncpa [#allocation4], 1
    %s6375 = scalar_lea.sflag [#allocation4], 1
    %6376 = vsyncpa %s6375, 1
    %6377 = vsyncpa [#allocation25], 1
    %s6378 = scalar_lea.sflag [#allocation25], 1
    %6379 = vsyncpa %s6378, 1

</llo_original>
